<compile_context>
chip_gen: v5e
topology: v5e:2x2
jax: 0.10.0
libtpu: 0.0.40
codegen_flags: <defaults>
</compile_context>

<pallas_src>
import jax
import jax.numpy as jnp
from jax.experimental import pallas as pl
from jax.experimental.pallas import tpu as pltpu

# bf16 weights/activations with f32 accumulation (MXU-friendly on v6e/v7x).
# Set to jnp.float32 to track PyTorch f32 numerics more closely.
COMPUTE_DTYPE = jnp.bfloat16


# ----------------------------- Pallas kernels -----------------------------

def _stem_kernel(x_ref, w1_ref, b1_ref, wb_ref, bb_ref, w2_ref, b2_ref,
                 y1_ref, z_ref, y2_ref):
    """Fused cv1 -> bottleneck.conv1, plus cv2: three 1x1 conv+BN+SiLU."""
    x = x_ref[...]                                            # (tm, Cin)
    h = jnp.dot(x, w1_ref[...], preferred_element_type=jnp.float32) + b1_ref[...]
    y1 = h * jax.nn.sigmoid(h)                                # SiLU(cv1)
    h = jnp.dot(y1.astype(wb_ref.dtype), wb_ref[...],
                preferred_element_type=jnp.float32) + bb_ref[...]
    z = h * jax.nn.sigmoid(h)                                 # SiLU(b_conv1)
    h = jnp.dot(x, w2_ref[...], preferred_element_type=jnp.float32) + b2_ref[...]
    y2 = h * jax.nn.sigmoid(h)                                # SiLU(cv2)
    y1_ref[...] = y1.astype(y1_ref.dtype)
    z_ref[...] = z.astype(z_ref.dtype)
    y2_ref[...] = y2.astype(y2_ref.dtype)


def _bottleneck_cv3_kernel(z_ref, y1_ref, y2_ref, w9_ref, b9_ref,
                           w3a_ref, w3b_ref, b3_ref, o_ref, pbuf_ref):
    """Fused 3x3 conv+BN+SiLU, shortcut add, and cv3 (concat folded in)."""
    r = pl.program_id(1)
    th, W, Cm = y1_ref.shape
    Cout = o_ref.shape[-1]

    # (th+2, W+2, Cm) window of the zero-padded z map for this row tile.
    row0 = pl.multiple_of(r * th, th)
    zwin = z_ref[pl.ds(row0, th + 2)]

    # im2col into a VMEM scratch -> one K = 9*Cm contraction on the MXU.
    for dy in range(3):
        for dx in range(3):
            k = dy * 3 + dx
            pbuf_ref[:, :, k * Cm:(k + 1) * Cm] = zwin[dy:dy + th, dx:dx + W, :]
    patches = pbuf_ref[...].reshape(th * W, 9 * Cm)

    acc = jnp.dot(patches, w9_ref[...], preferred_element_type=jnp.float32)
    acc = acc + b9_ref[...]
    acc = acc * jax.nn.sigmoid(acc)                           # SiLU(b_conv2)

    # BottleNeck shortcut.
    y1n = acc + y1_ref[...].reshape(th * W, Cm).astype(jnp.float32)

    # cv3 with the channel concat fused: cat([y1n, y2], -1) @ W3 + b3.
    out = jnp.dot(y1n.astype(w3a_ref.dtype), w3a_ref[...],
                  preferred_element_type=jnp.float32)
    out = out + jnp.dot(y2_ref[...].reshape(th * W, Cm), w3b_ref[...],
                        preferred_element_type=jnp.float32)
    out = out + b3_ref[...]
    out = out * jax.nn.sigmoid(out)                           # SiLU(cv3)
    o_ref[...] = out.reshape(th, W, Cout).astype(o_ref.dtype)


# ------------------------------ tiling helpers -----------------------------

def _choose_tm(M, pref=512):
    """Row tile for the 1x1 path: prefer 512 rows, keep >=2 grid steps, /8."""
    tm = pref
    while tm > 8 and M <= tm:
        tm //= 2
    return tm


def _choose_th(H, max_th=32):
    """Row tile for the 3x3 path: largest divisor of H that is <= max_th."""
    for th in range(min(H, max_th), 0, -1):
        if H % th == 0:
            return th
    return H


def _compiler_params(semantics, block_bytes, temp_bytes=0):
    """Explicit VMEM budget derived from the chosen tiles (with margin)."""
    need = 2 * int(block_bytes) + int(temp_bytes)   # double-buffered blocks + temps
    limit = int(min(56 << 20, max(16 << 20, 2 * need)))
    return pltpu.CompilerParams(dimension_semantics=semantics,
                                vmem_limit_bytes=limit)


# ------------------------------- wrappers ----------------------------------

def fused_stem(x_nhwc, w1, b1, wb, bb, w2, b2):
    """y1 = SiLU(BN(cv1(x))); z = SiLU(BN(b_conv1(y1))); y2 = SiLU(BN(cv2(x)))."""
    N, H, W, Cin = x_nhwc.shape
    Cm = w1.shape[1]
    M = N * H * W
    tm = _choose_tm(M)
    n_tiles = pl.cdiv(M, tm)
    M_pad = n_tiles * tm

    x2d = x_nhwc.reshape(M, Cin)
    if M_pad != M:                                 # pad rows so the grid is exact
        x2d = jnp.pad(x2d, ((0, M_pad - M), (0, 0)))

    row_out = pl.BlockSpec((tm, Cm), lambda i: (i, 0))
    full2d = lambda a: pl.BlockSpec(a.shape, lambda i: (0, 0))

    itm = jnp.dtype(COMPUTE_DTYPE).itemsize
    block_bytes = ((tm * Cin + 3 * tm * Cm) * itm
                   + sum(int(a.size) * a.dtype.itemsize
                         for a in (w1, b1, wb, bb, w2, b2)))
    cost = pl.CostEstimate(
        flops=int(2 * M_pad * Cm * (2 * Cin + Cm) + 8 * M_pad * Cm),
        transcendentals=int(3 * M_pad * Cm),
        bytes_accessed=int(M_pad * Cin * itm + 3 * M_pad * Cm * itm))

    y1, z, y2 = pl.pallas_call(
        _stem_kernel,
        out_shape=tuple(jax.ShapeDtypeStruct((M_pad, Cm), COMPUTE_DTYPE)
                        for _ in range(3)),
        grid=(n_tiles,),
        in_specs=[
            pl.BlockSpec((tm, Cin), lambda i: (i, 0)),
            full2d(w1), full2d(b1), full2d(wb), full2d(bb), full2d(w2), full2d(b2),
        ],
        out_specs=(row_out, row_out, row_out),
        compiler_params=_compiler_params(("parallel",), block_bytes,
                                         temp_bytes=4 * tm * (Cin + 4 * Cm)),
        cost_estimate=cost,
    )(x2d, w1, b1, wb, bb, w2, b2)

    def to4d(a):
        return a[:M].reshape(N, H, W, Cm)
    return to4d(y1), to4d(z), to4d(y2)


def fused_bottleneck_cv3(z, y1, y2, w3x3, b3x3, w3, b3, out_dtype):
    """SiLU(BN(3x3(z))) + y1, then cv3 on the (fused) channel concat with y2."""
    N, H, W, Cm = z.shape
    Cout = w3.shape[1]
    th = _choose_th(H)
    nh = H // th

    # 1-px zero halo for the 3x3 conv; z is the narrowest activation here.
    zp = jnp.pad(z, ((0, 0), (1, 1), (1, 1), (0, 0)))
    w9 = w3x3.reshape(9 * Cm, Cm)                 # (dy, dx, cin) -> contraction rows
    w3a, w3b = w3[:Cm], w3[Cm:]                   # concat fused: split cv3 weight

    itm = jnp.dtype(COMPUTE_DTYPE).itemsize
    oitm = jnp.dtype(out_dtype).itemsize
    block_bytes = ((H + 2) * (W + 2) * Cm * itm            # resident z (per n)
                   + 2 * th * W * Cm * itm                 # y1 / y2 tiles
                   + th * W * Cout * oitm                  # output tile
                   + (9 * Cm * Cm + 2 * Cm * Cout) * itm + (Cm + Cout) * 4)
    temp_bytes = th * W * 9 * Cm * itm + 6 * th * W * max(Cm, Cout) * 4
    cost = pl.CostEstimate(
        flops=int(2 * N * H * W * Cm * (9 * Cm + 2 * Cout)
                  + 8 * N * H * W * (Cm + Cout)),
        transcendentals=int(N * H * W * (Cm + Cout)),
        bytes_accessed=int(zp.size * itm + y1.size * itm + y2.size * itm
                           + N * H * W * Cout * oitm))

    tile = lambda C: pl.BlockSpec((None, th, W, C), lambda n, r: (n, r, 0, 0))
    full2d = lambda a: pl.BlockSpec(a.shape, lambda n, r: (0, 0))

    return pl.pallas_call(
        _bottleneck_cv3_kernel,
        out_shape=jax.ShapeDtypeStruct((N, H, W, Cout), out_dtype),
        grid=(N, nh),
        in_specs=[
            pl.BlockSpec((None, H + 2, W + 2, Cm), lambda n, r: (n, 0, 0, 0)),
            tile(Cm), tile(Cm),
            full2d(w9), full2d(b3x3), full2d(w3a), full2d(w3b), full2d(b3),
        ],
        out_specs=tile(Cout),
        scratch_shapes=[pltpu.VMEM((th, W, 9 * Cm), COMPUTE_DTYPE)],
        compiler_params=_compiler_params(("parallel", "parallel"),
                                         block_bytes, temp_bytes),
        cost_estimate=cost,
    )(zp, y1, y2, w9, b3x3, w3a, w3b, b3)


# --------------------------- parameter setup -------------------------------

def _fold_bn(w, gamma, beta, mean, var, eps=1e-5):
    """Fold BatchNorm (running stats) into conv weight/bias (Cout = last axis)."""
    scale = gamma / jnp.sqrt(var + eps)
    w_eff = (w * scale).astype(COMPUTE_DTYPE)
    b_eff = (beta - mean * scale).reshape(1, -1).astype(jnp.float32)
    return w_eff, b_eff


def make_c3_params(key, in_channels, out_channels, expansion=0.5):
    out_c = int(out_channels * expansion)

    def conv_bn(key, cin, cout, k):
        kw, kg, kb, km, kv = jax.random.split(key, 5)
        if k == 1:
            w = 0.1 * jax.random.normal(kw, (cin, cout), jnp.float32)
        else:
            w = 0.1 * jax.random.normal(kw, (k, k, cin, cout), jnp.float32)  # HWIO
        gamma = 1.0 + 0.1 * jax.random.normal(kg, (cout,), jnp.float32)
        beta = 0.1 * jax.random.normal(kb, (cout,), jnp.float32)
        mean = 0.1 * jax.random.normal(km, (cout,), jnp.float32)
        var = 0.5 + jnp.abs(jax.random.normal(kv, (cout,), jnp.float32)) * 0.1
        return _fold_bn(w, gamma, beta, mean, var)

    ks = jax.random.split(key, 5)
    return {
        "cv1": conv_bn(ks[0], in_channels, out_c, 1),
        "cv2": conv_bn(ks[1], in_channels, out_c, 1),
        "cv3": conv_bn(ks[2], 2 * out_c, out_channels, 1),
        "b_conv1": conv_bn(ks[3], out_c, out_c, 1),     # bottleneck 1x1 (exp=1.0)
        "b_conv2": conv_bn(ks[4], out_c, out_c, 3),     # bottleneck 3x3
    }


# ------------------------------- forward -----------------------------------

def c3_forward(x_nchw, params):
    """C3 forward: NCHW in / NCHW out (PyTorch convention), NHWC inside."""
    x = jnp.transpose(x_nchw, (0, 2, 3, 1)).astype(COMPUTE_DTYPE)     # -> NHWC
    y1, z, y2 = fused_stem(x, *params["cv1"], *params["b_conv1"], *params["cv2"])
    out = fused_bottleneck_cv3(z, y1, y2, *params["b_conv2"], *params["cv3"],
                               out_dtype=x_nchw.dtype)
    return jnp.transpose(out, (0, 3, 1, 2))                            # -> NCHW


if __name__ == "__main__":
    key = jax.random.PRNGKey(0)
    k_x, k_p = jax.random.split(key)

    in_channels, out_channels = 8, 8
    x = jax.random.normal(k_x, (2, in_channels, 16, 16), jnp.float32)  # NCHW
    params = make_c3_params(k_p, in_channels, out_channels)

    fwd = jax.jit(c3_forward)
    out = fwd(x, params)
    out = jax.block_until_ready(out)

    assert out.shape == (2, out_channels, 16, 16)
    assert bool(jnp.all(jnp.isfinite(out)))
    print("KERNEL_OK")
</pallas_src>

<mosaic_0001>
module attributes {stable_mosaic.version = 11 : i64} {
  func.func @_stem_kernel(%arg0: i32, %arg1: memref<256x8xbf16, #tpu.memory_space<vmem>>, %arg2: memref<8x4xbf16, #tpu.memory_space<vmem>>, %arg3: memref<1x4xf32, #tpu.memory_space<vmem>>, %arg4: memref<4x4xbf16, #tpu.memory_space<vmem>>, %arg5: memref<1x4xf32, #tpu.memory_space<vmem>>, %arg6: memref<8x4xbf16, #tpu.memory_space<vmem>>, %arg7: memref<1x4xf32, #tpu.memory_space<vmem>>, %arg8: memref<256x4xbf16, #tpu.memory_space<vmem>>, %arg9: memref<256x4xbf16, #tpu.memory_space<vmem>>, %arg10: memref<256x4xbf16, #tpu.memory_space<vmem>>) attributes {dimension_semantics = [#tpu.dimension_semantics<parallel>], iteration_bounds = array<i64: 2>, scalar_prefetch = 0 : i64, scratch_operands = 0 : i64, tpu.core_type = #tpu.core_type<tc>, window_params = [{transform_indices = @transform_0, window_bounds = array<i64: 256, 8>}, {pipeline_mode = #tpu.pipeline_mode<synchronous>, transform_indices = @transform_1, window_bounds = array<i64: 8, 4>}, {pipeline_mode = #tpu.pipeline_mode<synchronous>, transform_indices = @transform_2, window_bounds = array<i64: 1, 4>}, {pipeline_mode = #tpu.pipeline_mode<synchronous>, transform_indices = @transform_3, window_bounds = array<i64: 4, 4>}, {pipeline_mode = #tpu.pipeline_mode<synchronous>, transform_indices = @transform_4, window_bounds = array<i64: 1, 4>}, {pipeline_mode = #tpu.pipeline_mode<synchronous>, transform_indices = @transform_5, window_bounds = array<i64: 8, 4>}, {pipeline_mode = #tpu.pipeline_mode<synchronous>, transform_indices = @transform_6, window_bounds = array<i64: 1, 4>}, {transform_indices = @transform_7, window_bounds = array<i64: 256, 4>}, {transform_indices = @transform_8, window_bounds = array<i64: 256, 4>}, {transform_indices = @transform_9, window_bounds = array<i64: 256, 4>}]} {
    %c0 = arith.constant 0 : index
    %c0_0 = arith.constant 0 : index
    %0 = vector.load %arg1[%c0, %c0_0] : memref<256x8xbf16, #tpu.memory_space<vmem>>, vector<256x8xbf16>
    %c0_1 = arith.constant 0 : index
    %c0_2 = arith.constant 0 : index
    %1 = vector.load %arg2[%c0_1, %c0_2] : memref<8x4xbf16, #tpu.memory_space<vmem>>, vector<8x4xbf16>
    %cst = arith.constant dense<0.000000e+00> : vector<256x4xf32>
    %2 = tpu.matmul %0, %1, %cst {dimension_numbers = #tpu.dot_dimension_numbers<[1], [0], [0], [1], [0, 0, 1, 1], [], []>} : vector<256x8xbf16>, vector<8x4xbf16>, vector<256x4xf32> -> vector<256x4xf32>
    %c0_3 = arith.constant 0 : index
    %c0_4 = arith.constant 0 : index
    %3 = vector.load %arg3[%c0_3, %c0_4] : memref<1x4xf32, #tpu.memory_space<vmem>>, vector<1x4xf32>
    %4 = vector.broadcast %3 : vector<1x4xf32> to vector<256x4xf32>
    %5 = arith.addf %2, %4 : vector<256x4xf32>
    %6 = arith.negf %5 : vector<256x4xf32>
    %7 = math.exp %6 : vector<256x4xf32>
    %cst_5 = arith.constant 1.000000e+00 : f32
    %8 = vector.broadcast %cst_5 : f32 to vector<256x4xf32>
    %9 = arith.addf %8, %7 : vector<256x4xf32>
    %10 = arith.divf %8, %9 : vector<256x4xf32>
    %11 = arith.mulf %5, %10 : vector<256x4xf32>
    %12 = arith.truncf %11 : vector<256x4xf32> to vector<256x4xbf16>
    %c0_6 = arith.constant 0 : index
    %c0_7 = arith.constant 0 : index
    %13 = vector.load %arg4[%c0_6, %c0_7] : memref<4x4xbf16, #tpu.memory_space<vmem>>, vector<4x4xbf16>
    %cst_8 = arith.constant dense<0.000000e+00> : vector<256x4xf32>
    %14 = tpu.matmul %12, %13, %cst_8 {dimension_numbers = #tpu.dot_dimension_numbers<[1], [0], [0], [1], [0, 0, 1, 1], [], []>} : vector<256x4xbf16>, vector<4x4xbf16>, vector<256x4xf32> -> vector<256x4xf32>
    %c0_9 = arith.constant 0 : index
    %c0_10 = arith.constant 0 : index
    %15 = vector.load %arg5[%c0_9, %c0_10] : memref<1x4xf32, #tpu.memory_space<vmem>>, vector<1x4xf32>
    %16 = vector.broadcast %15 : vector<1x4xf32> to vector<256x4xf32>
    %17 = arith.addf %14, %16 : vector<256x4xf32>
    %18 = arith.negf %17 : vector<256x4xf32>
    %19 = math.exp %18 : vector<256x4xf32>
    %cst_11 = arith.constant 1.000000e+00 : f32
    %20 = vector.broadcast %cst_11 : f32 to vector<256x4xf32>
    %21 = arith.addf %20, %19 : vector<256x4xf32>
    %22 = arith.divf %20, %21 : vector<256x4xf32>
    %23 = arith.mulf %17, %22 : vector<256x4xf32>
    %c0_12 = arith.constant 0 : index
    %c0_13 = arith.constant 0 : index
    %24 = vector.load %arg6[%c0_12, %c0_13] : memref<8x4xbf16, #tpu.memory_space<vmem>>, vector<8x4xbf16>
    %cst_14 = arith.constant dense<0.000000e+00> : vector<256x4xf32>
    %25 = tpu.matmul %0, %24, %cst_14 {dimension_numbers = #tpu.dot_dimension_numbers<[1], [0], [0], [1], [0, 0, 1, 1], [], []>} : vector<256x8xbf16>, vector<8x4xbf16>, vector<256x4xf32> -> vector<256x4xf32>
    %c0_15 = arith.constant 0 : index
    %c0_16 = arith.constant 0 : index
    %26 = vector.load %arg7[%c0_15, %c0_16] : memref<1x4xf32, #tpu.memory_space<vmem>>, vector<1x4xf32>
    %27 = vector.broadcast %26 : vector<1x4xf32> to vector<256x4xf32>
    %28 = arith.addf %25, %27 : vector<256x4xf32>
    %29 = arith.negf %28 : vector<256x4xf32>
    %30 = math.exp %29 : vector<256x4xf32>
    %cst_17 = arith.constant 1.000000e+00 : f32
    %31 = vector.broadcast %cst_17 : f32 to vector<256x4xf32>
    %32 = arith.addf %31, %30 : vector<256x4xf32>
    %33 = arith.divf %31, %32 : vector<256x4xf32>
    %34 = arith.mulf %28, %33 : vector<256x4xf32>
    %35 = arith.truncf %11 : vector<256x4xf32> to vector<256x4xbf16>
    %c0_18 = arith.constant 0 : index
    %c0_19 = arith.constant 0 : index
    %36 = vector.load %arg8[%c0_18, %c0_19] : memref<256x4xbf16, #tpu.memory_space<vmem>>, vector<256x4xbf16>
    tpu.vector_store %arg8[%c0_18, %c0_19], %35 {strides = array<i32>} : memref<256x4xbf16, #tpu.memory_space<vmem>>, vector<256x4xbf16>,
    %37 = arith.truncf %23 : vector<256x4xf32> to vector<256x4xbf16>
    %c0_20 = arith.constant 0 : index
    %c0_21 = arith.constant 0 : index
    %38 = vector.load %arg9[%c0_20, %c0_21] : memref<256x4xbf16, #tpu.memory_space<vmem>>, vector<256x4xbf16>
    tpu.vector_store %arg9[%c0_20, %c0_21], %37 {strides = array<i32>} : memref<256x4xbf16, #tpu.memory_space<vmem>>, vector<256x4xbf16>,
    %39 = arith.truncf %34 : vector<256x4xf32> to vector<256x4xbf16>
    %c0_22 = arith.constant 0 : index
    %c0_23 = arith.constant 0 : index
    %40 = vector.load %arg10[%c0_22, %c0_23] : memref<256x4xbf16, #tpu.memory_space<vmem>>, vector<256x4xbf16>
    tpu.vector_store %arg10[%c0_22, %c0_23], %39 {strides = array<i32>} : memref<256x4xbf16, #tpu.memory_space<vmem>>, vector<256x4xbf16>,
    return
  }
  func.func @transform_0(%arg0: i32) -> (i32, i32) {
    %c0_i32 = arith.constant 0 : i32
    %c0_i32_0 = arith.constant 0 : i32
    return %arg0, %c0_i32 : i32, i32
  }
  func.func @transform_1(%arg0: i32) -> (i32, i32) {
    %c0_i32 = arith.constant 0 : i32
    %c0_i32_0 = arith.constant 0 : i32
    %c0_i32_1 = arith.constant 0 : i32
    return %c0_i32, %c0_i32_0 : i32, i32
  }
  func.func @transform_2(%arg0: i32) -> (i32, i32) {
    %c0_i32 = arith.constant 0 : i32
    %c0_i32_0 = arith.constant 0 : i32
    %c0_i32_1 = arith.constant 0 : i32
    return %c0_i32, %c0_i32_0 : i32, i32
  }
  func.func @transform_3(%arg0: i32) -> (i32, i32) {
    %c0_i32 = arith.constant 0 : i32
    %c0_i32_0 = arith.constant 0 : i32
    %c0_i32_1 = arith.constant 0 : i32
    return %c0_i32, %c0_i32_0 : i32, i32
  }
  func.func @transform_4(%arg0: i32) -> (i32, i32) {
    %c0_i32 = arith.constant 0 : i32
    %c0_i32_0 = arith.constant 0 : i32
    %c0_i32_1 = arith.constant 0 : i32
    return %c0_i32, %c0_i32_0 : i32, i32
  }
  func.func @transform_5(%arg0: i32) -> (i32, i32) {
    %c0_i32 = arith.constant 0 : i32
    %c0_i32_0 = arith.constant 0 : i32
    %c0_i32_1 = arith.constant 0 : i32
    return %c0_i32, %c0_i32_0 : i32, i32
  }
  func.func @transform_6(%arg0: i32) -> (i32, i32) {
    %c0_i32 = arith.constant 0 : i32
    %c0_i32_0 = arith.constant 0 : i32
    %c0_i32_1 = arith.constant 0 : i32
    return %c0_i32, %c0_i32_0 : i32, i32
  }
  func.func @transform_7(%arg0: i32) -> (i32, i32) {
    %c0_i32 = arith.constant 0 : i32
    %c0_i32_0 = arith.constant 0 : i32
    return %arg0, %c0_i32 : i32, i32
  }
  func.func @transform_8(%arg0: i32) -> (i32, i32) {
    %c0_i32 = arith.constant 0 : i32
    %c0_i32_0 = arith.constant 0 : i32
    return %arg0, %c0_i32 : i32, i32
  }
  func.func @transform_9(%arg0: i32) -> (i32, i32) {
    %c0_i32 = arith.constant 0 : i32
    %c0_i32_0 = arith.constant 0 : i32
    return %arg0, %c0_i32 : i32, i32
  }
}

module attributes {stable_mosaic.version = 11 : i64} {
  func.func @_bottleneck_cv3_kernel(%arg0: i32, %arg1: i32, %arg2: memref<1x18x18x4xbf16, #tpu.memory_space<vmem>>, %arg3: memref<1x16x16x4xbf16, #tpu.memory_space<vmem>>, %arg4: memref<1x16x16x4xbf16, #tpu.memory_space<vmem>>, %arg5: memref<36x4xbf16, #tpu.memory_space<vmem>>, %arg6: memref<1x4xf32, #tpu.memory_space<vmem>>, %arg7: memref<4x8xbf16, #tpu.memory_space<vmem>>, %arg8: memref<4x8xbf16, #tpu.memory_space<vmem>>, %arg9: memref<1x8xf32, #tpu.memory_space<vmem>>, %arg10: memref<1x16x16x8xf32, #tpu.memory_space<vmem>>, %arg11: memref<16x16x36xbf16, #tpu.memory_space<vmem>>) attributes {dimension_semantics = [#tpu.dimension_semantics<parallel>, #tpu.dimension_semantics<parallel>], iteration_bounds = array<i64: 2, 1>, scalar_prefetch = 0 : i64, scratch_operands = 1 : i64, tpu.core_type = #tpu.core_type<tc>, window_params = [{transform_indices = @transform_0, window_bounds = array<i64: 1, 18, 18, 4>}, {transform_indices = @transform_1, window_bounds = array<i64: 1, 16, 16, 4>}, {transform_indices = @transform_2, window_bounds = array<i64: 1, 16, 16, 4>}, {pipeline_mode = #tpu.pipeline_mode<synchronous>, transform_indices = @transform_3, window_bounds = array<i64: 36, 4>}, {pipeline_mode = #tpu.pipeline_mode<synchronous>, transform_indices = @transform_4, window_bounds = array<i64: 1, 4>}, {pipeline_mode = #tpu.pipeline_mode<synchronous>, transform_indices = @transform_5, window_bounds = array<i64: 4, 8>}, {pipeline_mode = #tpu.pipeline_mode<synchronous>, transform_indices = @transform_6, window_bounds = array<i64: 4, 8>}, {pipeline_mode = #tpu.pipeline_mode<synchronous>, transform_indices = @transform_7, window_bounds = array<i64: 1, 8>}, {transform_indices = @transform_8, window_bounds = array<i64: 1, 16, 16, 8>}]} {
    %c16_i32 = arith.constant 16 : i32
    %0 = arith.muli %arg1, %c16_i32 : i32
    %1 = tpu.assume_multiple %0, 16 : i32
    %c0 = arith.constant 0 : index
    %2 = arith.index_cast %1 : i32 to index
    %c0_0 = arith.constant 0 : index
    %c0_1 = arith.constant 0 : index
    %3 = vector.load %arg2[%c0, %2, %c0_0, %c0_1] : memref<1x18x18x4xbf16, #tpu.memory_space<vmem>>, vector<1x18x18x4xbf16>
    %4 = vector.shape_cast %3 : vector<1x18x18x4xbf16> to vector<18x18x4xbf16>
    %5 = vector.extract_strided_slice %4 {offsets = [0, 0, 0], sizes = [16, 16, 4], strides = [1, 1, 1]} : vector<18x18x4xbf16> to vector<16x16x4xbf16>
    %c0_2 = arith.constant 0 : index
    %c0_3 = arith.constant 0 : index
    %c0_4 = arith.constant 0 : index
    %6 = vector.load %arg11[%c0_2, %c0_3, %c0_4] : memref<16x16x36xbf16, #tpu.memory_space<vmem>>, vector<16x16x4xbf16>
    tpu.vector_store %arg11[%c0_2, %c0_3, %c0_4], %5 {strides = array<i32>} : memref<16x16x36xbf16, #tpu.memory_space<vmem>>, vector<16x16x4xbf16>,
    %7 = vector.extract_strided_slice %4 {offsets = [0, 1, 0], sizes = [16, 16, 4], strides = [1, 1, 1]} : vector<18x18x4xbf16> to vector<16x16x4xbf16>
    %c0_5 = arith.constant 0 : index
    %c0_6 = arith.constant 0 : index
    %c4 = arith.constant 4 : index
    %8 = vector.load %arg11[%c0_5, %c0_6, %c4] : memref<16x16x36xbf16, #tpu.memory_space<vmem>>, vector<16x16x4xbf16>
    tpu.vector_store %arg11[%c0_5, %c0_6, %c4], %7 {strides = array<i32>} : memref<16x16x36xbf16, #tpu.memory_space<vmem>>, vector<16x16x4xbf16>,
    %9 = vector.extract_strided_slice %4 {offsets = [0, 2, 0], sizes = [16, 16, 4], strides = [1, 1, 1]} : vector<18x18x4xbf16> to vector<16x16x4xbf16>
    %c0_7 = arith.constant 0 : index
    %c0_8 = arith.constant 0 : index
    %c8 = arith.constant 8 : index
    %10 = vector.load %arg11[%c0_7, %c0_8, %c8] : memref<16x16x36xbf16, #tpu.memory_space<vmem>>, vector<16x16x4xbf16>
    tpu.vector_store %arg11[%c0_7, %c0_8, %c8], %9 {strides = array<i32>} : memref<16x16x36xbf16, #tpu.memory_space<vmem>>, vector<16x16x4xbf16>,
    %11 = vector.extract_strided_slice %4 {offsets = [1, 0, 0], sizes = [16, 16, 4], strides = [1, 1, 1]} : vector<18x18x4xbf16> to vector<16x16x4xbf16>
    %c0_9 = arith.constant 0 : index
    %c0_10 = arith.constant 0 : index
    %c12 = arith.constant 12 : index
    %12 = vector.load %arg11[%c0_9, %c0_10, %c12] : memref<16x16x36xbf16, #tpu.memory_space<vmem>>, vector<16x16x4xbf16>
    tpu.vector_store %arg11[%c0_9, %c0_10, %c12], %11 {strides = array<i32>} : memref<16x16x36xbf16, #tpu.memory_space<vmem>>, vector<16x16x4xbf16>,
    %13 = vector.extract_strided_slice %4 {offsets = [1, 1, 0], sizes = [16, 16, 4], strides = [1, 1, 1]} : vector<18x18x4xbf16> to vector<16x16x4xbf16>
    %c0_11 = arith.constant 0 : index
    %c0_12 = arith.constant 0 : index
    %c16 = arith.constant 16 : index
    %14 = vector.load %arg11[%c0_11, %c0_12, %c16] : memref<16x16x36xbf16, #tpu.memory_space<vmem>>, vector<16x16x4xbf16>
    tpu.vector_store %arg11[%c0_11, %c0_12, %c16], %13 {strides = array<i32>} : memref<16x16x36xbf16, #tpu.memory_space<vmem>>, vector<16x16x4xbf16>,
    %15 = vector.extract_strided_slice %4 {offsets = [1, 2, 0], sizes = [16, 16, 4], strides = [1, 1, 1]} : vector<18x18x4xbf16> to vector<16x16x4xbf16>
    %c0_13 = arith.constant 0 : index
    %c0_14 = arith.constant 0 : index
    %c20 = arith.constant 20 : index
    %16 = vector.load %arg11[%c0_13, %c0_14, %c20] : memref<16x16x36xbf16, #tpu.memory_space<vmem>>, vector<16x16x4xbf16>
    tpu.vector_store %arg11[%c0_13, %c0_14, %c20], %15 {strides = array<i32>} : memref<16x16x36xbf16, #tpu.memory_space<vmem>>, vector<16x16x4xbf16>,
    %17 = vector.extract_strided_slice %4 {offsets = [2, 0, 0], sizes = [16, 16, 4], strides = [1, 1, 1]} : vector<18x18x4xbf16> to vector<16x16x4xbf16>
    %c0_15 = arith.constant 0 : index
    %c0_16 = arith.constant 0 : index
    %c24 = arith.constant 24 : index
    %18 = vector.load %arg11[%c0_15, %c0_16, %c24] : memref<16x16x36xbf16, #tpu.memory_space<vmem>>, vector<16x16x4xbf16>
    tpu.vector_store %arg11[%c0_15, %c0_16, %c24], %17 {strides = array<i32>} : memref<16x16x36xbf16, #tpu.memory_space<vmem>>, vector<16x16x4xbf16>,
    %19 = vector.extract_strided_slice %4 {offsets = [2, 1, 0], sizes = [16, 16, 4], strides = [1, 1, 1]} : vector<18x18x4xbf16> to vector<16x16x4xbf16>
    %c0_17 = arith.constant 0 : index
    %c0_18 = arith.constant 0 : index
    %c28 = arith.constant 28 : index
    %20 = vector.load %arg11[%c0_17, %c0_18, %c28] : memref<16x16x36xbf16, #tpu.memory_space<vmem>>, vector<16x16x4xbf16>
    tpu.vector_store %arg11[%c0_17, %c0_18, %c28], %19 {strides = array<i32>} : memref<16x16x36xbf16, #tpu.memory_space<vmem>>, vector<16x16x4xbf16>,
    %21 = vector.extract_strided_slice %4 {offsets = [2, 2, 0], sizes = [16, 16, 4], strides = [1, 1, 1]} : vector<18x18x4xbf16> to vector<16x16x4xbf16>
    %c0_19 = arith.constant 0 : index
    %c0_20 = arith.constant 0 : index
    %c32 = arith.constant 32 : index
    %22 = vector.load %arg11[%c0_19, %c0_20, %c32] : memref<16x16x36xbf16, #tpu.memory_space<vmem>>, vector<16x16x4xbf16>
    tpu.vector_store %arg11[%c0_19, %c0_20, %c32], %21 {strides = array<i32>} : memref<16x16x36xbf16, #tpu.memory_space<vmem>>, vector<16x16x4xbf16>,
    %c0_21 = arith.constant 0 : index
    %c0_22 = arith.constant 0 : index
    %c0_23 = arith.constant 0 : index
    %23 = vector.load %arg11[%c0_21, %c0_22, %c0_23] : memref<16x16x36xbf16, #tpu.memory_space<vmem>>, vector<16x16x36xbf16>
    %24 = vector.shape_cast %23 : vector<16x16x36xbf16> to vector<256x36xbf16>
    %c0_24 = arith.constant 0 : index
    %c0_25 = arith.constant 0 : index
    %25 = vector.load %arg5[%c0_24, %c0_25] : memref<36x4xbf16, #tpu.memory_space<vmem>>, vector<36x4xbf16>
    %cst = arith.constant dense<0.000000e+00> : vector<256x4xf32>
    %26 = tpu.matmul %24, %25, %cst {dimension_numbers = #tpu.dot_dimension_numbers<[1], [0], [0], [1], [0, 0, 1, 1], [], []>} : vector<256x36xbf16>, vector<36x4xbf16>, vector<256x4xf32> -> vector<256x4xf32>
    %c0_26 = arith.constant 0 : index
    %c0_27 = arith.constant 0 : index
    %27 = vector.load %arg6[%c0_26, %c0_27] : memref<1x4xf32, #tpu.memory_space<vmem>>, vector<1x4xf32>
    %28 = vector.broadcast %27 : vector<1x4xf32> to vector<256x4xf32>
    %29 = arith.addf %26, %28 : vector<256x4xf32>
    %30 = arith.negf %29 : vector<256x4xf32>
    %31 = math.exp %30 : vector<256x4xf32>
    %cst_28 = arith.constant 1.000000e+00 : f32
    %32 = vector.broadcast %cst_28 : f32 to vector<256x4xf32>
    %33 = arith.addf %32, %31 : vector<256x4xf32>
    %34 = arith.divf %32, %33 : vector<256x4xf32>
    %35 = arith.mulf %29, %34 : vector<256x4xf32>
    %c0_29 = arith.constant 0 : index
    %c0_30 = arith.constant 0 : index
    %c0_31 = arith.constant 0 : index
    %c0_32 = arith.constant 0 : index
    %36 = vector.load %arg3[%c0_29, %c0_30, %c0_31, %c0_32] : memref<1x16x16x4xbf16, #tpu.memory_space<vmem>>, vector<1x16x16x4xbf16>
    %37 = vector.shape_cast %36 : vector<1x16x16x4xbf16> to vector<16x16x4xbf16>
    %38 = vector.shape_cast %37 : vector<16x16x4xbf16> to vector<256x4xbf16>
    %39 = arith.extf %38 : vector<256x4xbf16> to vector<256x4xf32>
    %40 = arith.addf %35, %39 : vector<256x4xf32>
    %41 = arith.truncf %40 : vector<256x4xf32> to vector<256x4xbf16>
    %c0_33 = arith.constant 0 : index
    %c0_34 = arith.constant 0 : index
    %42 = vector.load %arg7[%c0_33, %c0_34] : memref<4x8xbf16, #tpu.memory_space<vmem>>, vector<4x8xbf16>
    %cst_35 = arith.constant dense<0.000000e+00> : vector<256x8xf32>
    %43 = tpu.matmul %41, %42, %cst_35 {dimension_numbers = #tpu.dot_dimension_numbers<[1], [0], [0], [1], [0, 0, 1, 1], [], []>} : vector<256x4xbf16>, vector<4x8xbf16>, vector<256x8xf32> -> vector<256x8xf32>
    %c0_36 = arith.constant 0 : index
    %c0_37 = arith.constant 0 : index
    %c0_38 = arith.constant 0 : index
    %c0_39 = arith.constant 0 : index
    %44 = vector.load %arg4[%c0_36, %c0_37, %c0_38, %c0_39] : memref<1x16x16x4xbf16, #tpu.memory_space<vmem>>, vector<1x16x16x4xbf16>
    %45 = vector.shape_cast %44 : vector<1x16x16x4xbf16> to vector<16x16x4xbf16>
    %46 = vector.shape_cast %45 : vector<16x16x4xbf16> to vector<256x4xbf16>
    %c0_40 = arith.constant 0 : index
    %c0_41 = arith.constant 0 : index
    %47 = vector.load %arg8[%c0_40, %c0_41] : memref<4x8xbf16, #tpu.memory_space<vmem>>, vector<4x8xbf16>
    %cst_42 = arith.constant dense<0.000000e+00> : vector<256x8xf32>
    %48 = tpu.matmul %46, %47, %cst_42 {dimension_numbers = #tpu.dot_dimension_numbers<[1], [0], [0], [1], [0, 0, 1, 1], [], []>} : vector<256x4xbf16>, vector<4x8xbf16>, vector<256x8xf32> -> vector<256x8xf32>
    %49 = arith.addf %43, %48 : vector<256x8xf32>
    %c0_43 = arith.constant 0 : index
    %c0_44 = arith.constant 0 : index
    %50 = vector.load %arg9[%c0_43, %c0_44] : memref<1x8xf32, #tpu.memory_space<vmem>>, vector<1x8xf32>
    %51 = vector.broadcast %50 : vector<1x8xf32> to vector<256x8xf32>
    %52 = arith.addf %49, %51 : vector<256x8xf32>
    %53 = arith.negf %52 : vector<256x8xf32>
    %54 = math.exp %53 : vector<256x8xf32>
    %cst_45 = arith.constant 1.000000e+00 : f32
    %55 = vector.broadcast %cst_45 : f32 to vector<256x8xf32>
    %56 = arith.addf %55, %54 : vector<256x8xf32>
    %57 = arith.divf %55, %56 : vector<256x8xf32>
    %58 = arith.mulf %52, %57 : vector<256x8xf32>
    %59 = vector.shape_cast %58 : vector<256x8xf32> to vector<16x16x8xf32>
    %c0_46 = arith.constant 0 : index
    %c0_47 = arith.constant 0 : index
    %c0_48 = arith.constant 0 : index
    %c0_49 = arith.constant 0 : index
    %60 = vector.load %arg10[%c0_46, %c0_47, %c0_48, %c0_49] : memref<1x16x16x8xf32, #tpu.memory_space<vmem>>, vector<1x16x16x8xf32>
    %61 = vector.shape_cast %60 : vector<1x16x16x8xf32> to vector<16x16x8xf32>
    %62 = vector.shape_cast %59 : vector<16x16x8xf32> to vector<1x16x16x8xf32>
    tpu.vector_store %arg10[%c0_46, %c0_47, %c0_48, %c0_49], %62 {strides = array<i32>} : memref<1x16x16x8xf32, #tpu.memory_space<vmem>>, vector<1x16x16x8xf32>,
    return
  }
  func.func @transform_0(%arg0: i32, %arg1: i32) -> (i32, i32, i32, i32) {
    %c0_i32 = arith.constant 0 : i32
    %c0_i32_0 = arith.constant 0 : i32
    %c0_i32_1 = arith.constant 0 : i32
    %c0_i32_2 = arith.constant 0 : i32
    return %arg0, %c0_i32, %c0_i32_0, %c0_i32_1 : i32, i32, i32, i32
  }
  func.func @transform_1(%arg0: i32, %arg1: i32) -> (i32, i32, i32, i32) {
    %c0_i32 = arith.constant 0 : i32
    %c0_i32_0 = arith.constant 0 : i32
    %c0_i32_1 = arith.constant 0 : i32
    return %arg0, %arg1, %c0_i32, %c0_i32_0 : i32, i32, i32, i32
  }
  func.func @transform_2(%arg0: i32, %arg1: i32) -> (i32, i32, i32, i32) {
    %c0_i32 = arith.constant 0 : i32
    %c0_i32_0 = arith.constant 0 : i32
    %c0_i32_1 = arith.constant 0 : i32
    return %arg0, %arg1, %c0_i32, %c0_i32_0 : i32, i32, i32, i32
  }
  func.func @transform_3(%arg0: i32, %arg1: i32) -> (i32, i32) {
    %c0_i32 = arith.constant 0 : i32
    %c0_i32_0 = arith.constant 0 : i32
    %c0_i32_1 = arith.constant 0 : i32
    return %c0_i32, %c0_i32_0 : i32, i32
  }
  func.func @transform_4(%arg0: i32, %arg1: i32) -> (i32, i32) {
    %c0_i32 = arith.constant 0 : i32
    %c0_i32_0 = arith.constant 0 : i32
    %c0_i32_1 = arith.constant 0 : i32
    return %c0_i32, %c0_i32_0 : i32, i32
  }
  func.func @transform_5(%arg0: i32, %arg1: i32) -> (i32, i32) {
    %c0_i32 = arith.constant 0 : i32
    %c0_i32_0 = arith.constant 0 : i32
    %c0_i32_1 = arith.constant 0 : i32
    return %c0_i32, %c0_i32_0 : i32, i32
  }
  func.func @transform_6(%arg0: i32, %arg1: i32) -> (i32, i32) {
    %c0_i32 = arith.constant 0 : i32
    %c0_i32_0 = arith.constant 0 : i32
    %c0_i32_1 = arith.constant 0 : i32
    return %c0_i32, %c0_i32_0 : i32, i32
  }
  func.func @transform_7(%arg0: i32, %arg1: i32) -> (i32, i32) {
    %c0_i32 = arith.constant 0 : i32
    %c0_i32_0 = arith.constant 0 : i32
    %c0_i32_1 = arith.constant 0 : i32
    return %c0_i32, %c0_i32_0 : i32, i32
  }
  func.func @transform_8(%arg0: i32, %arg1: i32) -> (i32, i32, i32, i32) {
    %c0_i32 = arith.constant 0 : i32
    %c0_i32_0 = arith.constant 0 : i32
    %c0_i32_1 = arith.constant 0 : i32
    return %arg0, %arg1, %c0_i32, %c0_i32_0 : i32, i32, i32, i32
  }
}

</mosaic_0001>

<llo_original>
// kernel: c3_forward.2
$region0: #{c3_forward.2}
  #allocation0 [shape = 'u32[]', space=smem, size = 0x4, offset = 0x4, fixed_abs, tag = 'smem constant byte address 0x4 - core index']
  #allocation1 [shape = 'u32[72,128]{1,0:T(1,128)}', space=vmem, size = 0x9000, scoped, tag = 'internal scratch']
  %s0 = inlined_call_operand.vmem [shape: bf16[512,8], index: 0, kind: input, shape index: {}]
  %s1 = inlined_call_operand.vmem [shape: bf16[8,4], index: 1, kind: input, shape index: {}]
  %s2 = inlined_call_operand.vmem [shape: f32[1,4], index: 2, kind: input, shape index: {}]
  %s3 = inlined_call_operand.vmem [shape: bf16[4,4], index: 3, kind: input, shape index: {}]
  %s4 = inlined_call_operand.vmem [shape: f32[1,4], index: 4, kind: input, shape index: {}]
  %s5 = inlined_call_operand.vmem [shape: bf16[8,4], index: 5, kind: input, shape index: {}]
  %s6 = inlined_call_operand.vmem [shape: f32[1,4], index: 6, kind: input, shape index: {}]
  %s7 = inlined_call_operand.vmem [shape: bf16[512,4], index: 7, kind: output, shape index: {0}]
  %s8 = inlined_call_operand.vmem [shape: bf16[512,4], index: 8, kind: output, shape index: {1}]
  %s9 = inlined_call_operand.vmem [shape: bf16[512,4], index: 9, kind: output, shape index: {2}]
  %10 = xla_tuple %s7, %s8, %s9
  %s11 = sld [smem:[#allocation0]]
  $region77: #{c3_forward.2} parent=0
    _
  %s13 = ssub.s32 1, %s11
  %s14 = scalar_select 0, %s13, %s11
  loop: start=0, step=1, limit=4
  $region2: #{c3_forward.2} parent=0 // loop_pre_header
    _
  $region3: #{c3_forward.2} parent=0 // loop_header
    %s16 = sphi 0, %s20
    %p17 = scmp.ge.s32.totalorder %s16, 4
    %s26 = sphi 0, %s28
    %s29 = sphi 0, %s26
    %s30 = sphi 0, %s29
    %s46 = sphi 0, %s30
    %s50 = sphi 0, %s50
    %s52 = sphi 0, %s50
    %s53 = sphi 0, %s52
    %s67 = sphi 0, %s53
    %s71 = sphi 0, %s71
    %s73 = sphi 0, %s71
    %s74 = sphi 0, %s73
    %s88 = sphi 0, %s74
    %s92 = sphi 0, %s92
    %s94 = sphi 0, %s92
    %s95 = sphi 0, %s94
    %s109 = sphi 0, %s95
    %s113 = sphi 0, %s113
    %s115 = sphi 0, %s113
    %s116 = sphi 0, %s115
    %s130 = sphi 0, %s116
    %s134 = sphi 0, %s134
    %s136 = sphi 0, %s134
    %s137 = sphi 0, %s136
    %s151 = sphi 0, %s137
    %s155 = sphi 0, %s155
    %s157 = sphi 0, %s155
    %s158 = sphi 0, %s157
    %s172 = sphi 0, %s158
    %s178 = sphi 0, %s180
    %s181 = sphi 0, %s178
    %s182 = sphi 0, %s181
    %s198 = sphi 0, %s182
    %s204 = sphi 0, %s206
    %s207 = sphi 0, %s204
    %s208 = sphi 0, %s207
    %s224 = sphi 0, %s208
    %s230 = sphi 0, %s232
    %s233 = sphi 0, %s230
    %s234 = sphi 0, %s233
    %s250 = sphi 0, %s234
  $region4: #{c3_forward.2} parent=0 // loop_header_branch
    %19 = sbr.rel (%p17) target = $region8
  $region5: #{c3_forward.2} parent=0 // loop_body
    %s21 = ssub.s32 %s16, 1
    %s22 = ssub.s32 %s16, 2
    %s23 = sadd.s32 %s16, 1
    %s24 = ssub.s32 %s16, %s23
    %p25 = scmp.eq.s32.totalorder %s24, 0
    %s27 = sadd.s32 %s26, 1
    %s28 = scalar_select %p25, %s26, %s27
    %p31 = pneg %p25
    %p32 = scmp.eq.s32.totalorder %s16, 1
    %p33 = por %p31, %p32
    %p34 = scmp.ne.s32.totalorder %s26, %s29
    %p35 = scmp.eq.s32.totalorder %s16, 0
    %p36 = por %p34, %p35
    %p37 = scmp.ne.s32.totalorder %s26, %s29
    %p38 = scmp.eq.s32.totalorder %s21, 1
    %p39 = por %p37, %p38
    %p40 = scmp.ne.s32.totalorder %s29, %s30
    %p41 = scmp.eq.s32.totalorder %s21, 0
    %p42 = por %p40, %p41
    %p43 = scmp.ne.s32.totalorder %s29, %s30
    %p44 = scmp.eq.s32.totalorder %s22, 1
    %p45 = por %p43, %p44
    %p47 = scmp.ne.s32.totalorder %s30, %s46
    %p48 = scmp.eq.s32.totalorder %s22, 0
    %p49 = por %p47, %p48
    %s51 = sadd.s32 %s50, 1
    %p54 = scmp.eq.s32.totalorder %s16, 1
    %p55 = scmp.ne.s32.totalorder %s50, %s52
    %p56 = scmp.eq.s32.totalorder %s16, 0
    %p57 = por %p55, %p56
    %p58 = scmp.ne.s32.totalorder %s50, %s52
    %p59 = scmp.eq.s32.totalorder %s21, 1
    %p60 = por %p58, %p59
    %p61 = scmp.ne.s32.totalorder %s52, %s53
    %p62 = scmp.eq.s32.totalorder %s21, 0
    %p63 = por %p61, %p62
    %p64 = scmp.ne.s32.totalorder %s52, %s53
    %p65 = scmp.eq.s32.totalorder %s22, 1
    %p66 = por %p64, %p65
    %p68 = scmp.ne.s32.totalorder %s53, %s67
    %p69 = scmp.eq.s32.totalorder %s22, 0
    %p70 = por %p68, %p69
    %s72 = sadd.s32 %s71, 1
    %p75 = scmp.eq.s32.totalorder %s16, 1
    %p76 = scmp.ne.s32.totalorder %s71, %s73
    %p77 = scmp.eq.s32.totalorder %s16, 0
    %p78 = por %p76, %p77
    %p79 = scmp.ne.s32.totalorder %s71, %s73
    %p80 = scmp.eq.s32.totalorder %s21, 1
    %p81 = por %p79, %p80
    %p82 = scmp.ne.s32.totalorder %s73, %s74
    %p83 = scmp.eq.s32.totalorder %s21, 0
    %p84 = por %p82, %p83
    %p85 = scmp.ne.s32.totalorder %s73, %s74
    %p86 = scmp.eq.s32.totalorder %s22, 1
    %p87 = por %p85, %p86
    %p89 = scmp.ne.s32.totalorder %s74, %s88
    %p90 = scmp.eq.s32.totalorder %s22, 0
    %p91 = por %p89, %p90
    %s93 = sadd.s32 %s92, 1
    %p96 = scmp.eq.s32.totalorder %s16, 1
    %p97 = scmp.ne.s32.totalorder %s92, %s94
    %p98 = scmp.eq.s32.totalorder %s16, 0
    %p99 = por %p97, %p98
    %p100 = scmp.ne.s32.totalorder %s92, %s94
    %p101 = scmp.eq.s32.totalorder %s21, 1
    %p102 = por %p100, %p101
    %p103 = scmp.ne.s32.totalorder %s94, %s95
    %p104 = scmp.eq.s32.totalorder %s21, 0
    %p105 = por %p103, %p104
    %p106 = scmp.ne.s32.totalorder %s94, %s95
    %p107 = scmp.eq.s32.totalorder %s22, 1
    %p108 = por %p106, %p107
    %p110 = scmp.ne.s32.totalorder %s95, %s109
    %p111 = scmp.eq.s32.totalorder %s22, 0
    %p112 = por %p110, %p111
    %s114 = sadd.s32 %s113, 1
    %p117 = scmp.eq.s32.totalorder %s16, 1
    %p118 = scmp.ne.s32.totalorder %s113, %s115
    %p119 = scmp.eq.s32.totalorder %s16, 0
    %p120 = por %p118, %p119
    %p121 = scmp.ne.s32.totalorder %s113, %s115
    %p122 = scmp.eq.s32.totalorder %s21, 1
    %p123 = por %p121, %p122
    %p124 = scmp.ne.s32.totalorder %s115, %s116
    %p125 = scmp.eq.s32.totalorder %s21, 0
    %p126 = por %p124, %p125
    %p127 = scmp.ne.s32.totalorder %s115, %s116
    %p128 = scmp.eq.s32.totalorder %s22, 1
    %p129 = por %p127, %p128
    %p131 = scmp.ne.s32.totalorder %s116, %s130
    %p132 = scmp.eq.s32.totalorder %s22, 0
    %p133 = por %p131, %p132
    %s135 = sadd.s32 %s134, 1
    %p138 = scmp.eq.s32.totalorder %s16, 1
    %p139 = scmp.ne.s32.totalorder %s134, %s136
    %p140 = scmp.eq.s32.totalorder %s16, 0
    %p141 = por %p139, %p140
    %p142 = scmp.ne.s32.totalorder %s134, %s136
    %p143 = scmp.eq.s32.totalorder %s21, 1
    %p144 = por %p142, %p143
    %p145 = scmp.ne.s32.totalorder %s136, %s137
    %p146 = scmp.eq.s32.totalorder %s21, 0
    %p147 = por %p145, %p146
    %p148 = scmp.ne.s32.totalorder %s136, %s137
    %p149 = scmp.eq.s32.totalorder %s22, 1
    %p150 = por %p148, %p149
    %p152 = scmp.ne.s32.totalorder %s137, %s151
    %p153 = scmp.eq.s32.totalorder %s22, 0
    %p154 = por %p152, %p153
    %s156 = sadd.s32 %s155, 1
    %p159 = scmp.eq.s32.totalorder %s16, 1
    %p160 = scmp.ne.s32.totalorder %s155, %s157
    %p161 = scmp.eq.s32.totalorder %s16, 0
    %p162 = por %p160, %p161
    %p163 = scmp.ne.s32.totalorder %s155, %s157
    %p164 = scmp.eq.s32.totalorder %s21, 1
    %p165 = por %p163, %p164
    %p166 = scmp.ne.s32.totalorder %s157, %s158
    %p167 = scmp.eq.s32.totalorder %s21, 0
    %p168 = por %p166, %p167
    %p169 = scmp.ne.s32.totalorder %s157, %s158
    %p170 = scmp.eq.s32.totalorder %s22, 1
    %p171 = por %p169, %p170
    %p173 = scmp.ne.s32.totalorder %s158, %s172
    %p174 = scmp.eq.s32.totalorder %s22, 0
    %p175 = por %p173, %p174
    %s176 = ssub.s32 %s16, %s23
    %p177 = scmp.eq.s32.totalorder %s176, 0
    %s179 = sadd.s32 %s178, 1
    %s180 = scalar_select %p177, %s178, %s179
    %p183 = pneg %p177
    %p184 = scmp.eq.s32.totalorder %s16, 1
    %p185 = por %p183, %p184
    %p186 = scmp.ne.s32.totalorder %s178, %s181
    %p187 = scmp.eq.s32.totalorder %s16, 0
    %p188 = por %p186, %p187
    %p189 = scmp.ne.s32.totalorder %s178, %s181
    %p190 = scmp.eq.s32.totalorder %s21, 1
    %p191 = por %p189, %p190
    %p192 = scmp.ne.s32.totalorder %s181, %s182
    %p193 = scmp.eq.s32.totalorder %s21, 0
    %p194 = por %p192, %p193
    %p195 = scmp.ne.s32.totalorder %s181, %s182
    %p196 = scmp.eq.s32.totalorder %s22, 1
    %p197 = por %p195, %p196
    %p199 = scmp.ne.s32.totalorder %s182, %s198
    %p200 = scmp.eq.s32.totalorder %s22, 0
    %p201 = por %p199, %p200
    %s202 = ssub.s32 %s16, %s23
    %p203 = scmp.eq.s32.totalorder %s202, 0
    %s205 = sadd.s32 %s204, 1
    %s206 = scalar_select %p203, %s204, %s205
    %p209 = pneg %p203
    %p210 = scmp.eq.s32.totalorder %s16, 1
    %p211 = por %p209, %p210
    %p212 = scmp.ne.s32.totalorder %s204, %s207
    %p213 = scmp.eq.s32.totalorder %s16, 0
    %p214 = por %p212, %p213
    %p215 = scmp.ne.s32.totalorder %s204, %s207
    %p216 = scmp.eq.s32.totalorder %s21, 1
    %p217 = por %p215, %p216
    %p218 = scmp.ne.s32.totalorder %s207, %s208
    %p219 = scmp.eq.s32.totalorder %s21, 0
    %p220 = por %p218, %p219
    %p221 = scmp.ne.s32.totalorder %s207, %s208
    %p222 = scmp.eq.s32.totalorder %s22, 1
    %p223 = por %p221, %p222
    %p225 = scmp.ne.s32.totalorder %s208, %s224
    %p226 = scmp.eq.s32.totalorder %s22, 0
    %p227 = por %p225, %p226
    %s228 = ssub.s32 %s16, %s23
    %p229 = scmp.eq.s32.totalorder %s228, 0
    %s231 = sadd.s32 %s230, 1
    %s232 = scalar_select %p229, %s230, %s231
    %p235 = pneg %p229
    %p236 = scmp.eq.s32.totalorder %s16, 1
    %p237 = por %p235, %p236
    %p238 = scmp.ne.s32.totalorder %s230, %s233
    %p239 = scmp.eq.s32.totalorder %s16, 0
    %p240 = por %p238, %p239
    %p241 = scmp.ne.s32.totalorder %s230, %s233
    %p242 = scmp.eq.s32.totalorder %s21, 1
    %p243 = por %p241, %p242
    %p244 = scmp.ne.s32.totalorder %s233, %s234
    %p245 = scmp.eq.s32.totalorder %s21, 0
    %p246 = por %p244, %p245
    %p247 = scmp.ne.s32.totalorder %s233, %s234
    %p248 = scmp.eq.s32.totalorder %s22, 1
    %p249 = por %p247, %p248
    %p251 = scmp.ne.s32.totalorder %s234, %s250
    %p252 = scmp.eq.s32.totalorder %s22, 0
    %p253 = por %p251, %p252
    %p254 = scmp.le.s32.totalorder 1, %s16
    %p255 = scmp.lt.s32.totalorder %s16, 3
    %p256 = pnand %p254, %p255
    %p257 = pneg %p256
    // Predicated region
    $region9: #{c3_forward.2} parent=5 // pred_check
      _
    $region10: #{c3_forward.2} parent=5 // pred_check_branch
      %259 = sbr.rel (%p256) target = $region12
    $region11: #{c3_forward.2} parent=5 // pred_region
      %s260 = ssub.s32 %s16, 1
      // Predicated region
      $region13: #{c3_forward.2} parent=11 // pred_check
        %p261 = pneg %p63
      $region14: #{c3_forward.2} parent=11 // pred_check_branch
        %263 = sbr.rel (%p261) target = $region16
      $region15: #{c3_forward.2} parent=11 // pred_region
        _
      $region16: #{c3_forward.2} parent=11 // pred_fallthru
        _
      // Predicated region
      $region17: #{c3_forward.2} parent=11 // pred_check
        %p264 = pneg %p84
      $region18: #{c3_forward.2} parent=11 // pred_check_branch
        %266 = sbr.rel (%p264) target = $region20
      $region19: #{c3_forward.2} parent=11 // pred_region
        _
      $region20: #{c3_forward.2} parent=11 // pred_fallthru
        _
      // Predicated region
      $region21: #{c3_forward.2} parent=11 // pred_check
        %p267 = pneg %p105
      $region22: #{c3_forward.2} parent=11 // pred_check_branch
        %269 = sbr.rel (%p267) target = $region24
      $region23: #{c3_forward.2} parent=11 // pred_region
        _
      $region24: #{c3_forward.2} parent=11 // pred_fallthru
        _
      // Predicated region
      $region25: #{c3_forward.2} parent=11 // pred_check
        %p270 = pneg %p126
      $region26: #{c3_forward.2} parent=11 // pred_check_branch
        %272 = sbr.rel (%p270) target = $region28
      $region27: #{c3_forward.2} parent=11 // pred_region
        _
      $region28: #{c3_forward.2} parent=11 // pred_fallthru
        _
      // Predicated region
      $region29: #{c3_forward.2} parent=11 // pred_check
        %p273 = pneg %p147
      $region30: #{c3_forward.2} parent=11 // pred_check_branch
        %275 = sbr.rel (%p273) target = $region32
      $region31: #{c3_forward.2} parent=11 // pred_region
        _
      $region32: #{c3_forward.2} parent=11 // pred_fallthru
        _
      // Predicated region
      $region33: #{c3_forward.2} parent=11 // pred_check
        %p276 = pneg %p168
      $region34: #{c3_forward.2} parent=11 // pred_check_branch
        %278 = sbr.rel (%p276) target = $region36
      $region35: #{c3_forward.2} parent=11 // pred_region
        _
      $region36: #{c3_forward.2} parent=11 // pred_fallthru
        _
    $region12: #{c3_forward.2} parent=5 // pred_fallthru
      _
    %p279 = scmp.lt.s32.totalorder %s16, 2
    // Predicated region
    $region37: #{c3_forward.2} parent=5 // pred_check
      %p280 = pneg %p279
    $region38: #{c3_forward.2} parent=5 // pred_check_branch
      %282 = sbr.rel (%p280) target = $region40
    $region39: #{c3_forward.2} parent=5 // pred_region
      // Predicated region
      $region41: #{c3_forward.2} parent=39 // pred_check
        %p283 = pneg %p36
      $region42: #{c3_forward.2} parent=39 // pred_check_branch
        %285 = sbr.rel (%p283) target = $region44
      $region43: #{c3_forward.2} parent=39 // pred_region
        %s286 = smul.u32 32, %s16
        %p287 = scmp.lt.s32.totalorder %s286, 63
        %s288 = scalar_select %p287, %s286, 63
        %s289 = smul.addr %s288, 4
        %s290 = scalar_lea.vmem %s0, %s289
        %s291 = smul.u32 32, %s16
      $region44: #{c3_forward.2} parent=39 // pred_fallthru
        _
    $region40: #{c3_forward.2} parent=5 // pred_fallthru
      _
    %p292 = scmp.le.s32.totalorder 1, %s16
    %p293 = scmp.lt.s32.totalorder %s16, 3
    %p294 = pnand %p292, %p293
    %p295 = pneg %p294
    // Predicated region
    $region45: #{c3_forward.2} parent=5 // pred_check
      _
    $region46: #{c3_forward.2} parent=5 // pred_check_branch
      %297 = sbr.rel (%p294) target = $region48
    $region47: #{c3_forward.2} parent=5 // pred_region
      %s298 = ssub.s32 %s16, 1
      %s299 = smul.u32 32, %s21
      %p300 = scmp.lt.s32.totalorder %s299, 63
      %s301 = scalar_select %p300, %s299, 63
      %s302 = smul.addr %s301, 4
      %s303 = scalar_lea.vmem %s0, %s302
      %p304 = pneg %p42
      %p305 = pneg %p39
      %p306 = pneg %p63
      %p307 = pneg %p60
      %p308 = pneg %p84
      %p309 = pneg %p81
      %p310 = pneg %p105
      %p311 = pneg %p102
      %p312 = pneg %p126
      %p313 = pneg %p123
      %p314 = pneg %p147
      %p315 = pneg %p144
      %p316 = pneg %p168
      %p317 = pneg %p165
      %p318 = pneg %p194
      %p319 = pneg %p191
      %s320 = smul.u32 32, %s21
      %p321 = scmp.lt.s32.totalorder %s320, 63
      %s322 = scalar_select %p321, %s320, 63
      %s323 = smul.addr %s322, 4
      %s324 = scalar_lea.vmem %s7, %s323
      %p325 = pneg %p220
      %p326 = pneg %p217
      %s327 = smul.u32 32, %s21
      %p328 = scmp.lt.s32.totalorder %s327, 63
      %s329 = scalar_select %p328, %s327, 63
      %s330 = smul.addr %s329, 4
      %s331 = scalar_lea.vmem %s8, %s330
      %p332 = pneg %p246
      %p333 = pneg %p243
      %s334 = smul.u32 32, %s21
      %p335 = scmp.lt.s32.totalorder %s334, 63
      %s336 = scalar_select %p335, %s334, 63
      %s337 = smul.addr %s336, 4
      %s338 = scalar_lea.vmem %s9, %s337
      %s339 = smul.u32 32, %s21
      %p340 = scmp.lt.s32.totalorder %s339, 63
      %s341 = scalar_select %p340, %s339, 63
      %s342 = smul.addr %s341, 4
      %s343 = scalar_lea.vmem %s0, %s342
      %s344 = smul.u32 32, %s21
      %s345 = smul.u32 32, %s21
      %p346 = scmp.lt.s32.totalorder %s345, 63
      %s347 = scalar_select %p346, %s345, 63
      %s348 = smul.addr %s347, 4
      %s349 = scalar_lea.vmem %s7, %s348
      %s350 = smul.u32 32, %s21
      %s351 = smul.u32 32, %s21
      %p352 = scmp.lt.s32.totalorder %s351, 63
      %s353 = scalar_select %p352, %s351, 63
      %s354 = smul.addr %s353, 4
      %s355 = scalar_lea.vmem %s8, %s354
      %s356 = smul.u32 32, %s21
      %s357 = smul.u32 32, %s21
      %p358 = scmp.lt.s32.totalorder %s357, 63
      %s359 = scalar_select %p358, %s357, 63
      %s360 = smul.addr %s359, 4
      %s361 = scalar_lea.vmem %s9, %s360
      %s362 = smul.u32 32, %s21
      %v364 = vld [vmem:[%s343] sm:$0xf]
      %v365 = vld [vmem:[%s343 + $0x4] sm:$0xf]
      %v366 = vld [vmem:[%s343 + $0x8] sm:$0xf]
      %v367 = vld [vmem:[%s343 + $0xc] sm:$0xf]
      %v368 = vld [vmem:[%s343 + $0x10] sm:$0xf]
      %v369 = vld [vmem:[%s343 + $0x14] sm:$0xf]
      %v370 = vld [vmem:[%s343 + $0x18] sm:$0xf]
      %v371 = vld [vmem:[%s343 + $0x1c] sm:$0xf]
      %v372 = vld [vmem:[%s343 + $0x20] sm:$0xf]
      %v373 = vld [vmem:[%s343 + $0x24] sm:$0xf]
      %v374 = vld [vmem:[%s343 + $0x28] sm:$0xf]
      %v375 = vld [vmem:[%s343 + $0x2c] sm:$0xf]
      %v376 = vld [vmem:[%s343 + $0x30] sm:$0xf]
      %v377 = vld [vmem:[%s343 + $0x34] sm:$0xf]
      %v378 = vld [vmem:[%s343 + $0x38] sm:$0xf]
      %v379 = vld [vmem:[%s343 + $0x3c] sm:$0xf]
      %v380 = vld [vmem:[%s343 + $0x40] sm:$0xf]
      %v381 = vld [vmem:[%s343 + $0x44] sm:$0xf]
      %v382 = vld [vmem:[%s343 + $0x48] sm:$0xf]
      %v383 = vld [vmem:[%s343 + $0x4c] sm:$0xf]
      %v384 = vld [vmem:[%s343 + $0x50] sm:$0xf]
      %v385 = vld [vmem:[%s343 + $0x54] sm:$0xf]
      %v386 = vld [vmem:[%s343 + $0x58] sm:$0xf]
      %v387 = vld [vmem:[%s343 + $0x5c] sm:$0xf]
      %v388 = vld [vmem:[%s343 + $0x60] sm:$0xf]
      %v389 = vld [vmem:[%s343 + $0x64] sm:$0xf]
      %v390 = vld [vmem:[%s343 + $0x68] sm:$0xf]
      %v391 = vld [vmem:[%s343 + $0x6c] sm:$0xf]
      %v392 = vld [vmem:[%s343 + $0x70] sm:$0xf]
      %v393 = vld [vmem:[%s343 + $0x74] sm:$0xf]
      %v394 = vld [vmem:[%s343 + $0x78] sm:$0xf]
      %v395 = vld [vmem:[%s343 + $0x7c] sm:$0xf]
      %v396 = vld [vmem:[%s1] sm:$0xf]
      %v397 = vld [vmem:[%s2] sm:$0x1]
      %v399 = vperm.slane %v397, 0
      %v433 = vunpack.c.l.b16 %v364
      %v434 = vunpack.c.l.b16 %v365
      %v435 = vunpack.c.l.b16 %v366
      %v436 = vunpack.c.l.b16 %v367
      %v437 = vunpack.c.l.b16 %v368
      %v438 = vunpack.c.l.b16 %v369
      %v439 = vunpack.c.l.b16 %v370
      %v440 = vunpack.c.l.b16 %v371
      %v441 = vunpack.c.l.b16 %v372
      %v442 = vunpack.c.l.b16 %v373
      %v443 = vunpack.c.l.b16 %v374
      %v444 = vunpack.c.l.b16 %v375
      %v445 = vunpack.c.l.b16 %v376
      %v446 = vunpack.c.l.b16 %v377
      %v447 = vunpack.c.l.b16 %v378
      %v448 = vunpack.c.l.b16 %v379
      %v449 = vunpack.c.l.b16 %v380
      %v450 = vunpack.c.l.b16 %v381
      %v451 = vunpack.c.l.b16 %v382
      %v452 = vunpack.c.l.b16 %v383
      %v453 = vunpack.c.l.b16 %v384
      %v454 = vunpack.c.l.b16 %v385
      %v455 = vunpack.c.l.b16 %v386
      %v456 = vunpack.c.l.b16 %v387
      %v457 = vunpack.c.l.b16 %v388
      %v458 = vunpack.c.l.b16 %v389
      %v459 = vunpack.c.l.b16 %v390
      %v460 = vunpack.c.l.b16 %v391
      %v461 = vunpack.c.l.b16 %v392
      %v462 = vunpack.c.l.b16 %v393
      %v463 = vunpack.c.l.b16 %v394
      %v464 = vunpack.c.l.b16 %v395
      %v465 = vpack.c.b16 %v434, %v433
      %v466 = vpack.c.b16 %v436, %v435
      %v467 = vpack.c.b16 %v438, %v437
      %v468 = vpack.c.b16 %v440, %v439
      %v469 = vpack.c.b16 %v442, %v441
      %v470 = vpack.c.b16 %v444, %v443
      %v471 = vpack.c.b16 %v446, %v445
      %v472 = vpack.c.b16 %v448, %v447
      %v473 = vpack.c.b16 %v450, %v449
      %v474 = vpack.c.b16 %v452, %v451
      %v475 = vpack.c.b16 %v454, %v453
      %v476 = vpack.c.b16 %v456, %v455
      %v477 = vpack.c.b16 %v458, %v457
      %v478 = vpack.c.b16 %v460, %v459
      %v479 = vpack.c.b16 %v462, %v461
      %v480 = vpack.c.b16 %v464, %v463
      %vm481 = vcmask 64512
      %v483 = vsel %vm481, %v465, 0
      %v486 = vsel %vm481, %v466, 0
      %v489 = vsel %vm481, %v467, 0
      %v492 = vsel %vm481, %v468, 0
      %v495 = vsel %vm481, %v469, 0
      %v498 = vsel %vm481, %v470, 0
      %v501 = vsel %vm481, %v471, 0
      %v504 = vsel %vm481, %v472, 0
      %v507 = vsel %vm481, %v473, 0
      %v510 = vsel %vm481, %v474, 0
      %v513 = vsel %vm481, %v475, 0
      %v516 = vsel %vm481, %v476, 0
      %v519 = vsel %vm481, %v477, 0
      %v522 = vsel %vm481, %v478, 0
      %v525 = vsel %vm481, %v479, 0
      %v528 = vsel %vm481, %v480, 0
      %vm530 = vcmask 1043456
      %v532 = vsel %vm530, %v396, 0
      %534 = vmatpush.bf16.msra.mxu0 0
      %535 = vmatpush.bf16.msra.mxu0 0
      %536 = vmatpush.bf16.msra.mxu0 0
      %537 = vmatpush.bf16.msra.mxu0 0
      %538 = vmatpush.bf16.msra.mxu0 0
      %539 = vmatpush.bf16.msra.mxu0 0
      %540 = vmatpush.bf16.msra.mxu0 0
      %541 = vmatpush.bf16.msra.mxu0 %v532
      %542 = vmatmul.bf16.gmra.mxu0 %v483
      %v543 = vpop.f32.mrf.mxu0
      %v544 = vadd.f32 %v399, %v543
      %v545 = vpop.f32.mrf.mxu0
      %v546 = vadd.f32 %v399, %v545
      %547 = vmatmul.bf16.gmra.mxu0 %v486
      %v548 = vpop.f32.mrf.mxu0
      %v549 = vadd.f32 %v399, %v548
      %v550 = vpop.f32.mrf.mxu0
      %v551 = vadd.f32 %v399, %v550
      %552 = vmatmul.bf16.gmra.mxu0 %v489
      %v553 = vpop.f32.mrf.mxu0
      %v554 = vadd.f32 %v399, %v553
      %v555 = vpop.f32.mrf.mxu0
      %v556 = vadd.f32 %v399, %v555
      %557 = vmatmul.bf16.gmra.mxu0 %v492
      %v558 = vpop.f32.mrf.mxu0
      %v559 = vadd.f32 %v399, %v558
      %v560 = vpop.f32.mrf.mxu0
      %v561 = vadd.f32 %v399, %v560
      %562 = vmatmul.bf16.gmra.mxu0 %v495
      %v563 = vpop.f32.mrf.mxu0
      %v564 = vadd.f32 %v399, %v563
      %v565 = vpop.f32.mrf.mxu0
      %v566 = vadd.f32 %v399, %v565
      %567 = vmatmul.bf16.gmra.mxu0 %v498
      %v568 = vpop.f32.mrf.mxu0
      %v569 = vadd.f32 %v399, %v568
      %v570 = vpop.f32.mrf.mxu0
      %v571 = vadd.f32 %v399, %v570
      %572 = vmatmul.bf16.gmra.mxu0 %v501
      %v573 = vpop.f32.mrf.mxu0
      %v574 = vadd.f32 %v399, %v573
      %v575 = vpop.f32.mrf.mxu0
      %v576 = vadd.f32 %v399, %v575
      %577 = vmatmul.bf16.gmra.mxu0 %v504
      %v578 = vpop.f32.mrf.mxu0
      %v579 = vadd.f32 %v399, %v578
      %v580 = vpop.f32.mrf.mxu0
      %v581 = vadd.f32 %v399, %v580
      %582 = vmatmul.bf16.gmra.mxu0 %v507
      %v583 = vpop.f32.mrf.mxu0
      %v584 = vadd.f32 %v399, %v583
      %v585 = vpop.f32.mrf.mxu0
      %v586 = vadd.f32 %v399, %v585
      %587 = vmatmul.bf16.gmra.mxu0 %v510
      %v588 = vpop.f32.mrf.mxu0
      %v589 = vadd.f32 %v399, %v588
      %v590 = vpop.f32.mrf.mxu0
      %v591 = vadd.f32 %v399, %v590
      %592 = vmatmul.bf16.gmra.mxu0 %v513
      %v593 = vpop.f32.mrf.mxu0
      %v594 = vadd.f32 %v399, %v593
      %v595 = vpop.f32.mrf.mxu0
      %v596 = vadd.f32 %v399, %v595
      %597 = vmatmul.bf16.gmra.mxu0 %v516
      %v598 = vpop.f32.mrf.mxu0
      %v599 = vadd.f32 %v399, %v598
      %v600 = vpop.f32.mrf.mxu0
      %v601 = vadd.f32 %v399, %v600
      %602 = vmatmul.bf16.gmra.mxu0 %v519
      %v603 = vpop.f32.mrf.mxu0
      %v604 = vadd.f32 %v399, %v603
      %v605 = vpop.f32.mrf.mxu0
      %v606 = vadd.f32 %v399, %v605
      %607 = vmatmul.bf16.gmra.mxu0 %v522
      %v608 = vpop.f32.mrf.mxu0
      %v609 = vadd.f32 %v399, %v608
      %v610 = vpop.f32.mrf.mxu0
      %v611 = vadd.f32 %v399, %v610
      %612 = vmatmul.bf16.gmra.mxu0 %v525
      %v613 = vpop.f32.mrf.mxu0
      %v614 = vadd.f32 %v399, %v613
      %v615 = vpop.f32.mrf.mxu0
      %v616 = vadd.f32 %v399, %v615
      %617 = vmatmul.bf16.gmra.mxu0 %v528
      %v618 = vpop.f32.mrf.mxu0
      %v619 = vadd.f32 %v399, %v618
      %v620 = vpop.f32.mrf.mxu0
      %v621 = vadd.f32 %v399, %v620
      %622 = vdwg.mxu0
      %v623 = vxor.u32 %v544, 2147483648
      %v624 = vxor.u32 %v546, 2147483648
      %v625 = vxor.u32 %v549, 2147483648
      %v626 = vxor.u32 %v551, 2147483648
      %v627 = vxor.u32 %v554, 2147483648
      %v628 = vxor.u32 %v556, 2147483648
      %v629 = vxor.u32 %v559, 2147483648
      %v630 = vxor.u32 %v561, 2147483648
      %v631 = vxor.u32 %v564, 2147483648
      %v632 = vxor.u32 %v566, 2147483648
      %v633 = vxor.u32 %v569, 2147483648
      %v634 = vxor.u32 %v571, 2147483648
      %v635 = vxor.u32 %v574, 2147483648
      %v636 = vxor.u32 %v576, 2147483648
      %v637 = vxor.u32 %v579, 2147483648
      %v638 = vxor.u32 %v581, 2147483648
      %v639 = vxor.u32 %v584, 2147483648
      %v640 = vxor.u32 %v586, 2147483648
      %v641 = vxor.u32 %v589, 2147483648
      %v642 = vxor.u32 %v591, 2147483648
      %v643 = vxor.u32 %v594, 2147483648
      %v644 = vxor.u32 %v596, 2147483648
      %v645 = vxor.u32 %v599, 2147483648
      %v646 = vxor.u32 %v601, 2147483648
      %v647 = vxor.u32 %v604, 2147483648
      %v648 = vxor.u32 %v606, 2147483648
      %v649 = vxor.u32 %v609, 2147483648
      %v650 = vxor.u32 %v611, 2147483648
      %v651 = vxor.u32 %v614, 2147483648
      %v652 = vxor.u32 %v616, 2147483648
      %v653 = vxor.u32 %v619, 2147483648
      %v654 = vxor.u32 %v621, 2147483648
      %v655 = vmul.f32 %v623, 1.442695
      %v656 = vpow.pop %v655
      %v657 = vmul.f32 %v624, 1.442695
      %v658 = vpow.pop %v657
      %v659 = vmul.f32 %v625, 1.442695
      %v660 = vpow.pop %v659
      %v661 = vmul.f32 %v626, 1.442695
      %v662 = vpow.pop %v661
      %v663 = vmul.f32 %v627, 1.442695
      %v664 = vpow.pop %v663
      %v665 = vmul.f32 %v628, 1.442695
      %v666 = vpow.pop %v665
      %v667 = vmul.f32 %v629, 1.442695
      %v668 = vpow.pop %v667
      %v669 = vmul.f32 %v630, 1.442695
      %v670 = vpow.pop %v669
      %v671 = vmul.f32 %v631, 1.442695
      %v672 = vpow.pop %v671
      %v673 = vmul.f32 %v632, 1.442695
      %v674 = vpow.pop %v673
      %v675 = vmul.f32 %v633, 1.442695
      %v676 = vpow.pop %v675
      %v677 = vmul.f32 %v634, 1.442695
      %v678 = vpow.pop %v677
      %v679 = vmul.f32 %v635, 1.442695
      %v680 = vpow.pop %v679
      %v681 = vmul.f32 %v636, 1.442695
      %v682 = vpow.pop %v681
      %v683 = vmul.f32 %v637, 1.442695
      %v684 = vpow.pop %v683
      %v685 = vmul.f32 %v638, 1.442695
      %v686 = vpow.pop %v685
      %v687 = vmul.f32 %v639, 1.442695
      %v688 = vpow.pop %v687
      %v689 = vmul.f32 %v640, 1.442695
      %v690 = vpow.pop %v689
      %v691 = vmul.f32 %v641, 1.442695
      %v692 = vpow.pop %v691
      %v693 = vmul.f32 %v642, 1.442695
      %v694 = vpow.pop %v693
      %v695 = vmul.f32 %v643, 1.442695
      %v696 = vpow.pop %v695
      %v697 = vmul.f32 %v644, 1.442695
      %v698 = vpow.pop %v697
      %v699 = vmul.f32 %v645, 1.442695
      %v700 = vpow.pop %v699
      %v701 = vmul.f32 %v646, 1.442695
      %v702 = vpow.pop %v701
      %v703 = vmul.f32 %v647, 1.442695
      %v704 = vpow.pop %v703
      %v705 = vmul.f32 %v648, 1.442695
      %v706 = vpow.pop %v705
      %v707 = vmul.f32 %v649, 1.442695
      %v708 = vpow.pop %v707
      %v709 = vmul.f32 %v650, 1.442695
      %v710 = vpow.pop %v709
      %v711 = vmul.f32 %v651, 1.442695
      %v712 = vpow.pop %v711
      %v713 = vmul.f32 %v652, 1.442695
      %v714 = vpow.pop %v713
      %v715 = vmul.f32 %v653, 1.442695
      %v716 = vpow.pop %v715
      %v717 = vmul.f32 %v654, 1.442695
      %v718 = vpow.pop %v717
      %v719 = vadd.f32 %v656, 1.0
      %v720 = vadd.f32 %v658, 1.0
      %v721 = vadd.f32 %v660, 1.0
      %v722 = vadd.f32 %v662, 1.0
      %v723 = vadd.f32 %v664, 1.0
      %v724 = vadd.f32 %v666, 1.0
      %v725 = vadd.f32 %v668, 1.0
      %v726 = vadd.f32 %v670, 1.0
      %v727 = vadd.f32 %v672, 1.0
      %v728 = vadd.f32 %v674, 1.0
      %v729 = vadd.f32 %v676, 1.0
      %v730 = vadd.f32 %v678, 1.0
      %v731 = vadd.f32 %v680, 1.0
      %v732 = vadd.f32 %v682, 1.0
      %v733 = vadd.f32 %v684, 1.0
      %v734 = vadd.f32 %v686, 1.0
      %v735 = vadd.f32 %v688, 1.0
      %v736 = vadd.f32 %v690, 1.0
      %v737 = vadd.f32 %v692, 1.0
      %v738 = vadd.f32 %v694, 1.0
      %v739 = vadd.f32 %v696, 1.0
      %v740 = vadd.f32 %v698, 1.0
      %v741 = vadd.f32 %v700, 1.0
      %v742 = vadd.f32 %v702, 1.0
      %v743 = vadd.f32 %v704, 1.0
      %v744 = vadd.f32 %v706, 1.0
      %v745 = vadd.f32 %v708, 1.0
      %v746 = vadd.f32 %v710, 1.0
      %v747 = vadd.f32 %v712, 1.0
      %v748 = vadd.f32 %v714, 1.0
      %v749 = vadd.f32 %v716, 1.0
      %v750 = vadd.f32 %v718, 1.0
      %v751 = vrcp.pop %v719
      %v752 = vmul.f32 %v719, %v751
      %v753 = vsub.f32 1.0, %v752
      %v754 = vmul.f32 %v751, %v753
      %v755 = vadd.f32 %v751, %v754
      %vm756 = vweird.f32 %v719
      %vm757 = vweird.f32 %v751
      %vm758 = vmor %vm756, %vm757
      %v759 = vsel %vm758, %v751, %v755
      %v760 = vand.u32 2147483647, %v719
      %vm761 = vcmp.eq.f32.partialorder %v760, 8.507059e+37
      %v762 = vand.u32 %v719, 2147483648
      %v763 = vor.u32 1.1754944e-38, %v762
      %v764 = vsel %vm761, %v763, %v759
      %v765 = vmul.f32 1.0, %v764
      %v766 = vrcp.pop %v720
      %v767 = vmul.f32 %v720, %v766
      %v768 = vsub.f32 1.0, %v767
      %v769 = vmul.f32 %v766, %v768
      %v770 = vadd.f32 %v766, %v769
      %vm771 = vweird.f32 %v720
      %vm772 = vweird.f32 %v766
      %vm773 = vmor %vm771, %vm772
      %v774 = vsel %vm773, %v766, %v770
      %v775 = vand.u32 2147483647, %v720
      %vm776 = vcmp.eq.f32.partialorder %v775, 8.507059e+37
      %v777 = vand.u32 %v720, 2147483648
      %v778 = vor.u32 1.1754944e-38, %v777
      %v779 = vsel %vm776, %v778, %v774
      %v780 = vmul.f32 1.0, %v779
      %v781 = vrcp.pop %v721
      %v782 = vmul.f32 %v721, %v781
      %v783 = vsub.f32 1.0, %v782
      %v784 = vmul.f32 %v781, %v783
      %v785 = vadd.f32 %v781, %v784
      %vm786 = vweird.f32 %v721
      %vm787 = vweird.f32 %v781
      %vm788 = vmor %vm786, %vm787
      %v789 = vsel %vm788, %v781, %v785
      %v790 = vand.u32 2147483647, %v721
      %vm791 = vcmp.eq.f32.partialorder %v790, 8.507059e+37
      %v792 = vand.u32 %v721, 2147483648
      %v793 = vor.u32 1.1754944e-38, %v792
      %v794 = vsel %vm791, %v793, %v789
      %v795 = vmul.f32 1.0, %v794
      %v796 = vrcp.pop %v722
      %v797 = vmul.f32 %v722, %v796
      %v798 = vsub.f32 1.0, %v797
      %v799 = vmul.f32 %v796, %v798
      %v800 = vadd.f32 %v796, %v799
      %vm801 = vweird.f32 %v722
      %vm802 = vweird.f32 %v796
      %vm803 = vmor %vm801, %vm802
      %v804 = vsel %vm803, %v796, %v800
      %v805 = vand.u32 2147483647, %v722
      %vm806 = vcmp.eq.f32.partialorder %v805, 8.507059e+37
      %v807 = vand.u32 %v722, 2147483648
      %v808 = vor.u32 1.1754944e-38, %v807
      %v809 = vsel %vm806, %v808, %v804
      %v810 = vmul.f32 1.0, %v809
      %v811 = vrcp.pop %v723
      %v812 = vmul.f32 %v723, %v811
      %v813 = vsub.f32 1.0, %v812
      %v814 = vmul.f32 %v811, %v813
      %v815 = vadd.f32 %v811, %v814
      %vm816 = vweird.f32 %v723
      %vm817 = vweird.f32 %v811
      %vm818 = vmor %vm816, %vm817
      %v819 = vsel %vm818, %v811, %v815
      %v820 = vand.u32 2147483647, %v723
      %vm821 = vcmp.eq.f32.partialorder %v820, 8.507059e+37
      %v822 = vand.u32 %v723, 2147483648
      %v823 = vor.u32 1.1754944e-38, %v822
      %v824 = vsel %vm821, %v823, %v819
      %v825 = vmul.f32 1.0, %v824
      %v826 = vrcp.pop %v724
      %v827 = vmul.f32 %v724, %v826
      %v828 = vsub.f32 1.0, %v827
      %v829 = vmul.f32 %v826, %v828
      %v830 = vadd.f32 %v826, %v829
      %vm831 = vweird.f32 %v724
      %vm832 = vweird.f32 %v826
      %vm833 = vmor %vm831, %vm832
      %v834 = vsel %vm833, %v826, %v830
      %v835 = vand.u32 2147483647, %v724
      %vm836 = vcmp.eq.f32.partialorder %v835, 8.507059e+37
      %v837 = vand.u32 %v724, 2147483648
      %v838 = vor.u32 1.1754944e-38, %v837
      %v839 = vsel %vm836, %v838, %v834
      %v840 = vmul.f32 1.0, %v839
      %v841 = vrcp.pop %v725
      %v842 = vmul.f32 %v725, %v841
      %v843 = vsub.f32 1.0, %v842
      %v844 = vmul.f32 %v841, %v843
      %v845 = vadd.f32 %v841, %v844
      %vm846 = vweird.f32 %v725
      %vm847 = vweird.f32 %v841
      %vm848 = vmor %vm846, %vm847
      %v849 = vsel %vm848, %v841, %v845
      %v850 = vand.u32 2147483647, %v725
      %vm851 = vcmp.eq.f32.partialorder %v850, 8.507059e+37
      %v852 = vand.u32 %v725, 2147483648
      %v853 = vor.u32 1.1754944e-38, %v852
      %v854 = vsel %vm851, %v853, %v849
      %v855 = vmul.f32 1.0, %v854
      %v856 = vrcp.pop %v726
      %v857 = vmul.f32 %v726, %v856
      %v858 = vsub.f32 1.0, %v857
      %v859 = vmul.f32 %v856, %v858
      %v860 = vadd.f32 %v856, %v859
      %vm861 = vweird.f32 %v726
      %vm862 = vweird.f32 %v856
      %vm863 = vmor %vm861, %vm862
      %v864 = vsel %vm863, %v856, %v860
      %v865 = vand.u32 2147483647, %v726
      %vm866 = vcmp.eq.f32.partialorder %v865, 8.507059e+37
      %v867 = vand.u32 %v726, 2147483648
      %v868 = vor.u32 1.1754944e-38, %v867
      %v869 = vsel %vm866, %v868, %v864
      %v870 = vmul.f32 1.0, %v869
      %v871 = vrcp.pop %v727
      %v872 = vmul.f32 %v727, %v871
      %v873 = vsub.f32 1.0, %v872
      %v874 = vmul.f32 %v871, %v873
      %v875 = vadd.f32 %v871, %v874
      %vm876 = vweird.f32 %v727
      %vm877 = vweird.f32 %v871
      %vm878 = vmor %vm876, %vm877
      %v879 = vsel %vm878, %v871, %v875
      %v880 = vand.u32 2147483647, %v727
      %vm881 = vcmp.eq.f32.partialorder %v880, 8.507059e+37
      %v882 = vand.u32 %v727, 2147483648
      %v883 = vor.u32 1.1754944e-38, %v882
      %v884 = vsel %vm881, %v883, %v879
      %v885 = vmul.f32 1.0, %v884
      %v886 = vrcp.pop %v728
      %v887 = vmul.f32 %v728, %v886
      %v888 = vsub.f32 1.0, %v887
      %v889 = vmul.f32 %v886, %v888
      %v890 = vadd.f32 %v886, %v889
      %vm891 = vweird.f32 %v728
      %vm892 = vweird.f32 %v886
      %vm893 = vmor %vm891, %vm892
      %v894 = vsel %vm893, %v886, %v890
      %v895 = vand.u32 2147483647, %v728
      %vm896 = vcmp.eq.f32.partialorder %v895, 8.507059e+37
      %v897 = vand.u32 %v728, 2147483648
      %v898 = vor.u32 1.1754944e-38, %v897
      %v899 = vsel %vm896, %v898, %v894
      %v900 = vmul.f32 1.0, %v899
      %v901 = vrcp.pop %v729
      %v902 = vmul.f32 %v729, %v901
      %v903 = vsub.f32 1.0, %v902
      %v904 = vmul.f32 %v901, %v903
      %v905 = vadd.f32 %v901, %v904
      %vm906 = vweird.f32 %v729
      %vm907 = vweird.f32 %v901
      %vm908 = vmor %vm906, %vm907
      %v909 = vsel %vm908, %v901, %v905
      %v910 = vand.u32 2147483647, %v729
      %vm911 = vcmp.eq.f32.partialorder %v910, 8.507059e+37
      %v912 = vand.u32 %v729, 2147483648
      %v913 = vor.u32 1.1754944e-38, %v912
      %v914 = vsel %vm911, %v913, %v909
      %v915 = vmul.f32 1.0, %v914
      %v916 = vrcp.pop %v730
      %v917 = vmul.f32 %v730, %v916
      %v918 = vsub.f32 1.0, %v917
      %v919 = vmul.f32 %v916, %v918
      %v920 = vadd.f32 %v916, %v919
      %vm921 = vweird.f32 %v730
      %vm922 = vweird.f32 %v916
      %vm923 = vmor %vm921, %vm922
      %v924 = vsel %vm923, %v916, %v920
      %v925 = vand.u32 2147483647, %v730
      %vm926 = vcmp.eq.f32.partialorder %v925, 8.507059e+37
      %v927 = vand.u32 %v730, 2147483648
      %v928 = vor.u32 1.1754944e-38, %v927
      %v929 = vsel %vm926, %v928, %v924
      %v930 = vmul.f32 1.0, %v929
      %v931 = vrcp.pop %v731
      %v932 = vmul.f32 %v731, %v931
      %v933 = vsub.f32 1.0, %v932
      %v934 = vmul.f32 %v931, %v933
      %v935 = vadd.f32 %v931, %v934
      %vm936 = vweird.f32 %v731
      %vm937 = vweird.f32 %v931
      %vm938 = vmor %vm936, %vm937
      %v939 = vsel %vm938, %v931, %v935
      %v940 = vand.u32 2147483647, %v731
      %vm941 = vcmp.eq.f32.partialorder %v940, 8.507059e+37
      %v942 = vand.u32 %v731, 2147483648
      %v943 = vor.u32 1.1754944e-38, %v942
      %v944 = vsel %vm941, %v943, %v939
      %v945 = vmul.f32 1.0, %v944
      %v946 = vrcp.pop %v732
      %v947 = vmul.f32 %v732, %v946
      %v948 = vsub.f32 1.0, %v947
      %v949 = vmul.f32 %v946, %v948
      %v950 = vadd.f32 %v946, %v949
      %vm951 = vweird.f32 %v732
      %vm952 = vweird.f32 %v946
      %vm953 = vmor %vm951, %vm952
      %v954 = vsel %vm953, %v946, %v950
      %v955 = vand.u32 2147483647, %v732
      %vm956 = vcmp.eq.f32.partialorder %v955, 8.507059e+37
      %v957 = vand.u32 %v732, 2147483648
      %v958 = vor.u32 1.1754944e-38, %v957
      %v959 = vsel %vm956, %v958, %v954
      %v960 = vmul.f32 1.0, %v959
      %v961 = vrcp.pop %v733
      %v962 = vmul.f32 %v733, %v961
      %v963 = vsub.f32 1.0, %v962
      %v964 = vmul.f32 %v961, %v963
      %v965 = vadd.f32 %v961, %v964
      %vm966 = vweird.f32 %v733
      %vm967 = vweird.f32 %v961
      %vm968 = vmor %vm966, %vm967
      %v969 = vsel %vm968, %v961, %v965
      %v970 = vand.u32 2147483647, %v733
      %vm971 = vcmp.eq.f32.partialorder %v970, 8.507059e+37
      %v972 = vand.u32 %v733, 2147483648
      %v973 = vor.u32 1.1754944e-38, %v972
      %v974 = vsel %vm971, %v973, %v969
      %v975 = vmul.f32 1.0, %v974
      %v976 = vrcp.pop %v734
      %v977 = vmul.f32 %v734, %v976
      %v978 = vsub.f32 1.0, %v977
      %v979 = vmul.f32 %v976, %v978
      %v980 = vadd.f32 %v976, %v979
      %vm981 = vweird.f32 %v734
      %vm982 = vweird.f32 %v976
      %vm983 = vmor %vm981, %vm982
      %v984 = vsel %vm983, %v976, %v980
      %v985 = vand.u32 2147483647, %v734
      %vm986 = vcmp.eq.f32.partialorder %v985, 8.507059e+37
      %v987 = vand.u32 %v734, 2147483648
      %v988 = vor.u32 1.1754944e-38, %v987
      %v989 = vsel %vm986, %v988, %v984
      %v990 = vmul.f32 1.0, %v989
      %v991 = vrcp.pop %v735
      %v992 = vmul.f32 %v735, %v991
      %v993 = vsub.f32 1.0, %v992
      %v994 = vmul.f32 %v991, %v993
      %v995 = vadd.f32 %v991, %v994
      %vm996 = vweird.f32 %v735
      %vm997 = vweird.f32 %v991
      %vm998 = vmor %vm996, %vm997
      %v999 = vsel %vm998, %v991, %v995
      %v1000 = vand.u32 2147483647, %v735
      %vm1001 = vcmp.eq.f32.partialorder %v1000, 8.507059e+37
      %v1002 = vand.u32 %v735, 2147483648
      %v1003 = vor.u32 1.1754944e-38, %v1002
      %v1004 = vsel %vm1001, %v1003, %v999
      %v1005 = vmul.f32 1.0, %v1004
      %v1006 = vrcp.pop %v736
      %v1007 = vmul.f32 %v736, %v1006
      %v1008 = vsub.f32 1.0, %v1007
      %v1009 = vmul.f32 %v1006, %v1008
      %v1010 = vadd.f32 %v1006, %v1009
      %vm1011 = vweird.f32 %v736
      %vm1012 = vweird.f32 %v1006
      %vm1013 = vmor %vm1011, %vm1012
      %v1014 = vsel %vm1013, %v1006, %v1010
      %v1015 = vand.u32 2147483647, %v736
      %vm1016 = vcmp.eq.f32.partialorder %v1015, 8.507059e+37
      %v1017 = vand.u32 %v736, 2147483648
      %v1018 = vor.u32 1.1754944e-38, %v1017
      %v1019 = vsel %vm1016, %v1018, %v1014
      %v1020 = vmul.f32 1.0, %v1019
      %v1021 = vrcp.pop %v737
      %v1022 = vmul.f32 %v737, %v1021
      %v1023 = vsub.f32 1.0, %v1022
      %v1024 = vmul.f32 %v1021, %v1023
      %v1025 = vadd.f32 %v1021, %v1024
      %vm1026 = vweird.f32 %v737
      %vm1027 = vweird.f32 %v1021
      %vm1028 = vmor %vm1026, %vm1027
      %v1029 = vsel %vm1028, %v1021, %v1025
      %v1030 = vand.u32 2147483647, %v737
      %vm1031 = vcmp.eq.f32.partialorder %v1030, 8.507059e+37
      %v1032 = vand.u32 %v737, 2147483648
      %v1033 = vor.u32 1.1754944e-38, %v1032
      %v1034 = vsel %vm1031, %v1033, %v1029
      %v1035 = vmul.f32 1.0, %v1034
      %v1036 = vrcp.pop %v738
      %v1037 = vmul.f32 %v738, %v1036
      %v1038 = vsub.f32 1.0, %v1037
      %v1039 = vmul.f32 %v1036, %v1038
      %v1040 = vadd.f32 %v1036, %v1039
      %vm1041 = vweird.f32 %v738
      %vm1042 = vweird.f32 %v1036
      %vm1043 = vmor %vm1041, %vm1042
      %v1044 = vsel %vm1043, %v1036, %v1040
      %v1045 = vand.u32 2147483647, %v738
      %vm1046 = vcmp.eq.f32.partialorder %v1045, 8.507059e+37
      %v1047 = vand.u32 %v738, 2147483648
      %v1048 = vor.u32 1.1754944e-38, %v1047
      %v1049 = vsel %vm1046, %v1048, %v1044
      %v1050 = vmul.f32 1.0, %v1049
      %v1051 = vrcp.pop %v739
      %v1052 = vmul.f32 %v739, %v1051
      %v1053 = vsub.f32 1.0, %v1052
      %v1054 = vmul.f32 %v1051, %v1053
      %v1055 = vadd.f32 %v1051, %v1054
      %vm1056 = vweird.f32 %v739
      %vm1057 = vweird.f32 %v1051
      %vm1058 = vmor %vm1056, %vm1057
      %v1059 = vsel %vm1058, %v1051, %v1055
      %v1060 = vand.u32 2147483647, %v739
      %vm1061 = vcmp.eq.f32.partialorder %v1060, 8.507059e+37
      %v1062 = vand.u32 %v739, 2147483648
      %v1063 = vor.u32 1.1754944e-38, %v1062
      %v1064 = vsel %vm1061, %v1063, %v1059
      %v1065 = vmul.f32 1.0, %v1064
      %v1066 = vrcp.pop %v740
      %v1067 = vmul.f32 %v740, %v1066
      %v1068 = vsub.f32 1.0, %v1067
      %v1069 = vmul.f32 %v1066, %v1068
      %v1070 = vadd.f32 %v1066, %v1069
      %vm1071 = vweird.f32 %v740
      %vm1072 = vweird.f32 %v1066
      %vm1073 = vmor %vm1071, %vm1072
      %v1074 = vsel %vm1073, %v1066, %v1070
      %v1075 = vand.u32 2147483647, %v740
      %vm1076 = vcmp.eq.f32.partialorder %v1075, 8.507059e+37
      %v1077 = vand.u32 %v740, 2147483648
      %v1078 = vor.u32 1.1754944e-38, %v1077
      %v1079 = vsel %vm1076, %v1078, %v1074
      %v1080 = vmul.f32 1.0, %v1079
      %v1081 = vrcp.pop %v741
      %v1082 = vmul.f32 %v741, %v1081
      %v1083 = vsub.f32 1.0, %v1082
      %v1084 = vmul.f32 %v1081, %v1083
      %v1085 = vadd.f32 %v1081, %v1084
      %vm1086 = vweird.f32 %v741
      %vm1087 = vweird.f32 %v1081
      %vm1088 = vmor %vm1086, %vm1087
      %v1089 = vsel %vm1088, %v1081, %v1085
      %v1090 = vand.u32 2147483647, %v741
      %vm1091 = vcmp.eq.f32.partialorder %v1090, 8.507059e+37
      %v1092 = vand.u32 %v741, 2147483648
      %v1093 = vor.u32 1.1754944e-38, %v1092
      %v1094 = vsel %vm1091, %v1093, %v1089
      %v1095 = vmul.f32 1.0, %v1094
      %v1096 = vrcp.pop %v742
      %v1097 = vmul.f32 %v742, %v1096
      %v1098 = vsub.f32 1.0, %v1097
      %v1099 = vmul.f32 %v1096, %v1098
      %v1100 = vadd.f32 %v1096, %v1099
      %vm1101 = vweird.f32 %v742
      %vm1102 = vweird.f32 %v1096
      %vm1103 = vmor %vm1101, %vm1102
      %v1104 = vsel %vm1103, %v1096, %v1100
      %v1105 = vand.u32 2147483647, %v742
      %vm1106 = vcmp.eq.f32.partialorder %v1105, 8.507059e+37
      %v1107 = vand.u32 %v742, 2147483648
      %v1108 = vor.u32 1.1754944e-38, %v1107
      %v1109 = vsel %vm1106, %v1108, %v1104
      %v1110 = vmul.f32 1.0, %v1109
      %v1111 = vrcp.pop %v743
      %v1112 = vmul.f32 %v743, %v1111
      %v1113 = vsub.f32 1.0, %v1112
      %v1114 = vmul.f32 %v1111, %v1113
      %v1115 = vadd.f32 %v1111, %v1114
      %vm1116 = vweird.f32 %v743
      %vm1117 = vweird.f32 %v1111
      %vm1118 = vmor %vm1116, %vm1117
      %v1119 = vsel %vm1118, %v1111, %v1115
      %v1120 = vand.u32 2147483647, %v743
      %vm1121 = vcmp.eq.f32.partialorder %v1120, 8.507059e+37
      %v1122 = vand.u32 %v743, 2147483648
      %v1123 = vor.u32 1.1754944e-38, %v1122
      %v1124 = vsel %vm1121, %v1123, %v1119
      %v1125 = vmul.f32 1.0, %v1124
      %v1126 = vrcp.pop %v744
      %v1127 = vmul.f32 %v744, %v1126
      %v1128 = vsub.f32 1.0, %v1127
      %v1129 = vmul.f32 %v1126, %v1128
      %v1130 = vadd.f32 %v1126, %v1129
      %vm1131 = vweird.f32 %v744
      %vm1132 = vweird.f32 %v1126
      %vm1133 = vmor %vm1131, %vm1132
      %v1134 = vsel %vm1133, %v1126, %v1130
      %v1135 = vand.u32 2147483647, %v744
      %vm1136 = vcmp.eq.f32.partialorder %v1135, 8.507059e+37
      %v1137 = vand.u32 %v744, 2147483648
      %v1138 = vor.u32 1.1754944e-38, %v1137
      %v1139 = vsel %vm1136, %v1138, %v1134
      %v1140 = vmul.f32 1.0, %v1139
      %v1141 = vrcp.pop %v745
      %v1142 = vmul.f32 %v745, %v1141
      %v1143 = vsub.f32 1.0, %v1142
      %v1144 = vmul.f32 %v1141, %v1143
      %v1145 = vadd.f32 %v1141, %v1144
      %vm1146 = vweird.f32 %v745
      %vm1147 = vweird.f32 %v1141
      %vm1148 = vmor %vm1146, %vm1147
      %v1149 = vsel %vm1148, %v1141, %v1145
      %v1150 = vand.u32 2147483647, %v745
      %vm1151 = vcmp.eq.f32.partialorder %v1150, 8.507059e+37
      %v1152 = vand.u32 %v745, 2147483648
      %v1153 = vor.u32 1.1754944e-38, %v1152
      %v1154 = vsel %vm1151, %v1153, %v1149
      %v1155 = vmul.f32 1.0, %v1154
      %v1156 = vrcp.pop %v746
      %v1157 = vmul.f32 %v746, %v1156
      %v1158 = vsub.f32 1.0, %v1157
      %v1159 = vmul.f32 %v1156, %v1158
      %v1160 = vadd.f32 %v1156, %v1159
      %vm1161 = vweird.f32 %v746
      %vm1162 = vweird.f32 %v1156
      %vm1163 = vmor %vm1161, %vm1162
      %v1164 = vsel %vm1163, %v1156, %v1160
      %v1165 = vand.u32 2147483647, %v746
      %vm1166 = vcmp.eq.f32.partialorder %v1165, 8.507059e+37
      %v1167 = vand.u32 %v746, 2147483648
      %v1168 = vor.u32 1.1754944e-38, %v1167
      %v1169 = vsel %vm1166, %v1168, %v1164
      %v1170 = vmul.f32 1.0, %v1169
      %v1171 = vrcp.pop %v747
      %v1172 = vmul.f32 %v747, %v1171
      %v1173 = vsub.f32 1.0, %v1172
      %v1174 = vmul.f32 %v1171, %v1173
      %v1175 = vadd.f32 %v1171, %v1174
      %vm1176 = vweird.f32 %v747
      %vm1177 = vweird.f32 %v1171
      %vm1178 = vmor %vm1176, %vm1177
      %v1179 = vsel %vm1178, %v1171, %v1175
      %v1180 = vand.u32 2147483647, %v747
      %vm1181 = vcmp.eq.f32.partialorder %v1180, 8.507059e+37
      %v1182 = vand.u32 %v747, 2147483648
      %v1183 = vor.u32 1.1754944e-38, %v1182
      %v1184 = vsel %vm1181, %v1183, %v1179
      %v1185 = vmul.f32 1.0, %v1184
      %v1186 = vrcp.pop %v748
      %v1187 = vmul.f32 %v748, %v1186
      %v1188 = vsub.f32 1.0, %v1187
      %v1189 = vmul.f32 %v1186, %v1188
      %v1190 = vadd.f32 %v1186, %v1189
      %vm1191 = vweird.f32 %v748
      %vm1192 = vweird.f32 %v1186
      %vm1193 = vmor %vm1191, %vm1192
      %v1194 = vsel %vm1193, %v1186, %v1190
      %v1195 = vand.u32 2147483647, %v748
      %vm1196 = vcmp.eq.f32.partialorder %v1195, 8.507059e+37
      %v1197 = vand.u32 %v748, 2147483648
      %v1198 = vor.u32 1.1754944e-38, %v1197
      %v1199 = vsel %vm1196, %v1198, %v1194
      %v1200 = vmul.f32 1.0, %v1199
      %v1201 = vrcp.pop %v749
      %v1202 = vmul.f32 %v749, %v1201
      %v1203 = vsub.f32 1.0, %v1202
      %v1204 = vmul.f32 %v1201, %v1203
      %v1205 = vadd.f32 %v1201, %v1204
      %vm1206 = vweird.f32 %v749
      %vm1207 = vweird.f32 %v1201
      %vm1208 = vmor %vm1206, %vm1207
      %v1209 = vsel %vm1208, %v1201, %v1205
      %v1210 = vand.u32 2147483647, %v749
      %vm1211 = vcmp.eq.f32.partialorder %v1210, 8.507059e+37
      %v1212 = vand.u32 %v749, 2147483648
      %v1213 = vor.u32 1.1754944e-38, %v1212
      %v1214 = vsel %vm1211, %v1213, %v1209
      %v1215 = vmul.f32 1.0, %v1214
      %v1216 = vrcp.pop %v750
      %v1217 = vmul.f32 %v750, %v1216
      %v1218 = vsub.f32 1.0, %v1217
      %v1219 = vmul.f32 %v1216, %v1218
      %v1220 = vadd.f32 %v1216, %v1219
      %vm1221 = vweird.f32 %v750
      %vm1222 = vweird.f32 %v1216
      %vm1223 = vmor %vm1221, %vm1222
      %v1224 = vsel %vm1223, %v1216, %v1220
      %v1225 = vand.u32 2147483647, %v750
      %vm1226 = vcmp.eq.f32.partialorder %v1225, 8.507059e+37
      %v1227 = vand.u32 %v750, 2147483648
      %v1228 = vor.u32 1.1754944e-38, %v1227
      %v1229 = vsel %vm1226, %v1228, %v1224
      %v1230 = vmul.f32 1.0, %v1229
      %v1231 = vmul.f32 %v544, %v765
      %v1232 = vmul.f32 %v546, %v780
      %v1233 = vmul.f32 %v549, %v795
      %v1234 = vmul.f32 %v551, %v810
      %v1235 = vmul.f32 %v554, %v825
      %v1236 = vmul.f32 %v556, %v840
      %v1237 = vmul.f32 %v559, %v855
      %v1238 = vmul.f32 %v561, %v870
      %v1239 = vmul.f32 %v564, %v885
      %v1240 = vmul.f32 %v566, %v900
      %v1241 = vmul.f32 %v569, %v915
      %v1242 = vmul.f32 %v571, %v930
      %v1243 = vmul.f32 %v574, %v945
      %v1244 = vmul.f32 %v576, %v960
      %v1245 = vmul.f32 %v579, %v975
      %v1246 = vmul.f32 %v581, %v990
      %v1247 = vmul.f32 %v584, %v1005
      %v1248 = vmul.f32 %v586, %v1020
      %v1249 = vmul.f32 %v589, %v1035
      %v1250 = vmul.f32 %v591, %v1050
      %v1251 = vmul.f32 %v594, %v1065
      %v1252 = vmul.f32 %v596, %v1080
      %v1253 = vmul.f32 %v599, %v1095
      %v1254 = vmul.f32 %v601, %v1110
      %v1255 = vmul.f32 %v604, %v1125
      %v1256 = vmul.f32 %v606, %v1140
      %v1257 = vmul.f32 %v609, %v1155
      %v1258 = vmul.f32 %v611, %v1170
      %v1259 = vmul.f32 %v614, %v1185
      %v1260 = vmul.f32 %v616, %v1200
      %v1261 = vmul.f32 %v619, %v1215
      %v1262 = vmul.f32 %v621, %v1230
      %v1263 = vpack.c.bf16 %v1231, %v1231
      %v1264 = vpack.c.bf16 %v1232, %v1232
      %v1265 = vpack.c.bf16 %v1233, %v1233
      %v1266 = vpack.c.bf16 %v1234, %v1234
      %v1267 = vpack.c.bf16 %v1235, %v1235
      %v1268 = vpack.c.bf16 %v1236, %v1236
      %v1269 = vpack.c.bf16 %v1237, %v1237
      %v1270 = vpack.c.bf16 %v1238, %v1238
      %v1271 = vpack.c.bf16 %v1239, %v1239
      %v1272 = vpack.c.bf16 %v1240, %v1240
      %v1273 = vpack.c.bf16 %v1241, %v1241
      %v1274 = vpack.c.bf16 %v1242, %v1242
      %v1275 = vpack.c.bf16 %v1243, %v1243
      %v1276 = vpack.c.bf16 %v1244, %v1244
      %v1277 = vpack.c.bf16 %v1245, %v1245
      %v1278 = vpack.c.bf16 %v1246, %v1246
      %v1279 = vpack.c.bf16 %v1247, %v1247
      %v1280 = vpack.c.bf16 %v1248, %v1248
      %v1281 = vpack.c.bf16 %v1249, %v1249
      %v1282 = vpack.c.bf16 %v1250, %v1250
      %v1283 = vpack.c.bf16 %v1251, %v1251
      %v1284 = vpack.c.bf16 %v1252, %v1252
      %v1285 = vpack.c.bf16 %v1253, %v1253
      %v1286 = vpack.c.bf16 %v1254, %v1254
      %v1287 = vpack.c.bf16 %v1255, %v1255
      %v1288 = vpack.c.bf16 %v1256, %v1256
      %v1289 = vpack.c.bf16 %v1257, %v1257
      %v1290 = vpack.c.bf16 %v1258, %v1258
      %v1291 = vpack.c.bf16 %v1259, %v1259
      %v1292 = vpack.c.bf16 %v1260, %v1260
      %v1293 = vpack.c.bf16 %v1261, %v1261
      %v1294 = vpack.c.bf16 %v1262, %v1262
      %v1295 = vld [vmem:[%s3] sm:$0x3]
      %v1296 = vld [vmem:[%s4] sm:$0x1]
      %v1298 = vperm.slane %v1296, 0
      %v1332 = vunpack.c.l.b16 %v1263
      %v1333 = vunpack.c.l.b16 %v1264
      %v1334 = vunpack.c.l.b16 %v1265
      %v1335 = vunpack.c.l.b16 %v1266
      %v1336 = vunpack.c.l.b16 %v1267
      %v1337 = vunpack.c.l.b16 %v1268
      %v1338 = vunpack.c.l.b16 %v1269
      %v1339 = vunpack.c.l.b16 %v1270
      %v1340 = vunpack.c.l.b16 %v1271
      %v1341 = vunpack.c.l.b16 %v1272
      %v1342 = vunpack.c.l.b16 %v1273
      %v1343 = vunpack.c.l.b16 %v1274
      %v1344 = vunpack.c.l.b16 %v1275
      %v1345 = vunpack.c.l.b16 %v1276
      %v1346 = vunpack.c.l.b16 %v1277
      %v1347 = vunpack.c.l.b16 %v1278
      %v1348 = vunpack.c.l.b16 %v1279
      %v1349 = vunpack.c.l.b16 %v1280
      %v1350 = vunpack.c.l.b16 %v1281
      %v1351 = vunpack.c.l.b16 %v1282
      %v1352 = vunpack.c.l.b16 %v1283
      %v1353 = vunpack.c.l.b16 %v1284
      %v1354 = vunpack.c.l.b16 %v1285
      %v1355 = vunpack.c.l.b16 %v1286
      %v1356 = vunpack.c.l.b16 %v1287
      %v1357 = vunpack.c.l.b16 %v1288
      %v1358 = vunpack.c.l.b16 %v1289
      %v1359 = vunpack.c.l.b16 %v1290
      %v1360 = vunpack.c.l.b16 %v1291
      %v1361 = vunpack.c.l.b16 %v1292
      %v1362 = vunpack.c.l.b16 %v1293
      %v1363 = vunpack.c.l.b16 %v1294
      %v1364 = vpack.c.b16 %v1333, %v1332
      %v1365 = vpack.c.b16 %v1335, %v1334
      %v1366 = vpack.c.b16 %v1337, %v1336
      %v1367 = vpack.c.b16 %v1339, %v1338
      %v1368 = vpack.c.b16 %v1341, %v1340
      %v1369 = vpack.c.b16 %v1343, %v1342
      %v1370 = vpack.c.b16 %v1345, %v1344
      %v1371 = vpack.c.b16 %v1347, %v1346
      %v1372 = vpack.c.b16 %v1349, %v1348
      %v1373 = vpack.c.b16 %v1351, %v1350
      %v1374 = vpack.c.b16 %v1353, %v1352
      %v1375 = vpack.c.b16 %v1355, %v1354
      %v1376 = vpack.c.b16 %v1357, %v1356
      %v1377 = vpack.c.b16 %v1359, %v1358
      %v1378 = vpack.c.b16 %v1361, %v1360
      %v1379 = vpack.c.b16 %v1363, %v1362
      %vm1380 = vcmask 31744
      %v1382 = vsel %vm1380, %v1364, 0
      %v1385 = vsel %vm1380, %v1365, 0
      %v1388 = vsel %vm1380, %v1366, 0
      %v1391 = vsel %vm1380, %v1367, 0
      %v1394 = vsel %vm1380, %v1368, 0
      %v1397 = vsel %vm1380, %v1369, 0
      %v1400 = vsel %vm1380, %v1370, 0
      %v1403 = vsel %vm1380, %v1371, 0
      %v1406 = vsel %vm1380, %v1372, 0
      %v1409 = vsel %vm1380, %v1373, 0
      %v1412 = vsel %vm1380, %v1374, 0
      %v1415 = vsel %vm1380, %v1375, 0
      %v1418 = vsel %vm1380, %v1376, 0
      %v1421 = vsel %vm1380, %v1377, 0
      %v1424 = vsel %vm1380, %v1378, 0
      %v1427 = vsel %vm1380, %v1379, 0
      %vm1429 = vcmask 1041408
      %v1431 = vsel %vm1429, %v1295, 0
      %1433 = vmatpush.bf16.msra.mxu0 0
      %1434 = vmatpush.bf16.msra.mxu0 0
      %1435 = vmatpush.bf16.msra.mxu0 0
      %1436 = vmatpush.bf16.msra.mxu0 0
      %1437 = vmatpush.bf16.msra.mxu0 0
      %1438 = vmatpush.bf16.msra.mxu0 0
      %1439 = vmatpush.bf16.msra.mxu0 0
      %1440 = vmatpush.bf16.msra.mxu0 %v1431
      %1441 = vmatmul.bf16.gmra.mxu0 %v1382
      %v1442 = vpop.f32.mrf.mxu0
      %v1443 = vadd.f32 %v1298, %v1442
      %v1444 = vpop.f32.mrf.mxu0
      %v1445 = vadd.f32 %v1298, %v1444
      %1446 = vmatmul.bf16.gmra.mxu0 %v1385
      %v1447 = vpop.f32.mrf.mxu0
      %v1448 = vadd.f32 %v1298, %v1447
      %v1449 = vpop.f32.mrf.mxu0
      %v1450 = vadd.f32 %v1298, %v1449
      %1451 = vmatmul.bf16.gmra.mxu0 %v1388
      %v1452 = vpop.f32.mrf.mxu0
      %v1453 = vadd.f32 %v1298, %v1452
      %v1454 = vpop.f32.mrf.mxu0
      %v1455 = vadd.f32 %v1298, %v1454
      %1456 = vmatmul.bf16.gmra.mxu0 %v1391
      %v1457 = vpop.f32.mrf.mxu0
      %v1458 = vadd.f32 %v1298, %v1457
      %v1459 = vpop.f32.mrf.mxu0
      %v1460 = vadd.f32 %v1298, %v1459
      %1461 = vmatmul.bf16.gmra.mxu0 %v1394
      %v1462 = vpop.f32.mrf.mxu0
      %v1463 = vadd.f32 %v1298, %v1462
      %v1464 = vpop.f32.mrf.mxu0
      %v1465 = vadd.f32 %v1298, %v1464
      %1466 = vmatmul.bf16.gmra.mxu0 %v1397
      %v1467 = vpop.f32.mrf.mxu0
      %v1468 = vadd.f32 %v1298, %v1467
      %v1469 = vpop.f32.mrf.mxu0
      %v1470 = vadd.f32 %v1298, %v1469
      %1471 = vmatmul.bf16.gmra.mxu0 %v1400
      %v1472 = vpop.f32.mrf.mxu0
      %v1473 = vadd.f32 %v1298, %v1472
      %v1474 = vpop.f32.mrf.mxu0
      %v1475 = vadd.f32 %v1298, %v1474
      %1476 = vmatmul.bf16.gmra.mxu0 %v1403
      %v1477 = vpop.f32.mrf.mxu0
      %v1478 = vadd.f32 %v1298, %v1477
      %v1479 = vpop.f32.mrf.mxu0
      %v1480 = vadd.f32 %v1298, %v1479
      %1481 = vmatmul.bf16.gmra.mxu0 %v1406
      %v1482 = vpop.f32.mrf.mxu0
      %v1483 = vadd.f32 %v1298, %v1482
      %v1484 = vpop.f32.mrf.mxu0
      %v1485 = vadd.f32 %v1298, %v1484
      %1486 = vmatmul.bf16.gmra.mxu0 %v1409
      %v1487 = vpop.f32.mrf.mxu0
      %v1488 = vadd.f32 %v1298, %v1487
      %v1489 = vpop.f32.mrf.mxu0
      %v1490 = vadd.f32 %v1298, %v1489
      %1491 = vmatmul.bf16.gmra.mxu0 %v1412
      %v1492 = vpop.f32.mrf.mxu0
      %v1493 = vadd.f32 %v1298, %v1492
      %v1494 = vpop.f32.mrf.mxu0
      %v1495 = vadd.f32 %v1298, %v1494
      %1496 = vmatmul.bf16.gmra.mxu0 %v1415
      %v1497 = vpop.f32.mrf.mxu0
      %v1498 = vadd.f32 %v1298, %v1497
      %v1499 = vpop.f32.mrf.mxu0
      %v1500 = vadd.f32 %v1298, %v1499
      %1501 = vmatmul.bf16.gmra.mxu0 %v1418
      %v1502 = vpop.f32.mrf.mxu0
      %v1503 = vadd.f32 %v1298, %v1502
      %v1504 = vpop.f32.mrf.mxu0
      %v1505 = vadd.f32 %v1298, %v1504
      %1506 = vmatmul.bf16.gmra.mxu0 %v1421
      %v1507 = vpop.f32.mrf.mxu0
      %v1508 = vadd.f32 %v1298, %v1507
      %v1509 = vpop.f32.mrf.mxu0
      %v1510 = vadd.f32 %v1298, %v1509
      %1511 = vmatmul.bf16.gmra.mxu0 %v1424
      %v1512 = vpop.f32.mrf.mxu0
      %v1513 = vadd.f32 %v1298, %v1512
      %v1514 = vpop.f32.mrf.mxu0
      %v1515 = vadd.f32 %v1298, %v1514
      %1516 = vmatmul.bf16.gmra.mxu0 %v1427
      %v1517 = vpop.f32.mrf.mxu0
      %v1518 = vadd.f32 %v1298, %v1517
      %v1519 = vpop.f32.mrf.mxu0
      %v1520 = vadd.f32 %v1298, %v1519
      %1521 = vdwg.mxu0
      %v1522 = vxor.u32 %v1443, 2147483648
      %v1523 = vxor.u32 %v1445, 2147483648
      %v1524 = vxor.u32 %v1448, 2147483648
      %v1525 = vxor.u32 %v1450, 2147483648
      %v1526 = vxor.u32 %v1453, 2147483648
      %v1527 = vxor.u32 %v1455, 2147483648
      %v1528 = vxor.u32 %v1458, 2147483648
      %v1529 = vxor.u32 %v1460, 2147483648
      %v1530 = vxor.u32 %v1463, 2147483648
      %v1531 = vxor.u32 %v1465, 2147483648
      %v1532 = vxor.u32 %v1468, 2147483648
      %v1533 = vxor.u32 %v1470, 2147483648
      %v1534 = vxor.u32 %v1473, 2147483648
      %v1535 = vxor.u32 %v1475, 2147483648
      %v1536 = vxor.u32 %v1478, 2147483648
      %v1537 = vxor.u32 %v1480, 2147483648
      %v1538 = vxor.u32 %v1483, 2147483648
      %v1539 = vxor.u32 %v1485, 2147483648
      %v1540 = vxor.u32 %v1488, 2147483648
      %v1541 = vxor.u32 %v1490, 2147483648
      %v1542 = vxor.u32 %v1493, 2147483648
      %v1543 = vxor.u32 %v1495, 2147483648
      %v1544 = vxor.u32 %v1498, 2147483648
      %v1545 = vxor.u32 %v1500, 2147483648
      %v1546 = vxor.u32 %v1503, 2147483648
      %v1547 = vxor.u32 %v1505, 2147483648
      %v1548 = vxor.u32 %v1508, 2147483648
      %v1549 = vxor.u32 %v1510, 2147483648
      %v1550 = vxor.u32 %v1513, 2147483648
      %v1551 = vxor.u32 %v1515, 2147483648
      %v1552 = vxor.u32 %v1518, 2147483648
      %v1553 = vxor.u32 %v1520, 2147483648
      %v1554 = vmul.f32 %v1522, 1.442695
      %v1555 = vpow.pop %v1554
      %v1556 = vmul.f32 %v1523, 1.442695
      %v1557 = vpow.pop %v1556
      %v1558 = vmul.f32 %v1524, 1.442695
      %v1559 = vpow.pop %v1558
      %v1560 = vmul.f32 %v1525, 1.442695
      %v1561 = vpow.pop %v1560
      %v1562 = vmul.f32 %v1526, 1.442695
      %v1563 = vpow.pop %v1562
      %v1564 = vmul.f32 %v1527, 1.442695
      %v1565 = vpow.pop %v1564
      %v1566 = vmul.f32 %v1528, 1.442695
      %v1567 = vpow.pop %v1566
      %v1568 = vmul.f32 %v1529, 1.442695
      %v1569 = vpow.pop %v1568
      %v1570 = vmul.f32 %v1530, 1.442695
      %v1571 = vpow.pop %v1570
      %v1572 = vmul.f32 %v1531, 1.442695
      %v1573 = vpow.pop %v1572
      %v1574 = vmul.f32 %v1532, 1.442695
      %v1575 = vpow.pop %v1574
      %v1576 = vmul.f32 %v1533, 1.442695
      %v1577 = vpow.pop %v1576
      %v1578 = vmul.f32 %v1534, 1.442695
      %v1579 = vpow.pop %v1578
      %v1580 = vmul.f32 %v1535, 1.442695
      %v1581 = vpow.pop %v1580
      %v1582 = vmul.f32 %v1536, 1.442695
      %v1583 = vpow.pop %v1582
      %v1584 = vmul.f32 %v1537, 1.442695
      %v1585 = vpow.pop %v1584
      %v1586 = vmul.f32 %v1538, 1.442695
      %v1587 = vpow.pop %v1586
      %v1588 = vmul.f32 %v1539, 1.442695
      %v1589 = vpow.pop %v1588
      %v1590 = vmul.f32 %v1540, 1.442695
      %v1591 = vpow.pop %v1590
      %v1592 = vmul.f32 %v1541, 1.442695
      %v1593 = vpow.pop %v1592
      %v1594 = vmul.f32 %v1542, 1.442695
      %v1595 = vpow.pop %v1594
      %v1596 = vmul.f32 %v1543, 1.442695
      %v1597 = vpow.pop %v1596
      %v1598 = vmul.f32 %v1544, 1.442695
      %v1599 = vpow.pop %v1598
      %v1600 = vmul.f32 %v1545, 1.442695
      %v1601 = vpow.pop %v1600
      %v1602 = vmul.f32 %v1546, 1.442695
      %v1603 = vpow.pop %v1602
      %v1604 = vmul.f32 %v1547, 1.442695
      %v1605 = vpow.pop %v1604
      %v1606 = vmul.f32 %v1548, 1.442695
      %v1607 = vpow.pop %v1606
      %v1608 = vmul.f32 %v1549, 1.442695
      %v1609 = vpow.pop %v1608
      %v1610 = vmul.f32 %v1550, 1.442695
      %v1611 = vpow.pop %v1610
      %v1612 = vmul.f32 %v1551, 1.442695
      %v1613 = vpow.pop %v1612
      %v1614 = vmul.f32 %v1552, 1.442695
      %v1615 = vpow.pop %v1614
      %v1616 = vmul.f32 %v1553, 1.442695
      %v1617 = vpow.pop %v1616
      %v1618 = vadd.f32 %v1555, 1.0
      %v1619 = vadd.f32 %v1557, 1.0
      %v1620 = vadd.f32 %v1559, 1.0
      %v1621 = vadd.f32 %v1561, 1.0
      %v1622 = vadd.f32 %v1563, 1.0
      %v1623 = vadd.f32 %v1565, 1.0
      %v1624 = vadd.f32 %v1567, 1.0
      %v1625 = vadd.f32 %v1569, 1.0
      %v1626 = vadd.f32 %v1571, 1.0
      %v1627 = vadd.f32 %v1573, 1.0
      %v1628 = vadd.f32 %v1575, 1.0
      %v1629 = vadd.f32 %v1577, 1.0
      %v1630 = vadd.f32 %v1579, 1.0
      %v1631 = vadd.f32 %v1581, 1.0
      %v1632 = vadd.f32 %v1583, 1.0
      %v1633 = vadd.f32 %v1585, 1.0
      %v1634 = vadd.f32 %v1587, 1.0
      %v1635 = vadd.f32 %v1589, 1.0
      %v1636 = vadd.f32 %v1591, 1.0
      %v1637 = vadd.f32 %v1593, 1.0
      %v1638 = vadd.f32 %v1595, 1.0
      %v1639 = vadd.f32 %v1597, 1.0
      %v1640 = vadd.f32 %v1599, 1.0
      %v1641 = vadd.f32 %v1601, 1.0
      %v1642 = vadd.f32 %v1603, 1.0
      %v1643 = vadd.f32 %v1605, 1.0
      %v1644 = vadd.f32 %v1607, 1.0
      %v1645 = vadd.f32 %v1609, 1.0
      %v1646 = vadd.f32 %v1611, 1.0
      %v1647 = vadd.f32 %v1613, 1.0
      %v1648 = vadd.f32 %v1615, 1.0
      %v1649 = vadd.f32 %v1617, 1.0
      %v1650 = vrcp.pop %v1618
      %v1651 = vmul.f32 %v1618, %v1650
      %v1652 = vsub.f32 1.0, %v1651
      %v1653 = vmul.f32 %v1650, %v1652
      %v1654 = vadd.f32 %v1650, %v1653
      %vm1655 = vweird.f32 %v1618
      %vm1656 = vweird.f32 %v1650
      %vm1657 = vmor %vm1655, %vm1656
      %v1658 = vsel %vm1657, %v1650, %v1654
      %v1659 = vand.u32 2147483647, %v1618
      %vm1660 = vcmp.eq.f32.partialorder %v1659, 8.507059e+37
      %v1661 = vand.u32 %v1618, 2147483648
      %v1662 = vor.u32 1.1754944e-38, %v1661
      %v1663 = vsel %vm1660, %v1662, %v1658
      %v1664 = vmul.f32 1.0, %v1663
      %v1665 = vrcp.pop %v1619
      %v1666 = vmul.f32 %v1619, %v1665
      %v1667 = vsub.f32 1.0, %v1666
      %v1668 = vmul.f32 %v1665, %v1667
      %v1669 = vadd.f32 %v1665, %v1668
      %vm1670 = vweird.f32 %v1619
      %vm1671 = vweird.f32 %v1665
      %vm1672 = vmor %vm1670, %vm1671
      %v1673 = vsel %vm1672, %v1665, %v1669
      %v1674 = vand.u32 2147483647, %v1619
      %vm1675 = vcmp.eq.f32.partialorder %v1674, 8.507059e+37
      %v1676 = vand.u32 %v1619, 2147483648
      %v1677 = vor.u32 1.1754944e-38, %v1676
      %v1678 = vsel %vm1675, %v1677, %v1673
      %v1679 = vmul.f32 1.0, %v1678
      %v1680 = vrcp.pop %v1620
      %v1681 = vmul.f32 %v1620, %v1680
      %v1682 = vsub.f32 1.0, %v1681
      %v1683 = vmul.f32 %v1680, %v1682
      %v1684 = vadd.f32 %v1680, %v1683
      %vm1685 = vweird.f32 %v1620
      %vm1686 = vweird.f32 %v1680
      %vm1687 = vmor %vm1685, %vm1686
      %v1688 = vsel %vm1687, %v1680, %v1684
      %v1689 = vand.u32 2147483647, %v1620
      %vm1690 = vcmp.eq.f32.partialorder %v1689, 8.507059e+37
      %v1691 = vand.u32 %v1620, 2147483648
      %v1692 = vor.u32 1.1754944e-38, %v1691
      %v1693 = vsel %vm1690, %v1692, %v1688
      %v1694 = vmul.f32 1.0, %v1693
      %v1695 = vrcp.pop %v1621
      %v1696 = vmul.f32 %v1621, %v1695
      %v1697 = vsub.f32 1.0, %v1696
      %v1698 = vmul.f32 %v1695, %v1697
      %v1699 = vadd.f32 %v1695, %v1698
      %vm1700 = vweird.f32 %v1621
      %vm1701 = vweird.f32 %v1695
      %vm1702 = vmor %vm1700, %vm1701
      %v1703 = vsel %vm1702, %v1695, %v1699
      %v1704 = vand.u32 2147483647, %v1621
      %vm1705 = vcmp.eq.f32.partialorder %v1704, 8.507059e+37
      %v1706 = vand.u32 %v1621, 2147483648
      %v1707 = vor.u32 1.1754944e-38, %v1706
      %v1708 = vsel %vm1705, %v1707, %v1703
      %v1709 = vmul.f32 1.0, %v1708
      %v1710 = vrcp.pop %v1622
      %v1711 = vmul.f32 %v1622, %v1710
      %v1712 = vsub.f32 1.0, %v1711
      %v1713 = vmul.f32 %v1710, %v1712
      %v1714 = vadd.f32 %v1710, %v1713
      %vm1715 = vweird.f32 %v1622
      %vm1716 = vweird.f32 %v1710
      %vm1717 = vmor %vm1715, %vm1716
      %v1718 = vsel %vm1717, %v1710, %v1714
      %v1719 = vand.u32 2147483647, %v1622
      %vm1720 = vcmp.eq.f32.partialorder %v1719, 8.507059e+37
      %v1721 = vand.u32 %v1622, 2147483648
      %v1722 = vor.u32 1.1754944e-38, %v1721
      %v1723 = vsel %vm1720, %v1722, %v1718
      %v1724 = vmul.f32 1.0, %v1723
      %v1725 = vrcp.pop %v1623
      %v1726 = vmul.f32 %v1623, %v1725
      %v1727 = vsub.f32 1.0, %v1726
      %v1728 = vmul.f32 %v1725, %v1727
      %v1729 = vadd.f32 %v1725, %v1728
      %vm1730 = vweird.f32 %v1623
      %vm1731 = vweird.f32 %v1725
      %vm1732 = vmor %vm1730, %vm1731
      %v1733 = vsel %vm1732, %v1725, %v1729
      %v1734 = vand.u32 2147483647, %v1623
      %vm1735 = vcmp.eq.f32.partialorder %v1734, 8.507059e+37
      %v1736 = vand.u32 %v1623, 2147483648
      %v1737 = vor.u32 1.1754944e-38, %v1736
      %v1738 = vsel %vm1735, %v1737, %v1733
      %v1739 = vmul.f32 1.0, %v1738
      %v1740 = vrcp.pop %v1624
      %v1741 = vmul.f32 %v1624, %v1740
      %v1742 = vsub.f32 1.0, %v1741
      %v1743 = vmul.f32 %v1740, %v1742
      %v1744 = vadd.f32 %v1740, %v1743
      %vm1745 = vweird.f32 %v1624
      %vm1746 = vweird.f32 %v1740
      %vm1747 = vmor %vm1745, %vm1746
      %v1748 = vsel %vm1747, %v1740, %v1744
      %v1749 = vand.u32 2147483647, %v1624
      %vm1750 = vcmp.eq.f32.partialorder %v1749, 8.507059e+37
      %v1751 = vand.u32 %v1624, 2147483648
      %v1752 = vor.u32 1.1754944e-38, %v1751
      %v1753 = vsel %vm1750, %v1752, %v1748
      %v1754 = vmul.f32 1.0, %v1753
      %v1755 = vrcp.pop %v1625
      %v1756 = vmul.f32 %v1625, %v1755
      %v1757 = vsub.f32 1.0, %v1756
      %v1758 = vmul.f32 %v1755, %v1757
      %v1759 = vadd.f32 %v1755, %v1758
      %vm1760 = vweird.f32 %v1625
      %vm1761 = vweird.f32 %v1755
      %vm1762 = vmor %vm1760, %vm1761
      %v1763 = vsel %vm1762, %v1755, %v1759
      %v1764 = vand.u32 2147483647, %v1625
      %vm1765 = vcmp.eq.f32.partialorder %v1764, 8.507059e+37
      %v1766 = vand.u32 %v1625, 2147483648
      %v1767 = vor.u32 1.1754944e-38, %v1766
      %v1768 = vsel %vm1765, %v1767, %v1763
      %v1769 = vmul.f32 1.0, %v1768
      %v1770 = vrcp.pop %v1626
      %v1771 = vmul.f32 %v1626, %v1770
      %v1772 = vsub.f32 1.0, %v1771
      %v1773 = vmul.f32 %v1770, %v1772
      %v1774 = vadd.f32 %v1770, %v1773
      %vm1775 = vweird.f32 %v1626
      %vm1776 = vweird.f32 %v1770
      %vm1777 = vmor %vm1775, %vm1776
      %v1778 = vsel %vm1777, %v1770, %v1774
      %v1779 = vand.u32 2147483647, %v1626
      %vm1780 = vcmp.eq.f32.partialorder %v1779, 8.507059e+37
      %v1781 = vand.u32 %v1626, 2147483648
      %v1782 = vor.u32 1.1754944e-38, %v1781
      %v1783 = vsel %vm1780, %v1782, %v1778
      %v1784 = vmul.f32 1.0, %v1783
      %v1785 = vrcp.pop %v1627
      %v1786 = vmul.f32 %v1627, %v1785
      %v1787 = vsub.f32 1.0, %v1786
      %v1788 = vmul.f32 %v1785, %v1787
      %v1789 = vadd.f32 %v1785, %v1788
      %vm1790 = vweird.f32 %v1627
      %vm1791 = vweird.f32 %v1785
      %vm1792 = vmor %vm1790, %vm1791
      %v1793 = vsel %vm1792, %v1785, %v1789
      %v1794 = vand.u32 2147483647, %v1627
      %vm1795 = vcmp.eq.f32.partialorder %v1794, 8.507059e+37
      %v1796 = vand.u32 %v1627, 2147483648
      %v1797 = vor.u32 1.1754944e-38, %v1796
      %v1798 = vsel %vm1795, %v1797, %v1793
      %v1799 = vmul.f32 1.0, %v1798
      %v1800 = vrcp.pop %v1628
      %v1801 = vmul.f32 %v1628, %v1800
      %v1802 = vsub.f32 1.0, %v1801
      %v1803 = vmul.f32 %v1800, %v1802
      %v1804 = vadd.f32 %v1800, %v1803
      %vm1805 = vweird.f32 %v1628
      %vm1806 = vweird.f32 %v1800
      %vm1807 = vmor %vm1805, %vm1806
      %v1808 = vsel %vm1807, %v1800, %v1804
      %v1809 = vand.u32 2147483647, %v1628
      %vm1810 = vcmp.eq.f32.partialorder %v1809, 8.507059e+37
      %v1811 = vand.u32 %v1628, 2147483648
      %v1812 = vor.u32 1.1754944e-38, %v1811
      %v1813 = vsel %vm1810, %v1812, %v1808
      %v1814 = vmul.f32 1.0, %v1813
      %v1815 = vrcp.pop %v1629
      %v1816 = vmul.f32 %v1629, %v1815
      %v1817 = vsub.f32 1.0, %v1816
      %v1818 = vmul.f32 %v1815, %v1817
      %v1819 = vadd.f32 %v1815, %v1818
      %vm1820 = vweird.f32 %v1629
      %vm1821 = vweird.f32 %v1815
      %vm1822 = vmor %vm1820, %vm1821
      %v1823 = vsel %vm1822, %v1815, %v1819
      %v1824 = vand.u32 2147483647, %v1629
      %vm1825 = vcmp.eq.f32.partialorder %v1824, 8.507059e+37
      %v1826 = vand.u32 %v1629, 2147483648
      %v1827 = vor.u32 1.1754944e-38, %v1826
      %v1828 = vsel %vm1825, %v1827, %v1823
      %v1829 = vmul.f32 1.0, %v1828
      %v1830 = vrcp.pop %v1630
      %v1831 = vmul.f32 %v1630, %v1830
      %v1832 = vsub.f32 1.0, %v1831
      %v1833 = vmul.f32 %v1830, %v1832
      %v1834 = vadd.f32 %v1830, %v1833
      %vm1835 = vweird.f32 %v1630
      %vm1836 = vweird.f32 %v1830
      %vm1837 = vmor %vm1835, %vm1836
      %v1838 = vsel %vm1837, %v1830, %v1834
      %v1839 = vand.u32 2147483647, %v1630
      %vm1840 = vcmp.eq.f32.partialorder %v1839, 8.507059e+37
      %v1841 = vand.u32 %v1630, 2147483648
      %v1842 = vor.u32 1.1754944e-38, %v1841
      %v1843 = vsel %vm1840, %v1842, %v1838
      %v1844 = vmul.f32 1.0, %v1843
      %v1845 = vrcp.pop %v1631
      %v1846 = vmul.f32 %v1631, %v1845
      %v1847 = vsub.f32 1.0, %v1846
      %v1848 = vmul.f32 %v1845, %v1847
      %v1849 = vadd.f32 %v1845, %v1848
      %vm1850 = vweird.f32 %v1631
      %vm1851 = vweird.f32 %v1845
      %vm1852 = vmor %vm1850, %vm1851
      %v1853 = vsel %vm1852, %v1845, %v1849
      %v1854 = vand.u32 2147483647, %v1631
      %vm1855 = vcmp.eq.f32.partialorder %v1854, 8.507059e+37
      %v1856 = vand.u32 %v1631, 2147483648
      %v1857 = vor.u32 1.1754944e-38, %v1856
      %v1858 = vsel %vm1855, %v1857, %v1853
      %v1859 = vmul.f32 1.0, %v1858
      %v1860 = vrcp.pop %v1632
      %v1861 = vmul.f32 %v1632, %v1860
      %v1862 = vsub.f32 1.0, %v1861
      %v1863 = vmul.f32 %v1860, %v1862
      %v1864 = vadd.f32 %v1860, %v1863
      %vm1865 = vweird.f32 %v1632
      %vm1866 = vweird.f32 %v1860
      %vm1867 = vmor %vm1865, %vm1866
      %v1868 = vsel %vm1867, %v1860, %v1864
      %v1869 = vand.u32 2147483647, %v1632
      %vm1870 = vcmp.eq.f32.partialorder %v1869, 8.507059e+37
      %v1871 = vand.u32 %v1632, 2147483648
      %v1872 = vor.u32 1.1754944e-38, %v1871
      %v1873 = vsel %vm1870, %v1872, %v1868
      %v1874 = vmul.f32 1.0, %v1873
      %v1875 = vrcp.pop %v1633
      %v1876 = vmul.f32 %v1633, %v1875
      %v1877 = vsub.f32 1.0, %v1876
      %v1878 = vmul.f32 %v1875, %v1877
      %v1879 = vadd.f32 %v1875, %v1878
      %vm1880 = vweird.f32 %v1633
      %vm1881 = vweird.f32 %v1875
      %vm1882 = vmor %vm1880, %vm1881
      %v1883 = vsel %vm1882, %v1875, %v1879
      %v1884 = vand.u32 2147483647, %v1633
      %vm1885 = vcmp.eq.f32.partialorder %v1884, 8.507059e+37
      %v1886 = vand.u32 %v1633, 2147483648
      %v1887 = vor.u32 1.1754944e-38, %v1886
      %v1888 = vsel %vm1885, %v1887, %v1883
      %v1889 = vmul.f32 1.0, %v1888
      %v1890 = vrcp.pop %v1634
      %v1891 = vmul.f32 %v1634, %v1890
      %v1892 = vsub.f32 1.0, %v1891
      %v1893 = vmul.f32 %v1890, %v1892
      %v1894 = vadd.f32 %v1890, %v1893
      %vm1895 = vweird.f32 %v1634
      %vm1896 = vweird.f32 %v1890
      %vm1897 = vmor %vm1895, %vm1896
      %v1898 = vsel %vm1897, %v1890, %v1894
      %v1899 = vand.u32 2147483647, %v1634
      %vm1900 = vcmp.eq.f32.partialorder %v1899, 8.507059e+37
      %v1901 = vand.u32 %v1634, 2147483648
      %v1902 = vor.u32 1.1754944e-38, %v1901
      %v1903 = vsel %vm1900, %v1902, %v1898
      %v1904 = vmul.f32 1.0, %v1903
      %v1905 = vrcp.pop %v1635
      %v1906 = vmul.f32 %v1635, %v1905
      %v1907 = vsub.f32 1.0, %v1906
      %v1908 = vmul.f32 %v1905, %v1907
      %v1909 = vadd.f32 %v1905, %v1908
      %vm1910 = vweird.f32 %v1635
      %vm1911 = vweird.f32 %v1905
      %vm1912 = vmor %vm1910, %vm1911
      %v1913 = vsel %vm1912, %v1905, %v1909
      %v1914 = vand.u32 2147483647, %v1635
      %vm1915 = vcmp.eq.f32.partialorder %v1914, 8.507059e+37
      %v1916 = vand.u32 %v1635, 2147483648
      %v1917 = vor.u32 1.1754944e-38, %v1916
      %v1918 = vsel %vm1915, %v1917, %v1913
      %v1919 = vmul.f32 1.0, %v1918
      %v1920 = vrcp.pop %v1636
      %v1921 = vmul.f32 %v1636, %v1920
      %v1922 = vsub.f32 1.0, %v1921
      %v1923 = vmul.f32 %v1920, %v1922
      %v1924 = vadd.f32 %v1920, %v1923
      %vm1925 = vweird.f32 %v1636
      %vm1926 = vweird.f32 %v1920
      %vm1927 = vmor %vm1925, %vm1926
      %v1928 = vsel %vm1927, %v1920, %v1924
      %v1929 = vand.u32 2147483647, %v1636
      %vm1930 = vcmp.eq.f32.partialorder %v1929, 8.507059e+37
      %v1931 = vand.u32 %v1636, 2147483648
      %v1932 = vor.u32 1.1754944e-38, %v1931
      %v1933 = vsel %vm1930, %v1932, %v1928
      %v1934 = vmul.f32 1.0, %v1933
      %v1935 = vrcp.pop %v1637
      %v1936 = vmul.f32 %v1637, %v1935
      %v1937 = vsub.f32 1.0, %v1936
      %v1938 = vmul.f32 %v1935, %v1937
      %v1939 = vadd.f32 %v1935, %v1938
      %vm1940 = vweird.f32 %v1637
      %vm1941 = vweird.f32 %v1935
      %vm1942 = vmor %vm1940, %vm1941
      %v1943 = vsel %vm1942, %v1935, %v1939
      %v1944 = vand.u32 2147483647, %v1637
      %vm1945 = vcmp.eq.f32.partialorder %v1944, 8.507059e+37
      %v1946 = vand.u32 %v1637, 2147483648
      %v1947 = vor.u32 1.1754944e-38, %v1946
      %v1948 = vsel %vm1945, %v1947, %v1943
      %v1949 = vmul.f32 1.0, %v1948
      %v1950 = vrcp.pop %v1638
      %v1951 = vmul.f32 %v1638, %v1950
      %v1952 = vsub.f32 1.0, %v1951
      %v1953 = vmul.f32 %v1950, %v1952
      %v1954 = vadd.f32 %v1950, %v1953
      %vm1955 = vweird.f32 %v1638
      %vm1956 = vweird.f32 %v1950
      %vm1957 = vmor %vm1955, %vm1956
      %v1958 = vsel %vm1957, %v1950, %v1954
      %v1959 = vand.u32 2147483647, %v1638
      %vm1960 = vcmp.eq.f32.partialorder %v1959, 8.507059e+37
      %v1961 = vand.u32 %v1638, 2147483648
      %v1962 = vor.u32 1.1754944e-38, %v1961
      %v1963 = vsel %vm1960, %v1962, %v1958
      %v1964 = vmul.f32 1.0, %v1963
      %v1965 = vrcp.pop %v1639
      %v1966 = vmul.f32 %v1639, %v1965
      %v1967 = vsub.f32 1.0, %v1966
      %v1968 = vmul.f32 %v1965, %v1967
      %v1969 = vadd.f32 %v1965, %v1968
      %vm1970 = vweird.f32 %v1639
      %vm1971 = vweird.f32 %v1965
      %vm1972 = vmor %vm1970, %vm1971
      %v1973 = vsel %vm1972, %v1965, %v1969
      %v1974 = vand.u32 2147483647, %v1639
      %vm1975 = vcmp.eq.f32.partialorder %v1974, 8.507059e+37
      %v1976 = vand.u32 %v1639, 2147483648
      %v1977 = vor.u32 1.1754944e-38, %v1976
      %v1978 = vsel %vm1975, %v1977, %v1973
      %v1979 = vmul.f32 1.0, %v1978
      %v1980 = vrcp.pop %v1640
      %v1981 = vmul.f32 %v1640, %v1980
      %v1982 = vsub.f32 1.0, %v1981
      %v1983 = vmul.f32 %v1980, %v1982
      %v1984 = vadd.f32 %v1980, %v1983
      %vm1985 = vweird.f32 %v1640
      %vm1986 = vweird.f32 %v1980
      %vm1987 = vmor %vm1985, %vm1986
      %v1988 = vsel %vm1987, %v1980, %v1984
      %v1989 = vand.u32 2147483647, %v1640
      %vm1990 = vcmp.eq.f32.partialorder %v1989, 8.507059e+37
      %v1991 = vand.u32 %v1640, 2147483648
      %v1992 = vor.u32 1.1754944e-38, %v1991
      %v1993 = vsel %vm1990, %v1992, %v1988
      %v1994 = vmul.f32 1.0, %v1993
      %v1995 = vrcp.pop %v1641
      %v1996 = vmul.f32 %v1641, %v1995
      %v1997 = vsub.f32 1.0, %v1996
      %v1998 = vmul.f32 %v1995, %v1997
      %v1999 = vadd.f32 %v1995, %v1998
      %vm2000 = vweird.f32 %v1641
      %vm2001 = vweird.f32 %v1995
      %vm2002 = vmor %vm2000, %vm2001
      %v2003 = vsel %vm2002, %v1995, %v1999
      %v2004 = vand.u32 2147483647, %v1641
      %vm2005 = vcmp.eq.f32.partialorder %v2004, 8.507059e+37
      %v2006 = vand.u32 %v1641, 2147483648
      %v2007 = vor.u32 1.1754944e-38, %v2006
      %v2008 = vsel %vm2005, %v2007, %v2003
      %v2009 = vmul.f32 1.0, %v2008
      %v2010 = vrcp.pop %v1642
      %v2011 = vmul.f32 %v1642, %v2010
      %v2012 = vsub.f32 1.0, %v2011
      %v2013 = vmul.f32 %v2010, %v2012
      %v2014 = vadd.f32 %v2010, %v2013
      %vm2015 = vweird.f32 %v1642
      %vm2016 = vweird.f32 %v2010
      %vm2017 = vmor %vm2015, %vm2016
      %v2018 = vsel %vm2017, %v2010, %v2014
      %v2019 = vand.u32 2147483647, %v1642
      %vm2020 = vcmp.eq.f32.partialorder %v2019, 8.507059e+37
      %v2021 = vand.u32 %v1642, 2147483648
      %v2022 = vor.u32 1.1754944e-38, %v2021
      %v2023 = vsel %vm2020, %v2022, %v2018
      %v2024 = vmul.f32 1.0, %v2023
      %v2025 = vrcp.pop %v1643
      %v2026 = vmul.f32 %v1643, %v2025
      %v2027 = vsub.f32 1.0, %v2026
      %v2028 = vmul.f32 %v2025, %v2027
      %v2029 = vadd.f32 %v2025, %v2028
      %vm2030 = vweird.f32 %v1643
      %vm2031 = vweird.f32 %v2025
      %vm2032 = vmor %vm2030, %vm2031
      %v2033 = vsel %vm2032, %v2025, %v2029
      %v2034 = vand.u32 2147483647, %v1643
      %vm2035 = vcmp.eq.f32.partialorder %v2034, 8.507059e+37
      %v2036 = vand.u32 %v1643, 2147483648
      %v2037 = vor.u32 1.1754944e-38, %v2036
      %v2038 = vsel %vm2035, %v2037, %v2033
      %v2039 = vmul.f32 1.0, %v2038
      %v2040 = vrcp.pop %v1644
      %v2041 = vmul.f32 %v1644, %v2040
      %v2042 = vsub.f32 1.0, %v2041
      %v2043 = vmul.f32 %v2040, %v2042
      %v2044 = vadd.f32 %v2040, %v2043
      %vm2045 = vweird.f32 %v1644
      %vm2046 = vweird.f32 %v2040
      %vm2047 = vmor %vm2045, %vm2046
      %v2048 = vsel %vm2047, %v2040, %v2044
      %v2049 = vand.u32 2147483647, %v1644
      %vm2050 = vcmp.eq.f32.partialorder %v2049, 8.507059e+37
      %v2051 = vand.u32 %v1644, 2147483648
      %v2052 = vor.u32 1.1754944e-38, %v2051
      %v2053 = vsel %vm2050, %v2052, %v2048
      %v2054 = vmul.f32 1.0, %v2053
      %v2055 = vrcp.pop %v1645
      %v2056 = vmul.f32 %v1645, %v2055
      %v2057 = vsub.f32 1.0, %v2056
      %v2058 = vmul.f32 %v2055, %v2057
      %v2059 = vadd.f32 %v2055, %v2058
      %vm2060 = vweird.f32 %v1645
      %vm2061 = vweird.f32 %v2055
      %vm2062 = vmor %vm2060, %vm2061
      %v2063 = vsel %vm2062, %v2055, %v2059
      %v2064 = vand.u32 2147483647, %v1645
      %vm2065 = vcmp.eq.f32.partialorder %v2064, 8.507059e+37
      %v2066 = vand.u32 %v1645, 2147483648
      %v2067 = vor.u32 1.1754944e-38, %v2066
      %v2068 = vsel %vm2065, %v2067, %v2063
      %v2069 = vmul.f32 1.0, %v2068
      %v2070 = vrcp.pop %v1646
      %v2071 = vmul.f32 %v1646, %v2070
      %v2072 = vsub.f32 1.0, %v2071
      %v2073 = vmul.f32 %v2070, %v2072
      %v2074 = vadd.f32 %v2070, %v2073
      %vm2075 = vweird.f32 %v1646
      %vm2076 = vweird.f32 %v2070
      %vm2077 = vmor %vm2075, %vm2076
      %v2078 = vsel %vm2077, %v2070, %v2074
      %v2079 = vand.u32 2147483647, %v1646
      %vm2080 = vcmp.eq.f32.partialorder %v2079, 8.507059e+37
      %v2081 = vand.u32 %v1646, 2147483648
      %v2082 = vor.u32 1.1754944e-38, %v2081
      %v2083 = vsel %vm2080, %v2082, %v2078
      %v2084 = vmul.f32 1.0, %v2083
      %v2085 = vrcp.pop %v1647
      %v2086 = vmul.f32 %v1647, %v2085
      %v2087 = vsub.f32 1.0, %v2086
      %v2088 = vmul.f32 %v2085, %v2087
      %v2089 = vadd.f32 %v2085, %v2088
      %vm2090 = vweird.f32 %v1647
      %vm2091 = vweird.f32 %v2085
      %vm2092 = vmor %vm2090, %vm2091
      %v2093 = vsel %vm2092, %v2085, %v2089
      %v2094 = vand.u32 2147483647, %v1647
      %vm2095 = vcmp.eq.f32.partialorder %v2094, 8.507059e+37
      %v2096 = vand.u32 %v1647, 2147483648
      %v2097 = vor.u32 1.1754944e-38, %v2096
      %v2098 = vsel %vm2095, %v2097, %v2093
      %v2099 = vmul.f32 1.0, %v2098
      %v2100 = vrcp.pop %v1648
      %v2101 = vmul.f32 %v1648, %v2100
      %v2102 = vsub.f32 1.0, %v2101
      %v2103 = vmul.f32 %v2100, %v2102
      %v2104 = vadd.f32 %v2100, %v2103
      %vm2105 = vweird.f32 %v1648
      %vm2106 = vweird.f32 %v2100
      %vm2107 = vmor %vm2105, %vm2106
      %v2108 = vsel %vm2107, %v2100, %v2104
      %v2109 = vand.u32 2147483647, %v1648
      %vm2110 = vcmp.eq.f32.partialorder %v2109, 8.507059e+37
      %v2111 = vand.u32 %v1648, 2147483648
      %v2112 = vor.u32 1.1754944e-38, %v2111
      %v2113 = vsel %vm2110, %v2112, %v2108
      %v2114 = vmul.f32 1.0, %v2113
      %v2115 = vrcp.pop %v1649
      %v2116 = vmul.f32 %v1649, %v2115
      %v2117 = vsub.f32 1.0, %v2116
      %v2118 = vmul.f32 %v2115, %v2117
      %v2119 = vadd.f32 %v2115, %v2118
      %vm2120 = vweird.f32 %v1649
      %vm2121 = vweird.f32 %v2115
      %vm2122 = vmor %vm2120, %vm2121
      %v2123 = vsel %vm2122, %v2115, %v2119
      %v2124 = vand.u32 2147483647, %v1649
      %vm2125 = vcmp.eq.f32.partialorder %v2124, 8.507059e+37
      %v2126 = vand.u32 %v1649, 2147483648
      %v2127 = vor.u32 1.1754944e-38, %v2126
      %v2128 = vsel %vm2125, %v2127, %v2123
      %v2129 = vmul.f32 1.0, %v2128
      %v2130 = vmul.f32 %v1443, %v1664
      %v2131 = vmul.f32 %v1445, %v1679
      %v2132 = vmul.f32 %v1448, %v1694
      %v2133 = vmul.f32 %v1450, %v1709
      %v2134 = vmul.f32 %v1453, %v1724
      %v2135 = vmul.f32 %v1455, %v1739
      %v2136 = vmul.f32 %v1458, %v1754
      %v2137 = vmul.f32 %v1460, %v1769
      %v2138 = vmul.f32 %v1463, %v1784
      %v2139 = vmul.f32 %v1465, %v1799
      %v2140 = vmul.f32 %v1468, %v1814
      %v2141 = vmul.f32 %v1470, %v1829
      %v2142 = vmul.f32 %v1473, %v1844
      %v2143 = vmul.f32 %v1475, %v1859
      %v2144 = vmul.f32 %v1478, %v1874
      %v2145 = vmul.f32 %v1480, %v1889
      %v2146 = vmul.f32 %v1483, %v1904
      %v2147 = vmul.f32 %v1485, %v1919
      %v2148 = vmul.f32 %v1488, %v1934
      %v2149 = vmul.f32 %v1490, %v1949
      %v2150 = vmul.f32 %v1493, %v1964
      %v2151 = vmul.f32 %v1495, %v1979
      %v2152 = vmul.f32 %v1498, %v1994
      %v2153 = vmul.f32 %v1500, %v2009
      %v2154 = vmul.f32 %v1503, %v2024
      %v2155 = vmul.f32 %v1505, %v2039
      %v2156 = vmul.f32 %v1508, %v2054
      %v2157 = vmul.f32 %v1510, %v2069
      %v2158 = vmul.f32 %v1513, %v2084
      %v2159 = vmul.f32 %v1515, %v2099
      %v2160 = vmul.f32 %v1518, %v2114
      %v2161 = vmul.f32 %v1520, %v2129
      %v2162 = vld [vmem:[%s5] sm:$0xf]
      %v2163 = vld [vmem:[%s6] sm:$0x1]
      %v2165 = vperm.slane %v2163, 0
      %v2168 = vsel %vm530, %v2162, 0
      %2170 = vmatpush.bf16.msra.mxu0 0
      %2171 = vmatpush.bf16.msra.mxu0 0
      %2172 = vmatpush.bf16.msra.mxu0 0
      %2173 = vmatpush.bf16.msra.mxu0 0
      %2174 = vmatpush.bf16.msra.mxu0 0
      %2175 = vmatpush.bf16.msra.mxu0 0
      %2176 = vmatpush.bf16.msra.mxu0 0
      %2177 = vmatpush.bf16.msra.mxu0 %v2168
      %2178 = vmatmul.bf16.gmra.mxu0 %v483
      %v2179 = vpop.f32.mrf.mxu0
      %v2180 = vadd.f32 %v2165, %v2179
      %v2181 = vpop.f32.mrf.mxu0
      %v2182 = vadd.f32 %v2165, %v2181
      %2183 = vmatmul.bf16.gmra.mxu0 %v486
      %v2184 = vpop.f32.mrf.mxu0
      %v2185 = vadd.f32 %v2165, %v2184
      %v2186 = vpop.f32.mrf.mxu0
      %v2187 = vadd.f32 %v2165, %v2186
      %2188 = vmatmul.bf16.gmra.mxu0 %v489
      %v2189 = vpop.f32.mrf.mxu0
      %v2190 = vadd.f32 %v2165, %v2189
      %v2191 = vpop.f32.mrf.mxu0
      %v2192 = vadd.f32 %v2165, %v2191
      %2193 = vmatmul.bf16.gmra.mxu0 %v492
      %v2194 = vpop.f32.mrf.mxu0
      %v2195 = vadd.f32 %v2165, %v2194
      %v2196 = vpop.f32.mrf.mxu0
      %v2197 = vadd.f32 %v2165, %v2196
      %2198 = vmatmul.bf16.gmra.mxu0 %v495
      %v2199 = vpop.f32.mrf.mxu0
      %v2200 = vadd.f32 %v2165, %v2199
      %v2201 = vpop.f32.mrf.mxu0
      %v2202 = vadd.f32 %v2165, %v2201
      %2203 = vmatmul.bf16.gmra.mxu0 %v498
      %v2204 = vpop.f32.mrf.mxu0
      %v2205 = vadd.f32 %v2165, %v2204
      %v2206 = vpop.f32.mrf.mxu0
      %v2207 = vadd.f32 %v2165, %v2206
      %2208 = vmatmul.bf16.gmra.mxu0 %v501
      %v2209 = vpop.f32.mrf.mxu0
      %v2210 = vadd.f32 %v2165, %v2209
      %v2211 = vpop.f32.mrf.mxu0
      %v2212 = vadd.f32 %v2165, %v2211
      %2213 = vmatmul.bf16.gmra.mxu0 %v504
      %v2214 = vpop.f32.mrf.mxu0
      %v2215 = vadd.f32 %v2165, %v2214
      %v2216 = vpop.f32.mrf.mxu0
      %v2217 = vadd.f32 %v2165, %v2216
      %2218 = vmatmul.bf16.gmra.mxu0 %v507
      %v2219 = vpop.f32.mrf.mxu0
      %v2220 = vadd.f32 %v2165, %v2219
      %v2221 = vpop.f32.mrf.mxu0
      %v2222 = vadd.f32 %v2165, %v2221
      %2223 = vmatmul.bf16.gmra.mxu0 %v510
      %v2224 = vpop.f32.mrf.mxu0
      %v2225 = vadd.f32 %v2165, %v2224
      %v2226 = vpop.f32.mrf.mxu0
      %v2227 = vadd.f32 %v2165, %v2226
      %2228 = vmatmul.bf16.gmra.mxu0 %v513
      %v2229 = vpop.f32.mrf.mxu0
      %v2230 = vadd.f32 %v2165, %v2229
      %v2231 = vpop.f32.mrf.mxu0
      %v2232 = vadd.f32 %v2165, %v2231
      %2233 = vmatmul.bf16.gmra.mxu0 %v516
      %v2234 = vpop.f32.mrf.mxu0
      %v2235 = vadd.f32 %v2165, %v2234
      %v2236 = vpop.f32.mrf.mxu0
      %v2237 = vadd.f32 %v2165, %v2236
      %2238 = vmatmul.bf16.gmra.mxu0 %v519
      %v2239 = vpop.f32.mrf.mxu0
      %v2240 = vadd.f32 %v2165, %v2239
      %v2241 = vpop.f32.mrf.mxu0
      %v2242 = vadd.f32 %v2165, %v2241
      %2243 = vmatmul.bf16.gmra.mxu0 %v522
      %v2244 = vpop.f32.mrf.mxu0
      %v2245 = vadd.f32 %v2165, %v2244
      %v2246 = vpop.f32.mrf.mxu0
      %v2247 = vadd.f32 %v2165, %v2246
      %2248 = vmatmul.bf16.gmra.mxu0 %v525
      %v2249 = vpop.f32.mrf.mxu0
      %v2250 = vadd.f32 %v2165, %v2249
      %v2251 = vpop.f32.mrf.mxu0
      %v2252 = vadd.f32 %v2165, %v2251
      %2253 = vmatmul.bf16.gmra.mxu0 %v528
      %v2254 = vpop.f32.mrf.mxu0
      %v2255 = vadd.f32 %v2165, %v2254
      %v2256 = vpop.f32.mrf.mxu0
      %v2257 = vadd.f32 %v2165, %v2256
      %2258 = vdwg.mxu0
      %v2259 = vxor.u32 %v2180, 2147483648
      %v2260 = vxor.u32 %v2182, 2147483648
      %v2261 = vxor.u32 %v2185, 2147483648
      %v2262 = vxor.u32 %v2187, 2147483648
      %v2263 = vxor.u32 %v2190, 2147483648
      %v2264 = vxor.u32 %v2192, 2147483648
      %v2265 = vxor.u32 %v2195, 2147483648
      %v2266 = vxor.u32 %v2197, 2147483648
      %v2267 = vxor.u32 %v2200, 2147483648
      %v2268 = vxor.u32 %v2202, 2147483648
      %v2269 = vxor.u32 %v2205, 2147483648
      %v2270 = vxor.u32 %v2207, 2147483648
      %v2271 = vxor.u32 %v2210, 2147483648
      %v2272 = vxor.u32 %v2212, 2147483648
      %v2273 = vxor.u32 %v2215, 2147483648
      %v2274 = vxor.u32 %v2217, 2147483648
      %v2275 = vxor.u32 %v2220, 2147483648
      %v2276 = vxor.u32 %v2222, 2147483648
      %v2277 = vxor.u32 %v2225, 2147483648
      %v2278 = vxor.u32 %v2227, 2147483648
      %v2279 = vxor.u32 %v2230, 2147483648
      %v2280 = vxor.u32 %v2232, 2147483648
      %v2281 = vxor.u32 %v2235, 2147483648
      %v2282 = vxor.u32 %v2237, 2147483648
      %v2283 = vxor.u32 %v2240, 2147483648
      %v2284 = vxor.u32 %v2242, 2147483648
      %v2285 = vxor.u32 %v2245, 2147483648
      %v2286 = vxor.u32 %v2247, 2147483648
      %v2287 = vxor.u32 %v2250, 2147483648
      %v2288 = vxor.u32 %v2252, 2147483648
      %v2289 = vxor.u32 %v2255, 2147483648
      %v2290 = vxor.u32 %v2257, 2147483648
      %v2291 = vmul.f32 %v2259, 1.442695
      %v2292 = vpow.pop %v2291
      %v2293 = vmul.f32 %v2260, 1.442695
      %v2294 = vpow.pop %v2293
      %v2295 = vmul.f32 %v2261, 1.442695
      %v2296 = vpow.pop %v2295
      %v2297 = vmul.f32 %v2262, 1.442695
      %v2298 = vpow.pop %v2297
      %v2299 = vmul.f32 %v2263, 1.442695
      %v2300 = vpow.pop %v2299
      %v2301 = vmul.f32 %v2264, 1.442695
      %v2302 = vpow.pop %v2301
      %v2303 = vmul.f32 %v2265, 1.442695
      %v2304 = vpow.pop %v2303
      %v2305 = vmul.f32 %v2266, 1.442695
      %v2306 = vpow.pop %v2305
      %v2307 = vmul.f32 %v2267, 1.442695
      %v2308 = vpow.pop %v2307
      %v2309 = vmul.f32 %v2268, 1.442695
      %v2310 = vpow.pop %v2309
      %v2311 = vmul.f32 %v2269, 1.442695
      %v2312 = vpow.pop %v2311
      %v2313 = vmul.f32 %v2270, 1.442695
      %v2314 = vpow.pop %v2313
      %v2315 = vmul.f32 %v2271, 1.442695
      %v2316 = vpow.pop %v2315
      %v2317 = vmul.f32 %v2272, 1.442695
      %v2318 = vpow.pop %v2317
      %v2319 = vmul.f32 %v2273, 1.442695
      %v2320 = vpow.pop %v2319
      %v2321 = vmul.f32 %v2274, 1.442695
      %v2322 = vpow.pop %v2321
      %v2323 = vmul.f32 %v2275, 1.442695
      %v2324 = vpow.pop %v2323
      %v2325 = vmul.f32 %v2276, 1.442695
      %v2326 = vpow.pop %v2325
      %v2327 = vmul.f32 %v2277, 1.442695
      %v2328 = vpow.pop %v2327
      %v2329 = vmul.f32 %v2278, 1.442695
      %v2330 = vpow.pop %v2329
      %v2331 = vmul.f32 %v2279, 1.442695
      %v2332 = vpow.pop %v2331
      %v2333 = vmul.f32 %v2280, 1.442695
      %v2334 = vpow.pop %v2333
      %v2335 = vmul.f32 %v2281, 1.442695
      %v2336 = vpow.pop %v2335
      %v2337 = vmul.f32 %v2282, 1.442695
      %v2338 = vpow.pop %v2337
      %v2339 = vmul.f32 %v2283, 1.442695
      %v2340 = vpow.pop %v2339
      %v2341 = vmul.f32 %v2284, 1.442695
      %v2342 = vpow.pop %v2341
      %v2343 = vmul.f32 %v2285, 1.442695
      %v2344 = vpow.pop %v2343
      %v2345 = vmul.f32 %v2286, 1.442695
      %v2346 = vpow.pop %v2345
      %v2347 = vmul.f32 %v2287, 1.442695
      %v2348 = vpow.pop %v2347
      %v2349 = vmul.f32 %v2288, 1.442695
      %v2350 = vpow.pop %v2349
      %v2351 = vmul.f32 %v2289, 1.442695
      %v2352 = vpow.pop %v2351
      %v2353 = vmul.f32 %v2290, 1.442695
      %v2354 = vpow.pop %v2353
      %v2355 = vadd.f32 %v2292, 1.0
      %v2356 = vadd.f32 %v2294, 1.0
      %v2357 = vadd.f32 %v2296, 1.0
      %v2358 = vadd.f32 %v2298, 1.0
      %v2359 = vadd.f32 %v2300, 1.0
      %v2360 = vadd.f32 %v2302, 1.0
      %v2361 = vadd.f32 %v2304, 1.0
      %v2362 = vadd.f32 %v2306, 1.0
      %v2363 = vadd.f32 %v2308, 1.0
      %v2364 = vadd.f32 %v2310, 1.0
      %v2365 = vadd.f32 %v2312, 1.0
      %v2366 = vadd.f32 %v2314, 1.0
      %v2367 = vadd.f32 %v2316, 1.0
      %v2368 = vadd.f32 %v2318, 1.0
      %v2369 = vadd.f32 %v2320, 1.0
      %v2370 = vadd.f32 %v2322, 1.0
      %v2371 = vadd.f32 %v2324, 1.0
      %v2372 = vadd.f32 %v2326, 1.0
      %v2373 = vadd.f32 %v2328, 1.0
      %v2374 = vadd.f32 %v2330, 1.0
      %v2375 = vadd.f32 %v2332, 1.0
      %v2376 = vadd.f32 %v2334, 1.0
      %v2377 = vadd.f32 %v2336, 1.0
      %v2378 = vadd.f32 %v2338, 1.0
      %v2379 = vadd.f32 %v2340, 1.0
      %v2380 = vadd.f32 %v2342, 1.0
      %v2381 = vadd.f32 %v2344, 1.0
      %v2382 = vadd.f32 %v2346, 1.0
      %v2383 = vadd.f32 %v2348, 1.0
      %v2384 = vadd.f32 %v2350, 1.0
      %v2385 = vadd.f32 %v2352, 1.0
      %v2386 = vadd.f32 %v2354, 1.0
      %v2387 = vrcp.pop %v2355
      %v2388 = vmul.f32 %v2355, %v2387
      %v2389 = vsub.f32 1.0, %v2388
      %v2390 = vmul.f32 %v2387, %v2389
      %v2391 = vadd.f32 %v2387, %v2390
      %vm2392 = vweird.f32 %v2355
      %vm2393 = vweird.f32 %v2387
      %vm2394 = vmor %vm2392, %vm2393
      %v2395 = vsel %vm2394, %v2387, %v2391
      %v2396 = vand.u32 2147483647, %v2355
      %vm2397 = vcmp.eq.f32.partialorder %v2396, 8.507059e+37
      %v2398 = vand.u32 %v2355, 2147483648
      %v2399 = vor.u32 1.1754944e-38, %v2398
      %v2400 = vsel %vm2397, %v2399, %v2395
      %v2401 = vmul.f32 1.0, %v2400
      %v2402 = vrcp.pop %v2356
      %v2403 = vmul.f32 %v2356, %v2402
      %v2404 = vsub.f32 1.0, %v2403
      %v2405 = vmul.f32 %v2402, %v2404
      %v2406 = vadd.f32 %v2402, %v2405
      %vm2407 = vweird.f32 %v2356
      %vm2408 = vweird.f32 %v2402
      %vm2409 = vmor %vm2407, %vm2408
      %v2410 = vsel %vm2409, %v2402, %v2406
      %v2411 = vand.u32 2147483647, %v2356
      %vm2412 = vcmp.eq.f32.partialorder %v2411, 8.507059e+37
      %v2413 = vand.u32 %v2356, 2147483648
      %v2414 = vor.u32 1.1754944e-38, %v2413
      %v2415 = vsel %vm2412, %v2414, %v2410
      %v2416 = vmul.f32 1.0, %v2415
      %v2417 = vrcp.pop %v2357
      %v2418 = vmul.f32 %v2357, %v2417
      %v2419 = vsub.f32 1.0, %v2418
      %v2420 = vmul.f32 %v2417, %v2419
      %v2421 = vadd.f32 %v2417, %v2420
      %vm2422 = vweird.f32 %v2357
      %vm2423 = vweird.f32 %v2417
      %vm2424 = vmor %vm2422, %vm2423
      %v2425 = vsel %vm2424, %v2417, %v2421
      %v2426 = vand.u32 2147483647, %v2357
      %vm2427 = vcmp.eq.f32.partialorder %v2426, 8.507059e+37
      %v2428 = vand.u32 %v2357, 2147483648
      %v2429 = vor.u32 1.1754944e-38, %v2428
      %v2430 = vsel %vm2427, %v2429, %v2425
      %v2431 = vmul.f32 1.0, %v2430
      %v2432 = vrcp.pop %v2358
      %v2433 = vmul.f32 %v2358, %v2432
      %v2434 = vsub.f32 1.0, %v2433
      %v2435 = vmul.f32 %v2432, %v2434
      %v2436 = vadd.f32 %v2432, %v2435
      %vm2437 = vweird.f32 %v2358
      %vm2438 = vweird.f32 %v2432
      %vm2439 = vmor %vm2437, %vm2438
      %v2440 = vsel %vm2439, %v2432, %v2436
      %v2441 = vand.u32 2147483647, %v2358
      %vm2442 = vcmp.eq.f32.partialorder %v2441, 8.507059e+37
      %v2443 = vand.u32 %v2358, 2147483648
      %v2444 = vor.u32 1.1754944e-38, %v2443
      %v2445 = vsel %vm2442, %v2444, %v2440
      %v2446 = vmul.f32 1.0, %v2445
      %v2447 = vrcp.pop %v2359
      %v2448 = vmul.f32 %v2359, %v2447
      %v2449 = vsub.f32 1.0, %v2448
      %v2450 = vmul.f32 %v2447, %v2449
      %v2451 = vadd.f32 %v2447, %v2450
      %vm2452 = vweird.f32 %v2359
      %vm2453 = vweird.f32 %v2447
      %vm2454 = vmor %vm2452, %vm2453
      %v2455 = vsel %vm2454, %v2447, %v2451
      %v2456 = vand.u32 2147483647, %v2359
      %vm2457 = vcmp.eq.f32.partialorder %v2456, 8.507059e+37
      %v2458 = vand.u32 %v2359, 2147483648
      %v2459 = vor.u32 1.1754944e-38, %v2458
      %v2460 = vsel %vm2457, %v2459, %v2455
      %v2461 = vmul.f32 1.0, %v2460
      %v2462 = vrcp.pop %v2360
      %v2463 = vmul.f32 %v2360, %v2462
      %v2464 = vsub.f32 1.0, %v2463
      %v2465 = vmul.f32 %v2462, %v2464
      %v2466 = vadd.f32 %v2462, %v2465
      %vm2467 = vweird.f32 %v2360
      %vm2468 = vweird.f32 %v2462
      %vm2469 = vmor %vm2467, %vm2468
      %v2470 = vsel %vm2469, %v2462, %v2466
      %v2471 = vand.u32 2147483647, %v2360
      %vm2472 = vcmp.eq.f32.partialorder %v2471, 8.507059e+37
      %v2473 = vand.u32 %v2360, 2147483648
      %v2474 = vor.u32 1.1754944e-38, %v2473
      %v2475 = vsel %vm2472, %v2474, %v2470
      %v2476 = vmul.f32 1.0, %v2475
      %v2477 = vrcp.pop %v2361
      %v2478 = vmul.f32 %v2361, %v2477
      %v2479 = vsub.f32 1.0, %v2478
      %v2480 = vmul.f32 %v2477, %v2479
      %v2481 = vadd.f32 %v2477, %v2480
      %vm2482 = vweird.f32 %v2361
      %vm2483 = vweird.f32 %v2477
      %vm2484 = vmor %vm2482, %vm2483
      %v2485 = vsel %vm2484, %v2477, %v2481
      %v2486 = vand.u32 2147483647, %v2361
      %vm2487 = vcmp.eq.f32.partialorder %v2486, 8.507059e+37
      %v2488 = vand.u32 %v2361, 2147483648
      %v2489 = vor.u32 1.1754944e-38, %v2488
      %v2490 = vsel %vm2487, %v2489, %v2485
      %v2491 = vmul.f32 1.0, %v2490
      %v2492 = vrcp.pop %v2362
      %v2493 = vmul.f32 %v2362, %v2492
      %v2494 = vsub.f32 1.0, %v2493
      %v2495 = vmul.f32 %v2492, %v2494
      %v2496 = vadd.f32 %v2492, %v2495
      %vm2497 = vweird.f32 %v2362
      %vm2498 = vweird.f32 %v2492
      %vm2499 = vmor %vm2497, %vm2498
      %v2500 = vsel %vm2499, %v2492, %v2496
      %v2501 = vand.u32 2147483647, %v2362
      %vm2502 = vcmp.eq.f32.partialorder %v2501, 8.507059e+37
      %v2503 = vand.u32 %v2362, 2147483648
      %v2504 = vor.u32 1.1754944e-38, %v2503
      %v2505 = vsel %vm2502, %v2504, %v2500
      %v2506 = vmul.f32 1.0, %v2505
      %v2507 = vrcp.pop %v2363
      %v2508 = vmul.f32 %v2363, %v2507
      %v2509 = vsub.f32 1.0, %v2508
      %v2510 = vmul.f32 %v2507, %v2509
      %v2511 = vadd.f32 %v2507, %v2510
      %vm2512 = vweird.f32 %v2363
      %vm2513 = vweird.f32 %v2507
      %vm2514 = vmor %vm2512, %vm2513
      %v2515 = vsel %vm2514, %v2507, %v2511
      %v2516 = vand.u32 2147483647, %v2363
      %vm2517 = vcmp.eq.f32.partialorder %v2516, 8.507059e+37
      %v2518 = vand.u32 %v2363, 2147483648
      %v2519 = vor.u32 1.1754944e-38, %v2518
      %v2520 = vsel %vm2517, %v2519, %v2515
      %v2521 = vmul.f32 1.0, %v2520
      %v2522 = vrcp.pop %v2364
      %v2523 = vmul.f32 %v2364, %v2522
      %v2524 = vsub.f32 1.0, %v2523
      %v2525 = vmul.f32 %v2522, %v2524
      %v2526 = vadd.f32 %v2522, %v2525
      %vm2527 = vweird.f32 %v2364
      %vm2528 = vweird.f32 %v2522
      %vm2529 = vmor %vm2527, %vm2528
      %v2530 = vsel %vm2529, %v2522, %v2526
      %v2531 = vand.u32 2147483647, %v2364
      %vm2532 = vcmp.eq.f32.partialorder %v2531, 8.507059e+37
      %v2533 = vand.u32 %v2364, 2147483648
      %v2534 = vor.u32 1.1754944e-38, %v2533
      %v2535 = vsel %vm2532, %v2534, %v2530
      %v2536 = vmul.f32 1.0, %v2535
      %v2537 = vrcp.pop %v2365
      %v2538 = vmul.f32 %v2365, %v2537
      %v2539 = vsub.f32 1.0, %v2538
      %v2540 = vmul.f32 %v2537, %v2539
      %v2541 = vadd.f32 %v2537, %v2540
      %vm2542 = vweird.f32 %v2365
      %vm2543 = vweird.f32 %v2537
      %vm2544 = vmor %vm2542, %vm2543
      %v2545 = vsel %vm2544, %v2537, %v2541
      %v2546 = vand.u32 2147483647, %v2365
      %vm2547 = vcmp.eq.f32.partialorder %v2546, 8.507059e+37
      %v2548 = vand.u32 %v2365, 2147483648
      %v2549 = vor.u32 1.1754944e-38, %v2548
      %v2550 = vsel %vm2547, %v2549, %v2545
      %v2551 = vmul.f32 1.0, %v2550
      %v2552 = vrcp.pop %v2366
      %v2553 = vmul.f32 %v2366, %v2552
      %v2554 = vsub.f32 1.0, %v2553
      %v2555 = vmul.f32 %v2552, %v2554
      %v2556 = vadd.f32 %v2552, %v2555
      %vm2557 = vweird.f32 %v2366
      %vm2558 = vweird.f32 %v2552
      %vm2559 = vmor %vm2557, %vm2558
      %v2560 = vsel %vm2559, %v2552, %v2556
      %v2561 = vand.u32 2147483647, %v2366
      %vm2562 = vcmp.eq.f32.partialorder %v2561, 8.507059e+37
      %v2563 = vand.u32 %v2366, 2147483648
      %v2564 = vor.u32 1.1754944e-38, %v2563
      %v2565 = vsel %vm2562, %v2564, %v2560
      %v2566 = vmul.f32 1.0, %v2565
      %v2567 = vrcp.pop %v2367
      %v2568 = vmul.f32 %v2367, %v2567
      %v2569 = vsub.f32 1.0, %v2568
      %v2570 = vmul.f32 %v2567, %v2569
      %v2571 = vadd.f32 %v2567, %v2570
      %vm2572 = vweird.f32 %v2367
      %vm2573 = vweird.f32 %v2567
      %vm2574 = vmor %vm2572, %vm2573
      %v2575 = vsel %vm2574, %v2567, %v2571
      %v2576 = vand.u32 2147483647, %v2367
      %vm2577 = vcmp.eq.f32.partialorder %v2576, 8.507059e+37
      %v2578 = vand.u32 %v2367, 2147483648
      %v2579 = vor.u32 1.1754944e-38, %v2578
      %v2580 = vsel %vm2577, %v2579, %v2575
      %v2581 = vmul.f32 1.0, %v2580
      %v2582 = vrcp.pop %v2368
      %v2583 = vmul.f32 %v2368, %v2582
      %v2584 = vsub.f32 1.0, %v2583
      %v2585 = vmul.f32 %v2582, %v2584
      %v2586 = vadd.f32 %v2582, %v2585
      %vm2587 = vweird.f32 %v2368
      %vm2588 = vweird.f32 %v2582
      %vm2589 = vmor %vm2587, %vm2588
      %v2590 = vsel %vm2589, %v2582, %v2586
      %v2591 = vand.u32 2147483647, %v2368
      %vm2592 = vcmp.eq.f32.partialorder %v2591, 8.507059e+37
      %v2593 = vand.u32 %v2368, 2147483648
      %v2594 = vor.u32 1.1754944e-38, %v2593
      %v2595 = vsel %vm2592, %v2594, %v2590
      %v2596 = vmul.f32 1.0, %v2595
      %v2597 = vrcp.pop %v2369
      %v2598 = vmul.f32 %v2369, %v2597
      %v2599 = vsub.f32 1.0, %v2598
      %v2600 = vmul.f32 %v2597, %v2599
      %v2601 = vadd.f32 %v2597, %v2600
      %vm2602 = vweird.f32 %v2369
      %vm2603 = vweird.f32 %v2597
      %vm2604 = vmor %vm2602, %vm2603
      %v2605 = vsel %vm2604, %v2597, %v2601
      %v2606 = vand.u32 2147483647, %v2369
      %vm2607 = vcmp.eq.f32.partialorder %v2606, 8.507059e+37
      %v2608 = vand.u32 %v2369, 2147483648
      %v2609 = vor.u32 1.1754944e-38, %v2608
      %v2610 = vsel %vm2607, %v2609, %v2605
      %v2611 = vmul.f32 1.0, %v2610
      %v2612 = vrcp.pop %v2370
      %v2613 = vmul.f32 %v2370, %v2612
      %v2614 = vsub.f32 1.0, %v2613
      %v2615 = vmul.f32 %v2612, %v2614
      %v2616 = vadd.f32 %v2612, %v2615
      %vm2617 = vweird.f32 %v2370
      %vm2618 = vweird.f32 %v2612
      %vm2619 = vmor %vm2617, %vm2618
      %v2620 = vsel %vm2619, %v2612, %v2616
      %v2621 = vand.u32 2147483647, %v2370
      %vm2622 = vcmp.eq.f32.partialorder %v2621, 8.507059e+37
      %v2623 = vand.u32 %v2370, 2147483648
      %v2624 = vor.u32 1.1754944e-38, %v2623
      %v2625 = vsel %vm2622, %v2624, %v2620
      %v2626 = vmul.f32 1.0, %v2625
      %v2627 = vrcp.pop %v2371
      %v2628 = vmul.f32 %v2371, %v2627
      %v2629 = vsub.f32 1.0, %v2628
      %v2630 = vmul.f32 %v2627, %v2629
      %v2631 = vadd.f32 %v2627, %v2630
      %vm2632 = vweird.f32 %v2371
      %vm2633 = vweird.f32 %v2627
      %vm2634 = vmor %vm2632, %vm2633
      %v2635 = vsel %vm2634, %v2627, %v2631
      %v2636 = vand.u32 2147483647, %v2371
      %vm2637 = vcmp.eq.f32.partialorder %v2636, 8.507059e+37
      %v2638 = vand.u32 %v2371, 2147483648
      %v2639 = vor.u32 1.1754944e-38, %v2638
      %v2640 = vsel %vm2637, %v2639, %v2635
      %v2641 = vmul.f32 1.0, %v2640
      %v2642 = vrcp.pop %v2372
      %v2643 = vmul.f32 %v2372, %v2642
      %v2644 = vsub.f32 1.0, %v2643
      %v2645 = vmul.f32 %v2642, %v2644
      %v2646 = vadd.f32 %v2642, %v2645
      %vm2647 = vweird.f32 %v2372
      %vm2648 = vweird.f32 %v2642
      %vm2649 = vmor %vm2647, %vm2648
      %v2650 = vsel %vm2649, %v2642, %v2646
      %v2651 = vand.u32 2147483647, %v2372
      %vm2652 = vcmp.eq.f32.partialorder %v2651, 8.507059e+37
      %v2653 = vand.u32 %v2372, 2147483648
      %v2654 = vor.u32 1.1754944e-38, %v2653
      %v2655 = vsel %vm2652, %v2654, %v2650
      %v2656 = vmul.f32 1.0, %v2655
      %v2657 = vrcp.pop %v2373
      %v2658 = vmul.f32 %v2373, %v2657
      %v2659 = vsub.f32 1.0, %v2658
      %v2660 = vmul.f32 %v2657, %v2659
      %v2661 = vadd.f32 %v2657, %v2660
      %vm2662 = vweird.f32 %v2373
      %vm2663 = vweird.f32 %v2657
      %vm2664 = vmor %vm2662, %vm2663
      %v2665 = vsel %vm2664, %v2657, %v2661
      %v2666 = vand.u32 2147483647, %v2373
      %vm2667 = vcmp.eq.f32.partialorder %v2666, 8.507059e+37
      %v2668 = vand.u32 %v2373, 2147483648
      %v2669 = vor.u32 1.1754944e-38, %v2668
      %v2670 = vsel %vm2667, %v2669, %v2665
      %v2671 = vmul.f32 1.0, %v2670
      %v2672 = vrcp.pop %v2374
      %v2673 = vmul.f32 %v2374, %v2672
      %v2674 = vsub.f32 1.0, %v2673
      %v2675 = vmul.f32 %v2672, %v2674
      %v2676 = vadd.f32 %v2672, %v2675
      %vm2677 = vweird.f32 %v2374
      %vm2678 = vweird.f32 %v2672
      %vm2679 = vmor %vm2677, %vm2678
      %v2680 = vsel %vm2679, %v2672, %v2676
      %v2681 = vand.u32 2147483647, %v2374
      %vm2682 = vcmp.eq.f32.partialorder %v2681, 8.507059e+37
      %v2683 = vand.u32 %v2374, 2147483648
      %v2684 = vor.u32 1.1754944e-38, %v2683
      %v2685 = vsel %vm2682, %v2684, %v2680
      %v2686 = vmul.f32 1.0, %v2685
      %v2687 = vrcp.pop %v2375
      %v2688 = vmul.f32 %v2375, %v2687
      %v2689 = vsub.f32 1.0, %v2688
      %v2690 = vmul.f32 %v2687, %v2689
      %v2691 = vadd.f32 %v2687, %v2690
      %vm2692 = vweird.f32 %v2375
      %vm2693 = vweird.f32 %v2687
      %vm2694 = vmor %vm2692, %vm2693
      %v2695 = vsel %vm2694, %v2687, %v2691
      %v2696 = vand.u32 2147483647, %v2375
      %vm2697 = vcmp.eq.f32.partialorder %v2696, 8.507059e+37
      %v2698 = vand.u32 %v2375, 2147483648
      %v2699 = vor.u32 1.1754944e-38, %v2698
      %v2700 = vsel %vm2697, %v2699, %v2695
      %v2701 = vmul.f32 1.0, %v2700
      %v2702 = vrcp.pop %v2376
      %v2703 = vmul.f32 %v2376, %v2702
      %v2704 = vsub.f32 1.0, %v2703
      %v2705 = vmul.f32 %v2702, %v2704
      %v2706 = vadd.f32 %v2702, %v2705
      %vm2707 = vweird.f32 %v2376
      %vm2708 = vweird.f32 %v2702
      %vm2709 = vmor %vm2707, %vm2708
      %v2710 = vsel %vm2709, %v2702, %v2706
      %v2711 = vand.u32 2147483647, %v2376
      %vm2712 = vcmp.eq.f32.partialorder %v2711, 8.507059e+37
      %v2713 = vand.u32 %v2376, 2147483648
      %v2714 = vor.u32 1.1754944e-38, %v2713
      %v2715 = vsel %vm2712, %v2714, %v2710
      %v2716 = vmul.f32 1.0, %v2715
      %v2717 = vrcp.pop %v2377
      %v2718 = vmul.f32 %v2377, %v2717
      %v2719 = vsub.f32 1.0, %v2718
      %v2720 = vmul.f32 %v2717, %v2719
      %v2721 = vadd.f32 %v2717, %v2720
      %vm2722 = vweird.f32 %v2377
      %vm2723 = vweird.f32 %v2717
      %vm2724 = vmor %vm2722, %vm2723
      %v2725 = vsel %vm2724, %v2717, %v2721
      %v2726 = vand.u32 2147483647, %v2377
      %vm2727 = vcmp.eq.f32.partialorder %v2726, 8.507059e+37
      %v2728 = vand.u32 %v2377, 2147483648
      %v2729 = vor.u32 1.1754944e-38, %v2728
      %v2730 = vsel %vm2727, %v2729, %v2725
      %v2731 = vmul.f32 1.0, %v2730
      %v2732 = vrcp.pop %v2378
      %v2733 = vmul.f32 %v2378, %v2732
      %v2734 = vsub.f32 1.0, %v2733
      %v2735 = vmul.f32 %v2732, %v2734
      %v2736 = vadd.f32 %v2732, %v2735
      %vm2737 = vweird.f32 %v2378
      %vm2738 = vweird.f32 %v2732
      %vm2739 = vmor %vm2737, %vm2738
      %v2740 = vsel %vm2739, %v2732, %v2736
      %v2741 = vand.u32 2147483647, %v2378
      %vm2742 = vcmp.eq.f32.partialorder %v2741, 8.507059e+37
      %v2743 = vand.u32 %v2378, 2147483648
      %v2744 = vor.u32 1.1754944e-38, %v2743
      %v2745 = vsel %vm2742, %v2744, %v2740
      %v2746 = vmul.f32 1.0, %v2745
      %v2747 = vrcp.pop %v2379
      %v2748 = vmul.f32 %v2379, %v2747
      %v2749 = vsub.f32 1.0, %v2748
      %v2750 = vmul.f32 %v2747, %v2749
      %v2751 = vadd.f32 %v2747, %v2750
      %vm2752 = vweird.f32 %v2379
      %vm2753 = vweird.f32 %v2747
      %vm2754 = vmor %vm2752, %vm2753
      %v2755 = vsel %vm2754, %v2747, %v2751
      %v2756 = vand.u32 2147483647, %v2379
      %vm2757 = vcmp.eq.f32.partialorder %v2756, 8.507059e+37
      %v2758 = vand.u32 %v2379, 2147483648
      %v2759 = vor.u32 1.1754944e-38, %v2758
      %v2760 = vsel %vm2757, %v2759, %v2755
      %v2761 = vmul.f32 1.0, %v2760
      %v2762 = vrcp.pop %v2380
      %v2763 = vmul.f32 %v2380, %v2762
      %v2764 = vsub.f32 1.0, %v2763
      %v2765 = vmul.f32 %v2762, %v2764
      %v2766 = vadd.f32 %v2762, %v2765
      %vm2767 = vweird.f32 %v2380
      %vm2768 = vweird.f32 %v2762
      %vm2769 = vmor %vm2767, %vm2768
      %v2770 = vsel %vm2769, %v2762, %v2766
      %v2771 = vand.u32 2147483647, %v2380
      %vm2772 = vcmp.eq.f32.partialorder %v2771, 8.507059e+37
      %v2773 = vand.u32 %v2380, 2147483648
      %v2774 = vor.u32 1.1754944e-38, %v2773
      %v2775 = vsel %vm2772, %v2774, %v2770
      %v2776 = vmul.f32 1.0, %v2775
      %v2777 = vrcp.pop %v2381
      %v2778 = vmul.f32 %v2381, %v2777
      %v2779 = vsub.f32 1.0, %v2778
      %v2780 = vmul.f32 %v2777, %v2779
      %v2781 = vadd.f32 %v2777, %v2780
      %vm2782 = vweird.f32 %v2381
      %vm2783 = vweird.f32 %v2777
      %vm2784 = vmor %vm2782, %vm2783
      %v2785 = vsel %vm2784, %v2777, %v2781
      %v2786 = vand.u32 2147483647, %v2381
      %vm2787 = vcmp.eq.f32.partialorder %v2786, 8.507059e+37
      %v2788 = vand.u32 %v2381, 2147483648
      %v2789 = vor.u32 1.1754944e-38, %v2788
      %v2790 = vsel %vm2787, %v2789, %v2785
      %v2791 = vmul.f32 1.0, %v2790
      %v2792 = vrcp.pop %v2382
      %v2793 = vmul.f32 %v2382, %v2792
      %v2794 = vsub.f32 1.0, %v2793
      %v2795 = vmul.f32 %v2792, %v2794
      %v2796 = vadd.f32 %v2792, %v2795
      %vm2797 = vweird.f32 %v2382
      %vm2798 = vweird.f32 %v2792
      %vm2799 = vmor %vm2797, %vm2798
      %v2800 = vsel %vm2799, %v2792, %v2796
      %v2801 = vand.u32 2147483647, %v2382
      %vm2802 = vcmp.eq.f32.partialorder %v2801, 8.507059e+37
      %v2803 = vand.u32 %v2382, 2147483648
      %v2804 = vor.u32 1.1754944e-38, %v2803
      %v2805 = vsel %vm2802, %v2804, %v2800
      %v2806 = vmul.f32 1.0, %v2805
      %v2807 = vrcp.pop %v2383
      %v2808 = vmul.f32 %v2383, %v2807
      %v2809 = vsub.f32 1.0, %v2808
      %v2810 = vmul.f32 %v2807, %v2809
      %v2811 = vadd.f32 %v2807, %v2810
      %vm2812 = vweird.f32 %v2383
      %vm2813 = vweird.f32 %v2807
      %vm2814 = vmor %vm2812, %vm2813
      %v2815 = vsel %vm2814, %v2807, %v2811
      %v2816 = vand.u32 2147483647, %v2383
      %vm2817 = vcmp.eq.f32.partialorder %v2816, 8.507059e+37
      %v2818 = vand.u32 %v2383, 2147483648
      %v2819 = vor.u32 1.1754944e-38, %v2818
      %v2820 = vsel %vm2817, %v2819, %v2815
      %v2821 = vmul.f32 1.0, %v2820
      %v2822 = vrcp.pop %v2384
      %v2823 = vmul.f32 %v2384, %v2822
      %v2824 = vsub.f32 1.0, %v2823
      %v2825 = vmul.f32 %v2822, %v2824
      %v2826 = vadd.f32 %v2822, %v2825
      %vm2827 = vweird.f32 %v2384
      %vm2828 = vweird.f32 %v2822
      %vm2829 = vmor %vm2827, %vm2828
      %v2830 = vsel %vm2829, %v2822, %v2826
      %v2831 = vand.u32 2147483647, %v2384
      %vm2832 = vcmp.eq.f32.partialorder %v2831, 8.507059e+37
      %v2833 = vand.u32 %v2384, 2147483648
      %v2834 = vor.u32 1.1754944e-38, %v2833
      %v2835 = vsel %vm2832, %v2834, %v2830
      %v2836 = vmul.f32 1.0, %v2835
      %v2837 = vrcp.pop %v2385
      %v2838 = vmul.f32 %v2385, %v2837
      %v2839 = vsub.f32 1.0, %v2838
      %v2840 = vmul.f32 %v2837, %v2839
      %v2841 = vadd.f32 %v2837, %v2840
      %vm2842 = vweird.f32 %v2385
      %vm2843 = vweird.f32 %v2837
      %vm2844 = vmor %vm2842, %vm2843
      %v2845 = vsel %vm2844, %v2837, %v2841
      %v2846 = vand.u32 2147483647, %v2385
      %vm2847 = vcmp.eq.f32.partialorder %v2846, 8.507059e+37
      %v2848 = vand.u32 %v2385, 2147483648
      %v2849 = vor.u32 1.1754944e-38, %v2848
      %v2850 = vsel %vm2847, %v2849, %v2845
      %v2851 = vmul.f32 1.0, %v2850
      %v2852 = vrcp.pop %v2386
      %v2853 = vmul.f32 %v2386, %v2852
      %v2854 = vsub.f32 1.0, %v2853
      %v2855 = vmul.f32 %v2852, %v2854
      %v2856 = vadd.f32 %v2852, %v2855
      %vm2857 = vweird.f32 %v2386
      %vm2858 = vweird.f32 %v2852
      %vm2859 = vmor %vm2857, %vm2858
      %v2860 = vsel %vm2859, %v2852, %v2856
      %v2861 = vand.u32 2147483647, %v2386
      %vm2862 = vcmp.eq.f32.partialorder %v2861, 8.507059e+37
      %v2863 = vand.u32 %v2386, 2147483648
      %v2864 = vor.u32 1.1754944e-38, %v2863
      %v2865 = vsel %vm2862, %v2864, %v2860
      %v2866 = vmul.f32 1.0, %v2865
      %v2867 = vmul.f32 %v2180, %v2401
      %v2868 = vmul.f32 %v2182, %v2416
      %v2869 = vmul.f32 %v2185, %v2431
      %v2870 = vmul.f32 %v2187, %v2446
      %v2871 = vmul.f32 %v2190, %v2461
      %v2872 = vmul.f32 %v2192, %v2476
      %v2873 = vmul.f32 %v2195, %v2491
      %v2874 = vmul.f32 %v2197, %v2506
      %v2875 = vmul.f32 %v2200, %v2521
      %v2876 = vmul.f32 %v2202, %v2536
      %v2877 = vmul.f32 %v2205, %v2551
      %v2878 = vmul.f32 %v2207, %v2566
      %v2879 = vmul.f32 %v2210, %v2581
      %v2880 = vmul.f32 %v2212, %v2596
      %v2881 = vmul.f32 %v2215, %v2611
      %v2882 = vmul.f32 %v2217, %v2626
      %v2883 = vmul.f32 %v2220, %v2641
      %v2884 = vmul.f32 %v2222, %v2656
      %v2885 = vmul.f32 %v2225, %v2671
      %v2886 = vmul.f32 %v2227, %v2686
      %v2887 = vmul.f32 %v2230, %v2701
      %v2888 = vmul.f32 %v2232, %v2716
      %v2889 = vmul.f32 %v2235, %v2731
      %v2890 = vmul.f32 %v2237, %v2746
      %v2891 = vmul.f32 %v2240, %v2761
      %v2892 = vmul.f32 %v2242, %v2776
      %v2893 = vmul.f32 %v2245, %v2791
      %v2894 = vmul.f32 %v2247, %v2806
      %v2895 = vmul.f32 %v2250, %v2821
      %v2896 = vmul.f32 %v2252, %v2836
      %v2897 = vmul.f32 %v2255, %v2851
      %v2898 = vmul.f32 %v2257, %v2866
      %vm2899 = vcmask 27648
      %2900 = vst.msk [vmem:[%s349] sm:$0xf] %vm2899, %v1263
      %2901 = vst.msk [vmem:[%s349 + $0x4] sm:$0xf] %vm2899, %v1264
      %2902 = vst.msk [vmem:[%s349 + $0x8] sm:$0xf] %vm2899, %v1265
      %2903 = vst.msk [vmem:[%s349 + $0xc] sm:$0xf] %vm2899, %v1266
      %2904 = vst.msk [vmem:[%s349 + $0x10] sm:$0xf] %vm2899, %v1267
      %2905 = vst.msk [vmem:[%s349 + $0x14] sm:$0xf] %vm2899, %v1268
      %2906 = vst.msk [vmem:[%s349 + $0x18] sm:$0xf] %vm2899, %v1269
      %2907 = vst.msk [vmem:[%s349 + $0x1c] sm:$0xf] %vm2899, %v1270
      %2908 = vst.msk [vmem:[%s349 + $0x20] sm:$0xf] %vm2899, %v1271
      %2909 = vst.msk [vmem:[%s349 + $0x24] sm:$0xf] %vm2899, %v1272
      %2910 = vst.msk [vmem:[%s349 + $0x28] sm:$0xf] %vm2899, %v1273
      %2911 = vst.msk [vmem:[%s349 + $0x2c] sm:$0xf] %vm2899, %v1274
      %2912 = vst.msk [vmem:[%s349 + $0x30] sm:$0xf] %vm2899, %v1275
      %2913 = vst.msk [vmem:[%s349 + $0x34] sm:$0xf] %vm2899, %v1276
      %2914 = vst.msk [vmem:[%s349 + $0x38] sm:$0xf] %vm2899, %v1277
      %2915 = vst.msk [vmem:[%s349 + $0x3c] sm:$0xf] %vm2899, %v1278
      %2916 = vst.msk [vmem:[%s349 + $0x40] sm:$0xf] %vm2899, %v1279
      %2917 = vst.msk [vmem:[%s349 + $0x44] sm:$0xf] %vm2899, %v1280
      %2918 = vst.msk [vmem:[%s349 + $0x48] sm:$0xf] %vm2899, %v1281
      %2919 = vst.msk [vmem:[%s349 + $0x4c] sm:$0xf] %vm2899, %v1282
      %2920 = vst.msk [vmem:[%s349 + $0x50] sm:$0xf] %vm2899, %v1283
      %2921 = vst.msk [vmem:[%s349 + $0x54] sm:$0xf] %vm2899, %v1284
      %2922 = vst.msk [vmem:[%s349 + $0x58] sm:$0xf] %vm2899, %v1285
      %2923 = vst.msk [vmem:[%s349 + $0x5c] sm:$0xf] %vm2899, %v1286
      %2924 = vst.msk [vmem:[%s349 + $0x60] sm:$0xf] %vm2899, %v1287
      %2925 = vst.msk [vmem:[%s349 + $0x64] sm:$0xf] %vm2899, %v1288
      %2926 = vst.msk [vmem:[%s349 + $0x68] sm:$0xf] %vm2899, %v1289
      %2927 = vst.msk [vmem:[%s349 + $0x6c] sm:$0xf] %vm2899, %v1290
      %2928 = vst.msk [vmem:[%s349 + $0x70] sm:$0xf] %vm2899, %v1291
      %2929 = vst.msk [vmem:[%s349 + $0x74] sm:$0xf] %vm2899, %v1292
      %2930 = vst.msk [vmem:[%s349 + $0x78] sm:$0xf] %vm2899, %v1293
      %2931 = vst.msk [vmem:[%s349 + $0x7c] sm:$0xf] %vm2899, %v1294
      %v2932 = vpack.c.bf16 %v2130, %v2130
      %v2933 = vpack.c.bf16 %v2131, %v2131
      %v2934 = vpack.c.bf16 %v2132, %v2132
      %v2935 = vpack.c.bf16 %v2133, %v2133
      %v2936 = vpack.c.bf16 %v2134, %v2134
      %v2937 = vpack.c.bf16 %v2135, %v2135
      %v2938 = vpack.c.bf16 %v2136, %v2136
      %v2939 = vpack.c.bf16 %v2137, %v2137
      %v2940 = vpack.c.bf16 %v2138, %v2138
      %v2941 = vpack.c.bf16 %v2139, %v2139
      %v2942 = vpack.c.bf16 %v2140, %v2140
      %v2943 = vpack.c.bf16 %v2141, %v2141
      %v2944 = vpack.c.bf16 %v2142, %v2142
      %v2945 = vpack.c.bf16 %v2143, %v2143
      %v2946 = vpack.c.bf16 %v2144, %v2144
      %v2947 = vpack.c.bf16 %v2145, %v2145
      %v2948 = vpack.c.bf16 %v2146, %v2146
      %v2949 = vpack.c.bf16 %v2147, %v2147
      %v2950 = vpack.c.bf16 %v2148, %v2148
      %v2951 = vpack.c.bf16 %v2149, %v2149
      %v2952 = vpack.c.bf16 %v2150, %v2150
      %v2953 = vpack.c.bf16 %v2151, %v2151
      %v2954 = vpack.c.bf16 %v2152, %v2152
      %v2955 = vpack.c.bf16 %v2153, %v2153
      %v2956 = vpack.c.bf16 %v2154, %v2154
      %v2957 = vpack.c.bf16 %v2155, %v2155
      %v2958 = vpack.c.bf16 %v2156, %v2156
      %v2959 = vpack.c.bf16 %v2157, %v2157
      %v2960 = vpack.c.bf16 %v2158, %v2158
      %v2961 = vpack.c.bf16 %v2159, %v2159
      %v2962 = vpack.c.bf16 %v2160, %v2160
      %v2963 = vpack.c.bf16 %v2161, %v2161
      %2964 = vst.msk [vmem:[%s355] sm:$0xf] %vm2899, %v2932
      %2965 = vst.msk [vmem:[%s355 + $0x4] sm:$0xf] %vm2899, %v2933
      %2966 = vst.msk [vmem:[%s355 + $0x8] sm:$0xf] %vm2899, %v2934
      %2967 = vst.msk [vmem:[%s355 + $0xc] sm:$0xf] %vm2899, %v2935
      %2968 = vst.msk [vmem:[%s355 + $0x10] sm:$0xf] %vm2899, %v2936
      %2969 = vst.msk [vmem:[%s355 + $0x14] sm:$0xf] %vm2899, %v2937
      %2970 = vst.msk [vmem:[%s355 + $0x18] sm:$0xf] %vm2899, %v2938
      %2971 = vst.msk [vmem:[%s355 + $0x1c] sm:$0xf] %vm2899, %v2939
      %2972 = vst.msk [vmem:[%s355 + $0x20] sm:$0xf] %vm2899, %v2940
      %2973 = vst.msk [vmem:[%s355 + $0x24] sm:$0xf] %vm2899, %v2941
      %2974 = vst.msk [vmem:[%s355 + $0x28] sm:$0xf] %vm2899, %v2942
      %2975 = vst.msk [vmem:[%s355 + $0x2c] sm:$0xf] %vm2899, %v2943
      %2976 = vst.msk [vmem:[%s355 + $0x30] sm:$0xf] %vm2899, %v2944
      %2977 = vst.msk [vmem:[%s355 + $0x34] sm:$0xf] %vm2899, %v2945
      %2978 = vst.msk [vmem:[%s355 + $0x38] sm:$0xf] %vm2899, %v2946
      %2979 = vst.msk [vmem:[%s355 + $0x3c] sm:$0xf] %vm2899, %v2947
      %2980 = vst.msk [vmem:[%s355 + $0x40] sm:$0xf] %vm2899, %v2948
      %2981 = vst.msk [vmem:[%s355 + $0x44] sm:$0xf] %vm2899, %v2949
      %2982 = vst.msk [vmem:[%s355 + $0x48] sm:$0xf] %vm2899, %v2950
      %2983 = vst.msk [vmem:[%s355 + $0x4c] sm:$0xf] %vm2899, %v2951
      %2984 = vst.msk [vmem:[%s355 + $0x50] sm:$0xf] %vm2899, %v2952
      %2985 = vst.msk [vmem:[%s355 + $0x54] sm:$0xf] %vm2899, %v2953
      %2986 = vst.msk [vmem:[%s355 + $0x58] sm:$0xf] %vm2899, %v2954
      %2987 = vst.msk [vmem:[%s355 + $0x5c] sm:$0xf] %vm2899, %v2955
      %2988 = vst.msk [vmem:[%s355 + $0x60] sm:$0xf] %vm2899, %v2956
      %2989 = vst.msk [vmem:[%s355 + $0x64] sm:$0xf] %vm2899, %v2957
      %2990 = vst.msk [vmem:[%s355 + $0x68] sm:$0xf] %vm2899, %v2958
      %2991 = vst.msk [vmem:[%s355 + $0x6c] sm:$0xf] %vm2899, %v2959
      %2992 = vst.msk [vmem:[%s355 + $0x70] sm:$0xf] %vm2899, %v2960
      %2993 = vst.msk [vmem:[%s355 + $0x74] sm:$0xf] %vm2899, %v2961
      %2994 = vst.msk [vmem:[%s355 + $0x78] sm:$0xf] %vm2899, %v2962
      %2995 = vst.msk [vmem:[%s355 + $0x7c] sm:$0xf] %vm2899, %v2963
      %v2996 = vpack.c.bf16 %v2867, %v2867
      %v2997 = vpack.c.bf16 %v2868, %v2868
      %v2998 = vpack.c.bf16 %v2869, %v2869
      %v2999 = vpack.c.bf16 %v2870, %v2870
      %v3000 = vpack.c.bf16 %v2871, %v2871
      %v3001 = vpack.c.bf16 %v2872, %v2872
      %v3002 = vpack.c.bf16 %v2873, %v2873
      %v3003 = vpack.c.bf16 %v2874, %v2874
      %v3004 = vpack.c.bf16 %v2875, %v2875
      %v3005 = vpack.c.bf16 %v2876, %v2876
      %v3006 = vpack.c.bf16 %v2877, %v2877
      %v3007 = vpack.c.bf16 %v2878, %v2878
      %v3008 = vpack.c.bf16 %v2879, %v2879
      %v3009 = vpack.c.bf16 %v2880, %v2880
      %v3010 = vpack.c.bf16 %v2881, %v2881
      %v3011 = vpack.c.bf16 %v2882, %v2882
      %v3012 = vpack.c.bf16 %v2883, %v2883
      %v3013 = vpack.c.bf16 %v2884, %v2884
      %v3014 = vpack.c.bf16 %v2885, %v2885
      %v3015 = vpack.c.bf16 %v2886, %v2886
      %v3016 = vpack.c.bf16 %v2887, %v2887
      %v3017 = vpack.c.bf16 %v2888, %v2888
      %v3018 = vpack.c.bf16 %v2889, %v2889
      %v3019 = vpack.c.bf16 %v2890, %v2890
      %v3020 = vpack.c.bf16 %v2891, %v2891
      %v3021 = vpack.c.bf16 %v2892, %v2892
      %v3022 = vpack.c.bf16 %v2893, %v2893
      %v3023 = vpack.c.bf16 %v2894, %v2894
      %v3024 = vpack.c.bf16 %v2895, %v2895
      %v3025 = vpack.c.bf16 %v2896, %v2896
      %v3026 = vpack.c.bf16 %v2897, %v2897
      %v3027 = vpack.c.bf16 %v2898, %v2898
      %3028 = vst.msk [vmem:[%s361] sm:$0xf] %vm2899, %v2996
      %3029 = vst.msk [vmem:[%s361 + $0x4] sm:$0xf] %vm2899, %v2997
      %3030 = vst.msk [vmem:[%s361 + $0x8] sm:$0xf] %vm2899, %v2998
      %3031 = vst.msk [vmem:[%s361 + $0xc] sm:$0xf] %vm2899, %v2999
      %3032 = vst.msk [vmem:[%s361 + $0x10] sm:$0xf] %vm2899, %v3000
      %3033 = vst.msk [vmem:[%s361 + $0x14] sm:$0xf] %vm2899, %v3001
      %3034 = vst.msk [vmem:[%s361 + $0x18] sm:$0xf] %vm2899, %v3002
      %3035 = vst.msk [vmem:[%s361 + $0x1c] sm:$0xf] %vm2899, %v3003
      %3036 = vst.msk [vmem:[%s361 + $0x20] sm:$0xf] %vm2899, %v3004
      %3037 = vst.msk [vmem:[%s361 + $0x24] sm:$0xf] %vm2899, %v3005
      %3038 = vst.msk [vmem:[%s361 + $0x28] sm:$0xf] %vm2899, %v3006
      %3039 = vst.msk [vmem:[%s361 + $0x2c] sm:$0xf] %vm2899, %v3007
      %3040 = vst.msk [vmem:[%s361 + $0x30] sm:$0xf] %vm2899, %v3008
      %3041 = vst.msk [vmem:[%s361 + $0x34] sm:$0xf] %vm2899, %v3009
      %3042 = vst.msk [vmem:[%s361 + $0x38] sm:$0xf] %vm2899, %v3010
      %3043 = vst.msk [vmem:[%s361 + $0x3c] sm:$0xf] %vm2899, %v3011
      %3044 = vst.msk [vmem:[%s361 + $0x40] sm:$0xf] %vm2899, %v3012
      %3045 = vst.msk [vmem:[%s361 + $0x44] sm:$0xf] %vm2899, %v3013
      %3046 = vst.msk [vmem:[%s361 + $0x48] sm:$0xf] %vm2899, %v3014
      %3047 = vst.msk [vmem:[%s361 + $0x4c] sm:$0xf] %vm2899, %v3015
      %3048 = vst.msk [vmem:[%s361 + $0x50] sm:$0xf] %vm2899, %v3016
      %3049 = vst.msk [vmem:[%s361 + $0x54] sm:$0xf] %vm2899, %v3017
      %3050 = vst.msk [vmem:[%s361 + $0x58] sm:$0xf] %vm2899, %v3018
      %3051 = vst.msk [vmem:[%s361 + $0x5c] sm:$0xf] %vm2899, %v3019
      %3052 = vst.msk [vmem:[%s361 + $0x60] sm:$0xf] %vm2899, %v3020
      %3053 = vst.msk [vmem:[%s361 + $0x64] sm:$0xf] %vm2899, %v3021
      %3054 = vst.msk [vmem:[%s361 + $0x68] sm:$0xf] %vm2899, %v3022
      %3055 = vst.msk [vmem:[%s361 + $0x6c] sm:$0xf] %vm2899, %v3023
      %3056 = vst.msk [vmem:[%s361 + $0x70] sm:$0xf] %vm2899, %v3024
      %3057 = vst.msk [vmem:[%s361 + $0x74] sm:$0xf] %vm2899, %v3025
      %3058 = vst.msk [vmem:[%s361 + $0x78] sm:$0xf] %vm2899, %v3026
      %3059 = vst.msk [vmem:[%s361 + $0x7c] sm:$0xf] %vm2899, %v3027
      %s3060 = smul.u32 32, %s21
      %p3061 = scmp.lt.s32.totalorder %s3060, 63
      %s3062 = scalar_select %p3061, %s3060, 63
      %s3063 = smul.addr %s3062, 4
      %s3064 = scalar_lea.vmem %s7, %s3063
      %s3065 = smul.u32 32, %s21
      %p3066 = scmp.lt.s32.totalorder %s3065, 63
      %s3067 = scalar_select %p3066, %s3065, 63
      %s3068 = smul.addr %s3067, 4
      %s3069 = scalar_lea.vmem %s8, %s3068
      %s3070 = smul.u32 32, %s21
      %p3071 = scmp.lt.s32.totalorder %s3070, 63
      %s3072 = scalar_select %p3071, %s3070, 63
      %s3073 = smul.addr %s3072, 4
      %s3074 = scalar_lea.vmem %s9, %s3073
      // Predicated region
      $region49: #{c3_forward.2} parent=47 // pred_check
        %p3075 = pneg %p191
      $region50: #{c3_forward.2} parent=47 // pred_check_branch
        %3077 = sbr.rel (%p3075) target = $region52
      $region51: #{c3_forward.2} parent=47 // pred_region
        %s3078 = smul.u32 32, %s21
      $region52: #{c3_forward.2} parent=47 // pred_fallthru
        _
      // Predicated region
      $region53: #{c3_forward.2} parent=47 // pred_check
        %p3079 = pneg %p217
      $region54: #{c3_forward.2} parent=47 // pred_check_branch
        %3081 = sbr.rel (%p3079) target = $region56
      $region55: #{c3_forward.2} parent=47 // pred_region
        %s3082 = smul.u32 32, %s21
      $region56: #{c3_forward.2} parent=47 // pred_fallthru
        _
      // Predicated region
      $region57: #{c3_forward.2} parent=47 // pred_check
        %p3083 = pneg %p243
      $region58: #{c3_forward.2} parent=47 // pred_check_branch
        %3085 = sbr.rel (%p3083) target = $region60
      $region59: #{c3_forward.2} parent=47 // pred_region
        %s3086 = smul.u32 32, %s21
      $region60: #{c3_forward.2} parent=47 // pred_fallthru
        _
    $region48: #{c3_forward.2} parent=5 // pred_fallthru
      _
    %p3087 = scmp.le.s32.totalorder 2, %s16
    // Predicated region
    $region61: #{c3_forward.2} parent=5 // pred_check
      %p3088 = pneg %p3087
    $region62: #{c3_forward.2} parent=5 // pred_check_branch
      %3090 = sbr.rel (%p3088) target = $region64
    $region63: #{c3_forward.2} parent=5 // pred_region
      %s3091 = ssub.s32 %s16, 2
      // Predicated region
      $region65: #{c3_forward.2} parent=63 // pred_check
        %p3092 = pneg %p197
      $region66: #{c3_forward.2} parent=63 // pred_check_branch
        %3094 = sbr.rel (%p3092) target = $region68
      $region67: #{c3_forward.2} parent=63 // pred_region
        %s3095 = smul.u32 32, %s22
        %p3096 = scmp.lt.s32.totalorder %s3095, 63
        %s3097 = scalar_select %p3096, %s3095, 63
        %s3098 = smul.addr %s3097, 4
        %s3099 = scalar_lea.vmem %s7, %s3098
      $region68: #{c3_forward.2} parent=63 // pred_fallthru
        _
      // Predicated region
      $region69: #{c3_forward.2} parent=63 // pred_check
        %p3100 = pneg %p223
      $region70: #{c3_forward.2} parent=63 // pred_check_branch
        %3102 = sbr.rel (%p3100) target = $region72
      $region71: #{c3_forward.2} parent=63 // pred_region
        %s3103 = smul.u32 32, %s22
        %p3104 = scmp.lt.s32.totalorder %s3103, 63
        %s3105 = scalar_select %p3104, %s3103, 63
        %s3106 = smul.addr %s3105, 4
        %s3107 = scalar_lea.vmem %s8, %s3106
      $region72: #{c3_forward.2} parent=63 // pred_fallthru
        _
      // Predicated region
      $region73: #{c3_forward.2} parent=63 // pred_check
        %p3108 = pneg %p249
      $region74: #{c3_forward.2} parent=63 // pred_check_branch
        %3110 = sbr.rel (%p3108) target = $region76
      $region75: #{c3_forward.2} parent=63 // pred_region
        %s3111 = smul.u32 32, %s22
        %p3112 = scmp.lt.s32.totalorder %s3111, 63
        %s3113 = scalar_select %p3112, %s3111, 63
        %s3114 = smul.addr %s3113, 4
        %s3115 = scalar_lea.vmem %s9, %s3114
      $region76: #{c3_forward.2} parent=63 // pred_fallthru
        _
    $region64: #{c3_forward.2} parent=5 // pred_fallthru
      _
  $region6: #{c3_forward.2} parent=0 // loop_footer
    %s20 = sadd.s32 1, %s16
  $region7: #{c3_forward.2} parent=0 // loop_footer_branch
    %15 = sbr.rel target = $region3
  $region8: #{c3_forward.2} parent=0 // loop_exit
    _

// kernel: c3_forward.3
$region0: #{c3_forward.3}
  #allocation0 [shape = 'u32[]', space=smem, size = 0x4, offset = 0x4, fixed_abs, tag = 'smem constant byte address 0x4 - core index']
  #allocation1 [shape = 'u32[72,128]{1,0:T(1,128)}', space=vmem, size = 0x9000, scoped, tag = 'internal scratch']
  #allocation2 [shape = 'bf16[16,16,36]{2,1,0:T(8,128)(2,1)}', space=vmem, size = 0x10000, scoped, tag = 'scratch operand']
  %s0 = inlined_call_operand.vmem [shape: bf16[2,18,18,4], index: 0, kind: input, shape index: {}]
  %s1 = inlined_call_operand.vmem [shape: bf16[2,16,16,4], index: 1, kind: input, shape index: {}]
  %s2 = inlined_call_operand.vmem [shape: bf16[2,16,16,4], index: 2, kind: input, shape index: {}]
  %s3 = inlined_call_operand.vmem [shape: bf16[36,4], index: 3, kind: input, shape index: {}]
  %s4 = inlined_call_operand.vmem [shape: f32[1,4], index: 4, kind: input, shape index: {}]
  %s5 = inlined_call_operand.vmem [shape: bf16[4,8], index: 5, kind: input, shape index: {}]
  %s6 = inlined_call_operand.vmem [shape: bf16[4,8], index: 6, kind: input, shape index: {}]
  %s7 = inlined_call_operand.vmem [shape: f32[1,8], index: 7, kind: input, shape index: {}]
  %s8 = inlined_call_operand.vmem [shape: f32[2,16,16,8], index: 8, kind: output, shape index: {}]
  %s9 = sld [smem:[#allocation0]]
  $region65: #{c3_forward.3} parent=0
    _
  %s11 = ssub.s32 1, %s9
  %s12 = scalar_select 0, %s11, %s9
  loop: start=0, step=1, limit=4
  $region2: #{c3_forward.3} parent=0 // loop_pre_header
    _
  $region3: #{c3_forward.3} parent=0 // loop_header
    %s14 = sphi 0, %s18
    %p15 = scmp.ge.s32.totalorder %s14, 4
    %s21 = sphi 0, %s33
    %s22 = sphi 0, %s29
    %s23 = sphi 0, %s21
    %s24 = sphi 0, %s22
    %s25 = sphi 0, %s23
    %s26 = sphi 0, %s24
    %s36 = sphi 0, %s38
    %s39 = sphi 0, %s36
    %s40 = sphi 0, %s39
    %s56 = sphi 0, %s40
    %s64 = sphi 0, %s66
    %s67 = sphi 0, %s64
    %s68 = sphi 0, %s67
    %s84 = sphi 0, %s68
    %s92 = sphi 0, %s94
    %s95 = sphi 0, %s92
    %s96 = sphi 0, %s95
    %s112 = sphi 0, %s96
    %s116 = sphi 0, %s116
    %s118 = sphi 0, %s116
    %s119 = sphi 0, %s118
    %s133 = sphi 0, %s119
    %s137 = sphi 0, %s137
    %s139 = sphi 0, %s137
    %s140 = sphi 0, %s139
    %s154 = sphi 0, %s140
    %s158 = sphi 0, %s158
    %s160 = sphi 0, %s158
    %s161 = sphi 0, %s160
    %s175 = sphi 0, %s161
    %s179 = sphi 0, %s179
    %s181 = sphi 0, %s179
    %s182 = sphi 0, %s181
    %s196 = sphi 0, %s182
    %s200 = sphi 0, %s200
    %s202 = sphi 0, %s200
    %s203 = sphi 0, %s202
    %s217 = sphi 0, %s203
    %s225 = sphi 0, %s227
    %s228 = sphi 0, %s225
    %s229 = sphi 0, %s228
    %s245 = sphi 0, %s229
  $region4: #{c3_forward.3} parent=0 // loop_header_branch
    %17 = sbr.rel (%p15) target = $region8
  $region5: #{c3_forward.3} parent=0 // loop_body
    %s19 = ssub.s32 %s14, 1
    %s20 = ssub.s32 %s14, 2
    %s27 = sadd.s32 1, %s22
    %p28 = scmp.ge.s32.totalorder %s27, 1
    %s29 = scalar_select %p28, 0, %s27
    %s30 = sadd.s32 1, %s21
    %s31 = scalar_select %p28, %s30, %s21
    %p32 = scmp.ge.s32.totalorder %s31, 2
    %s33 = scalar_select %p32, 0, %s31
    %s34 = ssub.s32 %s21, %s33
    %p35 = scmp.eq.s32.totalorder %s34, 0
    %s37 = sadd.s32 %s36, 1
    %s38 = scalar_select %p35, %s36, %s37
    %p41 = pneg %p35
    %p42 = scmp.eq.s32.totalorder %s14, 1
    %p43 = por %p41, %p42
    %p44 = scmp.ne.s32.totalorder %s36, %s39
    %p45 = scmp.eq.s32.totalorder %s14, 0
    %p46 = por %p44, %p45
    %p47 = scmp.ne.s32.totalorder %s36, %s39
    %p48 = scmp.eq.s32.totalorder %s19, 1
    %p49 = por %p47, %p48
    %p50 = scmp.ne.s32.totalorder %s39, %s40
    %p51 = scmp.eq.s32.totalorder %s19, 0
    %p52 = por %p50, %p51
    %p53 = scmp.ne.s32.totalorder %s39, %s40
    %p54 = scmp.eq.s32.totalorder %s20, 1
    %p55 = por %p53, %p54
    %p57 = scmp.ne.s32.totalorder %s40, %s56
    %p58 = scmp.eq.s32.totalorder %s20, 0
    %p59 = por %p57, %p58
    %s60 = ssub.s32 %s21, %s33
    %s61 = ssub.s32 %s22, %s29
    %s62 = sor.u32 %s60, %s61
    %p63 = scmp.eq.s32.totalorder %s62, 0
    %s65 = sadd.s32 %s64, 1
    %s66 = scalar_select %p63, %s64, %s65
    %p69 = pneg %p63
    %p70 = scmp.eq.s32.totalorder %s14, 1
    %p71 = por %p69, %p70
    %p72 = scmp.ne.s32.totalorder %s64, %s67
    %p73 = scmp.eq.s32.totalorder %s14, 0
    %p74 = por %p72, %p73
    %p75 = scmp.ne.s32.totalorder %s64, %s67
    %p76 = scmp.eq.s32.totalorder %s19, 1
    %p77 = por %p75, %p76
    %p78 = scmp.ne.s32.totalorder %s67, %s68
    %p79 = scmp.eq.s32.totalorder %s19, 0
    %p80 = por %p78, %p79
    %p81 = scmp.ne.s32.totalorder %s67, %s68
    %p82 = scmp.eq.s32.totalorder %s20, 1
    %p83 = por %p81, %p82
    %p85 = scmp.ne.s32.totalorder %s68, %s84
    %p86 = scmp.eq.s32.totalorder %s20, 0
    %p87 = por %p85, %p86
    %s88 = ssub.s32 %s21, %s33
    %s89 = ssub.s32 %s22, %s29
    %s90 = sor.u32 %s88, %s89
    %p91 = scmp.eq.s32.totalorder %s90, 0
    %s93 = sadd.s32 %s92, 1
    %s94 = scalar_select %p91, %s92, %s93
    %p97 = pneg %p91
    %p98 = scmp.eq.s32.totalorder %s14, 1
    %p99 = por %p97, %p98
    %p100 = scmp.ne.s32.totalorder %s92, %s95
    %p101 = scmp.eq.s32.totalorder %s14, 0
    %p102 = por %p100, %p101
    %p103 = scmp.ne.s32.totalorder %s92, %s95
    %p104 = scmp.eq.s32.totalorder %s19, 1
    %p105 = por %p103, %p104
    %p106 = scmp.ne.s32.totalorder %s95, %s96
    %p107 = scmp.eq.s32.totalorder %s19, 0
    %p108 = por %p106, %p107
    %p109 = scmp.ne.s32.totalorder %s95, %s96
    %p110 = scmp.eq.s32.totalorder %s20, 1
    %p111 = por %p109, %p110
    %p113 = scmp.ne.s32.totalorder %s96, %s112
    %p114 = scmp.eq.s32.totalorder %s20, 0
    %p115 = por %p113, %p114
    %s117 = sadd.s32 %s116, 1
    %p120 = scmp.eq.s32.totalorder %s14, 1
    %p121 = scmp.ne.s32.totalorder %s116, %s118
    %p122 = scmp.eq.s32.totalorder %s14, 0
    %p123 = por %p121, %p122
    %p124 = scmp.ne.s32.totalorder %s116, %s118
    %p125 = scmp.eq.s32.totalorder %s19, 1
    %p126 = por %p124, %p125
    %p127 = scmp.ne.s32.totalorder %s118, %s119
    %p128 = scmp.eq.s32.totalorder %s19, 0
    %p129 = por %p127, %p128
    %p130 = scmp.ne.s32.totalorder %s118, %s119
    %p131 = scmp.eq.s32.totalorder %s20, 1
    %p132 = por %p130, %p131
    %p134 = scmp.ne.s32.totalorder %s119, %s133
    %p135 = scmp.eq.s32.totalorder %s20, 0
    %p136 = por %p134, %p135
    %s138 = sadd.s32 %s137, 1
    %p141 = scmp.eq.s32.totalorder %s14, 1
    %p142 = scmp.ne.s32.totalorder %s137, %s139
    %p143 = scmp.eq.s32.totalorder %s14, 0
    %p144 = por %p142, %p143
    %p145 = scmp.ne.s32.totalorder %s137, %s139
    %p146 = scmp.eq.s32.totalorder %s19, 1
    %p147 = por %p145, %p146
    %p148 = scmp.ne.s32.totalorder %s139, %s140
    %p149 = scmp.eq.s32.totalorder %s19, 0
    %p150 = por %p148, %p149
    %p151 = scmp.ne.s32.totalorder %s139, %s140
    %p152 = scmp.eq.s32.totalorder %s20, 1
    %p153 = por %p151, %p152
    %p155 = scmp.ne.s32.totalorder %s140, %s154
    %p156 = scmp.eq.s32.totalorder %s20, 0
    %p157 = por %p155, %p156
    %s159 = sadd.s32 %s158, 1
    %p162 = scmp.eq.s32.totalorder %s14, 1
    %p163 = scmp.ne.s32.totalorder %s158, %s160
    %p164 = scmp.eq.s32.totalorder %s14, 0
    %p165 = por %p163, %p164
    %p166 = scmp.ne.s32.totalorder %s158, %s160
    %p167 = scmp.eq.s32.totalorder %s19, 1
    %p168 = por %p166, %p167
    %p169 = scmp.ne.s32.totalorder %s160, %s161
    %p170 = scmp.eq.s32.totalorder %s19, 0
    %p171 = por %p169, %p170
    %p172 = scmp.ne.s32.totalorder %s160, %s161
    %p173 = scmp.eq.s32.totalorder %s20, 1
    %p174 = por %p172, %p173
    %p176 = scmp.ne.s32.totalorder %s161, %s175
    %p177 = scmp.eq.s32.totalorder %s20, 0
    %p178 = por %p176, %p177
    %s180 = sadd.s32 %s179, 1
    %p183 = scmp.eq.s32.totalorder %s14, 1
    %p184 = scmp.ne.s32.totalorder %s179, %s181
    %p185 = scmp.eq.s32.totalorder %s14, 0
    %p186 = por %p184, %p185
    %p187 = scmp.ne.s32.totalorder %s179, %s181
    %p188 = scmp.eq.s32.totalorder %s19, 1
    %p189 = por %p187, %p188
    %p190 = scmp.ne.s32.totalorder %s181, %s182
    %p191 = scmp.eq.s32.totalorder %s19, 0
    %p192 = por %p190, %p191
    %p193 = scmp.ne.s32.totalorder %s181, %s182
    %p194 = scmp.eq.s32.totalorder %s20, 1
    %p195 = por %p193, %p194
    %p197 = scmp.ne.s32.totalorder %s182, %s196
    %p198 = scmp.eq.s32.totalorder %s20, 0
    %p199 = por %p197, %p198
    %s201 = sadd.s32 %s200, 1
    %p204 = scmp.eq.s32.totalorder %s14, 1
    %p205 = scmp.ne.s32.totalorder %s200, %s202
    %p206 = scmp.eq.s32.totalorder %s14, 0
    %p207 = por %p205, %p206
    %p208 = scmp.ne.s32.totalorder %s200, %s202
    %p209 = scmp.eq.s32.totalorder %s19, 1
    %p210 = por %p208, %p209
    %p211 = scmp.ne.s32.totalorder %s202, %s203
    %p212 = scmp.eq.s32.totalorder %s19, 0
    %p213 = por %p211, %p212
    %p214 = scmp.ne.s32.totalorder %s202, %s203
    %p215 = scmp.eq.s32.totalorder %s20, 1
    %p216 = por %p214, %p215
    %p218 = scmp.ne.s32.totalorder %s203, %s217
    %p219 = scmp.eq.s32.totalorder %s20, 0
    %p220 = por %p218, %p219
    %s221 = ssub.s32 %s21, %s33
    %s222 = ssub.s32 %s22, %s29
    %s223 = sor.u32 %s221, %s222
    %p224 = scmp.eq.s32.totalorder %s223, 0
    %s226 = sadd.s32 %s225, 1
    %s227 = scalar_select %p224, %s225, %s226
    %p230 = pneg %p224
    %p231 = scmp.eq.s32.totalorder %s14, 1
    %p232 = por %p230, %p231
    %p233 = scmp.ne.s32.totalorder %s225, %s228
    %p234 = scmp.eq.s32.totalorder %s14, 0
    %p235 = por %p233, %p234
    %p236 = scmp.ne.s32.totalorder %s225, %s228
    %p237 = scmp.eq.s32.totalorder %s19, 1
    %p238 = por %p236, %p237
    %p239 = scmp.ne.s32.totalorder %s228, %s229
    %p240 = scmp.eq.s32.totalorder %s19, 0
    %p241 = por %p239, %p240
    %p242 = scmp.ne.s32.totalorder %s228, %s229
    %p243 = scmp.eq.s32.totalorder %s20, 1
    %p244 = por %p242, %p243
    %p246 = scmp.ne.s32.totalorder %s229, %s245
    %p247 = scmp.eq.s32.totalorder %s20, 0
    %p248 = por %p246, %p247
    %p249 = scmp.le.s32.totalorder 1, %s14
    %p250 = scmp.lt.s32.totalorder %s14, 3
    %p251 = pnand %p249, %p250
    %p252 = pneg %p251
    // Predicated region
    $region9: #{c3_forward.3} parent=5 // pred_check
      _
    $region10: #{c3_forward.3} parent=5 // pred_check_branch
      %254 = sbr.rel (%p251) target = $region12
    $region11: #{c3_forward.3} parent=5 // pred_region
      %s255 = ssub.s32 %s14, 1
      // Predicated region
      $region13: #{c3_forward.3} parent=11 // pred_check
        %p256 = pneg %p129
      $region14: #{c3_forward.3} parent=11 // pred_check_branch
        %258 = sbr.rel (%p256) target = $region16
      $region15: #{c3_forward.3} parent=11 // pred_region
        _
      $region16: #{c3_forward.3} parent=11 // pred_fallthru
        _
      // Predicated region
      $region17: #{c3_forward.3} parent=11 // pred_check
        %p259 = pneg %p150
      $region18: #{c3_forward.3} parent=11 // pred_check_branch
        %261 = sbr.rel (%p259) target = $region20
      $region19: #{c3_forward.3} parent=11 // pred_region
        _
      $region20: #{c3_forward.3} parent=11 // pred_fallthru
        _
      // Predicated region
      $region21: #{c3_forward.3} parent=11 // pred_check
        %p262 = pneg %p171
      $region22: #{c3_forward.3} parent=11 // pred_check_branch
        %264 = sbr.rel (%p262) target = $region24
      $region23: #{c3_forward.3} parent=11 // pred_region
        _
      $region24: #{c3_forward.3} parent=11 // pred_fallthru
        _
      // Predicated region
      $region25: #{c3_forward.3} parent=11 // pred_check
        %p265 = pneg %p192
      $region26: #{c3_forward.3} parent=11 // pred_check_branch
        %267 = sbr.rel (%p265) target = $region28
      $region27: #{c3_forward.3} parent=11 // pred_region
        _
      $region28: #{c3_forward.3} parent=11 // pred_fallthru
        _
      // Predicated region
      $region29: #{c3_forward.3} parent=11 // pred_check
        %p268 = pneg %p213
      $region30: #{c3_forward.3} parent=11 // pred_check_branch
        %270 = sbr.rel (%p268) target = $region32
      $region31: #{c3_forward.3} parent=11 // pred_region
        _
      $region32: #{c3_forward.3} parent=11 // pred_fallthru
        _
    $region12: #{c3_forward.3} parent=5 // pred_fallthru
      _
    %p271 = scmp.lt.s32.totalorder %s14, 2
    // Predicated region
    $region33: #{c3_forward.3} parent=5 // pred_check
      %p272 = pneg %p271
    $region34: #{c3_forward.3} parent=5 // pred_check_branch
      %274 = sbr.rel (%p272) target = $region36
    $region35: #{c3_forward.3} parent=5 // pred_region
      // Predicated region
      $region37: #{c3_forward.3} parent=35 // pred_check
        %p275 = pneg %p46
      $region38: #{c3_forward.3} parent=35 // pred_check_branch
        %277 = sbr.rel (%p275) target = $region40
      $region39: #{c3_forward.3} parent=35 // pred_region
        %p278 = scmp.lt.s32.totalorder %s21, 1
        %s279 = scalar_select %p278, %s21, 1
        %s280 = smul.addr %s279, 54
        %s281 = smul.addr %s280, 4
        %s282 = scalar_lea.vmem %s0, %s281
      $region40: #{c3_forward.3} parent=35 // pred_fallthru
        _
      // Predicated region
      $region41: #{c3_forward.3} parent=35 // pred_check
        %p283 = pneg %p74
      $region42: #{c3_forward.3} parent=35 // pred_check_branch
        %285 = sbr.rel (%p283) target = $region44
      $region43: #{c3_forward.3} parent=35 // pred_region
        %s286 = smul.u32 16, %s22
        %p287 = scmp.lt.s32.totalorder %s21, 1
        %s288 = scalar_select %p287, %s21, 1
        %p289 = scmp.lt.s32.totalorder %s286, 15
        %s290 = scalar_select %p289, %s286, 15
        %s291 = smul.addr %s290, 2
        %s292 = smul.addr %s288, 32
        %s293 = sadd.s32 %s291, %s292
        %s294 = smul.addr %s293, 4
        %s295 = scalar_lea.vmem %s1, %s294
        %s296 = smul.u32 16, %s22
      $region44: #{c3_forward.3} parent=35 // pred_fallthru
        _
      // Predicated region
      $region45: #{c3_forward.3} parent=35 // pred_check
        %p297 = pneg %p102
      $region46: #{c3_forward.3} parent=35 // pred_check_branch
        %299 = sbr.rel (%p297) target = $region48
      $region47: #{c3_forward.3} parent=35 // pred_region
        %s300 = smul.u32 16, %s22
        %p301 = scmp.lt.s32.totalorder %s21, 1
        %s302 = scalar_select %p301, %s21, 1
        %p303 = scmp.lt.s32.totalorder %s300, 15
        %s304 = scalar_select %p303, %s300, 15
        %s305 = smul.addr %s304, 2
        %s306 = smul.addr %s302, 32
        %s307 = sadd.s32 %s305, %s306
        %s308 = smul.addr %s307, 4
        %s309 = scalar_lea.vmem %s2, %s308
        %s310 = smul.u32 16, %s22
      $region48: #{c3_forward.3} parent=35 // pred_fallthru
        _
    $region36: #{c3_forward.3} parent=5 // pred_fallthru
      _
    %p311 = scmp.le.s32.totalorder 1, %s14
    %p312 = scmp.lt.s32.totalorder %s14, 3
    %p313 = pnand %p311, %p312
    %p314 = pneg %p313
    // Predicated region
    $region49: #{c3_forward.3} parent=5 // pred_check
      _
    $region50: #{c3_forward.3} parent=5 // pred_check_branch
      %316 = sbr.rel (%p313) target = $region52
    $region51: #{c3_forward.3} parent=5 // pred_region
      %s317 = ssub.s32 %s14, 1
      %p318 = scmp.lt.s32.totalorder %s23, 1
      %s319 = scalar_select %p318, %s23, 1
      %s320 = smul.addr %s319, 54
      %s321 = smul.addr %s320, 4
      %s322 = scalar_lea.vmem %s0, %s321
      %p323 = pneg %p52
      %p324 = pneg %p49
      %s325 = smul.u32 16, %s24
      %p326 = scmp.lt.s32.totalorder %s23, 1
      %s327 = scalar_select %p326, %s23, 1
      %p328 = scmp.lt.s32.totalorder %s325, 15
      %s329 = scalar_select %p328, %s325, 15
      %s330 = smul.addr %s329, 2
      %s331 = smul.addr %s327, 32
      %s332 = sadd.s32 %s330, %s331
      %s333 = smul.addr %s332, 4
      %s334 = scalar_lea.vmem %s1, %s333
      %p335 = pneg %p80
      %p336 = pneg %p77
      %s337 = smul.u32 16, %s24
      %p338 = scmp.lt.s32.totalorder %s23, 1
      %s339 = scalar_select %p338, %s23, 1
      %p340 = scmp.lt.s32.totalorder %s337, 15
      %s341 = scalar_select %p340, %s337, 15
      %s342 = smul.addr %s341, 2
      %s343 = smul.addr %s339, 32
      %s344 = sadd.s32 %s342, %s343
      %s345 = smul.addr %s344, 4
      %s346 = scalar_lea.vmem %s2, %s345
      %p347 = pneg %p108
      %p348 = pneg %p105
      %p349 = pneg %p129
      %p350 = pneg %p126
      %p351 = pneg %p150
      %p352 = pneg %p147
      %p353 = pneg %p171
      %p354 = pneg %p168
      %p355 = pneg %p192
      %p356 = pneg %p189
      %p357 = pneg %p213
      %p358 = pneg %p210
      %p359 = pneg %p241
      %p360 = pneg %p238
      %s361 = smul.u32 16, %s24
      %p362 = scmp.lt.s32.totalorder %s23, 1
      %s363 = scalar_select %p362, %s23, 1
      %p364 = scmp.lt.s32.totalorder %s361, 15
      %s365 = scalar_select %p364, %s361, 15
      %s366 = smul.addr %s365, 2
      %s367 = smul.addr %s363, 32
      %s368 = sadd.s32 %s366, %s367
      %s369 = smul.addr %s368, 8
      %s370 = scalar_lea.vmem %s8, %s369
      %p371 = scmp.lt.s32.totalorder %s23, 1
      %s372 = scalar_select %p371, %s23, 1
      %s373 = smul.addr %s372, 54
      %s374 = smul.addr %s373, 4
      %s375 = scalar_lea.vmem %s0, %s374
      %s376 = smul.u32 16, %s24
      %p377 = scmp.lt.s32.totalorder %s23, 1
      %s378 = scalar_select %p377, %s23, 1
      %p379 = scmp.lt.s32.totalorder %s376, 15
      %s380 = scalar_select %p379, %s376, 15
      %s381 = smul.addr %s380, 2
      %s382 = smul.addr %s378, 32
      %s383 = sadd.s32 %s381, %s382
      %s384 = smul.addr %s383, 4
      %s385 = scalar_lea.vmem %s1, %s384
      %s386 = smul.u32 16, %s24
      %s387 = smul.u32 16, %s24
      %p388 = scmp.lt.s32.totalorder %s23, 1
      %s389 = scalar_select %p388, %s23, 1
      %p390 = scmp.lt.s32.totalorder %s387, 15
      %s391 = scalar_select %p390, %s387, 15
      %s392 = smul.addr %s391, 2
      %s393 = smul.addr %s389, 32
      %s394 = sadd.s32 %s392, %s393
      %s395 = smul.addr %s394, 4
      %s396 = scalar_lea.vmem %s2, %s395
      %s397 = smul.u32 16, %s24
      %s398 = smul.u32 16, %s24
      %p399 = scmp.lt.s32.totalorder %s23, 1
      %s400 = scalar_select %p399, %s23, 1
      %p401 = scmp.lt.s32.totalorder %s398, 15
      %s402 = scalar_select %p401, %s398, 15
      %s403 = smul.addr %s402, 2
      %s404 = smul.addr %s400, 32
      %s405 = sadd.s32 %s403, %s404
      %s406 = smul.addr %s405, 8
      %s407 = scalar_lea.vmem %s8, %s406
      %s408 = smul.u32 16, %s24
      %s410 = smul.u32 %s24, 16
      %s411 = smul.u32 %s410, 3
      %s412 = smul.addr %s411, 4
      %s413 = scalar_lea.vmem %s375, %s412
      %v414 = vld [vmem:[%s413] sm:$0xf]
      %v415 = vld [vmem:[%s413 + $0x4] sm:$0xf]
      %v416 = vld [vmem:[%s413 + $0x8] sm:$0x1]
      %v417 = vld [vmem:[%s413 + $0xc] sm:$0xf]
      %v418 = vld [vmem:[%s413 + $0x10] sm:$0xf]
      %v419 = vld [vmem:[%s413 + $0x14] sm:$0x1]
      %v420 = vld [vmem:[%s413 + $0x18] sm:$0xf]
      %v421 = vld [vmem:[%s413 + $0x1c] sm:$0xf]
      %v422 = vld [vmem:[%s413 + $0x20] sm:$0x1]
      %v423 = vld [vmem:[%s413 + $0x24] sm:$0xf]
      %v424 = vld [vmem:[%s413 + $0x28] sm:$0xf]
      %v425 = vld [vmem:[%s413 + $0x2c] sm:$0x1]
      %v426 = vld [vmem:[%s413 + $0x30] sm:$0xf]
      %v427 = vld [vmem:[%s413 + $0x34] sm:$0xf]
      %v428 = vld [vmem:[%s413 + $0x38] sm:$0x1]
      %v429 = vld [vmem:[%s413 + $0x3c] sm:$0xf]
      %v430 = vld [vmem:[%s413 + $0x40] sm:$0xf]
      %v431 = vld [vmem:[%s413 + $0x44] sm:$0x1]
      %v432 = vld [vmem:[%s413 + $0x48] sm:$0xf]
      %v433 = vld [vmem:[%s413 + $0x4c] sm:$0xf]
      %v434 = vld [vmem:[%s413 + $0x50] sm:$0x1]
      %v435 = vld [vmem:[%s413 + $0x54] sm:$0xf]
      %v436 = vld [vmem:[%s413 + $0x58] sm:$0xf]
      %v437 = vld [vmem:[%s413 + $0x5c] sm:$0x1]
      %v438 = vld [vmem:[%s413 + $0x60] sm:$0xf]
      %v439 = vld [vmem:[%s413 + $0x64] sm:$0xf]
      %v440 = vld [vmem:[%s413 + $0x68] sm:$0x1]
      %v441 = vld [vmem:[%s413 + $0x6c] sm:$0xf]
      %v442 = vld [vmem:[%s413 + $0x70] sm:$0xf]
      %v443 = vld [vmem:[%s413 + $0x74] sm:$0x1]
      %v444 = vld [vmem:[%s413 + $0x78] sm:$0xf]
      %v445 = vld [vmem:[%s413 + $0x7c] sm:$0xf]
      %v446 = vld [vmem:[%s413 + $0x80] sm:$0x1]
      %v447 = vld [vmem:[%s413 + $0x84] sm:$0xf]
      %v448 = vld [vmem:[%s413 + $0x88] sm:$0xf]
      %v449 = vld [vmem:[%s413 + $0x8c] sm:$0x1]
      %v450 = vld [vmem:[%s413 + $0x90] sm:$0xf]
      %v451 = vld [vmem:[%s413 + $0x94] sm:$0xf]
      %v452 = vld [vmem:[%s413 + $0x98] sm:$0x1]
      %v453 = vld [vmem:[%s413 + $0x9c] sm:$0xf]
      %v454 = vld [vmem:[%s413 + $0xa0] sm:$0xf]
      %v455 = vld [vmem:[%s413 + $0xa4] sm:$0x1]
      %v456 = vld [vmem:[%s413 + $0xa8] sm:$0xf]
      %v457 = vld [vmem:[%s413 + $0xac] sm:$0xf]
      %v458 = vld [vmem:[%s413 + $0xb0] sm:$0x1]
      %v459 = vld [vmem:[%s413 + $0xb4] sm:$0xf]
      %v460 = vld [vmem:[%s413 + $0xb8] sm:$0xf]
      %v461 = vld [vmem:[%s413 + $0xbc] sm:$0x1]
      %v462 = vld [vmem:[%s413 + $0xc0] sm:$0xf]
      %v463 = vld [vmem:[%s413 + $0xc4] sm:$0xf]
      %v464 = vld [vmem:[%s413 + $0xc8] sm:$0x1]
      %v465 = vld [vmem:[%s413 + $0xcc] sm:$0xf]
      %v466 = vld [vmem:[%s413 + $0xd0] sm:$0xf]
      %v467 = vld [vmem:[%s413 + $0xd4] sm:$0x1]
      %vm468 = vcmask 27648
      %469 = vst.msk [vmem:[#allocation2] sm:$0xf] %vm468, %v414
      %470 = vst.msk [vmem:[#allocation2 + $0x4] sm:$0xf] %vm468, %v415
      %471 = vst.msk [vmem:[#allocation2 + $0x8] sm:$0xf] %vm468, %v417
      %472 = vst.msk [vmem:[#allocation2 + $0xc] sm:$0xf] %vm468, %v418
      %473 = vst.msk [vmem:[#allocation2 + $0x10] sm:$0xf] %vm468, %v420
      %474 = vst.msk [vmem:[#allocation2 + $0x14] sm:$0xf] %vm468, %v421
      %475 = vst.msk [vmem:[#allocation2 + $0x18] sm:$0xf] %vm468, %v423
      %476 = vst.msk [vmem:[#allocation2 + $0x1c] sm:$0xf] %vm468, %v424
      %477 = vst.msk [vmem:[#allocation2 + $0x20] sm:$0xf] %vm468, %v426
      %478 = vst.msk [vmem:[#allocation2 + $0x24] sm:$0xf] %vm468, %v427
      %479 = vst.msk [vmem:[#allocation2 + $0x28] sm:$0xf] %vm468, %v429
      %480 = vst.msk [vmem:[#allocation2 + $0x2c] sm:$0xf] %vm468, %v430
      %481 = vst.msk [vmem:[#allocation2 + $0x30] sm:$0xf] %vm468, %v432
      %482 = vst.msk [vmem:[#allocation2 + $0x34] sm:$0xf] %vm468, %v433
      %483 = vst.msk [vmem:[#allocation2 + $0x38] sm:$0xf] %vm468, %v435
      %484 = vst.msk [vmem:[#allocation2 + $0x3c] sm:$0xf] %vm468, %v436
      %485 = vst.msk [vmem:[#allocation2 + $0x40] sm:$0xf] %vm468, %v438
      %486 = vst.msk [vmem:[#allocation2 + $0x44] sm:$0xf] %vm468, %v439
      %487 = vst.msk [vmem:[#allocation2 + $0x48] sm:$0xf] %vm468, %v441
      %488 = vst.msk [vmem:[#allocation2 + $0x4c] sm:$0xf] %vm468, %v442
      %489 = vst.msk [vmem:[#allocation2 + $0x50] sm:$0xf] %vm468, %v444
      %490 = vst.msk [vmem:[#allocation2 + $0x54] sm:$0xf] %vm468, %v445
      %491 = vst.msk [vmem:[#allocation2 + $0x58] sm:$0xf] %vm468, %v447
      %492 = vst.msk [vmem:[#allocation2 + $0x5c] sm:$0xf] %vm468, %v448
      %493 = vst.msk [vmem:[#allocation2 + $0x60] sm:$0xf] %vm468, %v450
      %494 = vst.msk [vmem:[#allocation2 + $0x64] sm:$0xf] %vm468, %v451
      %495 = vst.msk [vmem:[#allocation2 + $0x68] sm:$0xf] %vm468, %v453
      %496 = vst.msk [vmem:[#allocation2 + $0x6c] sm:$0xf] %vm468, %v454
      %497 = vst.msk [vmem:[#allocation2 + $0x70] sm:$0xf] %vm468, %v456
      %498 = vst.msk [vmem:[#allocation2 + $0x74] sm:$0xf] %vm468, %v457
      %499 = vst.msk [vmem:[#allocation2 + $0x78] sm:$0xf] %vm468, %v459
      %500 = vst.msk [vmem:[#allocation2 + $0x7c] sm:$0xf] %vm468, %v460
      %vm501 = vsmask.f32 3328
      %vm502 = vsmask.f32 7440
      %vm503 = vmor %vm501, %vm502
      %v505 = vshrl.u32 %v414, 16
      %v507 = vrot.slane %v505, 4
      %v508 = vshll.u32 %v414, 16
      %v510 = vrot.slane %v508, 5
      %v511 = vor.u32 %v507, %v510
      %v512 = vrot.slane %v511, 4
      %v514 = vshll.u32 %v415, 16
      %v516 = vrot.slane %v514, 5
      %v517 = vsel %vm503, %v512, %v516
      %v518 = vshrl.u32 %v415, 16
      %v520 = vrot.slane %v518, 4
      %v521 = vor.u32 %v520, %v516
      %v522 = vrot.slane %v521, 4
      %v524 = vshll.u32 %v416, 16
      %v526 = vrot.slane %v524, 5
      %v527 = vsel %vm503, %v522, %v526
      %v529 = vshrl.u32 %v417, 16
      %v531 = vrot.slane %v529, 4
      %v532 = vshll.u32 %v417, 16
      %v534 = vrot.slane %v532, 5
      %v535 = vor.u32 %v531, %v534
      %v536 = vrot.slane %v535, 4
      %v538 = vshll.u32 %v418, 16
      %v540 = vrot.slane %v538, 5
      %v541 = vsel %vm503, %v536, %v540
      %v542 = vshrl.u32 %v418, 16
      %v544 = vrot.slane %v542, 4
      %v545 = vor.u32 %v544, %v540
      %v546 = vrot.slane %v545, 4
      %v548 = vshll.u32 %v419, 16
      %v550 = vrot.slane %v548, 5
      %v551 = vsel %vm503, %v546, %v550
      %v553 = vshrl.u32 %v420, 16
      %v555 = vrot.slane %v553, 4
      %v556 = vshll.u32 %v420, 16
      %v558 = vrot.slane %v556, 5
      %v559 = vor.u32 %v555, %v558
      %v560 = vrot.slane %v559, 4
      %v562 = vshll.u32 %v421, 16
      %v564 = vrot.slane %v562, 5
      %v565 = vsel %vm503, %v560, %v564
      %v566 = vshrl.u32 %v421, 16
      %v568 = vrot.slane %v566, 4
      %v569 = vor.u32 %v568, %v564
      %v570 = vrot.slane %v569, 4
      %v572 = vshll.u32 %v422, 16
      %v574 = vrot.slane %v572, 5
      %v575 = vsel %vm503, %v570, %v574
      %v577 = vshrl.u32 %v423, 16
      %v579 = vrot.slane %v577, 4
      %v580 = vshll.u32 %v423, 16
      %v582 = vrot.slane %v580, 5
      %v583 = vor.u32 %v579, %v582
      %v584 = vrot.slane %v583, 4
      %v586 = vshll.u32 %v424, 16
      %v588 = vrot.slane %v586, 5
      %v589 = vsel %vm503, %v584, %v588
      %v590 = vshrl.u32 %v424, 16
      %v592 = vrot.slane %v590, 4
      %v593 = vor.u32 %v592, %v588
      %v594 = vrot.slane %v593, 4
      %v596 = vshll.u32 %v425, 16
      %v598 = vrot.slane %v596, 5
      %v599 = vsel %vm503, %v594, %v598
      %v601 = vshrl.u32 %v426, 16
      %v603 = vrot.slane %v601, 4
      %v604 = vshll.u32 %v426, 16
      %v606 = vrot.slane %v604, 5
      %v607 = vor.u32 %v603, %v606
      %v608 = vrot.slane %v607, 4
      %v610 = vshll.u32 %v427, 16
      %v612 = vrot.slane %v610, 5
      %v613 = vsel %vm503, %v608, %v612
      %v614 = vshrl.u32 %v427, 16
      %v616 = vrot.slane %v614, 4
      %v617 = vor.u32 %v616, %v612
      %v618 = vrot.slane %v617, 4
      %v620 = vshll.u32 %v428, 16
      %v622 = vrot.slane %v620, 5
      %v623 = vsel %vm503, %v618, %v622
      %v625 = vshrl.u32 %v429, 16
      %v627 = vrot.slane %v625, 4
      %v628 = vshll.u32 %v429, 16
      %v630 = vrot.slane %v628, 5
      %v631 = vor.u32 %v627, %v630
      %v632 = vrot.slane %v631, 4
      %v634 = vshll.u32 %v430, 16
      %v636 = vrot.slane %v634, 5
      %v637 = vsel %vm503, %v632, %v636
      %v638 = vshrl.u32 %v430, 16
      %v640 = vrot.slane %v638, 4
      %v641 = vor.u32 %v640, %v636
      %v642 = vrot.slane %v641, 4
      %v644 = vshll.u32 %v431, 16
      %v646 = vrot.slane %v644, 5
      %v647 = vsel %vm503, %v642, %v646
      %v649 = vshrl.u32 %v432, 16
      %v651 = vrot.slane %v649, 4
      %v652 = vshll.u32 %v432, 16
      %v654 = vrot.slane %v652, 5
      %v655 = vor.u32 %v651, %v654
      %v656 = vrot.slane %v655, 4
      %v658 = vshll.u32 %v433, 16
      %v660 = vrot.slane %v658, 5
      %v661 = vsel %vm503, %v656, %v660
      %v662 = vshrl.u32 %v433, 16
      %v664 = vrot.slane %v662, 4
      %v665 = vor.u32 %v664, %v660
      %v666 = vrot.slane %v665, 4
      %v668 = vshll.u32 %v434, 16
      %v670 = vrot.slane %v668, 5
      %v671 = vsel %vm503, %v666, %v670
      %v673 = vshrl.u32 %v435, 16
      %v675 = vrot.slane %v673, 4
      %v676 = vshll.u32 %v435, 16
      %v678 = vrot.slane %v676, 5
      %v679 = vor.u32 %v675, %v678
      %v680 = vrot.slane %v679, 4
      %v682 = vshll.u32 %v436, 16
      %v684 = vrot.slane %v682, 5
      %v685 = vsel %vm503, %v680, %v684
      %v686 = vshrl.u32 %v436, 16
      %v688 = vrot.slane %v686, 4
      %v689 = vor.u32 %v688, %v684
      %v690 = vrot.slane %v689, 4
      %v692 = vshll.u32 %v437, 16
      %v694 = vrot.slane %v692, 5
      %v695 = vsel %vm503, %v690, %v694
      %v697 = vshrl.u32 %v438, 16
      %v699 = vrot.slane %v697, 4
      %v700 = vshll.u32 %v438, 16
      %v702 = vrot.slane %v700, 5
      %v703 = vor.u32 %v699, %v702
      %v704 = vrot.slane %v703, 4
      %v706 = vshll.u32 %v439, 16
      %v708 = vrot.slane %v706, 5
      %v709 = vsel %vm503, %v704, %v708
      %v710 = vshrl.u32 %v439, 16
      %v712 = vrot.slane %v710, 4
      %v713 = vor.u32 %v712, %v708
      %v714 = vrot.slane %v713, 4
      %v716 = vshll.u32 %v440, 16
      %v718 = vrot.slane %v716, 5
      %v719 = vsel %vm503, %v714, %v718
      %v721 = vshrl.u32 %v441, 16
      %v723 = vrot.slane %v721, 4
      %v724 = vshll.u32 %v441, 16
      %v726 = vrot.slane %v724, 5
      %v727 = vor.u32 %v723, %v726
      %v728 = vrot.slane %v727, 4
      %v730 = vshll.u32 %v442, 16
      %v732 = vrot.slane %v730, 5
      %v733 = vsel %vm503, %v728, %v732
      %v734 = vshrl.u32 %v442, 16
      %v736 = vrot.slane %v734, 4
      %v737 = vor.u32 %v736, %v732
      %v738 = vrot.slane %v737, 4
      %v740 = vshll.u32 %v443, 16
      %v742 = vrot.slane %v740, 5
      %v743 = vsel %vm503, %v738, %v742
      %v745 = vshrl.u32 %v444, 16
      %v747 = vrot.slane %v745, 4
      %v748 = vshll.u32 %v444, 16
      %v750 = vrot.slane %v748, 5
      %v751 = vor.u32 %v747, %v750
      %v752 = vrot.slane %v751, 4
      %v754 = vshll.u32 %v445, 16
      %v756 = vrot.slane %v754, 5
      %v757 = vsel %vm503, %v752, %v756
      %v758 = vshrl.u32 %v445, 16
      %v760 = vrot.slane %v758, 4
      %v761 = vor.u32 %v760, %v756
      %v762 = vrot.slane %v761, 4
      %v764 = vshll.u32 %v446, 16
      %v766 = vrot.slane %v764, 5
      %v767 = vsel %vm503, %v762, %v766
      %v769 = vshrl.u32 %v447, 16
      %v771 = vrot.slane %v769, 4
      %v772 = vshll.u32 %v447, 16
      %v774 = vrot.slane %v772, 5
      %v775 = vor.u32 %v771, %v774
      %v776 = vrot.slane %v775, 4
      %v778 = vshll.u32 %v448, 16
      %v780 = vrot.slane %v778, 5
      %v781 = vsel %vm503, %v776, %v780
      %v782 = vshrl.u32 %v448, 16
      %v784 = vrot.slane %v782, 4
      %v785 = vor.u32 %v784, %v780
      %v786 = vrot.slane %v785, 4
      %v788 = vshll.u32 %v449, 16
      %v790 = vrot.slane %v788, 5
      %v791 = vsel %vm503, %v786, %v790
      %v793 = vshrl.u32 %v450, 16
      %v795 = vrot.slane %v793, 4
      %v796 = vshll.u32 %v450, 16
      %v798 = vrot.slane %v796, 5
      %v799 = vor.u32 %v795, %v798
      %v800 = vrot.slane %v799, 4
      %v802 = vshll.u32 %v451, 16
      %v804 = vrot.slane %v802, 5
      %v805 = vsel %vm503, %v800, %v804
      %v806 = vshrl.u32 %v451, 16
      %v808 = vrot.slane %v806, 4
      %v809 = vor.u32 %v808, %v804
      %v810 = vrot.slane %v809, 4
      %v812 = vshll.u32 %v452, 16
      %v814 = vrot.slane %v812, 5
      %v815 = vsel %vm503, %v810, %v814
      %v817 = vshrl.u32 %v453, 16
      %v819 = vrot.slane %v817, 4
      %v820 = vshll.u32 %v453, 16
      %v822 = vrot.slane %v820, 5
      %v823 = vor.u32 %v819, %v822
      %v824 = vrot.slane %v823, 4
      %v826 = vshll.u32 %v454, 16
      %v828 = vrot.slane %v826, 5
      %v829 = vsel %vm503, %v824, %v828
      %v830 = vshrl.u32 %v454, 16
      %v832 = vrot.slane %v830, 4
      %v833 = vor.u32 %v832, %v828
      %v834 = vrot.slane %v833, 4
      %v836 = vshll.u32 %v455, 16
      %v838 = vrot.slane %v836, 5
      %v839 = vsel %vm503, %v834, %v838
      %v841 = vshrl.u32 %v456, 16
      %v843 = vrot.slane %v841, 4
      %v844 = vshll.u32 %v456, 16
      %v846 = vrot.slane %v844, 5
      %v847 = vor.u32 %v843, %v846
      %v848 = vrot.slane %v847, 4
      %v850 = vshll.u32 %v457, 16
      %v852 = vrot.slane %v850, 5
      %v853 = vsel %vm503, %v848, %v852
      %v854 = vshrl.u32 %v457, 16
      %v856 = vrot.slane %v854, 4
      %v857 = vor.u32 %v856, %v852
      %v858 = vrot.slane %v857, 4
      %v860 = vshll.u32 %v458, 16
      %v862 = vrot.slane %v860, 5
      %v863 = vsel %vm503, %v858, %v862
      %v865 = vshrl.u32 %v459, 16
      %v867 = vrot.slane %v865, 4
      %v868 = vshll.u32 %v459, 16
      %v870 = vrot.slane %v868, 5
      %v871 = vor.u32 %v867, %v870
      %v872 = vrot.slane %v871, 4
      %v874 = vshll.u32 %v460, 16
      %v876 = vrot.slane %v874, 5
      %v877 = vsel %vm503, %v872, %v876
      %v878 = vshrl.u32 %v460, 16
      %v880 = vrot.slane %v878, 4
      %v881 = vor.u32 %v880, %v876
      %v882 = vrot.slane %v881, 4
      %v884 = vshll.u32 %v461, 16
      %v886 = vrot.slane %v884, 5
      %v887 = vsel %vm503, %v882, %v886
      %888 = vrot.lane.b32.xlu0 %v517, 4
      %v889 = vpop.permute.xlu0 %888
      %890 = vrot.lane.b32.xlu0 %v527, 4
      %v891 = vpop.permute.xlu0 %890
      %892 = vrot.lane.b32.xlu0 %v541, 4
      %v893 = vpop.permute.xlu0 %892
      %894 = vrot.lane.b32.xlu0 %v551, 4
      %v895 = vpop.permute.xlu0 %894
      %896 = vrot.lane.b32.xlu0 %v565, 4
      %v897 = vpop.permute.xlu0 %896
      %898 = vrot.lane.b32.xlu0 %v575, 4
      %v899 = vpop.permute.xlu0 %898
      %900 = vrot.lane.b32.xlu0 %v589, 4
      %v901 = vpop.permute.xlu0 %900
      %902 = vrot.lane.b32.xlu0 %v599, 4
      %v903 = vpop.permute.xlu0 %902
      %904 = vrot.lane.b32.xlu0 %v613, 4
      %v905 = vpop.permute.xlu0 %904
      %906 = vrot.lane.b32.xlu0 %v623, 4
      %v907 = vpop.permute.xlu0 %906
      %908 = vrot.lane.b32.xlu0 %v637, 4
      %v909 = vpop.permute.xlu0 %908
      %910 = vrot.lane.b32.xlu0 %v647, 4
      %v911 = vpop.permute.xlu0 %910
      %912 = vrot.lane.b32.xlu0 %v661, 4
      %v913 = vpop.permute.xlu0 %912
      %914 = vrot.lane.b32.xlu0 %v671, 4
      %v915 = vpop.permute.xlu0 %914
      %916 = vrot.lane.b32.xlu0 %v685, 4
      %v917 = vpop.permute.xlu0 %916
      %918 = vrot.lane.b32.xlu0 %v695, 4
      %v919 = vpop.permute.xlu0 %918
      %920 = vrot.lane.b32.xlu0 %v709, 4
      %v921 = vpop.permute.xlu0 %920
      %922 = vrot.lane.b32.xlu0 %v719, 4
      %v923 = vpop.permute.xlu0 %922
      %924 = vrot.lane.b32.xlu0 %v733, 4
      %v925 = vpop.permute.xlu0 %924
      %926 = vrot.lane.b32.xlu0 %v743, 4
      %v927 = vpop.permute.xlu0 %926
      %928 = vrot.lane.b32.xlu0 %v757, 4
      %v929 = vpop.permute.xlu0 %928
      %930 = vrot.lane.b32.xlu0 %v767, 4
      %v931 = vpop.permute.xlu0 %930
      %932 = vrot.lane.b32.xlu0 %v781, 4
      %v933 = vpop.permute.xlu0 %932
      %934 = vrot.lane.b32.xlu0 %v791, 4
      %v935 = vpop.permute.xlu0 %934
      %936 = vrot.lane.b32.xlu0 %v805, 4
      %v937 = vpop.permute.xlu0 %936
      %938 = vrot.lane.b32.xlu0 %v815, 4
      %v939 = vpop.permute.xlu0 %938
      %940 = vrot.lane.b32.xlu0 %v829, 4
      %v941 = vpop.permute.xlu0 %940
      %942 = vrot.lane.b32.xlu0 %v839, 4
      %v943 = vpop.permute.xlu0 %942
      %944 = vrot.lane.b32.xlu0 %v853, 4
      %v945 = vpop.permute.xlu0 %944
      %946 = vrot.lane.b32.xlu0 %v863, 4
      %v947 = vpop.permute.xlu0 %946
      %948 = vrot.lane.b32.xlu0 %v877, 4
      %v949 = vpop.permute.xlu0 %948
      %950 = vrot.lane.b32.xlu0 %v887, 4
      %v951 = vpop.permute.xlu0 %950
      %vm984 = vcmask 60448
      %985 = vst.msk [vmem:[#allocation2] sm:$0xf] %vm984, %v889
      %986 = vst.msk [vmem:[#allocation2 + $0x4] sm:$0xf] %vm984, %v891
      %987 = vst.msk [vmem:[#allocation2 + $0x8] sm:$0xf] %vm984, %v893
      %988 = vst.msk [vmem:[#allocation2 + $0xc] sm:$0xf] %vm984, %v895
      %989 = vst.msk [vmem:[#allocation2 + $0x10] sm:$0xf] %vm984, %v897
      %990 = vst.msk [vmem:[#allocation2 + $0x14] sm:$0xf] %vm984, %v899
      %991 = vst.msk [vmem:[#allocation2 + $0x18] sm:$0xf] %vm984, %v901
      %992 = vst.msk [vmem:[#allocation2 + $0x1c] sm:$0xf] %vm984, %v903
      %993 = vst.msk [vmem:[#allocation2 + $0x20] sm:$0xf] %vm984, %v905
      %994 = vst.msk [vmem:[#allocation2 + $0x24] sm:$0xf] %vm984, %v907
      %995 = vst.msk [vmem:[#allocation2 + $0x28] sm:$0xf] %vm984, %v909
      %996 = vst.msk [vmem:[#allocation2 + $0x2c] sm:$0xf] %vm984, %v911
      %997 = vst.msk [vmem:[#allocation2 + $0x30] sm:$0xf] %vm984, %v913
      %998 = vst.msk [vmem:[#allocation2 + $0x34] sm:$0xf] %vm984, %v915
      %999 = vst.msk [vmem:[#allocation2 + $0x38] sm:$0xf] %vm984, %v917
      %1000 = vst.msk [vmem:[#allocation2 + $0x3c] sm:$0xf] %vm984, %v919
      %1001 = vst.msk [vmem:[#allocation2 + $0x40] sm:$0xf] %vm984, %v921
      %1002 = vst.msk [vmem:[#allocation2 + $0x44] sm:$0xf] %vm984, %v923
      %1003 = vst.msk [vmem:[#allocation2 + $0x48] sm:$0xf] %vm984, %v925
      %1004 = vst.msk [vmem:[#allocation2 + $0x4c] sm:$0xf] %vm984, %v927
      %1005 = vst.msk [vmem:[#allocation2 + $0x50] sm:$0xf] %vm984, %v929
      %1006 = vst.msk [vmem:[#allocation2 + $0x54] sm:$0xf] %vm984, %v931
      %1007 = vst.msk [vmem:[#allocation2 + $0x58] sm:$0xf] %vm984, %v933
      %1008 = vst.msk [vmem:[#allocation2 + $0x5c] sm:$0xf] %vm984, %v935
      %1009 = vst.msk [vmem:[#allocation2 + $0x60] sm:$0xf] %vm984, %v937
      %1010 = vst.msk [vmem:[#allocation2 + $0x64] sm:$0xf] %vm984, %v939
      %1011 = vst.msk [vmem:[#allocation2 + $0x68] sm:$0xf] %vm984, %v941
      %1012 = vst.msk [vmem:[#allocation2 + $0x6c] sm:$0xf] %vm984, %v943
      %1013 = vst.msk [vmem:[#allocation2 + $0x70] sm:$0xf] %vm984, %v945
      %1014 = vst.msk [vmem:[#allocation2 + $0x74] sm:$0xf] %vm984, %v947
      %1015 = vst.msk [vmem:[#allocation2 + $0x78] sm:$0xf] %vm984, %v949
      %1016 = vst.msk [vmem:[#allocation2 + $0x7c] sm:$0xf] %vm984, %v951
      %vm1065 = vcmask 1042432
      %vm1066 = vcmask 1046532
      %vm1067 = vmor %vm1065, %vm1066
      %v1068 = vrot.slane %v414, 5
      %v1069 = vrot.slane %v1068, 4
      %v1070 = vrot.slane %v415, 5
      %v1071 = vsel %vm1067, %v1069, %v1070
      %v1072 = vrot.slane %v1070, 4
      %v1073 = vrot.slane %v416, 5
      %v1074 = vsel %vm1067, %v1072, %v1073
      %v1075 = vrot.slane %v417, 5
      %v1076 = vrot.slane %v1075, 4
      %v1077 = vrot.slane %v418, 5
      %v1078 = vsel %vm1067, %v1076, %v1077
      %v1079 = vrot.slane %v1077, 4
      %v1080 = vrot.slane %v419, 5
      %v1081 = vsel %vm1067, %v1079, %v1080
      %v1082 = vrot.slane %v420, 5
      %v1083 = vrot.slane %v1082, 4
      %v1084 = vrot.slane %v421, 5
      %v1085 = vsel %vm1067, %v1083, %v1084
      %v1086 = vrot.slane %v1084, 4
      %v1087 = vrot.slane %v422, 5
      %v1088 = vsel %vm1067, %v1086, %v1087
      %v1089 = vrot.slane %v423, 5
      %v1090 = vrot.slane %v1089, 4
      %v1091 = vrot.slane %v424, 5
      %v1092 = vsel %vm1067, %v1090, %v1091
      %v1093 = vrot.slane %v1091, 4
      %v1094 = vrot.slane %v425, 5
      %v1095 = vsel %vm1067, %v1093, %v1094
      %v1096 = vrot.slane %v426, 5
      %v1097 = vrot.slane %v1096, 4
      %v1098 = vrot.slane %v427, 5
      %v1099 = vsel %vm1067, %v1097, %v1098
      %v1100 = vrot.slane %v1098, 4
      %v1101 = vrot.slane %v428, 5
      %v1102 = vsel %vm1067, %v1100, %v1101
      %v1103 = vrot.slane %v429, 5
      %v1104 = vrot.slane %v1103, 4
      %v1105 = vrot.slane %v430, 5
      %v1106 = vsel %vm1067, %v1104, %v1105
      %v1107 = vrot.slane %v1105, 4
      %v1108 = vrot.slane %v431, 5
      %v1109 = vsel %vm1067, %v1107, %v1108
      %v1110 = vrot.slane %v432, 5
      %v1111 = vrot.slane %v1110, 4
      %v1112 = vrot.slane %v433, 5
      %v1113 = vsel %vm1067, %v1111, %v1112
      %v1114 = vrot.slane %v1112, 4
      %v1115 = vrot.slane %v434, 5
      %v1116 = vsel %vm1067, %v1114, %v1115
      %v1117 = vrot.slane %v435, 5
      %v1118 = vrot.slane %v1117, 4
      %v1119 = vrot.slane %v436, 5
      %v1120 = vsel %vm1067, %v1118, %v1119
      %v1121 = vrot.slane %v1119, 4
      %v1122 = vrot.slane %v437, 5
      %v1123 = vsel %vm1067, %v1121, %v1122
      %v1124 = vrot.slane %v438, 5
      %v1125 = vrot.slane %v1124, 4
      %v1126 = vrot.slane %v439, 5
      %v1127 = vsel %vm1067, %v1125, %v1126
      %v1128 = vrot.slane %v1126, 4
      %v1129 = vrot.slane %v440, 5
      %v1130 = vsel %vm1067, %v1128, %v1129
      %v1131 = vrot.slane %v441, 5
      %v1132 = vrot.slane %v1131, 4
      %v1133 = vrot.slane %v442, 5
      %v1134 = vsel %vm1067, %v1132, %v1133
      %v1135 = vrot.slane %v1133, 4
      %v1136 = vrot.slane %v443, 5
      %v1137 = vsel %vm1067, %v1135, %v1136
      %v1138 = vrot.slane %v444, 5
      %v1139 = vrot.slane %v1138, 4
      %v1140 = vrot.slane %v445, 5
      %v1141 = vsel %vm1067, %v1139, %v1140
      %v1142 = vrot.slane %v1140, 4
      %v1143 = vrot.slane %v446, 5
      %v1144 = vsel %vm1067, %v1142, %v1143
      %v1145 = vrot.slane %v447, 5
      %v1146 = vrot.slane %v1145, 4
      %v1147 = vrot.slane %v448, 5
      %v1148 = vsel %vm1067, %v1146, %v1147
      %v1149 = vrot.slane %v1147, 4
      %v1150 = vrot.slane %v449, 5
      %v1151 = vsel %vm1067, %v1149, %v1150
      %v1152 = vrot.slane %v450, 5
      %v1153 = vrot.slane %v1152, 4
      %v1154 = vrot.slane %v451, 5
      %v1155 = vsel %vm1067, %v1153, %v1154
      %v1156 = vrot.slane %v1154, 4
      %v1157 = vrot.slane %v452, 5
      %v1158 = vsel %vm1067, %v1156, %v1157
      %v1159 = vrot.slane %v453, 5
      %v1160 = vrot.slane %v1159, 4
      %v1161 = vrot.slane %v454, 5
      %v1162 = vsel %vm1067, %v1160, %v1161
      %v1163 = vrot.slane %v1161, 4
      %v1164 = vrot.slane %v455, 5
      %v1165 = vsel %vm1067, %v1163, %v1164
      %v1166 = vrot.slane %v456, 5
      %v1167 = vrot.slane %v1166, 4
      %v1168 = vrot.slane %v457, 5
      %v1169 = vsel %vm1067, %v1167, %v1168
      %v1170 = vrot.slane %v1168, 4
      %v1171 = vrot.slane %v458, 5
      %v1172 = vsel %vm1067, %v1170, %v1171
      %v1173 = vrot.slane %v459, 5
      %v1174 = vrot.slane %v1173, 4
      %v1175 = vrot.slane %v460, 5
      %v1176 = vsel %vm1067, %v1174, %v1175
      %v1177 = vrot.slane %v1175, 4
      %v1178 = vrot.slane %v461, 5
      %v1179 = vsel %vm1067, %v1177, %v1178
      %1180 = vrot.lane.b32.xlu0 %v1071, 8
      %v1181 = vpop.permute.xlu0 %1180
      %1182 = vrot.lane.b32.xlu0 %v1074, 8
      %v1183 = vpop.permute.xlu0 %1182
      %1184 = vrot.lane.b32.xlu0 %v1078, 8
      %v1185 = vpop.permute.xlu0 %1184
      %1186 = vrot.lane.b32.xlu0 %v1081, 8
      %v1187 = vpop.permute.xlu0 %1186
      %1188 = vrot.lane.b32.xlu0 %v1085, 8
      %v1189 = vpop.permute.xlu0 %1188
      %1190 = vrot.lane.b32.xlu0 %v1088, 8
      %v1191 = vpop.permute.xlu0 %1190
      %1192 = vrot.lane.b32.xlu0 %v1092, 8
      %v1193 = vpop.permute.xlu0 %1192
      %1194 = vrot.lane.b32.xlu0 %v1095, 8
      %v1195 = vpop.permute.xlu0 %1194
      %1196 = vrot.lane.b32.xlu0 %v1099, 8
      %v1197 = vpop.permute.xlu0 %1196
      %1198 = vrot.lane.b32.xlu0 %v1102, 8
      %v1199 = vpop.permute.xlu0 %1198
      %1200 = vrot.lane.b32.xlu0 %v1106, 8
      %v1201 = vpop.permute.xlu0 %1200
      %1202 = vrot.lane.b32.xlu0 %v1109, 8
      %v1203 = vpop.permute.xlu0 %1202
      %1204 = vrot.lane.b32.xlu0 %v1113, 8
      %v1205 = vpop.permute.xlu0 %1204
      %1206 = vrot.lane.b32.xlu0 %v1116, 8
      %v1207 = vpop.permute.xlu0 %1206
      %1208 = vrot.lane.b32.xlu0 %v1120, 8
      %v1209 = vpop.permute.xlu0 %1208
      %1210 = vrot.lane.b32.xlu0 %v1123, 8
      %v1211 = vpop.permute.xlu0 %1210
      %1212 = vrot.lane.b32.xlu0 %v1127, 8
      %v1213 = vpop.permute.xlu0 %1212
      %1214 = vrot.lane.b32.xlu0 %v1130, 8
      %v1215 = vpop.permute.xlu0 %1214
      %1216 = vrot.lane.b32.xlu0 %v1134, 8
      %v1217 = vpop.permute.xlu0 %1216
      %1218 = vrot.lane.b32.xlu0 %v1137, 8
      %v1219 = vpop.permute.xlu0 %1218
      %1220 = vrot.lane.b32.xlu0 %v1141, 8
      %v1221 = vpop.permute.xlu0 %1220
      %1222 = vrot.lane.b32.xlu0 %v1144, 8
      %v1223 = vpop.permute.xlu0 %1222
      %1224 = vrot.lane.b32.xlu0 %v1148, 8
      %v1225 = vpop.permute.xlu0 %1224
      %1226 = vrot.lane.b32.xlu0 %v1151, 8
      %v1227 = vpop.permute.xlu0 %1226
      %1228 = vrot.lane.b32.xlu0 %v1155, 8
      %v1229 = vpop.permute.xlu0 %1228
      %1230 = vrot.lane.b32.xlu0 %v1158, 8
      %v1231 = vpop.permute.xlu0 %1230
      %1232 = vrot.lane.b32.xlu0 %v1162, 8
      %v1233 = vpop.permute.xlu0 %1232
      %1234 = vrot.lane.b32.xlu0 %v1165, 8
      %v1235 = vpop.permute.xlu0 %1234
      %1236 = vrot.lane.b32.xlu0 %v1169, 8
      %v1237 = vpop.permute.xlu0 %1236
      %1238 = vrot.lane.b32.xlu0 %v1172, 8
      %v1239 = vpop.permute.xlu0 %1238
      %1240 = vrot.lane.b32.xlu0 %v1176, 8
      %v1241 = vpop.permute.xlu0 %1240
      %1242 = vrot.lane.b32.xlu0 %v1179, 8
      %v1243 = vpop.permute.xlu0 %1242
      %vm1276 = vcmask 93248
      %1277 = vst.msk [vmem:[#allocation2] sm:$0xf] %vm1276, %v1181
      %1278 = vst.msk [vmem:[#allocation2 + $0x4] sm:$0xf] %vm1276, %v1183
      %1279 = vst.msk [vmem:[#allocation2 + $0x8] sm:$0xf] %vm1276, %v1185
      %1280 = vst.msk [vmem:[#allocation2 + $0xc] sm:$0xf] %vm1276, %v1187
      %1281 = vst.msk [vmem:[#allocation2 + $0x10] sm:$0xf] %vm1276, %v1189
      %1282 = vst.msk [vmem:[#allocation2 + $0x14] sm:$0xf] %vm1276, %v1191
      %1283 = vst.msk [vmem:[#allocation2 + $0x18] sm:$0xf] %vm1276, %v1193
      %1284 = vst.msk [vmem:[#allocation2 + $0x1c] sm:$0xf] %vm1276, %v1195
      %1285 = vst.msk [vmem:[#allocation2 + $0x20] sm:$0xf] %vm1276, %v1197
      %1286 = vst.msk [vmem:[#allocation2 + $0x24] sm:$0xf] %vm1276, %v1199
      %1287 = vst.msk [vmem:[#allocation2 + $0x28] sm:$0xf] %vm1276, %v1201
      %1288 = vst.msk [vmem:[#allocation2 + $0x2c] sm:$0xf] %vm1276, %v1203
      %1289 = vst.msk [vmem:[#allocation2 + $0x30] sm:$0xf] %vm1276, %v1205
      %1290 = vst.msk [vmem:[#allocation2 + $0x34] sm:$0xf] %vm1276, %v1207
      %1291 = vst.msk [vmem:[#allocation2 + $0x38] sm:$0xf] %vm1276, %v1209
      %1292 = vst.msk [vmem:[#allocation2 + $0x3c] sm:$0xf] %vm1276, %v1211
      %1293 = vst.msk [vmem:[#allocation2 + $0x40] sm:$0xf] %vm1276, %v1213
      %1294 = vst.msk [vmem:[#allocation2 + $0x44] sm:$0xf] %vm1276, %v1215
      %1295 = vst.msk [vmem:[#allocation2 + $0x48] sm:$0xf] %vm1276, %v1217
      %1296 = vst.msk [vmem:[#allocation2 + $0x4c] sm:$0xf] %vm1276, %v1219
      %1297 = vst.msk [vmem:[#allocation2 + $0x50] sm:$0xf] %vm1276, %v1221
      %1298 = vst.msk [vmem:[#allocation2 + $0x54] sm:$0xf] %vm1276, %v1223
      %1299 = vst.msk [vmem:[#allocation2 + $0x58] sm:$0xf] %vm1276, %v1225
      %1300 = vst.msk [vmem:[#allocation2 + $0x5c] sm:$0xf] %vm1276, %v1227
      %1301 = vst.msk [vmem:[#allocation2 + $0x60] sm:$0xf] %vm1276, %v1229
      %1302 = vst.msk [vmem:[#allocation2 + $0x64] sm:$0xf] %vm1276, %v1231
      %1303 = vst.msk [vmem:[#allocation2 + $0x68] sm:$0xf] %vm1276, %v1233
      %1304 = vst.msk [vmem:[#allocation2 + $0x6c] sm:$0xf] %vm1276, %v1235
      %1305 = vst.msk [vmem:[#allocation2 + $0x70] sm:$0xf] %vm1276, %v1237
      %1306 = vst.msk [vmem:[#allocation2 + $0x74] sm:$0xf] %vm1276, %v1239
      %1307 = vst.msk [vmem:[#allocation2 + $0x78] sm:$0xf] %vm1276, %v1241
      %1308 = vst.msk [vmem:[#allocation2 + $0x7c] sm:$0xf] %vm1276, %v1243
      %1311 = vrot.lane.b32.xlu0 %v417, 12
      %v1312 = vpop.permute.xlu0 %1311
      %1313 = vrot.lane.b32.xlu0 %v418, 12
      %v1314 = vpop.permute.xlu0 %1313
      %1315 = vrot.lane.b32.xlu0 %v420, 12
      %v1316 = vpop.permute.xlu0 %1315
      %1317 = vrot.lane.b32.xlu0 %v421, 12
      %v1318 = vpop.permute.xlu0 %1317
      %1319 = vrot.lane.b32.xlu0 %v423, 12
      %v1320 = vpop.permute.xlu0 %1319
      %1321 = vrot.lane.b32.xlu0 %v424, 12
      %v1322 = vpop.permute.xlu0 %1321
      %1323 = vrot.lane.b32.xlu0 %v426, 12
      %v1324 = vpop.permute.xlu0 %1323
      %1325 = vrot.lane.b32.xlu0 %v427, 12
      %v1326 = vpop.permute.xlu0 %1325
      %1327 = vrot.lane.b32.xlu0 %v429, 12
      %v1328 = vpop.permute.xlu0 %1327
      %1329 = vrot.lane.b32.xlu0 %v430, 12
      %v1330 = vpop.permute.xlu0 %1329
      %1331 = vrot.lane.b32.xlu0 %v432, 12
      %v1332 = vpop.permute.xlu0 %1331
      %1333 = vrot.lane.b32.xlu0 %v433, 12
      %v1334 = vpop.permute.xlu0 %1333
      %1335 = vrot.lane.b32.xlu0 %v435, 12
      %v1336 = vpop.permute.xlu0 %1335
      %1337 = vrot.lane.b32.xlu0 %v436, 12
      %v1338 = vpop.permute.xlu0 %1337
      %1339 = vrot.lane.b32.xlu0 %v438, 12
      %v1340 = vpop.permute.xlu0 %1339
      %1341 = vrot.lane.b32.xlu0 %v439, 12
      %v1342 = vpop.permute.xlu0 %1341
      %1343 = vrot.lane.b32.xlu0 %v441, 12
      %v1344 = vpop.permute.xlu0 %1343
      %1345 = vrot.lane.b32.xlu0 %v442, 12
      %v1346 = vpop.permute.xlu0 %1345
      %1347 = vrot.lane.b32.xlu0 %v444, 12
      %v1348 = vpop.permute.xlu0 %1347
      %1349 = vrot.lane.b32.xlu0 %v445, 12
      %v1350 = vpop.permute.xlu0 %1349
      %1351 = vrot.lane.b32.xlu0 %v447, 12
      %v1352 = vpop.permute.xlu0 %1351
      %1353 = vrot.lane.b32.xlu0 %v448, 12
      %v1354 = vpop.permute.xlu0 %1353
      %1355 = vrot.lane.b32.xlu0 %v450, 12
      %v1356 = vpop.permute.xlu0 %1355
      %1357 = vrot.lane.b32.xlu0 %v451, 12
      %v1358 = vpop.permute.xlu0 %1357
      %1359 = vrot.lane.b32.xlu0 %v453, 12
      %v1360 = vpop.permute.xlu0 %1359
      %1361 = vrot.lane.b32.xlu0 %v454, 12
      %v1362 = vpop.permute.xlu0 %1361
      %1363 = vrot.lane.b32.xlu0 %v456, 12
      %v1364 = vpop.permute.xlu0 %1363
      %1365 = vrot.lane.b32.xlu0 %v457, 12
      %v1366 = vpop.permute.xlu0 %1365
      %1367 = vrot.lane.b32.xlu0 %v459, 12
      %v1368 = vpop.permute.xlu0 %1367
      %1369 = vrot.lane.b32.xlu0 %v460, 12
      %v1370 = vpop.permute.xlu0 %1369
      %1371 = vrot.lane.b32.xlu0 %v462, 12
      %v1372 = vpop.permute.xlu0 %1371
      %1373 = vrot.lane.b32.xlu0 %v463, 12
      %v1374 = vpop.permute.xlu0 %1373
      %vm1407 = vcmask 126048
      %1408 = vst.msk [vmem:[#allocation2] sm:$0xf] %vm1407, %v1312
      %1409 = vst.msk [vmem:[#allocation2 + $0x4] sm:$0xf] %vm1407, %v1314
      %1410 = vst.msk [vmem:[#allocation2 + $0x8] sm:$0xf] %vm1407, %v1316
      %1411 = vst.msk [vmem:[#allocation2 + $0xc] sm:$0xf] %vm1407, %v1318
      %1412 = vst.msk [vmem:[#allocation2 + $0x10] sm:$0xf] %vm1407, %v1320
      %1413 = vst.msk [vmem:[#allocation2 + $0x14] sm:$0xf] %vm1407, %v1322
      %1414 = vst.msk [vmem:[#allocation2 + $0x18] sm:$0xf] %vm1407, %v1324
      %1415 = vst.msk [vmem:[#allocation2 + $0x1c] sm:$0xf] %vm1407, %v1326
      %1416 = vst.msk [vmem:[#allocation2 + $0x20] sm:$0xf] %vm1407, %v1328
      %1417 = vst.msk [vmem:[#allocation2 + $0x24] sm:$0xf] %vm1407, %v1330
      %1418 = vst.msk [vmem:[#allocation2 + $0x28] sm:$0xf] %vm1407, %v1332
      %1419 = vst.msk [vmem:[#allocation2 + $0x2c] sm:$0xf] %vm1407, %v1334
      %1420 = vst.msk [vmem:[#allocation2 + $0x30] sm:$0xf] %vm1407, %v1336
      %1421 = vst.msk [vmem:[#allocation2 + $0x34] sm:$0xf] %vm1407, %v1338
      %1422 = vst.msk [vmem:[#allocation2 + $0x38] sm:$0xf] %vm1407, %v1340
      %1423 = vst.msk [vmem:[#allocation2 + $0x3c] sm:$0xf] %vm1407, %v1342
      %1424 = vst.msk [vmem:[#allocation2 + $0x40] sm:$0xf] %vm1407, %v1344
      %1425 = vst.msk [vmem:[#allocation2 + $0x44] sm:$0xf] %vm1407, %v1346
      %1426 = vst.msk [vmem:[#allocation2 + $0x48] sm:$0xf] %vm1407, %v1348
      %1427 = vst.msk [vmem:[#allocation2 + $0x4c] sm:$0xf] %vm1407, %v1350
      %1428 = vst.msk [vmem:[#allocation2 + $0x50] sm:$0xf] %vm1407, %v1352
      %1429 = vst.msk [vmem:[#allocation2 + $0x54] sm:$0xf] %vm1407, %v1354
      %1430 = vst.msk [vmem:[#allocation2 + $0x58] sm:$0xf] %vm1407, %v1356
      %1431 = vst.msk [vmem:[#allocation2 + $0x5c] sm:$0xf] %vm1407, %v1358
      %1432 = vst.msk [vmem:[#allocation2 + $0x60] sm:$0xf] %vm1407, %v1360
      %1433 = vst.msk [vmem:[#allocation2 + $0x64] sm:$0xf] %vm1407, %v1362
      %1434 = vst.msk [vmem:[#allocation2 + $0x68] sm:$0xf] %vm1407, %v1364
      %1435 = vst.msk [vmem:[#allocation2 + $0x6c] sm:$0xf] %vm1407, %v1366
      %1436 = vst.msk [vmem:[#allocation2 + $0x70] sm:$0xf] %vm1407, %v1368
      %1437 = vst.msk [vmem:[#allocation2 + $0x74] sm:$0xf] %vm1407, %v1370
      %1438 = vst.msk [vmem:[#allocation2 + $0x78] sm:$0xf] %vm1407, %v1372
      %1439 = vst.msk [vmem:[#allocation2 + $0x7c] sm:$0xf] %vm1407, %v1374
      %v1441 = vshrl.u32 %v462, 16
      %v1443 = vrot.slane %v1441, 4
      %v1444 = vshll.u32 %v462, 16
      %v1446 = vrot.slane %v1444, 5
      %v1447 = vor.u32 %v1443, %v1446
      %v1448 = vrot.slane %v1447, 4
      %v1450 = vshll.u32 %v463, 16
      %v1452 = vrot.slane %v1450, 5
      %v1453 = vsel %vm503, %v1448, %v1452
      %v1454 = vshrl.u32 %v463, 16
      %v1456 = vrot.slane %v1454, 4
      %v1457 = vor.u32 %v1456, %v1452
      %v1458 = vrot.slane %v1457, 4
      %v1460 = vshll.u32 %v464, 16
      %v1462 = vrot.slane %v1460, 5
      %v1463 = vsel %vm503, %v1458, %v1462
      %1464 = vrot.lane.b32.xlu0 %v541, 16
      %v1465 = vpop.permute.xlu0 %1464
      %1466 = vrot.lane.b32.xlu0 %v551, 16
      %v1467 = vpop.permute.xlu0 %1466
      %1468 = vrot.lane.b32.xlu0 %v565, 16
      %v1469 = vpop.permute.xlu0 %1468
      %1470 = vrot.lane.b32.xlu0 %v575, 16
      %v1471 = vpop.permute.xlu0 %1470
      %1472 = vrot.lane.b32.xlu0 %v589, 16
      %v1473 = vpop.permute.xlu0 %1472
      %1474 = vrot.lane.b32.xlu0 %v599, 16
      %v1475 = vpop.permute.xlu0 %1474
      %1476 = vrot.lane.b32.xlu0 %v613, 16
      %v1477 = vpop.permute.xlu0 %1476
      %1478 = vrot.lane.b32.xlu0 %v623, 16
      %v1479 = vpop.permute.xlu0 %1478
      %1480 = vrot.lane.b32.xlu0 %v637, 16
      %v1481 = vpop.permute.xlu0 %1480
      %1482 = vrot.lane.b32.xlu0 %v647, 16
      %v1483 = vpop.permute.xlu0 %1482
      %1484 = vrot.lane.b32.xlu0 %v661, 16
      %v1485 = vpop.permute.xlu0 %1484
      %1486 = vrot.lane.b32.xlu0 %v671, 16
      %v1487 = vpop.permute.xlu0 %1486
      %1488 = vrot.lane.b32.xlu0 %v685, 16
      %v1489 = vpop.permute.xlu0 %1488
      %1490 = vrot.lane.b32.xlu0 %v695, 16
      %v1491 = vpop.permute.xlu0 %1490
      %1492 = vrot.lane.b32.xlu0 %v709, 16
      %v1493 = vpop.permute.xlu0 %1492
      %1494 = vrot.lane.b32.xlu0 %v719, 16
      %v1495 = vpop.permute.xlu0 %1494
      %1496 = vrot.lane.b32.xlu0 %v733, 16
      %v1497 = vpop.permute.xlu0 %1496
      %1498 = vrot.lane.b32.xlu0 %v743, 16
      %v1499 = vpop.permute.xlu0 %1498
      %1500 = vrot.lane.b32.xlu0 %v757, 16
      %v1501 = vpop.permute.xlu0 %1500
      %1502 = vrot.lane.b32.xlu0 %v767, 16
      %v1503 = vpop.permute.xlu0 %1502
      %1504 = vrot.lane.b32.xlu0 %v781, 16
      %v1505 = vpop.permute.xlu0 %1504
      %1506 = vrot.lane.b32.xlu0 %v791, 16
      %v1507 = vpop.permute.xlu0 %1506
      %1508 = vrot.lane.b32.xlu0 %v805, 16
      %v1509 = vpop.permute.xlu0 %1508
      %1510 = vrot.lane.b32.xlu0 %v815, 16
      %v1511 = vpop.permute.xlu0 %1510
      %1512 = vrot.lane.b32.xlu0 %v829, 16
      %v1513 = vpop.permute.xlu0 %1512
      %1514 = vrot.lane.b32.xlu0 %v839, 16
      %v1515 = vpop.permute.xlu0 %1514
      %1516 = vrot.lane.b32.xlu0 %v853, 16
      %v1517 = vpop.permute.xlu0 %1516
      %1518 = vrot.lane.b32.xlu0 %v863, 16
      %v1519 = vpop.permute.xlu0 %1518
      %1520 = vrot.lane.b32.xlu0 %v877, 16
      %v1521 = vpop.permute.xlu0 %1520
      %1522 = vrot.lane.b32.xlu0 %v887, 16
      %v1523 = vpop.permute.xlu0 %1522
      %1524 = vrot.lane.b32.xlu0 %v1453, 16
      %v1525 = vpop.permute.xlu0 %1524
      %1526 = vrot.lane.b32.xlu0 %v1463, 16
      %v1527 = vpop.permute.xlu0 %1526
      %vm1560 = vcmask 158848
      %1561 = vst.msk [vmem:[#allocation2] sm:$0xf] %vm1560, %v1465
      %1562 = vst.msk [vmem:[#allocation2 + $0x4] sm:$0xf] %vm1560, %v1467
      %1563 = vst.msk [vmem:[#allocation2 + $0x8] sm:$0xf] %vm1560, %v1469
      %1564 = vst.msk [vmem:[#allocation2 + $0xc] sm:$0xf] %vm1560, %v1471
      %1565 = vst.msk [vmem:[#allocation2 + $0x10] sm:$0xf] %vm1560, %v1473
      %1566 = vst.msk [vmem:[#allocation2 + $0x14] sm:$0xf] %vm1560, %v1475
      %1567 = vst.msk [vmem:[#allocation2 + $0x18] sm:$0xf] %vm1560, %v1477
      %1568 = vst.msk [vmem:[#allocation2 + $0x1c] sm:$0xf] %vm1560, %v1479
      %1569 = vst.msk [vmem:[#allocation2 + $0x20] sm:$0xf] %vm1560, %v1481
      %1570 = vst.msk [vmem:[#allocation2 + $0x24] sm:$0xf] %vm1560, %v1483
      %1571 = vst.msk [vmem:[#allocation2 + $0x28] sm:$0xf] %vm1560, %v1485
      %1572 = vst.msk [vmem:[#allocation2 + $0x2c] sm:$0xf] %vm1560, %v1487
      %1573 = vst.msk [vmem:[#allocation2 + $0x30] sm:$0xf] %vm1560, %v1489
      %1574 = vst.msk [vmem:[#allocation2 + $0x34] sm:$0xf] %vm1560, %v1491
      %1575 = vst.msk [vmem:[#allocation2 + $0x38] sm:$0xf] %vm1560, %v1493
      %1576 = vst.msk [vmem:[#allocation2 + $0x3c] sm:$0xf] %vm1560, %v1495
      %1577 = vst.msk [vmem:[#allocation2 + $0x40] sm:$0xf] %vm1560, %v1497
      %1578 = vst.msk [vmem:[#allocation2 + $0x44] sm:$0xf] %vm1560, %v1499
      %1579 = vst.msk [vmem:[#allocation2 + $0x48] sm:$0xf] %vm1560, %v1501
      %1580 = vst.msk [vmem:[#allocation2 + $0x4c] sm:$0xf] %vm1560, %v1503
      %1581 = vst.msk [vmem:[#allocation2 + $0x50] sm:$0xf] %vm1560, %v1505
      %1582 = vst.msk [vmem:[#allocation2 + $0x54] sm:$0xf] %vm1560, %v1507
      %1583 = vst.msk [vmem:[#allocation2 + $0x58] sm:$0xf] %vm1560, %v1509
      %1584 = vst.msk [vmem:[#allocation2 + $0x5c] sm:$0xf] %vm1560, %v1511
      %1585 = vst.msk [vmem:[#allocation2 + $0x60] sm:$0xf] %vm1560, %v1513
      %1586 = vst.msk [vmem:[#allocation2 + $0x64] sm:$0xf] %vm1560, %v1515
      %1587 = vst.msk [vmem:[#allocation2 + $0x68] sm:$0xf] %vm1560, %v1517
      %1588 = vst.msk [vmem:[#allocation2 + $0x6c] sm:$0xf] %vm1560, %v1519
      %1589 = vst.msk [vmem:[#allocation2 + $0x70] sm:$0xf] %vm1560, %v1521
      %1590 = vst.msk [vmem:[#allocation2 + $0x74] sm:$0xf] %vm1560, %v1523
      %1591 = vst.msk [vmem:[#allocation2 + $0x78] sm:$0xf] %vm1560, %v1525
      %1592 = vst.msk [vmem:[#allocation2 + $0x7c] sm:$0xf] %vm1560, %v1527
      %v1594 = vrot.slane %v462, 5
      %v1595 = vrot.slane %v1594, 4
      %v1596 = vrot.slane %v463, 5
      %v1597 = vsel %vm1067, %v1595, %v1596
      %v1598 = vrot.slane %v1596, 4
      %v1599 = vrot.slane %v464, 5
      %v1600 = vsel %vm1067, %v1598, %v1599
      %1601 = vrot.lane.b32.xlu0 %v1078, 20
      %v1602 = vpop.permute.xlu0 %1601
      %1603 = vrot.lane.b32.xlu0 %v1081, 20
      %v1604 = vpop.permute.xlu0 %1603
      %1605 = vrot.lane.b32.xlu0 %v1085, 20
      %v1606 = vpop.permute.xlu0 %1605
      %1607 = vrot.lane.b32.xlu0 %v1088, 20
      %v1608 = vpop.permute.xlu0 %1607
      %1609 = vrot.lane.b32.xlu0 %v1092, 20
      %v1610 = vpop.permute.xlu0 %1609
      %1611 = vrot.lane.b32.xlu0 %v1095, 20
      %v1612 = vpop.permute.xlu0 %1611
      %1613 = vrot.lane.b32.xlu0 %v1099, 20
      %v1614 = vpop.permute.xlu0 %1613
      %1615 = vrot.lane.b32.xlu0 %v1102, 20
      %v1616 = vpop.permute.xlu0 %1615
      %1617 = vrot.lane.b32.xlu0 %v1106, 20
      %v1618 = vpop.permute.xlu0 %1617
      %1619 = vrot.lane.b32.xlu0 %v1109, 20
      %v1620 = vpop.permute.xlu0 %1619
      %1621 = vrot.lane.b32.xlu0 %v1113, 20
      %v1622 = vpop.permute.xlu0 %1621
      %1623 = vrot.lane.b32.xlu0 %v1116, 20
      %v1624 = vpop.permute.xlu0 %1623
      %1625 = vrot.lane.b32.xlu0 %v1120, 20
      %v1626 = vpop.permute.xlu0 %1625
      %1627 = vrot.lane.b32.xlu0 %v1123, 20
      %v1628 = vpop.permute.xlu0 %1627
      %1629 = vrot.lane.b32.xlu0 %v1127, 20
      %v1630 = vpop.permute.xlu0 %1629
      %1631 = vrot.lane.b32.xlu0 %v1130, 20
      %v1632 = vpop.permute.xlu0 %1631
      %1633 = vrot.lane.b32.xlu0 %v1134, 20
      %v1634 = vpop.permute.xlu0 %1633
      %1635 = vrot.lane.b32.xlu0 %v1137, 20
      %v1636 = vpop.permute.xlu0 %1635
      %1637 = vrot.lane.b32.xlu0 %v1141, 20
      %v1638 = vpop.permute.xlu0 %1637
      %1639 = vrot.lane.b32.xlu0 %v1144, 20
      %v1640 = vpop.permute.xlu0 %1639
      %1641 = vrot.lane.b32.xlu0 %v1148, 20
      %v1642 = vpop.permute.xlu0 %1641
      %1643 = vrot.lane.b32.xlu0 %v1151, 20
      %v1644 = vpop.permute.xlu0 %1643
      %1645 = vrot.lane.b32.xlu0 %v1155, 20
      %v1646 = vpop.permute.xlu0 %1645
      %1647 = vrot.lane.b32.xlu0 %v1158, 20
      %v1648 = vpop.permute.xlu0 %1647
      %1649 = vrot.lane.b32.xlu0 %v1162, 20
      %v1650 = vpop.permute.xlu0 %1649
      %1651 = vrot.lane.b32.xlu0 %v1165, 20
      %v1652 = vpop.permute.xlu0 %1651
      %1653 = vrot.lane.b32.xlu0 %v1169, 20
      %v1654 = vpop.permute.xlu0 %1653
      %1655 = vrot.lane.b32.xlu0 %v1172, 20
      %v1656 = vpop.permute.xlu0 %1655
      %1657 = vrot.lane.b32.xlu0 %v1176, 20
      %v1658 = vpop.permute.xlu0 %1657
      %1659 = vrot.lane.b32.xlu0 %v1179, 20
      %v1660 = vpop.permute.xlu0 %1659
      %1661 = vrot.lane.b32.xlu0 %v1597, 20
      %v1662 = vpop.permute.xlu0 %1661
      %1663 = vrot.lane.b32.xlu0 %v1600, 20
      %v1664 = vpop.permute.xlu0 %1663
      %vm1697 = vcmask 191648
      %1698 = vst.msk [vmem:[#allocation2] sm:$0xf] %vm1697, %v1602
      %1699 = vst.msk [vmem:[#allocation2 + $0x4] sm:$0xf] %vm1697, %v1604
      %1700 = vst.msk [vmem:[#allocation2 + $0x8] sm:$0xf] %vm1697, %v1606
      %1701 = vst.msk [vmem:[#allocation2 + $0xc] sm:$0xf] %vm1697, %v1608
      %1702 = vst.msk [vmem:[#allocation2 + $0x10] sm:$0xf] %vm1697, %v1610
      %1703 = vst.msk [vmem:[#allocation2 + $0x14] sm:$0xf] %vm1697, %v1612
      %1704 = vst.msk [vmem:[#allocation2 + $0x18] sm:$0xf] %vm1697, %v1614
      %1705 = vst.msk [vmem:[#allocation2 + $0x1c] sm:$0xf] %vm1697, %v1616
      %1706 = vst.msk [vmem:[#allocation2 + $0x20] sm:$0xf] %vm1697, %v1618
      %1707 = vst.msk [vmem:[#allocation2 + $0x24] sm:$0xf] %vm1697, %v1620
      %1708 = vst.msk [vmem:[#allocation2 + $0x28] sm:$0xf] %vm1697, %v1622
      %1709 = vst.msk [vmem:[#allocation2 + $0x2c] sm:$0xf] %vm1697, %v1624
      %1710 = vst.msk [vmem:[#allocation2 + $0x30] sm:$0xf] %vm1697, %v1626
      %1711 = vst.msk [vmem:[#allocation2 + $0x34] sm:$0xf] %vm1697, %v1628
      %1712 = vst.msk [vmem:[#allocation2 + $0x38] sm:$0xf] %vm1697, %v1630
      %1713 = vst.msk [vmem:[#allocation2 + $0x3c] sm:$0xf] %vm1697, %v1632
      %1714 = vst.msk [vmem:[#allocation2 + $0x40] sm:$0xf] %vm1697, %v1634
      %1715 = vst.msk [vmem:[#allocation2 + $0x44] sm:$0xf] %vm1697, %v1636
      %1716 = vst.msk [vmem:[#allocation2 + $0x48] sm:$0xf] %vm1697, %v1638
      %1717 = vst.msk [vmem:[#allocation2 + $0x4c] sm:$0xf] %vm1697, %v1640
      %1718 = vst.msk [vmem:[#allocation2 + $0x50] sm:$0xf] %vm1697, %v1642
      %1719 = vst.msk [vmem:[#allocation2 + $0x54] sm:$0xf] %vm1697, %v1644
      %1720 = vst.msk [vmem:[#allocation2 + $0x58] sm:$0xf] %vm1697, %v1646
      %1721 = vst.msk [vmem:[#allocation2 + $0x5c] sm:$0xf] %vm1697, %v1648
      %1722 = vst.msk [vmem:[#allocation2 + $0x60] sm:$0xf] %vm1697, %v1650
      %1723 = vst.msk [vmem:[#allocation2 + $0x64] sm:$0xf] %vm1697, %v1652
      %1724 = vst.msk [vmem:[#allocation2 + $0x68] sm:$0xf] %vm1697, %v1654
      %1725 = vst.msk [vmem:[#allocation2 + $0x6c] sm:$0xf] %vm1697, %v1656
      %1726 = vst.msk [vmem:[#allocation2 + $0x70] sm:$0xf] %vm1697, %v1658
      %1727 = vst.msk [vmem:[#allocation2 + $0x74] sm:$0xf] %vm1697, %v1660
      %1728 = vst.msk [vmem:[#allocation2 + $0x78] sm:$0xf] %vm1697, %v1662
      %1729 = vst.msk [vmem:[#allocation2 + $0x7c] sm:$0xf] %vm1697, %v1664
      %1732 = vrot.lane.b32.xlu0 %v420, 24
      %v1733 = vpop.permute.xlu0 %1732
      %1734 = vrot.lane.b32.xlu0 %v421, 24
      %v1735 = vpop.permute.xlu0 %1734
      %1736 = vrot.lane.b32.xlu0 %v423, 24
      %v1737 = vpop.permute.xlu0 %1736
      %1738 = vrot.lane.b32.xlu0 %v424, 24
      %v1739 = vpop.permute.xlu0 %1738
      %1740 = vrot.lane.b32.xlu0 %v426, 24
      %v1741 = vpop.permute.xlu0 %1740
      %1742 = vrot.lane.b32.xlu0 %v427, 24
      %v1743 = vpop.permute.xlu0 %1742
      %1744 = vrot.lane.b32.xlu0 %v429, 24
      %v1745 = vpop.permute.xlu0 %1744
      %1746 = vrot.lane.b32.xlu0 %v430, 24
      %v1747 = vpop.permute.xlu0 %1746
      %1748 = vrot.lane.b32.xlu0 %v432, 24
      %v1749 = vpop.permute.xlu0 %1748
      %1750 = vrot.lane.b32.xlu0 %v433, 24
      %v1751 = vpop.permute.xlu0 %1750
      %1752 = vrot.lane.b32.xlu0 %v435, 24
      %v1753 = vpop.permute.xlu0 %1752
      %1754 = vrot.lane.b32.xlu0 %v436, 24
      %v1755 = vpop.permute.xlu0 %1754
      %1756 = vrot.lane.b32.xlu0 %v438, 24
      %v1757 = vpop.permute.xlu0 %1756
      %1758 = vrot.lane.b32.xlu0 %v439, 24
      %v1759 = vpop.permute.xlu0 %1758
      %1760 = vrot.lane.b32.xlu0 %v441, 24
      %v1761 = vpop.permute.xlu0 %1760
      %1762 = vrot.lane.b32.xlu0 %v442, 24
      %v1763 = vpop.permute.xlu0 %1762
      %1764 = vrot.lane.b32.xlu0 %v444, 24
      %v1765 = vpop.permute.xlu0 %1764
      %1766 = vrot.lane.b32.xlu0 %v445, 24
      %v1767 = vpop.permute.xlu0 %1766
      %1768 = vrot.lane.b32.xlu0 %v447, 24
      %v1769 = vpop.permute.xlu0 %1768
      %1770 = vrot.lane.b32.xlu0 %v448, 24
      %v1771 = vpop.permute.xlu0 %1770
      %1772 = vrot.lane.b32.xlu0 %v450, 24
      %v1773 = vpop.permute.xlu0 %1772
      %1774 = vrot.lane.b32.xlu0 %v451, 24
      %v1775 = vpop.permute.xlu0 %1774
      %1776 = vrot.lane.b32.xlu0 %v453, 24
      %v1777 = vpop.permute.xlu0 %1776
      %1778 = vrot.lane.b32.xlu0 %v454, 24
      %v1779 = vpop.permute.xlu0 %1778
      %1780 = vrot.lane.b32.xlu0 %v456, 24
      %v1781 = vpop.permute.xlu0 %1780
      %1782 = vrot.lane.b32.xlu0 %v457, 24
      %v1783 = vpop.permute.xlu0 %1782
      %1784 = vrot.lane.b32.xlu0 %v459, 24
      %v1785 = vpop.permute.xlu0 %1784
      %1786 = vrot.lane.b32.xlu0 %v460, 24
      %v1787 = vpop.permute.xlu0 %1786
      %1788 = vrot.lane.b32.xlu0 %v462, 24
      %v1789 = vpop.permute.xlu0 %1788
      %1790 = vrot.lane.b32.xlu0 %v463, 24
      %v1791 = vpop.permute.xlu0 %1790
      %1792 = vrot.lane.b32.xlu0 %v465, 24
      %v1793 = vpop.permute.xlu0 %1792
      %1794 = vrot.lane.b32.xlu0 %v466, 24
      %v1795 = vpop.permute.xlu0 %1794
      %vm1828 = vcmask 224448
      %1829 = vst.msk [vmem:[#allocation2] sm:$0xf] %vm1828, %v1733
      %1830 = vst.msk [vmem:[#allocation2 + $0x4] sm:$0xf] %vm1828, %v1735
      %1831 = vst.msk [vmem:[#allocation2 + $0x8] sm:$0xf] %vm1828, %v1737
      %1832 = vst.msk [vmem:[#allocation2 + $0xc] sm:$0xf] %vm1828, %v1739
      %1833 = vst.msk [vmem:[#allocation2 + $0x10] sm:$0xf] %vm1828, %v1741
      %1834 = vst.msk [vmem:[#allocation2 + $0x14] sm:$0xf] %vm1828, %v1743
      %1835 = vst.msk [vmem:[#allocation2 + $0x18] sm:$0xf] %vm1828, %v1745
      %1836 = vst.msk [vmem:[#allocation2 + $0x1c] sm:$0xf] %vm1828, %v1747
      %1837 = vst.msk [vmem:[#allocation2 + $0x20] sm:$0xf] %vm1828, %v1749
      %1838 = vst.msk [vmem:[#allocation2 + $0x24] sm:$0xf] %vm1828, %v1751
      %1839 = vst.msk [vmem:[#allocation2 + $0x28] sm:$0xf] %vm1828, %v1753
      %1840 = vst.msk [vmem:[#allocation2 + $0x2c] sm:$0xf] %vm1828, %v1755
      %1841 = vst.msk [vmem:[#allocation2 + $0x30] sm:$0xf] %vm1828, %v1757
      %1842 = vst.msk [vmem:[#allocation2 + $0x34] sm:$0xf] %vm1828, %v1759
      %1843 = vst.msk [vmem:[#allocation2 + $0x38] sm:$0xf] %vm1828, %v1761
      %1844 = vst.msk [vmem:[#allocation2 + $0x3c] sm:$0xf] %vm1828, %v1763
      %1845 = vst.msk [vmem:[#allocation2 + $0x40] sm:$0xf] %vm1828, %v1765
      %1846 = vst.msk [vmem:[#allocation2 + $0x44] sm:$0xf] %vm1828, %v1767
      %1847 = vst.msk [vmem:[#allocation2 + $0x48] sm:$0xf] %vm1828, %v1769
      %1848 = vst.msk [vmem:[#allocation2 + $0x4c] sm:$0xf] %vm1828, %v1771
      %1849 = vst.msk [vmem:[#allocation2 + $0x50] sm:$0xf] %vm1828, %v1773
      %1850 = vst.msk [vmem:[#allocation2 + $0x54] sm:$0xf] %vm1828, %v1775
      %1851 = vst.msk [vmem:[#allocation2 + $0x58] sm:$0xf] %vm1828, %v1777
      %1852 = vst.msk [vmem:[#allocation2 + $0x5c] sm:$0xf] %vm1828, %v1779
      %1853 = vst.msk [vmem:[#allocation2 + $0x60] sm:$0xf] %vm1828, %v1781
      %1854 = vst.msk [vmem:[#allocation2 + $0x64] sm:$0xf] %vm1828, %v1783
      %1855 = vst.msk [vmem:[#allocation2 + $0x68] sm:$0xf] %vm1828, %v1785
      %1856 = vst.msk [vmem:[#allocation2 + $0x6c] sm:$0xf] %vm1828, %v1787
      %1857 = vst.msk [vmem:[#allocation2 + $0x70] sm:$0xf] %vm1828, %v1789
      %1858 = vst.msk [vmem:[#allocation2 + $0x74] sm:$0xf] %vm1828, %v1791
      %1859 = vst.msk [vmem:[#allocation2 + $0x78] sm:$0xf] %vm1828, %v1793
      %1860 = vst.msk [vmem:[#allocation2 + $0x7c] sm:$0xf] %vm1828, %v1795
      %v1862 = vshrl.u32 %v465, 16
      %v1864 = vrot.slane %v1862, 4
      %v1865 = vshll.u32 %v465, 16
      %v1867 = vrot.slane %v1865, 5
      %v1868 = vor.u32 %v1864, %v1867
      %v1869 = vrot.slane %v1868, 4
      %v1871 = vshll.u32 %v466, 16
      %v1873 = vrot.slane %v1871, 5
      %v1874 = vsel %vm503, %v1869, %v1873
      %v1875 = vshrl.u32 %v466, 16
      %v1877 = vrot.slane %v1875, 4
      %v1878 = vor.u32 %v1877, %v1873
      %v1879 = vrot.slane %v1878, 4
      %v1881 = vshll.u32 %v467, 16
      %v1883 = vrot.slane %v1881, 5
      %v1884 = vsel %vm503, %v1879, %v1883
      %1885 = vrot.lane.b32.xlu0 %v565, 28
      %v1886 = vpop.permute.xlu0 %1885
      %1887 = vrot.lane.b32.xlu0 %v575, 28
      %v1888 = vpop.permute.xlu0 %1887
      %1889 = vrot.lane.b32.xlu0 %v589, 28
      %v1890 = vpop.permute.xlu0 %1889
      %1891 = vrot.lane.b32.xlu0 %v599, 28
      %v1892 = vpop.permute.xlu0 %1891
      %1893 = vrot.lane.b32.xlu0 %v613, 28
      %v1894 = vpop.permute.xlu0 %1893
      %1895 = vrot.lane.b32.xlu0 %v623, 28
      %v1896 = vpop.permute.xlu0 %1895
      %1897 = vrot.lane.b32.xlu0 %v637, 28
      %v1898 = vpop.permute.xlu0 %1897
      %1899 = vrot.lane.b32.xlu0 %v647, 28
      %v1900 = vpop.permute.xlu0 %1899
      %1901 = vrot.lane.b32.xlu0 %v661, 28
      %v1902 = vpop.permute.xlu0 %1901
      %1903 = vrot.lane.b32.xlu0 %v671, 28
      %v1904 = vpop.permute.xlu0 %1903
      %1905 = vrot.lane.b32.xlu0 %v685, 28
      %v1906 = vpop.permute.xlu0 %1905
      %1907 = vrot.lane.b32.xlu0 %v695, 28
      %v1908 = vpop.permute.xlu0 %1907
      %1909 = vrot.lane.b32.xlu0 %v709, 28
      %v1910 = vpop.permute.xlu0 %1909
      %1911 = vrot.lane.b32.xlu0 %v719, 28
      %v1912 = vpop.permute.xlu0 %1911
      %1913 = vrot.lane.b32.xlu0 %v733, 28
      %v1914 = vpop.permute.xlu0 %1913
      %1915 = vrot.lane.b32.xlu0 %v743, 28
      %v1916 = vpop.permute.xlu0 %1915
      %1917 = vrot.lane.b32.xlu0 %v757, 28
      %v1918 = vpop.permute.xlu0 %1917
      %1919 = vrot.lane.b32.xlu0 %v767, 28
      %v1920 = vpop.permute.xlu0 %1919
      %1921 = vrot.lane.b32.xlu0 %v781, 28
      %v1922 = vpop.permute.xlu0 %1921
      %1923 = vrot.lane.b32.xlu0 %v791, 28
      %v1924 = vpop.permute.xlu0 %1923
      %1925 = vrot.lane.b32.xlu0 %v805, 28
      %v1926 = vpop.permute.xlu0 %1925
      %1927 = vrot.lane.b32.xlu0 %v815, 28
      %v1928 = vpop.permute.xlu0 %1927
      %1929 = vrot.lane.b32.xlu0 %v829, 28
      %v1930 = vpop.permute.xlu0 %1929
      %1931 = vrot.lane.b32.xlu0 %v839, 28
      %v1932 = vpop.permute.xlu0 %1931
      %1933 = vrot.lane.b32.xlu0 %v853, 28
      %v1934 = vpop.permute.xlu0 %1933
      %1935 = vrot.lane.b32.xlu0 %v863, 28
      %v1936 = vpop.permute.xlu0 %1935
      %1937 = vrot.lane.b32.xlu0 %v877, 28
      %v1938 = vpop.permute.xlu0 %1937
      %1939 = vrot.lane.b32.xlu0 %v887, 28
      %v1940 = vpop.permute.xlu0 %1939
      %1941 = vrot.lane.b32.xlu0 %v1453, 28
      %v1942 = vpop.permute.xlu0 %1941
      %1943 = vrot.lane.b32.xlu0 %v1463, 28
      %v1944 = vpop.permute.xlu0 %1943
      %1945 = vrot.lane.b32.xlu0 %v1874, 28
      %v1946 = vpop.permute.xlu0 %1945
      %1947 = vrot.lane.b32.xlu0 %v1884, 28
      %v1948 = vpop.permute.xlu0 %1947
      %vm1981 = vcmask 257248
      %1982 = vst.msk [vmem:[#allocation2] sm:$0xf] %vm1981, %v1886
      %1983 = vst.msk [vmem:[#allocation2 + $0x4] sm:$0xf] %vm1981, %v1888
      %1984 = vst.msk [vmem:[#allocation2 + $0x8] sm:$0xf] %vm1981, %v1890
      %1985 = vst.msk [vmem:[#allocation2 + $0xc] sm:$0xf] %vm1981, %v1892
      %1986 = vst.msk [vmem:[#allocation2 + $0x10] sm:$0xf] %vm1981, %v1894
      %1987 = vst.msk [vmem:[#allocation2 + $0x14] sm:$0xf] %vm1981, %v1896
      %1988 = vst.msk [vmem:[#allocation2 + $0x18] sm:$0xf] %vm1981, %v1898
      %1989 = vst.msk [vmem:[#allocation2 + $0x1c] sm:$0xf] %vm1981, %v1900
      %1990 = vst.msk [vmem:[#allocation2 + $0x20] sm:$0xf] %vm1981, %v1902
      %1991 = vst.msk [vmem:[#allocation2 + $0x24] sm:$0xf] %vm1981, %v1904
      %1992 = vst.msk [vmem:[#allocation2 + $0x28] sm:$0xf] %vm1981, %v1906
      %1993 = vst.msk [vmem:[#allocation2 + $0x2c] sm:$0xf] %vm1981, %v1908
      %1994 = vst.msk [vmem:[#allocation2 + $0x30] sm:$0xf] %vm1981, %v1910
      %1995 = vst.msk [vmem:[#allocation2 + $0x34] sm:$0xf] %vm1981, %v1912
      %1996 = vst.msk [vmem:[#allocation2 + $0x38] sm:$0xf] %vm1981, %v1914
      %1997 = vst.msk [vmem:[#allocation2 + $0x3c] sm:$0xf] %vm1981, %v1916
      %1998 = vst.msk [vmem:[#allocation2 + $0x40] sm:$0xf] %vm1981, %v1918
      %1999 = vst.msk [vmem:[#allocation2 + $0x44] sm:$0xf] %vm1981, %v1920
      %2000 = vst.msk [vmem:[#allocation2 + $0x48] sm:$0xf] %vm1981, %v1922
      %2001 = vst.msk [vmem:[#allocation2 + $0x4c] sm:$0xf] %vm1981, %v1924
      %2002 = vst.msk [vmem:[#allocation2 + $0x50] sm:$0xf] %vm1981, %v1926
      %2003 = vst.msk [vmem:[#allocation2 + $0x54] sm:$0xf] %vm1981, %v1928
      %2004 = vst.msk [vmem:[#allocation2 + $0x58] sm:$0xf] %vm1981, %v1930
      %2005 = vst.msk [vmem:[#allocation2 + $0x5c] sm:$0xf] %vm1981, %v1932
      %2006 = vst.msk [vmem:[#allocation2 + $0x60] sm:$0xf] %vm1981, %v1934
      %2007 = vst.msk [vmem:[#allocation2 + $0x64] sm:$0xf] %vm1981, %v1936
      %2008 = vst.msk [vmem:[#allocation2 + $0x68] sm:$0xf] %vm1981, %v1938
      %2009 = vst.msk [vmem:[#allocation2 + $0x6c] sm:$0xf] %vm1981, %v1940
      %2010 = vst.msk [vmem:[#allocation2 + $0x70] sm:$0xf] %vm1981, %v1942
      %2011 = vst.msk [vmem:[#allocation2 + $0x74] sm:$0xf] %vm1981, %v1944
      %2012 = vst.msk [vmem:[#allocation2 + $0x78] sm:$0xf] %vm1981, %v1946
      %2013 = vst.msk [vmem:[#allocation2 + $0x7c] sm:$0xf] %vm1981, %v1948
      %v2015 = vrot.slane %v465, 5
      %v2016 = vrot.slane %v2015, 4
      %v2017 = vrot.slane %v466, 5
      %v2018 = vsel %vm1067, %v2016, %v2017
      %v2019 = vrot.slane %v2017, 4
      %v2020 = vrot.slane %v467, 5
      %v2021 = vsel %vm1067, %v2019, %v2020
      %2022 = vrot.lane.b32.xlu0 %v1085, 32
      %v2023 = vpop.permute.xlu0 %2022
      %2024 = vrot.lane.b32.xlu0 %v1088, 32
      %v2025 = vpop.permute.xlu0 %2024
      %2026 = vrot.lane.b32.xlu0 %v1092, 32
      %v2027 = vpop.permute.xlu0 %2026
      %2028 = vrot.lane.b32.xlu0 %v1095, 32
      %v2029 = vpop.permute.xlu0 %2028
      %2030 = vrot.lane.b32.xlu0 %v1099, 32
      %v2031 = vpop.permute.xlu0 %2030
      %2032 = vrot.lane.b32.xlu0 %v1102, 32
      %v2033 = vpop.permute.xlu0 %2032
      %2034 = vrot.lane.b32.xlu0 %v1106, 32
      %v2035 = vpop.permute.xlu0 %2034
      %2036 = vrot.lane.b32.xlu0 %v1109, 32
      %v2037 = vpop.permute.xlu0 %2036
      %2038 = vrot.lane.b32.xlu0 %v1113, 32
      %v2039 = vpop.permute.xlu0 %2038
      %2040 = vrot.lane.b32.xlu0 %v1116, 32
      %v2041 = vpop.permute.xlu0 %2040
      %2042 = vrot.lane.b32.xlu0 %v1120, 32
      %v2043 = vpop.permute.xlu0 %2042
      %2044 = vrot.lane.b32.xlu0 %v1123, 32
      %v2045 = vpop.permute.xlu0 %2044
      %2046 = vrot.lane.b32.xlu0 %v1127, 32
      %v2047 = vpop.permute.xlu0 %2046
      %2048 = vrot.lane.b32.xlu0 %v1130, 32
      %v2049 = vpop.permute.xlu0 %2048
      %2050 = vrot.lane.b32.xlu0 %v1134, 32
      %v2051 = vpop.permute.xlu0 %2050
      %2052 = vrot.lane.b32.xlu0 %v1137, 32
      %v2053 = vpop.permute.xlu0 %2052
      %2054 = vrot.lane.b32.xlu0 %v1141, 32
      %v2055 = vpop.permute.xlu0 %2054
      %2056 = vrot.lane.b32.xlu0 %v1144, 32
      %v2057 = vpop.permute.xlu0 %2056
      %2058 = vrot.lane.b32.xlu0 %v1148, 32
      %v2059 = vpop.permute.xlu0 %2058
      %2060 = vrot.lane.b32.xlu0 %v1151, 32
      %v2061 = vpop.permute.xlu0 %2060
      %2062 = vrot.lane.b32.xlu0 %v1155, 32
      %v2063 = vpop.permute.xlu0 %2062
      %2064 = vrot.lane.b32.xlu0 %v1158, 32
      %v2065 = vpop.permute.xlu0 %2064
      %2066 = vrot.lane.b32.xlu0 %v1162, 32
      %v2067 = vpop.permute.xlu0 %2066
      %2068 = vrot.lane.b32.xlu0 %v1165, 32
      %v2069 = vpop.permute.xlu0 %2068
      %2070 = vrot.lane.b32.xlu0 %v1169, 32
      %v2071 = vpop.permute.xlu0 %2070
      %2072 = vrot.lane.b32.xlu0 %v1172, 32
      %v2073 = vpop.permute.xlu0 %2072
      %2074 = vrot.lane.b32.xlu0 %v1176, 32
      %v2075 = vpop.permute.xlu0 %2074
      %2076 = vrot.lane.b32.xlu0 %v1179, 32
      %v2077 = vpop.permute.xlu0 %2076
      %2078 = vrot.lane.b32.xlu0 %v1597, 32
      %v2079 = vpop.permute.xlu0 %2078
      %2080 = vrot.lane.b32.xlu0 %v1600, 32
      %v2081 = vpop.permute.xlu0 %2080
      %2082 = vrot.lane.b32.xlu0 %v2018, 32
      %v2083 = vpop.permute.xlu0 %2082
      %2084 = vrot.lane.b32.xlu0 %v2021, 32
      %v2085 = vpop.permute.xlu0 %2084
      %vm2118 = vcmask 290048
      %2119 = vst.msk [vmem:[#allocation2] sm:$0xf] %vm2118, %v2023
      %2120 = vst.msk [vmem:[#allocation2 + $0x4] sm:$0xf] %vm2118, %v2025
      %2121 = vst.msk [vmem:[#allocation2 + $0x8] sm:$0xf] %vm2118, %v2027
      %2122 = vst.msk [vmem:[#allocation2 + $0xc] sm:$0xf] %vm2118, %v2029
      %2123 = vst.msk [vmem:[#allocation2 + $0x10] sm:$0xf] %vm2118, %v2031
      %2124 = vst.msk [vmem:[#allocation2 + $0x14] sm:$0xf] %vm2118, %v2033
      %2125 = vst.msk [vmem:[#allocation2 + $0x18] sm:$0xf] %vm2118, %v2035
      %2126 = vst.msk [vmem:[#allocation2 + $0x1c] sm:$0xf] %vm2118, %v2037
      %2127 = vst.msk [vmem:[#allocation2 + $0x20] sm:$0xf] %vm2118, %v2039
      %2128 = vst.msk [vmem:[#allocation2 + $0x24] sm:$0xf] %vm2118, %v2041
      %2129 = vst.msk [vmem:[#allocation2 + $0x28] sm:$0xf] %vm2118, %v2043
      %2130 = vst.msk [vmem:[#allocation2 + $0x2c] sm:$0xf] %vm2118, %v2045
      %2131 = vst.msk [vmem:[#allocation2 + $0x30] sm:$0xf] %vm2118, %v2047
      %2132 = vst.msk [vmem:[#allocation2 + $0x34] sm:$0xf] %vm2118, %v2049
      %2133 = vst.msk [vmem:[#allocation2 + $0x38] sm:$0xf] %vm2118, %v2051
      %2134 = vst.msk [vmem:[#allocation2 + $0x3c] sm:$0xf] %vm2118, %v2053
      %2135 = vst.msk [vmem:[#allocation2 + $0x40] sm:$0xf] %vm2118, %v2055
      %2136 = vst.msk [vmem:[#allocation2 + $0x44] sm:$0xf] %vm2118, %v2057
      %2137 = vst.msk [vmem:[#allocation2 + $0x48] sm:$0xf] %vm2118, %v2059
      %2138 = vst.msk [vmem:[#allocation2 + $0x4c] sm:$0xf] %vm2118, %v2061
      %2139 = vst.msk [vmem:[#allocation2 + $0x50] sm:$0xf] %vm2118, %v2063
      %2140 = vst.msk [vmem:[#allocation2 + $0x54] sm:$0xf] %vm2118, %v2065
      %2141 = vst.msk [vmem:[#allocation2 + $0x58] sm:$0xf] %vm2118, %v2067
      %2142 = vst.msk [vmem:[#allocation2 + $0x5c] sm:$0xf] %vm2118, %v2069
      %2143 = vst.msk [vmem:[#allocation2 + $0x60] sm:$0xf] %vm2118, %v2071
      %2144 = vst.msk [vmem:[#allocation2 + $0x64] sm:$0xf] %vm2118, %v2073
      %2145 = vst.msk [vmem:[#allocation2 + $0x68] sm:$0xf] %vm2118, %v2075
      %2146 = vst.msk [vmem:[#allocation2 + $0x6c] sm:$0xf] %vm2118, %v2077
      %2147 = vst.msk [vmem:[#allocation2 + $0x70] sm:$0xf] %vm2118, %v2079
      %2148 = vst.msk [vmem:[#allocation2 + $0x74] sm:$0xf] %vm2118, %v2081
      %2149 = vst.msk [vmem:[#allocation2 + $0x78] sm:$0xf] %vm2118, %v2083
      %2150 = vst.msk [vmem:[#allocation2 + $0x7c] sm:$0xf] %vm2118, %v2085
      %v2151 = vld [vmem:[#allocation2] sm:$0xf]
      %v2152 = vld [vmem:[#allocation2 + $0x4] sm:$0xf]
      %v2153 = vld [vmem:[#allocation2 + $0x8] sm:$0xf]
      %v2154 = vld [vmem:[#allocation2 + $0xc] sm:$0xf]
      %v2155 = vld [vmem:[#allocation2 + $0x10] sm:$0xf]
      %v2156 = vld [vmem:[#allocation2 + $0x14] sm:$0xf]
      %v2157 = vld [vmem:[#allocation2 + $0x18] sm:$0xf]
      %v2158 = vld [vmem:[#allocation2 + $0x1c] sm:$0xf]
      %v2159 = vld [vmem:[#allocation2 + $0x20] sm:$0xf]
      %v2160 = vld [vmem:[#allocation2 + $0x24] sm:$0xf]
      %v2161 = vld [vmem:[#allocation2 + $0x28] sm:$0xf]
      %v2162 = vld [vmem:[#allocation2 + $0x2c] sm:$0xf]
      %v2163 = vld [vmem:[#allocation2 + $0x30] sm:$0xf]
      %v2164 = vld [vmem:[#allocation2 + $0x34] sm:$0xf]
      %v2165 = vld [vmem:[#allocation2 + $0x38] sm:$0xf]
      %v2166 = vld [vmem:[#allocation2 + $0x3c] sm:$0xf]
      %v2167 = vld [vmem:[#allocation2 + $0x40] sm:$0xf]
      %v2168 = vld [vmem:[#allocation2 + $0x44] sm:$0xf]
      %v2169 = vld [vmem:[#allocation2 + $0x48] sm:$0xf]
      %v2170 = vld [vmem:[#allocation2 + $0x4c] sm:$0xf]
      %v2171 = vld [vmem:[#allocation2 + $0x50] sm:$0xf]
      %v2172 = vld [vmem:[#allocation2 + $0x54] sm:$0xf]
      %v2173 = vld [vmem:[#allocation2 + $0x58] sm:$0xf]
      %v2174 = vld [vmem:[#allocation2 + $0x5c] sm:$0xf]
      %v2175 = vld [vmem:[#allocation2 + $0x60] sm:$0xf]
      %v2176 = vld [vmem:[#allocation2 + $0x64] sm:$0xf]
      %v2177 = vld [vmem:[#allocation2 + $0x68] sm:$0xf]
      %v2178 = vld [vmem:[#allocation2 + $0x6c] sm:$0xf]
      %v2179 = vld [vmem:[#allocation2 + $0x70] sm:$0xf]
      %v2180 = vld [vmem:[#allocation2 + $0x74] sm:$0xf]
      %v2181 = vld [vmem:[#allocation2 + $0x78] sm:$0xf]
      %v2182 = vld [vmem:[#allocation2 + $0x7c] sm:$0xf]
      %v2183 = vld [vmem:[%s3] sm:$0xf]
      %v2184 = vld [vmem:[%s3 + $0x4] sm:$0xf]
      %v2185 = vld [vmem:[%s3 + $0x8] sm:$0xf]
      %v2186 = vld [vmem:[%s3 + $0xc] sm:$0xf]
      %v2187 = vld [vmem:[%s3 + $0x10] sm:$0x3]
      %v2188 = vld [vmem:[%s4] sm:$0x1]
      %v2190 = vperm.slane %v2188, 0
      %v2224 = vunpack.c.l.b16 %v2151
      %v2225 = vunpack.c.l.b16 %v2152
      %v2226 = vunpack.c.l.b16 %v2153
      %v2227 = vunpack.c.l.b16 %v2154
      %v2228 = vunpack.c.l.b16 %v2155
      %v2229 = vunpack.c.l.b16 %v2156
      %v2230 = vunpack.c.l.b16 %v2157
      %v2231 = vunpack.c.l.b16 %v2158
      %v2232 = vunpack.c.l.b16 %v2159
      %v2233 = vunpack.c.l.b16 %v2160
      %v2234 = vunpack.c.l.b16 %v2161
      %v2235 = vunpack.c.l.b16 %v2162
      %v2236 = vunpack.c.l.b16 %v2163
      %v2237 = vunpack.c.l.b16 %v2164
      %v2238 = vunpack.c.l.b16 %v2165
      %v2239 = vunpack.c.l.b16 %v2166
      %v2240 = vunpack.c.l.b16 %v2167
      %v2241 = vunpack.c.l.b16 %v2168
      %v2242 = vunpack.c.l.b16 %v2169
      %v2243 = vunpack.c.l.b16 %v2170
      %v2244 = vunpack.c.l.b16 %v2171
      %v2245 = vunpack.c.l.b16 %v2172
      %v2246 = vunpack.c.l.b16 %v2173
      %v2247 = vunpack.c.l.b16 %v2174
      %v2248 = vunpack.c.l.b16 %v2175
      %v2249 = vunpack.c.l.b16 %v2176
      %v2250 = vunpack.c.l.b16 %v2177
      %v2251 = vunpack.c.l.b16 %v2178
      %v2252 = vunpack.c.l.b16 %v2179
      %v2253 = vunpack.c.l.b16 %v2180
      %v2254 = vunpack.c.l.b16 %v2181
      %v2255 = vunpack.c.l.b16 %v2182
      %v2256 = vpack.c.b16 %v2225, %v2224
      %v2257 = vpack.c.b16 %v2227, %v2226
      %v2258 = vpack.c.b16 %v2229, %v2228
      %v2259 = vpack.c.b16 %v2231, %v2230
      %v2260 = vpack.c.b16 %v2233, %v2232
      %v2261 = vpack.c.b16 %v2235, %v2234
      %v2262 = vpack.c.b16 %v2237, %v2236
      %v2263 = vpack.c.b16 %v2239, %v2238
      %v2264 = vpack.c.b16 %v2241, %v2240
      %v2265 = vpack.c.b16 %v2243, %v2242
      %v2266 = vpack.c.b16 %v2245, %v2244
      %v2267 = vpack.c.b16 %v2247, %v2246
      %v2268 = vpack.c.b16 %v2249, %v2248
      %v2269 = vpack.c.b16 %v2251, %v2250
      %v2270 = vpack.c.b16 %v2253, %v2252
      %v2271 = vpack.c.b16 %v2255, %v2254
      %v2277 = vunpack.c.l.b16 %v2183
      %v2278 = vunpack.c.l.b16 %v2184
      %v2279 = vunpack.c.l.b16 %v2185
      %v2280 = vunpack.c.l.b16 %v2186
      %v2281 = vunpack.c.l.b16 %v2187
      %v2282 = vpack.c.b16 %v2278, %v2277
      %v2283 = vpack.c.b16 %v2280, %v2279
      %v2284 = vpack.c.b16 %v2281, %v2281
      %vm2287 = vcmask 293888
      %v2289 = vsel %vm2287, %v2256, 0
      %v2292 = vsel %vm2287, %v2257, 0
      %v2295 = vsel %vm2287, %v2258, 0
      %v2298 = vsel %vm2287, %v2259, 0
      %v2301 = vsel %vm2287, %v2260, 0
      %v2304 = vsel %vm2287, %v2261, 0
      %v2307 = vsel %vm2287, %v2262, 0
      %v2310 = vsel %vm2287, %v2263, 0
      %v2313 = vsel %vm2287, %v2264, 0
      %v2316 = vsel %vm2287, %v2265, 0
      %v2319 = vsel %vm2287, %v2266, 0
      %v2322 = vsel %vm2287, %v2267, 0
      %v2325 = vsel %vm2287, %v2268, 0
      %v2328 = vsel %vm2287, %v2269, 0
      %v2331 = vsel %vm2287, %v2270, 0
      %v2334 = vsel %vm2287, %v2271, 0
      %vm2336 = vcmask 1041408
      %v2338 = vsel %vm2336, %v2284, 0
      %2340 = vmatpush.bf16.msra.mxu0 0
      %2341 = vmatpush.bf16.msra.mxu0 0
      %2342 = vmatpush.bf16.msra.mxu0 0
      %2343 = vmatpush.bf16.msra.mxu0 0
      %2344 = vmatpush.bf16.msra.mxu0 0
      %2345 = vmatpush.bf16.msra.mxu0 %v2338
      %2346 = vmatpush.bf16.msra.mxu0 %v2283
      %2347 = vmatpush.bf16.msra.mxu0 %v2282
      %2348 = vmatmul.bf16.gmra.mxu0 %v2289
      %v2349 = vpop.f32.mrf.mxu0
      %v2350 = vadd.f32 %v2190, %v2349
      %v2351 = vpop.f32.mrf.mxu0
      %v2352 = vadd.f32 %v2190, %v2351
      %2353 = vmatmul.bf16.gmra.mxu0 %v2292
      %v2354 = vpop.f32.mrf.mxu0
      %v2355 = vadd.f32 %v2190, %v2354
      %v2356 = vpop.f32.mrf.mxu0
      %v2357 = vadd.f32 %v2190, %v2356
      %2358 = vmatmul.bf16.gmra.mxu0 %v2295
      %v2359 = vpop.f32.mrf.mxu0
      %v2360 = vadd.f32 %v2190, %v2359
      %v2361 = vpop.f32.mrf.mxu0
      %v2362 = vadd.f32 %v2190, %v2361
      %2363 = vmatmul.bf16.gmra.mxu0 %v2298
      %v2364 = vpop.f32.mrf.mxu0
      %v2365 = vadd.f32 %v2190, %v2364
      %v2366 = vpop.f32.mrf.mxu0
      %v2367 = vadd.f32 %v2190, %v2366
      %2368 = vmatmul.bf16.gmra.mxu0 %v2301
      %v2369 = vpop.f32.mrf.mxu0
      %v2370 = vadd.f32 %v2190, %v2369
      %v2371 = vpop.f32.mrf.mxu0
      %v2372 = vadd.f32 %v2190, %v2371
      %2373 = vmatmul.bf16.gmra.mxu0 %v2304
      %v2374 = vpop.f32.mrf.mxu0
      %v2375 = vadd.f32 %v2190, %v2374
      %v2376 = vpop.f32.mrf.mxu0
      %v2377 = vadd.f32 %v2190, %v2376
      %2378 = vmatmul.bf16.gmra.mxu0 %v2307
      %v2379 = vpop.f32.mrf.mxu0
      %v2380 = vadd.f32 %v2190, %v2379
      %v2381 = vpop.f32.mrf.mxu0
      %v2382 = vadd.f32 %v2190, %v2381
      %2383 = vmatmul.bf16.gmra.mxu0 %v2310
      %v2384 = vpop.f32.mrf.mxu0
      %v2385 = vadd.f32 %v2190, %v2384
      %v2386 = vpop.f32.mrf.mxu0
      %v2387 = vadd.f32 %v2190, %v2386
      %2388 = vmatmul.bf16.gmra.mxu0 %v2313
      %v2389 = vpop.f32.mrf.mxu0
      %v2390 = vadd.f32 %v2190, %v2389
      %v2391 = vpop.f32.mrf.mxu0
      %v2392 = vadd.f32 %v2190, %v2391
      %2393 = vmatmul.bf16.gmra.mxu0 %v2316
      %v2394 = vpop.f32.mrf.mxu0
      %v2395 = vadd.f32 %v2190, %v2394
      %v2396 = vpop.f32.mrf.mxu0
      %v2397 = vadd.f32 %v2190, %v2396
      %2398 = vmatmul.bf16.gmra.mxu0 %v2319
      %v2399 = vpop.f32.mrf.mxu0
      %v2400 = vadd.f32 %v2190, %v2399
      %v2401 = vpop.f32.mrf.mxu0
      %v2402 = vadd.f32 %v2190, %v2401
      %2403 = vmatmul.bf16.gmra.mxu0 %v2322
      %v2404 = vpop.f32.mrf.mxu0
      %v2405 = vadd.f32 %v2190, %v2404
      %v2406 = vpop.f32.mrf.mxu0
      %v2407 = vadd.f32 %v2190, %v2406
      %2408 = vmatmul.bf16.gmra.mxu0 %v2325
      %v2409 = vpop.f32.mrf.mxu0
      %v2410 = vadd.f32 %v2190, %v2409
      %v2411 = vpop.f32.mrf.mxu0
      %v2412 = vadd.f32 %v2190, %v2411
      %2413 = vmatmul.bf16.gmra.mxu0 %v2328
      %v2414 = vpop.f32.mrf.mxu0
      %v2415 = vadd.f32 %v2190, %v2414
      %v2416 = vpop.f32.mrf.mxu0
      %v2417 = vadd.f32 %v2190, %v2416
      %2418 = vmatmul.bf16.gmra.mxu0 %v2331
      %v2419 = vpop.f32.mrf.mxu0
      %v2420 = vadd.f32 %v2190, %v2419
      %v2421 = vpop.f32.mrf.mxu0
      %v2422 = vadd.f32 %v2190, %v2421
      %2423 = vmatmul.bf16.gmra.mxu0 %v2334
      %v2424 = vpop.f32.mrf.mxu0
      %v2425 = vadd.f32 %v2190, %v2424
      %v2426 = vpop.f32.mrf.mxu0
      %v2427 = vadd.f32 %v2190, %v2426
      %2428 = vdwg.mxu0
      %v2429 = vxor.u32 %v2350, 2147483648
      %v2430 = vxor.u32 %v2352, 2147483648
      %v2431 = vxor.u32 %v2355, 2147483648
      %v2432 = vxor.u32 %v2357, 2147483648
      %v2433 = vxor.u32 %v2360, 2147483648
      %v2434 = vxor.u32 %v2362, 2147483648
      %v2435 = vxor.u32 %v2365, 2147483648
      %v2436 = vxor.u32 %v2367, 2147483648
      %v2437 = vxor.u32 %v2370, 2147483648
      %v2438 = vxor.u32 %v2372, 2147483648
      %v2439 = vxor.u32 %v2375, 2147483648
      %v2440 = vxor.u32 %v2377, 2147483648
      %v2441 = vxor.u32 %v2380, 2147483648
      %v2442 = vxor.u32 %v2382, 2147483648
      %v2443 = vxor.u32 %v2385, 2147483648
      %v2444 = vxor.u32 %v2387, 2147483648
      %v2445 = vxor.u32 %v2390, 2147483648
      %v2446 = vxor.u32 %v2392, 2147483648
      %v2447 = vxor.u32 %v2395, 2147483648
      %v2448 = vxor.u32 %v2397, 2147483648
      %v2449 = vxor.u32 %v2400, 2147483648
      %v2450 = vxor.u32 %v2402, 2147483648
      %v2451 = vxor.u32 %v2405, 2147483648
      %v2452 = vxor.u32 %v2407, 2147483648
      %v2453 = vxor.u32 %v2410, 2147483648
      %v2454 = vxor.u32 %v2412, 2147483648
      %v2455 = vxor.u32 %v2415, 2147483648
      %v2456 = vxor.u32 %v2417, 2147483648
      %v2457 = vxor.u32 %v2420, 2147483648
      %v2458 = vxor.u32 %v2422, 2147483648
      %v2459 = vxor.u32 %v2425, 2147483648
      %v2460 = vxor.u32 %v2427, 2147483648
      %v2461 = vmul.f32 %v2429, 1.442695
      %v2462 = vpow.pop %v2461
      %v2463 = vmul.f32 %v2430, 1.442695
      %v2464 = vpow.pop %v2463
      %v2465 = vmul.f32 %v2431, 1.442695
      %v2466 = vpow.pop %v2465
      %v2467 = vmul.f32 %v2432, 1.442695
      %v2468 = vpow.pop %v2467
      %v2469 = vmul.f32 %v2433, 1.442695
      %v2470 = vpow.pop %v2469
      %v2471 = vmul.f32 %v2434, 1.442695
      %v2472 = vpow.pop %v2471
      %v2473 = vmul.f32 %v2435, 1.442695
      %v2474 = vpow.pop %v2473
      %v2475 = vmul.f32 %v2436, 1.442695
      %v2476 = vpow.pop %v2475
      %v2477 = vmul.f32 %v2437, 1.442695
      %v2478 = vpow.pop %v2477
      %v2479 = vmul.f32 %v2438, 1.442695
      %v2480 = vpow.pop %v2479
      %v2481 = vmul.f32 %v2439, 1.442695
      %v2482 = vpow.pop %v2481
      %v2483 = vmul.f32 %v2440, 1.442695
      %v2484 = vpow.pop %v2483
      %v2485 = vmul.f32 %v2441, 1.442695
      %v2486 = vpow.pop %v2485
      %v2487 = vmul.f32 %v2442, 1.442695
      %v2488 = vpow.pop %v2487
      %v2489 = vmul.f32 %v2443, 1.442695
      %v2490 = vpow.pop %v2489
      %v2491 = vmul.f32 %v2444, 1.442695
      %v2492 = vpow.pop %v2491
      %v2493 = vmul.f32 %v2445, 1.442695
      %v2494 = vpow.pop %v2493
      %v2495 = vmul.f32 %v2446, 1.442695
      %v2496 = vpow.pop %v2495
      %v2497 = vmul.f32 %v2447, 1.442695
      %v2498 = vpow.pop %v2497
      %v2499 = vmul.f32 %v2448, 1.442695
      %v2500 = vpow.pop %v2499
      %v2501 = vmul.f32 %v2449, 1.442695
      %v2502 = vpow.pop %v2501
      %v2503 = vmul.f32 %v2450, 1.442695
      %v2504 = vpow.pop %v2503
      %v2505 = vmul.f32 %v2451, 1.442695
      %v2506 = vpow.pop %v2505
      %v2507 = vmul.f32 %v2452, 1.442695
      %v2508 = vpow.pop %v2507
      %v2509 = vmul.f32 %v2453, 1.442695
      %v2510 = vpow.pop %v2509
      %v2511 = vmul.f32 %v2454, 1.442695
      %v2512 = vpow.pop %v2511
      %v2513 = vmul.f32 %v2455, 1.442695
      %v2514 = vpow.pop %v2513
      %v2515 = vmul.f32 %v2456, 1.442695
      %v2516 = vpow.pop %v2515
      %v2517 = vmul.f32 %v2457, 1.442695
      %v2518 = vpow.pop %v2517
      %v2519 = vmul.f32 %v2458, 1.442695
      %v2520 = vpow.pop %v2519
      %v2521 = vmul.f32 %v2459, 1.442695
      %v2522 = vpow.pop %v2521
      %v2523 = vmul.f32 %v2460, 1.442695
      %v2524 = vpow.pop %v2523
      %v2525 = vadd.f32 %v2462, 1.0
      %v2526 = vadd.f32 %v2464, 1.0
      %v2527 = vadd.f32 %v2466, 1.0
      %v2528 = vadd.f32 %v2468, 1.0
      %v2529 = vadd.f32 %v2470, 1.0
      %v2530 = vadd.f32 %v2472, 1.0
      %v2531 = vadd.f32 %v2474, 1.0
      %v2532 = vadd.f32 %v2476, 1.0
      %v2533 = vadd.f32 %v2478, 1.0
      %v2534 = vadd.f32 %v2480, 1.0
      %v2535 = vadd.f32 %v2482, 1.0
      %v2536 = vadd.f32 %v2484, 1.0
      %v2537 = vadd.f32 %v2486, 1.0
      %v2538 = vadd.f32 %v2488, 1.0
      %v2539 = vadd.f32 %v2490, 1.0
      %v2540 = vadd.f32 %v2492, 1.0
      %v2541 = vadd.f32 %v2494, 1.0
      %v2542 = vadd.f32 %v2496, 1.0
      %v2543 = vadd.f32 %v2498, 1.0
      %v2544 = vadd.f32 %v2500, 1.0
      %v2545 = vadd.f32 %v2502, 1.0
      %v2546 = vadd.f32 %v2504, 1.0
      %v2547 = vadd.f32 %v2506, 1.0
      %v2548 = vadd.f32 %v2508, 1.0
      %v2549 = vadd.f32 %v2510, 1.0
      %v2550 = vadd.f32 %v2512, 1.0
      %v2551 = vadd.f32 %v2514, 1.0
      %v2552 = vadd.f32 %v2516, 1.0
      %v2553 = vadd.f32 %v2518, 1.0
      %v2554 = vadd.f32 %v2520, 1.0
      %v2555 = vadd.f32 %v2522, 1.0
      %v2556 = vadd.f32 %v2524, 1.0
      %v2557 = vrcp.pop %v2525
      %v2558 = vmul.f32 %v2525, %v2557
      %v2559 = vsub.f32 1.0, %v2558
      %v2560 = vmul.f32 %v2557, %v2559
      %v2561 = vadd.f32 %v2557, %v2560
      %vm2562 = vweird.f32 %v2525
      %vm2563 = vweird.f32 %v2557
      %vm2564 = vmor %vm2562, %vm2563
      %v2565 = vsel %vm2564, %v2557, %v2561
      %v2566 = vand.u32 2147483647, %v2525
      %vm2567 = vcmp.eq.f32.partialorder %v2566, 8.507059e+37
      %v2568 = vand.u32 %v2525, 2147483648
      %v2569 = vor.u32 1.1754944e-38, %v2568
      %v2570 = vsel %vm2567, %v2569, %v2565
      %v2571 = vmul.f32 1.0, %v2570
      %v2572 = vrcp.pop %v2526
      %v2573 = vmul.f32 %v2526, %v2572
      %v2574 = vsub.f32 1.0, %v2573
      %v2575 = vmul.f32 %v2572, %v2574
      %v2576 = vadd.f32 %v2572, %v2575
      %vm2577 = vweird.f32 %v2526
      %vm2578 = vweird.f32 %v2572
      %vm2579 = vmor %vm2577, %vm2578
      %v2580 = vsel %vm2579, %v2572, %v2576
      %v2581 = vand.u32 2147483647, %v2526
      %vm2582 = vcmp.eq.f32.partialorder %v2581, 8.507059e+37
      %v2583 = vand.u32 %v2526, 2147483648
      %v2584 = vor.u32 1.1754944e-38, %v2583
      %v2585 = vsel %vm2582, %v2584, %v2580
      %v2586 = vmul.f32 1.0, %v2585
      %v2587 = vrcp.pop %v2527
      %v2588 = vmul.f32 %v2527, %v2587
      %v2589 = vsub.f32 1.0, %v2588
      %v2590 = vmul.f32 %v2587, %v2589
      %v2591 = vadd.f32 %v2587, %v2590
      %vm2592 = vweird.f32 %v2527
      %vm2593 = vweird.f32 %v2587
      %vm2594 = vmor %vm2592, %vm2593
      %v2595 = vsel %vm2594, %v2587, %v2591
      %v2596 = vand.u32 2147483647, %v2527
      %vm2597 = vcmp.eq.f32.partialorder %v2596, 8.507059e+37
      %v2598 = vand.u32 %v2527, 2147483648
      %v2599 = vor.u32 1.1754944e-38, %v2598
      %v2600 = vsel %vm2597, %v2599, %v2595
      %v2601 = vmul.f32 1.0, %v2600
      %v2602 = vrcp.pop %v2528
      %v2603 = vmul.f32 %v2528, %v2602
      %v2604 = vsub.f32 1.0, %v2603
      %v2605 = vmul.f32 %v2602, %v2604
      %v2606 = vadd.f32 %v2602, %v2605
      %vm2607 = vweird.f32 %v2528
      %vm2608 = vweird.f32 %v2602
      %vm2609 = vmor %vm2607, %vm2608
      %v2610 = vsel %vm2609, %v2602, %v2606
      %v2611 = vand.u32 2147483647, %v2528
      %vm2612 = vcmp.eq.f32.partialorder %v2611, 8.507059e+37
      %v2613 = vand.u32 %v2528, 2147483648
      %v2614 = vor.u32 1.1754944e-38, %v2613
      %v2615 = vsel %vm2612, %v2614, %v2610
      %v2616 = vmul.f32 1.0, %v2615
      %v2617 = vrcp.pop %v2529
      %v2618 = vmul.f32 %v2529, %v2617
      %v2619 = vsub.f32 1.0, %v2618
      %v2620 = vmul.f32 %v2617, %v2619
      %v2621 = vadd.f32 %v2617, %v2620
      %vm2622 = vweird.f32 %v2529
      %vm2623 = vweird.f32 %v2617
      %vm2624 = vmor %vm2622, %vm2623
      %v2625 = vsel %vm2624, %v2617, %v2621
      %v2626 = vand.u32 2147483647, %v2529
      %vm2627 = vcmp.eq.f32.partialorder %v2626, 8.507059e+37
      %v2628 = vand.u32 %v2529, 2147483648
      %v2629 = vor.u32 1.1754944e-38, %v2628
      %v2630 = vsel %vm2627, %v2629, %v2625
      %v2631 = vmul.f32 1.0, %v2630
      %v2632 = vrcp.pop %v2530
      %v2633 = vmul.f32 %v2530, %v2632
      %v2634 = vsub.f32 1.0, %v2633
      %v2635 = vmul.f32 %v2632, %v2634
      %v2636 = vadd.f32 %v2632, %v2635
      %vm2637 = vweird.f32 %v2530
      %vm2638 = vweird.f32 %v2632
      %vm2639 = vmor %vm2637, %vm2638
      %v2640 = vsel %vm2639, %v2632, %v2636
      %v2641 = vand.u32 2147483647, %v2530
      %vm2642 = vcmp.eq.f32.partialorder %v2641, 8.507059e+37
      %v2643 = vand.u32 %v2530, 2147483648
      %v2644 = vor.u32 1.1754944e-38, %v2643
      %v2645 = vsel %vm2642, %v2644, %v2640
      %v2646 = vmul.f32 1.0, %v2645
      %v2647 = vrcp.pop %v2531
      %v2648 = vmul.f32 %v2531, %v2647
      %v2649 = vsub.f32 1.0, %v2648
      %v2650 = vmul.f32 %v2647, %v2649
      %v2651 = vadd.f32 %v2647, %v2650
      %vm2652 = vweird.f32 %v2531
      %vm2653 = vweird.f32 %v2647
      %vm2654 = vmor %vm2652, %vm2653
      %v2655 = vsel %vm2654, %v2647, %v2651
      %v2656 = vand.u32 2147483647, %v2531
      %vm2657 = vcmp.eq.f32.partialorder %v2656, 8.507059e+37
      %v2658 = vand.u32 %v2531, 2147483648
      %v2659 = vor.u32 1.1754944e-38, %v2658
      %v2660 = vsel %vm2657, %v2659, %v2655
      %v2661 = vmul.f32 1.0, %v2660
      %v2662 = vrcp.pop %v2532
      %v2663 = vmul.f32 %v2532, %v2662
      %v2664 = vsub.f32 1.0, %v2663
      %v2665 = vmul.f32 %v2662, %v2664
      %v2666 = vadd.f32 %v2662, %v2665
      %vm2667 = vweird.f32 %v2532
      %vm2668 = vweird.f32 %v2662
      %vm2669 = vmor %vm2667, %vm2668
      %v2670 = vsel %vm2669, %v2662, %v2666
      %v2671 = vand.u32 2147483647, %v2532
      %vm2672 = vcmp.eq.f32.partialorder %v2671, 8.507059e+37
      %v2673 = vand.u32 %v2532, 2147483648
      %v2674 = vor.u32 1.1754944e-38, %v2673
      %v2675 = vsel %vm2672, %v2674, %v2670
      %v2676 = vmul.f32 1.0, %v2675
      %v2677 = vrcp.pop %v2533
      %v2678 = vmul.f32 %v2533, %v2677
      %v2679 = vsub.f32 1.0, %v2678
      %v2680 = vmul.f32 %v2677, %v2679
      %v2681 = vadd.f32 %v2677, %v2680
      %vm2682 = vweird.f32 %v2533
      %vm2683 = vweird.f32 %v2677
      %vm2684 = vmor %vm2682, %vm2683
      %v2685 = vsel %vm2684, %v2677, %v2681
      %v2686 = vand.u32 2147483647, %v2533
      %vm2687 = vcmp.eq.f32.partialorder %v2686, 8.507059e+37
      %v2688 = vand.u32 %v2533, 2147483648
      %v2689 = vor.u32 1.1754944e-38, %v2688
      %v2690 = vsel %vm2687, %v2689, %v2685
      %v2691 = vmul.f32 1.0, %v2690
      %v2692 = vrcp.pop %v2534
      %v2693 = vmul.f32 %v2534, %v2692
      %v2694 = vsub.f32 1.0, %v2693
      %v2695 = vmul.f32 %v2692, %v2694
      %v2696 = vadd.f32 %v2692, %v2695
      %vm2697 = vweird.f32 %v2534
      %vm2698 = vweird.f32 %v2692
      %vm2699 = vmor %vm2697, %vm2698
      %v2700 = vsel %vm2699, %v2692, %v2696
      %v2701 = vand.u32 2147483647, %v2534
      %vm2702 = vcmp.eq.f32.partialorder %v2701, 8.507059e+37
      %v2703 = vand.u32 %v2534, 2147483648
      %v2704 = vor.u32 1.1754944e-38, %v2703
      %v2705 = vsel %vm2702, %v2704, %v2700
      %v2706 = vmul.f32 1.0, %v2705
      %v2707 = vrcp.pop %v2535
      %v2708 = vmul.f32 %v2535, %v2707
      %v2709 = vsub.f32 1.0, %v2708
      %v2710 = vmul.f32 %v2707, %v2709
      %v2711 = vadd.f32 %v2707, %v2710
      %vm2712 = vweird.f32 %v2535
      %vm2713 = vweird.f32 %v2707
      %vm2714 = vmor %vm2712, %vm2713
      %v2715 = vsel %vm2714, %v2707, %v2711
      %v2716 = vand.u32 2147483647, %v2535
      %vm2717 = vcmp.eq.f32.partialorder %v2716, 8.507059e+37
      %v2718 = vand.u32 %v2535, 2147483648
      %v2719 = vor.u32 1.1754944e-38, %v2718
      %v2720 = vsel %vm2717, %v2719, %v2715
      %v2721 = vmul.f32 1.0, %v2720
      %v2722 = vrcp.pop %v2536
      %v2723 = vmul.f32 %v2536, %v2722
      %v2724 = vsub.f32 1.0, %v2723
      %v2725 = vmul.f32 %v2722, %v2724
      %v2726 = vadd.f32 %v2722, %v2725
      %vm2727 = vweird.f32 %v2536
      %vm2728 = vweird.f32 %v2722
      %vm2729 = vmor %vm2727, %vm2728
      %v2730 = vsel %vm2729, %v2722, %v2726
      %v2731 = vand.u32 2147483647, %v2536
      %vm2732 = vcmp.eq.f32.partialorder %v2731, 8.507059e+37
      %v2733 = vand.u32 %v2536, 2147483648
      %v2734 = vor.u32 1.1754944e-38, %v2733
      %v2735 = vsel %vm2732, %v2734, %v2730
      %v2736 = vmul.f32 1.0, %v2735
      %v2737 = vrcp.pop %v2537
      %v2738 = vmul.f32 %v2537, %v2737
      %v2739 = vsub.f32 1.0, %v2738
      %v2740 = vmul.f32 %v2737, %v2739
      %v2741 = vadd.f32 %v2737, %v2740
      %vm2742 = vweird.f32 %v2537
      %vm2743 = vweird.f32 %v2737
      %vm2744 = vmor %vm2742, %vm2743
      %v2745 = vsel %vm2744, %v2737, %v2741
      %v2746 = vand.u32 2147483647, %v2537
      %vm2747 = vcmp.eq.f32.partialorder %v2746, 8.507059e+37
      %v2748 = vand.u32 %v2537, 2147483648
      %v2749 = vor.u32 1.1754944e-38, %v2748
      %v2750 = vsel %vm2747, %v2749, %v2745
      %v2751 = vmul.f32 1.0, %v2750
      %v2752 = vrcp.pop %v2538
      %v2753 = vmul.f32 %v2538, %v2752
      %v2754 = vsub.f32 1.0, %v2753
      %v2755 = vmul.f32 %v2752, %v2754
      %v2756 = vadd.f32 %v2752, %v2755
      %vm2757 = vweird.f32 %v2538
      %vm2758 = vweird.f32 %v2752
      %vm2759 = vmor %vm2757, %vm2758
      %v2760 = vsel %vm2759, %v2752, %v2756
      %v2761 = vand.u32 2147483647, %v2538
      %vm2762 = vcmp.eq.f32.partialorder %v2761, 8.507059e+37
      %v2763 = vand.u32 %v2538, 2147483648
      %v2764 = vor.u32 1.1754944e-38, %v2763
      %v2765 = vsel %vm2762, %v2764, %v2760
      %v2766 = vmul.f32 1.0, %v2765
      %v2767 = vrcp.pop %v2539
      %v2768 = vmul.f32 %v2539, %v2767
      %v2769 = vsub.f32 1.0, %v2768
      %v2770 = vmul.f32 %v2767, %v2769
      %v2771 = vadd.f32 %v2767, %v2770
      %vm2772 = vweird.f32 %v2539
      %vm2773 = vweird.f32 %v2767
      %vm2774 = vmor %vm2772, %vm2773
      %v2775 = vsel %vm2774, %v2767, %v2771
      %v2776 = vand.u32 2147483647, %v2539
      %vm2777 = vcmp.eq.f32.partialorder %v2776, 8.507059e+37
      %v2778 = vand.u32 %v2539, 2147483648
      %v2779 = vor.u32 1.1754944e-38, %v2778
      %v2780 = vsel %vm2777, %v2779, %v2775
      %v2781 = vmul.f32 1.0, %v2780
      %v2782 = vrcp.pop %v2540
      %v2783 = vmul.f32 %v2540, %v2782
      %v2784 = vsub.f32 1.0, %v2783
      %v2785 = vmul.f32 %v2782, %v2784
      %v2786 = vadd.f32 %v2782, %v2785
      %vm2787 = vweird.f32 %v2540
      %vm2788 = vweird.f32 %v2782
      %vm2789 = vmor %vm2787, %vm2788
      %v2790 = vsel %vm2789, %v2782, %v2786
      %v2791 = vand.u32 2147483647, %v2540
      %vm2792 = vcmp.eq.f32.partialorder %v2791, 8.507059e+37
      %v2793 = vand.u32 %v2540, 2147483648
      %v2794 = vor.u32 1.1754944e-38, %v2793
      %v2795 = vsel %vm2792, %v2794, %v2790
      %v2796 = vmul.f32 1.0, %v2795
      %v2797 = vrcp.pop %v2541
      %v2798 = vmul.f32 %v2541, %v2797
      %v2799 = vsub.f32 1.0, %v2798
      %v2800 = vmul.f32 %v2797, %v2799
      %v2801 = vadd.f32 %v2797, %v2800
      %vm2802 = vweird.f32 %v2541
      %vm2803 = vweird.f32 %v2797
      %vm2804 = vmor %vm2802, %vm2803
      %v2805 = vsel %vm2804, %v2797, %v2801
      %v2806 = vand.u32 2147483647, %v2541
      %vm2807 = vcmp.eq.f32.partialorder %v2806, 8.507059e+37
      %v2808 = vand.u32 %v2541, 2147483648
      %v2809 = vor.u32 1.1754944e-38, %v2808
      %v2810 = vsel %vm2807, %v2809, %v2805
      %v2811 = vmul.f32 1.0, %v2810
      %v2812 = vrcp.pop %v2542
      %v2813 = vmul.f32 %v2542, %v2812
      %v2814 = vsub.f32 1.0, %v2813
      %v2815 = vmul.f32 %v2812, %v2814
      %v2816 = vadd.f32 %v2812, %v2815
      %vm2817 = vweird.f32 %v2542
      %vm2818 = vweird.f32 %v2812
      %vm2819 = vmor %vm2817, %vm2818
      %v2820 = vsel %vm2819, %v2812, %v2816
      %v2821 = vand.u32 2147483647, %v2542
      %vm2822 = vcmp.eq.f32.partialorder %v2821, 8.507059e+37
      %v2823 = vand.u32 %v2542, 2147483648
      %v2824 = vor.u32 1.1754944e-38, %v2823
      %v2825 = vsel %vm2822, %v2824, %v2820
      %v2826 = vmul.f32 1.0, %v2825
      %v2827 = vrcp.pop %v2543
      %v2828 = vmul.f32 %v2543, %v2827
      %v2829 = vsub.f32 1.0, %v2828
      %v2830 = vmul.f32 %v2827, %v2829
      %v2831 = vadd.f32 %v2827, %v2830
      %vm2832 = vweird.f32 %v2543
      %vm2833 = vweird.f32 %v2827
      %vm2834 = vmor %vm2832, %vm2833
      %v2835 = vsel %vm2834, %v2827, %v2831
      %v2836 = vand.u32 2147483647, %v2543
      %vm2837 = vcmp.eq.f32.partialorder %v2836, 8.507059e+37
      %v2838 = vand.u32 %v2543, 2147483648
      %v2839 = vor.u32 1.1754944e-38, %v2838
      %v2840 = vsel %vm2837, %v2839, %v2835
      %v2841 = vmul.f32 1.0, %v2840
      %v2842 = vrcp.pop %v2544
      %v2843 = vmul.f32 %v2544, %v2842
      %v2844 = vsub.f32 1.0, %v2843
      %v2845 = vmul.f32 %v2842, %v2844
      %v2846 = vadd.f32 %v2842, %v2845
      %vm2847 = vweird.f32 %v2544
      %vm2848 = vweird.f32 %v2842
      %vm2849 = vmor %vm2847, %vm2848
      %v2850 = vsel %vm2849, %v2842, %v2846
      %v2851 = vand.u32 2147483647, %v2544
      %vm2852 = vcmp.eq.f32.partialorder %v2851, 8.507059e+37
      %v2853 = vand.u32 %v2544, 2147483648
      %v2854 = vor.u32 1.1754944e-38, %v2853
      %v2855 = vsel %vm2852, %v2854, %v2850
      %v2856 = vmul.f32 1.0, %v2855
      %v2857 = vrcp.pop %v2545
      %v2858 = vmul.f32 %v2545, %v2857
      %v2859 = vsub.f32 1.0, %v2858
      %v2860 = vmul.f32 %v2857, %v2859
      %v2861 = vadd.f32 %v2857, %v2860
      %vm2862 = vweird.f32 %v2545
      %vm2863 = vweird.f32 %v2857
      %vm2864 = vmor %vm2862, %vm2863
      %v2865 = vsel %vm2864, %v2857, %v2861
      %v2866 = vand.u32 2147483647, %v2545
      %vm2867 = vcmp.eq.f32.partialorder %v2866, 8.507059e+37
      %v2868 = vand.u32 %v2545, 2147483648
      %v2869 = vor.u32 1.1754944e-38, %v2868
      %v2870 = vsel %vm2867, %v2869, %v2865
      %v2871 = vmul.f32 1.0, %v2870
      %v2872 = vrcp.pop %v2546
      %v2873 = vmul.f32 %v2546, %v2872
      %v2874 = vsub.f32 1.0, %v2873
      %v2875 = vmul.f32 %v2872, %v2874
      %v2876 = vadd.f32 %v2872, %v2875
      %vm2877 = vweird.f32 %v2546
      %vm2878 = vweird.f32 %v2872
      %vm2879 = vmor %vm2877, %vm2878
      %v2880 = vsel %vm2879, %v2872, %v2876
      %v2881 = vand.u32 2147483647, %v2546
      %vm2882 = vcmp.eq.f32.partialorder %v2881, 8.507059e+37
      %v2883 = vand.u32 %v2546, 2147483648
      %v2884 = vor.u32 1.1754944e-38, %v2883
      %v2885 = vsel %vm2882, %v2884, %v2880
      %v2886 = vmul.f32 1.0, %v2885
      %v2887 = vrcp.pop %v2547
      %v2888 = vmul.f32 %v2547, %v2887
      %v2889 = vsub.f32 1.0, %v2888
      %v2890 = vmul.f32 %v2887, %v2889
      %v2891 = vadd.f32 %v2887, %v2890
      %vm2892 = vweird.f32 %v2547
      %vm2893 = vweird.f32 %v2887
      %vm2894 = vmor %vm2892, %vm2893
      %v2895 = vsel %vm2894, %v2887, %v2891
      %v2896 = vand.u32 2147483647, %v2547
      %vm2897 = vcmp.eq.f32.partialorder %v2896, 8.507059e+37
      %v2898 = vand.u32 %v2547, 2147483648
      %v2899 = vor.u32 1.1754944e-38, %v2898
      %v2900 = vsel %vm2897, %v2899, %v2895
      %v2901 = vmul.f32 1.0, %v2900
      %v2902 = vrcp.pop %v2548
      %v2903 = vmul.f32 %v2548, %v2902
      %v2904 = vsub.f32 1.0, %v2903
      %v2905 = vmul.f32 %v2902, %v2904
      %v2906 = vadd.f32 %v2902, %v2905
      %vm2907 = vweird.f32 %v2548
      %vm2908 = vweird.f32 %v2902
      %vm2909 = vmor %vm2907, %vm2908
      %v2910 = vsel %vm2909, %v2902, %v2906
      %v2911 = vand.u32 2147483647, %v2548
      %vm2912 = vcmp.eq.f32.partialorder %v2911, 8.507059e+37
      %v2913 = vand.u32 %v2548, 2147483648
      %v2914 = vor.u32 1.1754944e-38, %v2913
      %v2915 = vsel %vm2912, %v2914, %v2910
      %v2916 = vmul.f32 1.0, %v2915
      %v2917 = vrcp.pop %v2549
      %v2918 = vmul.f32 %v2549, %v2917
      %v2919 = vsub.f32 1.0, %v2918
      %v2920 = vmul.f32 %v2917, %v2919
      %v2921 = vadd.f32 %v2917, %v2920
      %vm2922 = vweird.f32 %v2549
      %vm2923 = vweird.f32 %v2917
      %vm2924 = vmor %vm2922, %vm2923
      %v2925 = vsel %vm2924, %v2917, %v2921
      %v2926 = vand.u32 2147483647, %v2549
      %vm2927 = vcmp.eq.f32.partialorder %v2926, 8.507059e+37
      %v2928 = vand.u32 %v2549, 2147483648
      %v2929 = vor.u32 1.1754944e-38, %v2928
      %v2930 = vsel %vm2927, %v2929, %v2925
      %v2931 = vmul.f32 1.0, %v2930
      %v2932 = vrcp.pop %v2550
      %v2933 = vmul.f32 %v2550, %v2932
      %v2934 = vsub.f32 1.0, %v2933
      %v2935 = vmul.f32 %v2932, %v2934
      %v2936 = vadd.f32 %v2932, %v2935
      %vm2937 = vweird.f32 %v2550
      %vm2938 = vweird.f32 %v2932
      %vm2939 = vmor %vm2937, %vm2938
      %v2940 = vsel %vm2939, %v2932, %v2936
      %v2941 = vand.u32 2147483647, %v2550
      %vm2942 = vcmp.eq.f32.partialorder %v2941, 8.507059e+37
      %v2943 = vand.u32 %v2550, 2147483648
      %v2944 = vor.u32 1.1754944e-38, %v2943
      %v2945 = vsel %vm2942, %v2944, %v2940
      %v2946 = vmul.f32 1.0, %v2945
      %v2947 = vrcp.pop %v2551
      %v2948 = vmul.f32 %v2551, %v2947
      %v2949 = vsub.f32 1.0, %v2948
      %v2950 = vmul.f32 %v2947, %v2949
      %v2951 = vadd.f32 %v2947, %v2950
      %vm2952 = vweird.f32 %v2551
      %vm2953 = vweird.f32 %v2947
      %vm2954 = vmor %vm2952, %vm2953
      %v2955 = vsel %vm2954, %v2947, %v2951
      %v2956 = vand.u32 2147483647, %v2551
      %vm2957 = vcmp.eq.f32.partialorder %v2956, 8.507059e+37
      %v2958 = vand.u32 %v2551, 2147483648
      %v2959 = vor.u32 1.1754944e-38, %v2958
      %v2960 = vsel %vm2957, %v2959, %v2955
      %v2961 = vmul.f32 1.0, %v2960
      %v2962 = vrcp.pop %v2552
      %v2963 = vmul.f32 %v2552, %v2962
      %v2964 = vsub.f32 1.0, %v2963
      %v2965 = vmul.f32 %v2962, %v2964
      %v2966 = vadd.f32 %v2962, %v2965
      %vm2967 = vweird.f32 %v2552
      %vm2968 = vweird.f32 %v2962
      %vm2969 = vmor %vm2967, %vm2968
      %v2970 = vsel %vm2969, %v2962, %v2966
      %v2971 = vand.u32 2147483647, %v2552
      %vm2972 = vcmp.eq.f32.partialorder %v2971, 8.507059e+37
      %v2973 = vand.u32 %v2552, 2147483648
      %v2974 = vor.u32 1.1754944e-38, %v2973
      %v2975 = vsel %vm2972, %v2974, %v2970
      %v2976 = vmul.f32 1.0, %v2975
      %v2977 = vrcp.pop %v2553
      %v2978 = vmul.f32 %v2553, %v2977
      %v2979 = vsub.f32 1.0, %v2978
      %v2980 = vmul.f32 %v2977, %v2979
      %v2981 = vadd.f32 %v2977, %v2980
      %vm2982 = vweird.f32 %v2553
      %vm2983 = vweird.f32 %v2977
      %vm2984 = vmor %vm2982, %vm2983
      %v2985 = vsel %vm2984, %v2977, %v2981
      %v2986 = vand.u32 2147483647, %v2553
      %vm2987 = vcmp.eq.f32.partialorder %v2986, 8.507059e+37
      %v2988 = vand.u32 %v2553, 2147483648
      %v2989 = vor.u32 1.1754944e-38, %v2988
      %v2990 = vsel %vm2987, %v2989, %v2985
      %v2991 = vmul.f32 1.0, %v2990
      %v2992 = vrcp.pop %v2554
      %v2993 = vmul.f32 %v2554, %v2992
      %v2994 = vsub.f32 1.0, %v2993
      %v2995 = vmul.f32 %v2992, %v2994
      %v2996 = vadd.f32 %v2992, %v2995
      %vm2997 = vweird.f32 %v2554
      %vm2998 = vweird.f32 %v2992
      %vm2999 = vmor %vm2997, %vm2998
      %v3000 = vsel %vm2999, %v2992, %v2996
      %v3001 = vand.u32 2147483647, %v2554
      %vm3002 = vcmp.eq.f32.partialorder %v3001, 8.507059e+37
      %v3003 = vand.u32 %v2554, 2147483648
      %v3004 = vor.u32 1.1754944e-38, %v3003
      %v3005 = vsel %vm3002, %v3004, %v3000
      %v3006 = vmul.f32 1.0, %v3005
      %v3007 = vrcp.pop %v2555
      %v3008 = vmul.f32 %v2555, %v3007
      %v3009 = vsub.f32 1.0, %v3008
      %v3010 = vmul.f32 %v3007, %v3009
      %v3011 = vadd.f32 %v3007, %v3010
      %vm3012 = vweird.f32 %v2555
      %vm3013 = vweird.f32 %v3007
      %vm3014 = vmor %vm3012, %vm3013
      %v3015 = vsel %vm3014, %v3007, %v3011
      %v3016 = vand.u32 2147483647, %v2555
      %vm3017 = vcmp.eq.f32.partialorder %v3016, 8.507059e+37
      %v3018 = vand.u32 %v2555, 2147483648
      %v3019 = vor.u32 1.1754944e-38, %v3018
      %v3020 = vsel %vm3017, %v3019, %v3015
      %v3021 = vmul.f32 1.0, %v3020
      %v3022 = vrcp.pop %v2556
      %v3023 = vmul.f32 %v2556, %v3022
      %v3024 = vsub.f32 1.0, %v3023
      %v3025 = vmul.f32 %v3022, %v3024
      %v3026 = vadd.f32 %v3022, %v3025
      %vm3027 = vweird.f32 %v2556
      %vm3028 = vweird.f32 %v3022
      %vm3029 = vmor %vm3027, %vm3028
      %v3030 = vsel %vm3029, %v3022, %v3026
      %v3031 = vand.u32 2147483647, %v2556
      %vm3032 = vcmp.eq.f32.partialorder %v3031, 8.507059e+37
      %v3033 = vand.u32 %v2556, 2147483648
      %v3034 = vor.u32 1.1754944e-38, %v3033
      %v3035 = vsel %vm3032, %v3034, %v3030
      %v3036 = vmul.f32 1.0, %v3035
      %v3037 = vmul.f32 %v2350, %v2571
      %v3038 = vmul.f32 %v2352, %v2586
      %v3039 = vmul.f32 %v2355, %v2601
      %v3040 = vmul.f32 %v2357, %v2616
      %v3041 = vmul.f32 %v2360, %v2631
      %v3042 = vmul.f32 %v2362, %v2646
      %v3043 = vmul.f32 %v2365, %v2661
      %v3044 = vmul.f32 %v2367, %v2676
      %v3045 = vmul.f32 %v2370, %v2691
      %v3046 = vmul.f32 %v2372, %v2706
      %v3047 = vmul.f32 %v2375, %v2721
      %v3048 = vmul.f32 %v2377, %v2736
      %v3049 = vmul.f32 %v2380, %v2751
      %v3050 = vmul.f32 %v2382, %v2766
      %v3051 = vmul.f32 %v2385, %v2781
      %v3052 = vmul.f32 %v2387, %v2796
      %v3053 = vmul.f32 %v2390, %v2811
      %v3054 = vmul.f32 %v2392, %v2826
      %v3055 = vmul.f32 %v2395, %v2841
      %v3056 = vmul.f32 %v2397, %v2856
      %v3057 = vmul.f32 %v2400, %v2871
      %v3058 = vmul.f32 %v2402, %v2886
      %v3059 = vmul.f32 %v2405, %v2901
      %v3060 = vmul.f32 %v2407, %v2916
      %v3061 = vmul.f32 %v2410, %v2931
      %v3062 = vmul.f32 %v2412, %v2946
      %v3063 = vmul.f32 %v2415, %v2961
      %v3064 = vmul.f32 %v2417, %v2976
      %v3065 = vmul.f32 %v2420, %v2991
      %v3066 = vmul.f32 %v2422, %v3006
      %v3067 = vmul.f32 %v2425, %v3021
      %v3068 = vmul.f32 %v2427, %v3036
      %v3069 = vld [vmem:[%s385] sm:$0xf]
      %v3070 = vld [vmem:[%s385 + $0x4] sm:$0xf]
      %v3071 = vld [vmem:[%s385 + $0x8] sm:$0xf]
      %v3072 = vld [vmem:[%s385 + $0xc] sm:$0xf]
      %v3073 = vld [vmem:[%s385 + $0x10] sm:$0xf]
      %v3074 = vld [vmem:[%s385 + $0x14] sm:$0xf]
      %v3075 = vld [vmem:[%s385 + $0x18] sm:$0xf]
      %v3076 = vld [vmem:[%s385 + $0x1c] sm:$0xf]
      %v3077 = vld [vmem:[%s385 + $0x20] sm:$0xf]
      %v3078 = vld [vmem:[%s385 + $0x24] sm:$0xf]
      %v3079 = vld [vmem:[%s385 + $0x28] sm:$0xf]
      %v3080 = vld [vmem:[%s385 + $0x2c] sm:$0xf]
      %v3081 = vld [vmem:[%s385 + $0x30] sm:$0xf]
      %v3082 = vld [vmem:[%s385 + $0x34] sm:$0xf]
      %v3083 = vld [vmem:[%s385 + $0x38] sm:$0xf]
      %v3084 = vld [vmem:[%s385 + $0x3c] sm:$0xf]
      %v3085 = vld [vmem:[%s385 + $0x40] sm:$0xf]
      %v3086 = vld [vmem:[%s385 + $0x44] sm:$0xf]
      %v3087 = vld [vmem:[%s385 + $0x48] sm:$0xf]
      %v3088 = vld [vmem:[%s385 + $0x4c] sm:$0xf]
      %v3089 = vld [vmem:[%s385 + $0x50] sm:$0xf]
      %v3090 = vld [vmem:[%s385 + $0x54] sm:$0xf]
      %v3091 = vld [vmem:[%s385 + $0x58] sm:$0xf]
      %v3092 = vld [vmem:[%s385 + $0x5c] sm:$0xf]
      %v3093 = vld [vmem:[%s385 + $0x60] sm:$0xf]
      %v3094 = vld [vmem:[%s385 + $0x64] sm:$0xf]
      %v3095 = vld [vmem:[%s385 + $0x68] sm:$0xf]
      %v3096 = vld [vmem:[%s385 + $0x6c] sm:$0xf]
      %v3097 = vld [vmem:[%s385 + $0x70] sm:$0xf]
      %v3098 = vld [vmem:[%s385 + $0x74] sm:$0xf]
      %v3099 = vld [vmem:[%s385 + $0x78] sm:$0xf]
      %v3100 = vld [vmem:[%s385 + $0x7c] sm:$0xf]
      %v3101 = vunpack.c.l.bf16 %v3069
      %v3102 = vunpack.c.l.bf16 %v3070
      %v3103 = vunpack.c.l.bf16 %v3071
      %v3104 = vunpack.c.l.bf16 %v3072
      %v3105 = vunpack.c.l.bf16 %v3073
      %v3106 = vunpack.c.l.bf16 %v3074
      %v3107 = vunpack.c.l.bf16 %v3075
      %v3108 = vunpack.c.l.bf16 %v3076
      %v3109 = vunpack.c.l.bf16 %v3077
      %v3110 = vunpack.c.l.bf16 %v3078
      %v3111 = vunpack.c.l.bf16 %v3079
      %v3112 = vunpack.c.l.bf16 %v3080
      %v3113 = vunpack.c.l.bf16 %v3081
      %v3114 = vunpack.c.l.bf16 %v3082
      %v3115 = vunpack.c.l.bf16 %v3083
      %v3116 = vunpack.c.l.bf16 %v3084
      %v3117 = vunpack.c.l.bf16 %v3085
      %v3118 = vunpack.c.l.bf16 %v3086
      %v3119 = vunpack.c.l.bf16 %v3087
      %v3120 = vunpack.c.l.bf16 %v3088
      %v3121 = vunpack.c.l.bf16 %v3089
      %v3122 = vunpack.c.l.bf16 %v3090
      %v3123 = vunpack.c.l.bf16 %v3091
      %v3124 = vunpack.c.l.bf16 %v3092
      %v3125 = vunpack.c.l.bf16 %v3093
      %v3126 = vunpack.c.l.bf16 %v3094
      %v3127 = vunpack.c.l.bf16 %v3095
      %v3128 = vunpack.c.l.bf16 %v3096
      %v3129 = vunpack.c.l.bf16 %v3097
      %v3130 = vunpack.c.l.bf16 %v3098
      %v3131 = vunpack.c.l.bf16 %v3099
      %v3132 = vunpack.c.l.bf16 %v3100
      %v3133 = vadd.f32 %v3037, %v3101
      %v3134 = vadd.f32 %v3038, %v3102
      %v3135 = vadd.f32 %v3039, %v3103
      %v3136 = vadd.f32 %v3040, %v3104
      %v3137 = vadd.f32 %v3041, %v3105
      %v3138 = vadd.f32 %v3042, %v3106
      %v3139 = vadd.f32 %v3043, %v3107
      %v3140 = vadd.f32 %v3044, %v3108
      %v3141 = vadd.f32 %v3045, %v3109
      %v3142 = vadd.f32 %v3046, %v3110
      %v3143 = vadd.f32 %v3047, %v3111
      %v3144 = vadd.f32 %v3048, %v3112
      %v3145 = vadd.f32 %v3049, %v3113
      %v3146 = vadd.f32 %v3050, %v3114
      %v3147 = vadd.f32 %v3051, %v3115
      %v3148 = vadd.f32 %v3052, %v3116
      %v3149 = vadd.f32 %v3053, %v3117
      %v3150 = vadd.f32 %v3054, %v3118
      %v3151 = vadd.f32 %v3055, %v3119
      %v3152 = vadd.f32 %v3056, %v3120
      %v3153 = vadd.f32 %v3057, %v3121
      %v3154 = vadd.f32 %v3058, %v3122
      %v3155 = vadd.f32 %v3059, %v3123
      %v3156 = vadd.f32 %v3060, %v3124
      %v3157 = vadd.f32 %v3061, %v3125
      %v3158 = vadd.f32 %v3062, %v3126
      %v3159 = vadd.f32 %v3063, %v3127
      %v3160 = vadd.f32 %v3064, %v3128
      %v3161 = vadd.f32 %v3065, %v3129
      %v3162 = vadd.f32 %v3066, %v3130
      %v3163 = vadd.f32 %v3067, %v3131
      %v3164 = vadd.f32 %v3068, %v3132
      %v3165 = vpack.c.bf16 %v3134, %v3133
      %v3166 = vpack.c.bf16 %v3136, %v3135
      %v3167 = vpack.c.bf16 %v3138, %v3137
      %v3168 = vpack.c.bf16 %v3140, %v3139
      %v3169 = vpack.c.bf16 %v3142, %v3141
      %v3170 = vpack.c.bf16 %v3144, %v3143
      %v3171 = vpack.c.bf16 %v3146, %v3145
      %v3172 = vpack.c.bf16 %v3148, %v3147
      %v3173 = vpack.c.bf16 %v3150, %v3149
      %v3174 = vpack.c.bf16 %v3152, %v3151
      %v3175 = vpack.c.bf16 %v3154, %v3153
      %v3176 = vpack.c.bf16 %v3156, %v3155
      %v3177 = vpack.c.bf16 %v3158, %v3157
      %v3178 = vpack.c.bf16 %v3160, %v3159
      %v3179 = vpack.c.bf16 %v3162, %v3161
      %v3180 = vpack.c.bf16 %v3164, %v3163
      %v3181 = vld [vmem:[%s5] sm:$0x3]
      %v3182 = vld [vmem:[%s396] sm:$0xf]
      %v3183 = vld [vmem:[%s396 + $0x4] sm:$0xf]
      %v3184 = vld [vmem:[%s396 + $0x8] sm:$0xf]
      %v3185 = vld [vmem:[%s396 + $0xc] sm:$0xf]
      %v3186 = vld [vmem:[%s396 + $0x10] sm:$0xf]
      %v3187 = vld [vmem:[%s396 + $0x14] sm:$0xf]
      %v3188 = vld [vmem:[%s396 + $0x18] sm:$0xf]
      %v3189 = vld [vmem:[%s396 + $0x1c] sm:$0xf]
      %v3190 = vld [vmem:[%s396 + $0x20] sm:$0xf]
      %v3191 = vld [vmem:[%s396 + $0x24] sm:$0xf]
      %v3192 = vld [vmem:[%s396 + $0x28] sm:$0xf]
      %v3193 = vld [vmem:[%s396 + $0x2c] sm:$0xf]
      %v3194 = vld [vmem:[%s396 + $0x30] sm:$0xf]
      %v3195 = vld [vmem:[%s396 + $0x34] sm:$0xf]
      %v3196 = vld [vmem:[%s396 + $0x38] sm:$0xf]
      %v3197 = vld [vmem:[%s396 + $0x3c] sm:$0xf]
      %v3198 = vld [vmem:[%s396 + $0x40] sm:$0xf]
      %v3199 = vld [vmem:[%s396 + $0x44] sm:$0xf]
      %v3200 = vld [vmem:[%s396 + $0x48] sm:$0xf]
      %v3201 = vld [vmem:[%s396 + $0x4c] sm:$0xf]
      %v3202 = vld [vmem:[%s396 + $0x50] sm:$0xf]
      %v3203 = vld [vmem:[%s396 + $0x54] sm:$0xf]
      %v3204 = vld [vmem:[%s396 + $0x58] sm:$0xf]
      %v3205 = vld [vmem:[%s396 + $0x5c] sm:$0xf]
      %v3206 = vld [vmem:[%s396 + $0x60] sm:$0xf]
      %v3207 = vld [vmem:[%s396 + $0x64] sm:$0xf]
      %v3208 = vld [vmem:[%s396 + $0x68] sm:$0xf]
      %v3209 = vld [vmem:[%s396 + $0x6c] sm:$0xf]
      %v3210 = vld [vmem:[%s396 + $0x70] sm:$0xf]
      %v3211 = vld [vmem:[%s396 + $0x74] sm:$0xf]
      %v3212 = vld [vmem:[%s396 + $0x78] sm:$0xf]
      %v3213 = vld [vmem:[%s396 + $0x7c] sm:$0xf]
      %v3214 = vld [vmem:[%s6] sm:$0x3]
      %v3247 = vunpack.c.l.b16 %v3182
      %v3248 = vunpack.c.l.b16 %v3183
      %v3249 = vunpack.c.l.b16 %v3184
      %v3250 = vunpack.c.l.b16 %v3185
      %v3251 = vunpack.c.l.b16 %v3186
      %v3252 = vunpack.c.l.b16 %v3187
      %v3253 = vunpack.c.l.b16 %v3188
      %v3254 = vunpack.c.l.b16 %v3189
      %v3255 = vunpack.c.l.b16 %v3190
      %v3256 = vunpack.c.l.b16 %v3191
      %v3257 = vunpack.c.l.b16 %v3192
      %v3258 = vunpack.c.l.b16 %v3193
      %v3259 = vunpack.c.l.b16 %v3194
      %v3260 = vunpack.c.l.b16 %v3195
      %v3261 = vunpack.c.l.b16 %v3196
      %v3262 = vunpack.c.l.b16 %v3197
      %v3263 = vunpack.c.l.b16 %v3198
      %v3264 = vunpack.c.l.b16 %v3199
      %v3265 = vunpack.c.l.b16 %v3200
      %v3266 = vunpack.c.l.b16 %v3201
      %v3267 = vunpack.c.l.b16 %v3202
      %v3268 = vunpack.c.l.b16 %v3203
      %v3269 = vunpack.c.l.b16 %v3204
      %v3270 = vunpack.c.l.b16 %v3205
      %v3271 = vunpack.c.l.b16 %v3206
      %v3272 = vunpack.c.l.b16 %v3207
      %v3273 = vunpack.c.l.b16 %v3208
      %v3274 = vunpack.c.l.b16 %v3209
      %v3275 = vunpack.c.l.b16 %v3210
      %v3276 = vunpack.c.l.b16 %v3211
      %v3277 = vunpack.c.l.b16 %v3212
      %v3278 = vunpack.c.l.b16 %v3213
      %v3279 = vpack.c.b16 %v3248, %v3247
      %v3280 = vpack.c.b16 %v3250, %v3249
      %v3281 = vpack.c.b16 %v3252, %v3251
      %v3282 = vpack.c.b16 %v3254, %v3253
      %v3283 = vpack.c.b16 %v3256, %v3255
      %v3284 = vpack.c.b16 %v3258, %v3257
      %v3285 = vpack.c.b16 %v3260, %v3259
      %v3286 = vpack.c.b16 %v3262, %v3261
      %v3287 = vpack.c.b16 %v3264, %v3263
      %v3288 = vpack.c.b16 %v3266, %v3265
      %v3289 = vpack.c.b16 %v3268, %v3267
      %v3290 = vpack.c.b16 %v3270, %v3269
      %v3291 = vpack.c.b16 %v3272, %v3271
      %v3292 = vpack.c.b16 %v3274, %v3273
      %v3293 = vpack.c.b16 %v3276, %v3275
      %v3294 = vpack.c.b16 %v3278, %v3277
      %vm3295 = vcmask 31744
      %v3297 = vsel %vm3295, %v3279, 0
      %v3300 = vsel %vm3295, %v3280, 0
      %v3303 = vsel %vm3295, %v3281, 0
      %v3306 = vsel %vm3295, %v3282, 0
      %v3309 = vsel %vm3295, %v3283, 0
      %v3312 = vsel %vm3295, %v3284, 0
      %v3315 = vsel %vm3295, %v3285, 0
      %v3318 = vsel %vm3295, %v3286, 0
      %v3321 = vsel %vm3295, %v3287, 0
      %v3324 = vsel %vm3295, %v3288, 0
      %v3327 = vsel %vm3295, %v3289, 0
      %v3330 = vsel %vm3295, %v3290, 0
      %v3333 = vsel %vm3295, %v3291, 0
      %v3336 = vsel %vm3295, %v3292, 0
      %v3339 = vsel %vm3295, %v3293, 0
      %v3342 = vsel %vm3295, %v3294, 0
      %v3345 = vsel %vm2336, %v3214, 0
      %3347 = vmatpush.bf16.msra.mxu0 0
      %3348 = vmatpush.bf16.msra.mxu0 0
      %3349 = vmatpush.bf16.msra.mxu0 0
      %3350 = vmatpush.bf16.msra.mxu0 0
      %3351 = vmatpush.bf16.msra.mxu0 0
      %3352 = vmatpush.bf16.msra.mxu0 0
      %3353 = vmatpush.bf16.msra.mxu0 0
      %3354 = vmatpush.bf16.msra.mxu0 %v3345
      %3355 = vmatmul.bf16.gmra.mxu0 %v3297
      %v3356 = vpop.f32.mrf.mxu0
      %v3357 = vadd.f32 0.0, %v3356
      %v3358 = vpop.f32.mrf.mxu0
      %v3359 = vadd.f32 0.0, %v3358
      %3360 = vmatmul.bf16.gmra.mxu0 %v3300
      %v3361 = vpop.f32.mrf.mxu0
      %v3362 = vadd.f32 0.0, %v3361
      %v3363 = vpop.f32.mrf.mxu0
      %v3364 = vadd.f32 0.0, %v3363
      %3365 = vmatmul.bf16.gmra.mxu0 %v3303
      %v3366 = vpop.f32.mrf.mxu0
      %v3367 = vadd.f32 0.0, %v3366
      %v3368 = vpop.f32.mrf.mxu0
      %v3369 = vadd.f32 0.0, %v3368
      %3370 = vmatmul.bf16.gmra.mxu0 %v3306
      %v3371 = vpop.f32.mrf.mxu0
      %v3372 = vadd.f32 0.0, %v3371
      %v3373 = vpop.f32.mrf.mxu0
      %v3374 = vadd.f32 0.0, %v3373
      %3375 = vmatmul.bf16.gmra.mxu0 %v3309
      %v3376 = vpop.f32.mrf.mxu0
      %v3377 = vadd.f32 0.0, %v3376
      %v3378 = vpop.f32.mrf.mxu0
      %v3379 = vadd.f32 0.0, %v3378
      %3380 = vmatmul.bf16.gmra.mxu0 %v3312
      %v3381 = vpop.f32.mrf.mxu0
      %v3382 = vadd.f32 0.0, %v3381
      %v3383 = vpop.f32.mrf.mxu0
      %v3384 = vadd.f32 0.0, %v3383
      %3385 = vmatmul.bf16.gmra.mxu0 %v3315
      %v3386 = vpop.f32.mrf.mxu0
      %v3387 = vadd.f32 0.0, %v3386
      %v3388 = vpop.f32.mrf.mxu0
      %v3389 = vadd.f32 0.0, %v3388
      %3390 = vmatmul.bf16.gmra.mxu0 %v3318
      %v3391 = vpop.f32.mrf.mxu0
      %v3392 = vadd.f32 0.0, %v3391
      %v3393 = vpop.f32.mrf.mxu0
      %v3394 = vadd.f32 0.0, %v3393
      %3395 = vmatmul.bf16.gmra.mxu0 %v3321
      %v3396 = vpop.f32.mrf.mxu0
      %v3397 = vadd.f32 0.0, %v3396
      %v3398 = vpop.f32.mrf.mxu0
      %v3399 = vadd.f32 0.0, %v3398
      %3400 = vmatmul.bf16.gmra.mxu0 %v3324
      %v3401 = vpop.f32.mrf.mxu0
      %v3402 = vadd.f32 0.0, %v3401
      %v3403 = vpop.f32.mrf.mxu0
      %v3404 = vadd.f32 0.0, %v3403
      %3405 = vmatmul.bf16.gmra.mxu0 %v3327
      %v3406 = vpop.f32.mrf.mxu0
      %v3407 = vadd.f32 0.0, %v3406
      %v3408 = vpop.f32.mrf.mxu0
      %v3409 = vadd.f32 0.0, %v3408
      %3410 = vmatmul.bf16.gmra.mxu0 %v3330
      %v3411 = vpop.f32.mrf.mxu0
      %v3412 = vadd.f32 0.0, %v3411
      %v3413 = vpop.f32.mrf.mxu0
      %v3414 = vadd.f32 0.0, %v3413
      %3415 = vmatmul.bf16.gmra.mxu0 %v3333
      %v3416 = vpop.f32.mrf.mxu0
      %v3417 = vadd.f32 0.0, %v3416
      %v3418 = vpop.f32.mrf.mxu0
      %v3419 = vadd.f32 0.0, %v3418
      %3420 = vmatmul.bf16.gmra.mxu0 %v3336
      %v3421 = vpop.f32.mrf.mxu0
      %v3422 = vadd.f32 0.0, %v3421
      %v3423 = vpop.f32.mrf.mxu0
      %v3424 = vadd.f32 0.0, %v3423
      %3425 = vmatmul.bf16.gmra.mxu0 %v3339
      %v3426 = vpop.f32.mrf.mxu0
      %v3427 = vadd.f32 0.0, %v3426
      %v3428 = vpop.f32.mrf.mxu0
      %v3429 = vadd.f32 0.0, %v3428
      %3430 = vmatmul.bf16.gmra.mxu0 %v3342
      %v3431 = vpop.f32.mrf.mxu0
      %v3432 = vadd.f32 0.0, %v3431
      %v3433 = vpop.f32.mrf.mxu0
      %v3434 = vadd.f32 0.0, %v3433
      %3435 = vdwg.mxu0
      %v3437 = vsel %vm3295, %v3165, 0
      %v3440 = vsel %vm3295, %v3166, 0
      %v3443 = vsel %vm3295, %v3167, 0
      %v3446 = vsel %vm3295, %v3168, 0
      %v3449 = vsel %vm3295, %v3169, 0
      %v3452 = vsel %vm3295, %v3170, 0
      %v3455 = vsel %vm3295, %v3171, 0
      %v3458 = vsel %vm3295, %v3172, 0
      %v3461 = vsel %vm3295, %v3173, 0
      %v3464 = vsel %vm3295, %v3174, 0
      %v3467 = vsel %vm3295, %v3175, 0
      %v3470 = vsel %vm3295, %v3176, 0
      %v3473 = vsel %vm3295, %v3177, 0
      %v3476 = vsel %vm3295, %v3178, 0
      %v3479 = vsel %vm3295, %v3179, 0
      %v3482 = vsel %vm3295, %v3180, 0
      %v3485 = vsel %vm2336, %v3181, 0
      %3487 = vmatpush.bf16.msra.mxu0 0
      %3488 = vmatpush.bf16.msra.mxu0 0
      %3489 = vmatpush.bf16.msra.mxu0 0
      %3490 = vmatpush.bf16.msra.mxu0 0
      %3491 = vmatpush.bf16.msra.mxu0 0
      %3492 = vmatpush.bf16.msra.mxu0 0
      %3493 = vmatpush.bf16.msra.mxu0 0
      %3494 = vmatpush.bf16.msra.mxu0 %v3485
      %3495 = vmatmul.bf16.gmra.mxu0 %v3437
      %v3496 = vpop.f32.mrf.mxu0
      %v3497 = vadd.f32 %v3357, %v3496
      %v3498 = vpop.f32.mrf.mxu0
      %v3499 = vadd.f32 %v3359, %v3498
      %3500 = vmatmul.bf16.gmra.mxu0 %v3440
      %v3501 = vpop.f32.mrf.mxu0
      %v3502 = vadd.f32 %v3362, %v3501
      %v3503 = vpop.f32.mrf.mxu0
      %v3504 = vadd.f32 %v3364, %v3503
      %3505 = vmatmul.bf16.gmra.mxu0 %v3443
      %v3506 = vpop.f32.mrf.mxu0
      %v3507 = vadd.f32 %v3367, %v3506
      %v3508 = vpop.f32.mrf.mxu0
      %v3509 = vadd.f32 %v3369, %v3508
      %3510 = vmatmul.bf16.gmra.mxu0 %v3446
      %v3511 = vpop.f32.mrf.mxu0
      %v3512 = vadd.f32 %v3372, %v3511
      %v3513 = vpop.f32.mrf.mxu0
      %v3514 = vadd.f32 %v3374, %v3513
      %3515 = vmatmul.bf16.gmra.mxu0 %v3449
      %v3516 = vpop.f32.mrf.mxu0
      %v3517 = vadd.f32 %v3377, %v3516
      %v3518 = vpop.f32.mrf.mxu0
      %v3519 = vadd.f32 %v3379, %v3518
      %3520 = vmatmul.bf16.gmra.mxu0 %v3452
      %v3521 = vpop.f32.mrf.mxu0
      %v3522 = vadd.f32 %v3382, %v3521
      %v3523 = vpop.f32.mrf.mxu0
      %v3524 = vadd.f32 %v3384, %v3523
      %3525 = vmatmul.bf16.gmra.mxu0 %v3455
      %v3526 = vpop.f32.mrf.mxu0
      %v3527 = vadd.f32 %v3387, %v3526
      %v3528 = vpop.f32.mrf.mxu0
      %v3529 = vadd.f32 %v3389, %v3528
      %3530 = vmatmul.bf16.gmra.mxu0 %v3458
      %v3531 = vpop.f32.mrf.mxu0
      %v3532 = vadd.f32 %v3392, %v3531
      %v3533 = vpop.f32.mrf.mxu0
      %v3534 = vadd.f32 %v3394, %v3533
      %3535 = vmatmul.bf16.gmra.mxu0 %v3461
      %v3536 = vpop.f32.mrf.mxu0
      %v3537 = vadd.f32 %v3397, %v3536
      %v3538 = vpop.f32.mrf.mxu0
      %v3539 = vadd.f32 %v3399, %v3538
      %3540 = vmatmul.bf16.gmra.mxu0 %v3464
      %v3541 = vpop.f32.mrf.mxu0
      %v3542 = vadd.f32 %v3402, %v3541
      %v3543 = vpop.f32.mrf.mxu0
      %v3544 = vadd.f32 %v3404, %v3543
      %3545 = vmatmul.bf16.gmra.mxu0 %v3467
      %v3546 = vpop.f32.mrf.mxu0
      %v3547 = vadd.f32 %v3407, %v3546
      %v3548 = vpop.f32.mrf.mxu0
      %v3549 = vadd.f32 %v3409, %v3548
      %3550 = vmatmul.bf16.gmra.mxu0 %v3470
      %v3551 = vpop.f32.mrf.mxu0
      %v3552 = vadd.f32 %v3412, %v3551
      %v3553 = vpop.f32.mrf.mxu0
      %v3554 = vadd.f32 %v3414, %v3553
      %3555 = vmatmul.bf16.gmra.mxu0 %v3473
      %v3556 = vpop.f32.mrf.mxu0
      %v3557 = vadd.f32 %v3417, %v3556
      %v3558 = vpop.f32.mrf.mxu0
      %v3559 = vadd.f32 %v3419, %v3558
      %3560 = vmatmul.bf16.gmra.mxu0 %v3476
      %v3561 = vpop.f32.mrf.mxu0
      %v3562 = vadd.f32 %v3422, %v3561
      %v3563 = vpop.f32.mrf.mxu0
      %v3564 = vadd.f32 %v3424, %v3563
      %3565 = vmatmul.bf16.gmra.mxu0 %v3479
      %v3566 = vpop.f32.mrf.mxu0
      %v3567 = vadd.f32 %v3427, %v3566
      %v3568 = vpop.f32.mrf.mxu0
      %v3569 = vadd.f32 %v3429, %v3568
      %3570 = vmatmul.bf16.gmra.mxu0 %v3482
      %v3571 = vpop.f32.mrf.mxu0
      %v3572 = vadd.f32 %v3432, %v3571
      %v3573 = vpop.f32.mrf.mxu0
      %v3574 = vadd.f32 %v3434, %v3573
      %3575 = vdwg.mxu0
      %v3576 = vld [vmem:[%s7] sm:$0x1]
      %v3578 = vperm.slane %v3576, 0
      %v3580 = vadd.f32 %v3497, %v3578
      %v3581 = vadd.f32 %v3499, %v3578
      %v3582 = vadd.f32 %v3502, %v3578
      %v3583 = vadd.f32 %v3504, %v3578
      %v3584 = vadd.f32 %v3507, %v3578
      %v3585 = vadd.f32 %v3509, %v3578
      %v3586 = vadd.f32 %v3512, %v3578
      %v3587 = vadd.f32 %v3514, %v3578
      %v3588 = vadd.f32 %v3517, %v3578
      %v3589 = vadd.f32 %v3519, %v3578
      %v3590 = vadd.f32 %v3522, %v3578
      %v3591 = vadd.f32 %v3524, %v3578
      %v3592 = vadd.f32 %v3527, %v3578
      %v3593 = vadd.f32 %v3529, %v3578
      %v3594 = vadd.f32 %v3532, %v3578
      %v3595 = vadd.f32 %v3534, %v3578
      %v3596 = vadd.f32 %v3537, %v3578
      %v3597 = vadd.f32 %v3539, %v3578
      %v3598 = vadd.f32 %v3542, %v3578
      %v3599 = vadd.f32 %v3544, %v3578
      %v3600 = vadd.f32 %v3547, %v3578
      %v3601 = vadd.f32 %v3549, %v3578
      %v3602 = vadd.f32 %v3552, %v3578
      %v3603 = vadd.f32 %v3554, %v3578
      %v3604 = vadd.f32 %v3557, %v3578
      %v3605 = vadd.f32 %v3559, %v3578
      %v3606 = vadd.f32 %v3562, %v3578
      %v3607 = vadd.f32 %v3564, %v3578
      %v3608 = vadd.f32 %v3567, %v3578
      %v3609 = vadd.f32 %v3569, %v3578
      %v3610 = vadd.f32 %v3572, %v3578
      %v3611 = vadd.f32 %v3574, %v3578
      %v3612 = vxor.u32 %v3580, 2147483648
      %v3613 = vxor.u32 %v3581, 2147483648
      %v3614 = vxor.u32 %v3582, 2147483648
      %v3615 = vxor.u32 %v3583, 2147483648
      %v3616 = vxor.u32 %v3584, 2147483648
      %v3617 = vxor.u32 %v3585, 2147483648
      %v3618 = vxor.u32 %v3586, 2147483648
      %v3619 = vxor.u32 %v3587, 2147483648
      %v3620 = vxor.u32 %v3588, 2147483648
      %v3621 = vxor.u32 %v3589, 2147483648
      %v3622 = vxor.u32 %v3590, 2147483648
      %v3623 = vxor.u32 %v3591, 2147483648
      %v3624 = vxor.u32 %v3592, 2147483648
      %v3625 = vxor.u32 %v3593, 2147483648
      %v3626 = vxor.u32 %v3594, 2147483648
      %v3627 = vxor.u32 %v3595, 2147483648
      %v3628 = vxor.u32 %v3596, 2147483648
      %v3629 = vxor.u32 %v3597, 2147483648
      %v3630 = vxor.u32 %v3598, 2147483648
      %v3631 = vxor.u32 %v3599, 2147483648
      %v3632 = vxor.u32 %v3600, 2147483648
      %v3633 = vxor.u32 %v3601, 2147483648
      %v3634 = vxor.u32 %v3602, 2147483648
      %v3635 = vxor.u32 %v3603, 2147483648
      %v3636 = vxor.u32 %v3604, 2147483648
      %v3637 = vxor.u32 %v3605, 2147483648
      %v3638 = vxor.u32 %v3606, 2147483648
      %v3639 = vxor.u32 %v3607, 2147483648
      %v3640 = vxor.u32 %v3608, 2147483648
      %v3641 = vxor.u32 %v3609, 2147483648
      %v3642 = vxor.u32 %v3610, 2147483648
      %v3643 = vxor.u32 %v3611, 2147483648
      %v3644 = vmul.f32 %v3612, 1.442695
      %v3645 = vpow.pop %v3644
      %v3646 = vmul.f32 %v3613, 1.442695
      %v3647 = vpow.pop %v3646
      %v3648 = vmul.f32 %v3614, 1.442695
      %v3649 = vpow.pop %v3648
      %v3650 = vmul.f32 %v3615, 1.442695
      %v3651 = vpow.pop %v3650
      %v3652 = vmul.f32 %v3616, 1.442695
      %v3653 = vpow.pop %v3652
      %v3654 = vmul.f32 %v3617, 1.442695
      %v3655 = vpow.pop %v3654
      %v3656 = vmul.f32 %v3618, 1.442695
      %v3657 = vpow.pop %v3656
      %v3658 = vmul.f32 %v3619, 1.442695
      %v3659 = vpow.pop %v3658
      %v3660 = vmul.f32 %v3620, 1.442695
      %v3661 = vpow.pop %v3660
      %v3662 = vmul.f32 %v3621, 1.442695
      %v3663 = vpow.pop %v3662
      %v3664 = vmul.f32 %v3622, 1.442695
      %v3665 = vpow.pop %v3664
      %v3666 = vmul.f32 %v3623, 1.442695
      %v3667 = vpow.pop %v3666
      %v3668 = vmul.f32 %v3624, 1.442695
      %v3669 = vpow.pop %v3668
      %v3670 = vmul.f32 %v3625, 1.442695
      %v3671 = vpow.pop %v3670
      %v3672 = vmul.f32 %v3626, 1.442695
      %v3673 = vpow.pop %v3672
      %v3674 = vmul.f32 %v3627, 1.442695
      %v3675 = vpow.pop %v3674
      %v3676 = vmul.f32 %v3628, 1.442695
      %v3677 = vpow.pop %v3676
      %v3678 = vmul.f32 %v3629, 1.442695
      %v3679 = vpow.pop %v3678
      %v3680 = vmul.f32 %v3630, 1.442695
      %v3681 = vpow.pop %v3680
      %v3682 = vmul.f32 %v3631, 1.442695
      %v3683 = vpow.pop %v3682
      %v3684 = vmul.f32 %v3632, 1.442695
      %v3685 = vpow.pop %v3684
      %v3686 = vmul.f32 %v3633, 1.442695
      %v3687 = vpow.pop %v3686
      %v3688 = vmul.f32 %v3634, 1.442695
      %v3689 = vpow.pop %v3688
      %v3690 = vmul.f32 %v3635, 1.442695
      %v3691 = vpow.pop %v3690
      %v3692 = vmul.f32 %v3636, 1.442695
      %v3693 = vpow.pop %v3692
      %v3694 = vmul.f32 %v3637, 1.442695
      %v3695 = vpow.pop %v3694
      %v3696 = vmul.f32 %v3638, 1.442695
      %v3697 = vpow.pop %v3696
      %v3698 = vmul.f32 %v3639, 1.442695
      %v3699 = vpow.pop %v3698
      %v3700 = vmul.f32 %v3640, 1.442695
      %v3701 = vpow.pop %v3700
      %v3702 = vmul.f32 %v3641, 1.442695
      %v3703 = vpow.pop %v3702
      %v3704 = vmul.f32 %v3642, 1.442695
      %v3705 = vpow.pop %v3704
      %v3706 = vmul.f32 %v3643, 1.442695
      %v3707 = vpow.pop %v3706
      %v3708 = vadd.f32 %v3645, 1.0
      %v3709 = vadd.f32 %v3647, 1.0
      %v3710 = vadd.f32 %v3649, 1.0
      %v3711 = vadd.f32 %v3651, 1.0
      %v3712 = vadd.f32 %v3653, 1.0
      %v3713 = vadd.f32 %v3655, 1.0
      %v3714 = vadd.f32 %v3657, 1.0
      %v3715 = vadd.f32 %v3659, 1.0
      %v3716 = vadd.f32 %v3661, 1.0
      %v3717 = vadd.f32 %v3663, 1.0
      %v3718 = vadd.f32 %v3665, 1.0
      %v3719 = vadd.f32 %v3667, 1.0
      %v3720 = vadd.f32 %v3669, 1.0
      %v3721 = vadd.f32 %v3671, 1.0
      %v3722 = vadd.f32 %v3673, 1.0
      %v3723 = vadd.f32 %v3675, 1.0
      %v3724 = vadd.f32 %v3677, 1.0
      %v3725 = vadd.f32 %v3679, 1.0
      %v3726 = vadd.f32 %v3681, 1.0
      %v3727 = vadd.f32 %v3683, 1.0
      %v3728 = vadd.f32 %v3685, 1.0
      %v3729 = vadd.f32 %v3687, 1.0
      %v3730 = vadd.f32 %v3689, 1.0
      %v3731 = vadd.f32 %v3691, 1.0
      %v3732 = vadd.f32 %v3693, 1.0
      %v3733 = vadd.f32 %v3695, 1.0
      %v3734 = vadd.f32 %v3697, 1.0
      %v3735 = vadd.f32 %v3699, 1.0
      %v3736 = vadd.f32 %v3701, 1.0
      %v3737 = vadd.f32 %v3703, 1.0
      %v3738 = vadd.f32 %v3705, 1.0
      %v3739 = vadd.f32 %v3707, 1.0
      %v3740 = vrcp.pop %v3708
      %v3741 = vmul.f32 %v3708, %v3740
      %v3742 = vsub.f32 1.0, %v3741
      %v3743 = vmul.f32 %v3740, %v3742
      %v3744 = vadd.f32 %v3740, %v3743
      %vm3745 = vweird.f32 %v3708
      %vm3746 = vweird.f32 %v3740
      %vm3747 = vmor %vm3745, %vm3746
      %v3748 = vsel %vm3747, %v3740, %v3744
      %v3749 = vand.u32 2147483647, %v3708
      %vm3750 = vcmp.eq.f32.partialorder %v3749, 8.507059e+37
      %v3751 = vand.u32 %v3708, 2147483648
      %v3752 = vor.u32 1.1754944e-38, %v3751
      %v3753 = vsel %vm3750, %v3752, %v3748
      %v3754 = vmul.f32 1.0, %v3753
      %v3755 = vrcp.pop %v3709
      %v3756 = vmul.f32 %v3709, %v3755
      %v3757 = vsub.f32 1.0, %v3756
      %v3758 = vmul.f32 %v3755, %v3757
      %v3759 = vadd.f32 %v3755, %v3758
      %vm3760 = vweird.f32 %v3709
      %vm3761 = vweird.f32 %v3755
      %vm3762 = vmor %vm3760, %vm3761
      %v3763 = vsel %vm3762, %v3755, %v3759
      %v3764 = vand.u32 2147483647, %v3709
      %vm3765 = vcmp.eq.f32.partialorder %v3764, 8.507059e+37
      %v3766 = vand.u32 %v3709, 2147483648
      %v3767 = vor.u32 1.1754944e-38, %v3766
      %v3768 = vsel %vm3765, %v3767, %v3763
      %v3769 = vmul.f32 1.0, %v3768
      %v3770 = vrcp.pop %v3710
      %v3771 = vmul.f32 %v3710, %v3770
      %v3772 = vsub.f32 1.0, %v3771
      %v3773 = vmul.f32 %v3770, %v3772
      %v3774 = vadd.f32 %v3770, %v3773
      %vm3775 = vweird.f32 %v3710
      %vm3776 = vweird.f32 %v3770
      %vm3777 = vmor %vm3775, %vm3776
      %v3778 = vsel %vm3777, %v3770, %v3774
      %v3779 = vand.u32 2147483647, %v3710
      %vm3780 = vcmp.eq.f32.partialorder %v3779, 8.507059e+37
      %v3781 = vand.u32 %v3710, 2147483648
      %v3782 = vor.u32 1.1754944e-38, %v3781
      %v3783 = vsel %vm3780, %v3782, %v3778
      %v3784 = vmul.f32 1.0, %v3783
      %v3785 = vrcp.pop %v3711
      %v3786 = vmul.f32 %v3711, %v3785
      %v3787 = vsub.f32 1.0, %v3786
      %v3788 = vmul.f32 %v3785, %v3787
      %v3789 = vadd.f32 %v3785, %v3788
      %vm3790 = vweird.f32 %v3711
      %vm3791 = vweird.f32 %v3785
      %vm3792 = vmor %vm3790, %vm3791
      %v3793 = vsel %vm3792, %v3785, %v3789
      %v3794 = vand.u32 2147483647, %v3711
      %vm3795 = vcmp.eq.f32.partialorder %v3794, 8.507059e+37
      %v3796 = vand.u32 %v3711, 2147483648
      %v3797 = vor.u32 1.1754944e-38, %v3796
      %v3798 = vsel %vm3795, %v3797, %v3793
      %v3799 = vmul.f32 1.0, %v3798
      %v3800 = vrcp.pop %v3712
      %v3801 = vmul.f32 %v3712, %v3800
      %v3802 = vsub.f32 1.0, %v3801
      %v3803 = vmul.f32 %v3800, %v3802
      %v3804 = vadd.f32 %v3800, %v3803
      %vm3805 = vweird.f32 %v3712
      %vm3806 = vweird.f32 %v3800
      %vm3807 = vmor %vm3805, %vm3806
      %v3808 = vsel %vm3807, %v3800, %v3804
      %v3809 = vand.u32 2147483647, %v3712
      %vm3810 = vcmp.eq.f32.partialorder %v3809, 8.507059e+37
      %v3811 = vand.u32 %v3712, 2147483648
      %v3812 = vor.u32 1.1754944e-38, %v3811
      %v3813 = vsel %vm3810, %v3812, %v3808
      %v3814 = vmul.f32 1.0, %v3813
      %v3815 = vrcp.pop %v3713
      %v3816 = vmul.f32 %v3713, %v3815
      %v3817 = vsub.f32 1.0, %v3816
      %v3818 = vmul.f32 %v3815, %v3817
      %v3819 = vadd.f32 %v3815, %v3818
      %vm3820 = vweird.f32 %v3713
      %vm3821 = vweird.f32 %v3815
      %vm3822 = vmor %vm3820, %vm3821
      %v3823 = vsel %vm3822, %v3815, %v3819
      %v3824 = vand.u32 2147483647, %v3713
      %vm3825 = vcmp.eq.f32.partialorder %v3824, 8.507059e+37
      %v3826 = vand.u32 %v3713, 2147483648
      %v3827 = vor.u32 1.1754944e-38, %v3826
      %v3828 = vsel %vm3825, %v3827, %v3823
      %v3829 = vmul.f32 1.0, %v3828
      %v3830 = vrcp.pop %v3714
      %v3831 = vmul.f32 %v3714, %v3830
      %v3832 = vsub.f32 1.0, %v3831
      %v3833 = vmul.f32 %v3830, %v3832
      %v3834 = vadd.f32 %v3830, %v3833
      %vm3835 = vweird.f32 %v3714
      %vm3836 = vweird.f32 %v3830
      %vm3837 = vmor %vm3835, %vm3836
      %v3838 = vsel %vm3837, %v3830, %v3834
      %v3839 = vand.u32 2147483647, %v3714
      %vm3840 = vcmp.eq.f32.partialorder %v3839, 8.507059e+37
      %v3841 = vand.u32 %v3714, 2147483648
      %v3842 = vor.u32 1.1754944e-38, %v3841
      %v3843 = vsel %vm3840, %v3842, %v3838
      %v3844 = vmul.f32 1.0, %v3843
      %v3845 = vrcp.pop %v3715
      %v3846 = vmul.f32 %v3715, %v3845
      %v3847 = vsub.f32 1.0, %v3846
      %v3848 = vmul.f32 %v3845, %v3847
      %v3849 = vadd.f32 %v3845, %v3848
      %vm3850 = vweird.f32 %v3715
      %vm3851 = vweird.f32 %v3845
      %vm3852 = vmor %vm3850, %vm3851
      %v3853 = vsel %vm3852, %v3845, %v3849
      %v3854 = vand.u32 2147483647, %v3715
      %vm3855 = vcmp.eq.f32.partialorder %v3854, 8.507059e+37
      %v3856 = vand.u32 %v3715, 2147483648
      %v3857 = vor.u32 1.1754944e-38, %v3856
      %v3858 = vsel %vm3855, %v3857, %v3853
      %v3859 = vmul.f32 1.0, %v3858
      %v3860 = vrcp.pop %v3716
      %v3861 = vmul.f32 %v3716, %v3860
      %v3862 = vsub.f32 1.0, %v3861
      %v3863 = vmul.f32 %v3860, %v3862
      %v3864 = vadd.f32 %v3860, %v3863
      %vm3865 = vweird.f32 %v3716
      %vm3866 = vweird.f32 %v3860
      %vm3867 = vmor %vm3865, %vm3866
      %v3868 = vsel %vm3867, %v3860, %v3864
      %v3869 = vand.u32 2147483647, %v3716
      %vm3870 = vcmp.eq.f32.partialorder %v3869, 8.507059e+37
      %v3871 = vand.u32 %v3716, 2147483648
      %v3872 = vor.u32 1.1754944e-38, %v3871
      %v3873 = vsel %vm3870, %v3872, %v3868
      %v3874 = vmul.f32 1.0, %v3873
      %v3875 = vrcp.pop %v3717
      %v3876 = vmul.f32 %v3717, %v3875
      %v3877 = vsub.f32 1.0, %v3876
      %v3878 = vmul.f32 %v3875, %v3877
      %v3879 = vadd.f32 %v3875, %v3878
      %vm3880 = vweird.f32 %v3717
      %vm3881 = vweird.f32 %v3875
      %vm3882 = vmor %vm3880, %vm3881
      %v3883 = vsel %vm3882, %v3875, %v3879
      %v3884 = vand.u32 2147483647, %v3717
      %vm3885 = vcmp.eq.f32.partialorder %v3884, 8.507059e+37
      %v3886 = vand.u32 %v3717, 2147483648
      %v3887 = vor.u32 1.1754944e-38, %v3886
      %v3888 = vsel %vm3885, %v3887, %v3883
      %v3889 = vmul.f32 1.0, %v3888
      %v3890 = vrcp.pop %v3718
      %v3891 = vmul.f32 %v3718, %v3890
      %v3892 = vsub.f32 1.0, %v3891
      %v3893 = vmul.f32 %v3890, %v3892
      %v3894 = vadd.f32 %v3890, %v3893
      %vm3895 = vweird.f32 %v3718
      %vm3896 = vweird.f32 %v3890
      %vm3897 = vmor %vm3895, %vm3896
      %v3898 = vsel %vm3897, %v3890, %v3894
      %v3899 = vand.u32 2147483647, %v3718
      %vm3900 = vcmp.eq.f32.partialorder %v3899, 8.507059e+37
      %v3901 = vand.u32 %v3718, 2147483648
      %v3902 = vor.u32 1.1754944e-38, %v3901
      %v3903 = vsel %vm3900, %v3902, %v3898
      %v3904 = vmul.f32 1.0, %v3903
      %v3905 = vrcp.pop %v3719
      %v3906 = vmul.f32 %v3719, %v3905
      %v3907 = vsub.f32 1.0, %v3906
      %v3908 = vmul.f32 %v3905, %v3907
      %v3909 = vadd.f32 %v3905, %v3908
      %vm3910 = vweird.f32 %v3719
      %vm3911 = vweird.f32 %v3905
      %vm3912 = vmor %vm3910, %vm3911
      %v3913 = vsel %vm3912, %v3905, %v3909
      %v3914 = vand.u32 2147483647, %v3719
      %vm3915 = vcmp.eq.f32.partialorder %v3914, 8.507059e+37
      %v3916 = vand.u32 %v3719, 2147483648
      %v3917 = vor.u32 1.1754944e-38, %v3916
      %v3918 = vsel %vm3915, %v3917, %v3913
      %v3919 = vmul.f32 1.0, %v3918
      %v3920 = vrcp.pop %v3720
      %v3921 = vmul.f32 %v3720, %v3920
      %v3922 = vsub.f32 1.0, %v3921
      %v3923 = vmul.f32 %v3920, %v3922
      %v3924 = vadd.f32 %v3920, %v3923
      %vm3925 = vweird.f32 %v3720
      %vm3926 = vweird.f32 %v3920
      %vm3927 = vmor %vm3925, %vm3926
      %v3928 = vsel %vm3927, %v3920, %v3924
      %v3929 = vand.u32 2147483647, %v3720
      %vm3930 = vcmp.eq.f32.partialorder %v3929, 8.507059e+37
      %v3931 = vand.u32 %v3720, 2147483648
      %v3932 = vor.u32 1.1754944e-38, %v3931
      %v3933 = vsel %vm3930, %v3932, %v3928
      %v3934 = vmul.f32 1.0, %v3933
      %v3935 = vrcp.pop %v3721
      %v3936 = vmul.f32 %v3721, %v3935
      %v3937 = vsub.f32 1.0, %v3936
      %v3938 = vmul.f32 %v3935, %v3937
      %v3939 = vadd.f32 %v3935, %v3938
      %vm3940 = vweird.f32 %v3721
      %vm3941 = vweird.f32 %v3935
      %vm3942 = vmor %vm3940, %vm3941
      %v3943 = vsel %vm3942, %v3935, %v3939
      %v3944 = vand.u32 2147483647, %v3721
      %vm3945 = vcmp.eq.f32.partialorder %v3944, 8.507059e+37
      %v3946 = vand.u32 %v3721, 2147483648
      %v3947 = vor.u32 1.1754944e-38, %v3946
      %v3948 = vsel %vm3945, %v3947, %v3943
      %v3949 = vmul.f32 1.0, %v3948
      %v3950 = vrcp.pop %v3722
      %v3951 = vmul.f32 %v3722, %v3950
      %v3952 = vsub.f32 1.0, %v3951
      %v3953 = vmul.f32 %v3950, %v3952
      %v3954 = vadd.f32 %v3950, %v3953
      %vm3955 = vweird.f32 %v3722
      %vm3956 = vweird.f32 %v3950
      %vm3957 = vmor %vm3955, %vm3956
      %v3958 = vsel %vm3957, %v3950, %v3954
      %v3959 = vand.u32 2147483647, %v3722
      %vm3960 = vcmp.eq.f32.partialorder %v3959, 8.507059e+37
      %v3961 = vand.u32 %v3722, 2147483648
      %v3962 = vor.u32 1.1754944e-38, %v3961
      %v3963 = vsel %vm3960, %v3962, %v3958
      %v3964 = vmul.f32 1.0, %v3963
      %v3965 = vrcp.pop %v3723
      %v3966 = vmul.f32 %v3723, %v3965
      %v3967 = vsub.f32 1.0, %v3966
      %v3968 = vmul.f32 %v3965, %v3967
      %v3969 = vadd.f32 %v3965, %v3968
      %vm3970 = vweird.f32 %v3723
      %vm3971 = vweird.f32 %v3965
      %vm3972 = vmor %vm3970, %vm3971
      %v3973 = vsel %vm3972, %v3965, %v3969
      %v3974 = vand.u32 2147483647, %v3723
      %vm3975 = vcmp.eq.f32.partialorder %v3974, 8.507059e+37
      %v3976 = vand.u32 %v3723, 2147483648
      %v3977 = vor.u32 1.1754944e-38, %v3976
      %v3978 = vsel %vm3975, %v3977, %v3973
      %v3979 = vmul.f32 1.0, %v3978
      %v3980 = vrcp.pop %v3724
      %v3981 = vmul.f32 %v3724, %v3980
      %v3982 = vsub.f32 1.0, %v3981
      %v3983 = vmul.f32 %v3980, %v3982
      %v3984 = vadd.f32 %v3980, %v3983
      %vm3985 = vweird.f32 %v3724
      %vm3986 = vweird.f32 %v3980
      %vm3987 = vmor %vm3985, %vm3986
      %v3988 = vsel %vm3987, %v3980, %v3984
      %v3989 = vand.u32 2147483647, %v3724
      %vm3990 = vcmp.eq.f32.partialorder %v3989, 8.507059e+37
      %v3991 = vand.u32 %v3724, 2147483648
      %v3992 = vor.u32 1.1754944e-38, %v3991
      %v3993 = vsel %vm3990, %v3992, %v3988
      %v3994 = vmul.f32 1.0, %v3993
      %v3995 = vrcp.pop %v3725
      %v3996 = vmul.f32 %v3725, %v3995
      %v3997 = vsub.f32 1.0, %v3996
      %v3998 = vmul.f32 %v3995, %v3997
      %v3999 = vadd.f32 %v3995, %v3998
      %vm4000 = vweird.f32 %v3725
      %vm4001 = vweird.f32 %v3995
      %vm4002 = vmor %vm4000, %vm4001
      %v4003 = vsel %vm4002, %v3995, %v3999
      %v4004 = vand.u32 2147483647, %v3725
      %vm4005 = vcmp.eq.f32.partialorder %v4004, 8.507059e+37
      %v4006 = vand.u32 %v3725, 2147483648
      %v4007 = vor.u32 1.1754944e-38, %v4006
      %v4008 = vsel %vm4005, %v4007, %v4003
      %v4009 = vmul.f32 1.0, %v4008
      %v4010 = vrcp.pop %v3726
      %v4011 = vmul.f32 %v3726, %v4010
      %v4012 = vsub.f32 1.0, %v4011
      %v4013 = vmul.f32 %v4010, %v4012
      %v4014 = vadd.f32 %v4010, %v4013
      %vm4015 = vweird.f32 %v3726
      %vm4016 = vweird.f32 %v4010
      %vm4017 = vmor %vm4015, %vm4016
      %v4018 = vsel %vm4017, %v4010, %v4014
      %v4019 = vand.u32 2147483647, %v3726
      %vm4020 = vcmp.eq.f32.partialorder %v4019, 8.507059e+37
      %v4021 = vand.u32 %v3726, 2147483648
      %v4022 = vor.u32 1.1754944e-38, %v4021
      %v4023 = vsel %vm4020, %v4022, %v4018
      %v4024 = vmul.f32 1.0, %v4023
      %v4025 = vrcp.pop %v3727
      %v4026 = vmul.f32 %v3727, %v4025
      %v4027 = vsub.f32 1.0, %v4026
      %v4028 = vmul.f32 %v4025, %v4027
      %v4029 = vadd.f32 %v4025, %v4028
      %vm4030 = vweird.f32 %v3727
      %vm4031 = vweird.f32 %v4025
      %vm4032 = vmor %vm4030, %vm4031
      %v4033 = vsel %vm4032, %v4025, %v4029
      %v4034 = vand.u32 2147483647, %v3727
      %vm4035 = vcmp.eq.f32.partialorder %v4034, 8.507059e+37
      %v4036 = vand.u32 %v3727, 2147483648
      %v4037 = vor.u32 1.1754944e-38, %v4036
      %v4038 = vsel %vm4035, %v4037, %v4033
      %v4039 = vmul.f32 1.0, %v4038
      %v4040 = vrcp.pop %v3728
      %v4041 = vmul.f32 %v3728, %v4040
      %v4042 = vsub.f32 1.0, %v4041
      %v4043 = vmul.f32 %v4040, %v4042
      %v4044 = vadd.f32 %v4040, %v4043
      %vm4045 = vweird.f32 %v3728
      %vm4046 = vweird.f32 %v4040
      %vm4047 = vmor %vm4045, %vm4046
      %v4048 = vsel %vm4047, %v4040, %v4044
      %v4049 = vand.u32 2147483647, %v3728
      %vm4050 = vcmp.eq.f32.partialorder %v4049, 8.507059e+37
      %v4051 = vand.u32 %v3728, 2147483648
      %v4052 = vor.u32 1.1754944e-38, %v4051
      %v4053 = vsel %vm4050, %v4052, %v4048
      %v4054 = vmul.f32 1.0, %v4053
      %v4055 = vrcp.pop %v3729
      %v4056 = vmul.f32 %v3729, %v4055
      %v4057 = vsub.f32 1.0, %v4056
      %v4058 = vmul.f32 %v4055, %v4057
      %v4059 = vadd.f32 %v4055, %v4058
      %vm4060 = vweird.f32 %v3729
      %vm4061 = vweird.f32 %v4055
      %vm4062 = vmor %vm4060, %vm4061
      %v4063 = vsel %vm4062, %v4055, %v4059
      %v4064 = vand.u32 2147483647, %v3729
      %vm4065 = vcmp.eq.f32.partialorder %v4064, 8.507059e+37
      %v4066 = vand.u32 %v3729, 2147483648
      %v4067 = vor.u32 1.1754944e-38, %v4066
      %v4068 = vsel %vm4065, %v4067, %v4063
      %v4069 = vmul.f32 1.0, %v4068
      %v4070 = vrcp.pop %v3730
      %v4071 = vmul.f32 %v3730, %v4070
      %v4072 = vsub.f32 1.0, %v4071
      %v4073 = vmul.f32 %v4070, %v4072
      %v4074 = vadd.f32 %v4070, %v4073
      %vm4075 = vweird.f32 %v3730
      %vm4076 = vweird.f32 %v4070
      %vm4077 = vmor %vm4075, %vm4076
      %v4078 = vsel %vm4077, %v4070, %v4074
      %v4079 = vand.u32 2147483647, %v3730
      %vm4080 = vcmp.eq.f32.partialorder %v4079, 8.507059e+37
      %v4081 = vand.u32 %v3730, 2147483648
      %v4082 = vor.u32 1.1754944e-38, %v4081
      %v4083 = vsel %vm4080, %v4082, %v4078
      %v4084 = vmul.f32 1.0, %v4083
      %v4085 = vrcp.pop %v3731
      %v4086 = vmul.f32 %v3731, %v4085
      %v4087 = vsub.f32 1.0, %v4086
      %v4088 = vmul.f32 %v4085, %v4087
      %v4089 = vadd.f32 %v4085, %v4088
      %vm4090 = vweird.f32 %v3731
      %vm4091 = vweird.f32 %v4085
      %vm4092 = vmor %vm4090, %vm4091
      %v4093 = vsel %vm4092, %v4085, %v4089
      %v4094 = vand.u32 2147483647, %v3731
      %vm4095 = vcmp.eq.f32.partialorder %v4094, 8.507059e+37
      %v4096 = vand.u32 %v3731, 2147483648
      %v4097 = vor.u32 1.1754944e-38, %v4096
      %v4098 = vsel %vm4095, %v4097, %v4093
      %v4099 = vmul.f32 1.0, %v4098
      %v4100 = vrcp.pop %v3732
      %v4101 = vmul.f32 %v3732, %v4100
      %v4102 = vsub.f32 1.0, %v4101
      %v4103 = vmul.f32 %v4100, %v4102
      %v4104 = vadd.f32 %v4100, %v4103
      %vm4105 = vweird.f32 %v3732
      %vm4106 = vweird.f32 %v4100
      %vm4107 = vmor %vm4105, %vm4106
      %v4108 = vsel %vm4107, %v4100, %v4104
      %v4109 = vand.u32 2147483647, %v3732
      %vm4110 = vcmp.eq.f32.partialorder %v4109, 8.507059e+37
      %v4111 = vand.u32 %v3732, 2147483648
      %v4112 = vor.u32 1.1754944e-38, %v4111
      %v4113 = vsel %vm4110, %v4112, %v4108
      %v4114 = vmul.f32 1.0, %v4113
      %v4115 = vrcp.pop %v3733
      %v4116 = vmul.f32 %v3733, %v4115
      %v4117 = vsub.f32 1.0, %v4116
      %v4118 = vmul.f32 %v4115, %v4117
      %v4119 = vadd.f32 %v4115, %v4118
      %vm4120 = vweird.f32 %v3733
      %vm4121 = vweird.f32 %v4115
      %vm4122 = vmor %vm4120, %vm4121
      %v4123 = vsel %vm4122, %v4115, %v4119
      %v4124 = vand.u32 2147483647, %v3733
      %vm4125 = vcmp.eq.f32.partialorder %v4124, 8.507059e+37
      %v4126 = vand.u32 %v3733, 2147483648
      %v4127 = vor.u32 1.1754944e-38, %v4126
      %v4128 = vsel %vm4125, %v4127, %v4123
      %v4129 = vmul.f32 1.0, %v4128
      %v4130 = vrcp.pop %v3734
      %v4131 = vmul.f32 %v3734, %v4130
      %v4132 = vsub.f32 1.0, %v4131
      %v4133 = vmul.f32 %v4130, %v4132
      %v4134 = vadd.f32 %v4130, %v4133
      %vm4135 = vweird.f32 %v3734
      %vm4136 = vweird.f32 %v4130
      %vm4137 = vmor %vm4135, %vm4136
      %v4138 = vsel %vm4137, %v4130, %v4134
      %v4139 = vand.u32 2147483647, %v3734
      %vm4140 = vcmp.eq.f32.partialorder %v4139, 8.507059e+37
      %v4141 = vand.u32 %v3734, 2147483648
      %v4142 = vor.u32 1.1754944e-38, %v4141
      %v4143 = vsel %vm4140, %v4142, %v4138
      %v4144 = vmul.f32 1.0, %v4143
      %v4145 = vrcp.pop %v3735
      %v4146 = vmul.f32 %v3735, %v4145
      %v4147 = vsub.f32 1.0, %v4146
      %v4148 = vmul.f32 %v4145, %v4147
      %v4149 = vadd.f32 %v4145, %v4148
      %vm4150 = vweird.f32 %v3735
      %vm4151 = vweird.f32 %v4145
      %vm4152 = vmor %vm4150, %vm4151
      %v4153 = vsel %vm4152, %v4145, %v4149
      %v4154 = vand.u32 2147483647, %v3735
      %vm4155 = vcmp.eq.f32.partialorder %v4154, 8.507059e+37
      %v4156 = vand.u32 %v3735, 2147483648
      %v4157 = vor.u32 1.1754944e-38, %v4156
      %v4158 = vsel %vm4155, %v4157, %v4153
      %v4159 = vmul.f32 1.0, %v4158
      %v4160 = vrcp.pop %v3736
      %v4161 = vmul.f32 %v3736, %v4160
      %v4162 = vsub.f32 1.0, %v4161
      %v4163 = vmul.f32 %v4160, %v4162
      %v4164 = vadd.f32 %v4160, %v4163
      %vm4165 = vweird.f32 %v3736
      %vm4166 = vweird.f32 %v4160
      %vm4167 = vmor %vm4165, %vm4166
      %v4168 = vsel %vm4167, %v4160, %v4164
      %v4169 = vand.u32 2147483647, %v3736
      %vm4170 = vcmp.eq.f32.partialorder %v4169, 8.507059e+37
      %v4171 = vand.u32 %v3736, 2147483648
      %v4172 = vor.u32 1.1754944e-38, %v4171
      %v4173 = vsel %vm4170, %v4172, %v4168
      %v4174 = vmul.f32 1.0, %v4173
      %v4175 = vrcp.pop %v3737
      %v4176 = vmul.f32 %v3737, %v4175
      %v4177 = vsub.f32 1.0, %v4176
      %v4178 = vmul.f32 %v4175, %v4177
      %v4179 = vadd.f32 %v4175, %v4178
      %vm4180 = vweird.f32 %v3737
      %vm4181 = vweird.f32 %v4175
      %vm4182 = vmor %vm4180, %vm4181
      %v4183 = vsel %vm4182, %v4175, %v4179
      %v4184 = vand.u32 2147483647, %v3737
      %vm4185 = vcmp.eq.f32.partialorder %v4184, 8.507059e+37
      %v4186 = vand.u32 %v3737, 2147483648
      %v4187 = vor.u32 1.1754944e-38, %v4186
      %v4188 = vsel %vm4185, %v4187, %v4183
      %v4189 = vmul.f32 1.0, %v4188
      %v4190 = vrcp.pop %v3738
      %v4191 = vmul.f32 %v3738, %v4190
      %v4192 = vsub.f32 1.0, %v4191
      %v4193 = vmul.f32 %v4190, %v4192
      %v4194 = vadd.f32 %v4190, %v4193
      %vm4195 = vweird.f32 %v3738
      %vm4196 = vweird.f32 %v4190
      %vm4197 = vmor %vm4195, %vm4196
      %v4198 = vsel %vm4197, %v4190, %v4194
      %v4199 = vand.u32 2147483647, %v3738
      %vm4200 = vcmp.eq.f32.partialorder %v4199, 8.507059e+37
      %v4201 = vand.u32 %v3738, 2147483648
      %v4202 = vor.u32 1.1754944e-38, %v4201
      %v4203 = vsel %vm4200, %v4202, %v4198
      %v4204 = vmul.f32 1.0, %v4203
      %v4205 = vrcp.pop %v3739
      %v4206 = vmul.f32 %v3739, %v4205
      %v4207 = vsub.f32 1.0, %v4206
      %v4208 = vmul.f32 %v4205, %v4207
      %v4209 = vadd.f32 %v4205, %v4208
      %vm4210 = vweird.f32 %v3739
      %vm4211 = vweird.f32 %v4205
      %vm4212 = vmor %vm4210, %vm4211
      %v4213 = vsel %vm4212, %v4205, %v4209
      %v4214 = vand.u32 2147483647, %v3739
      %vm4215 = vcmp.eq.f32.partialorder %v4214, 8.507059e+37
      %v4216 = vand.u32 %v3739, 2147483648
      %v4217 = vor.u32 1.1754944e-38, %v4216
      %v4218 = vsel %vm4215, %v4217, %v4213
      %v4219 = vmul.f32 1.0, %v4218
      %v4220 = vmul.f32 %v3580, %v3754
      %v4221 = vmul.f32 %v3581, %v3769
      %v4222 = vmul.f32 %v3582, %v3784
      %v4223 = vmul.f32 %v3583, %v3799
      %v4224 = vmul.f32 %v3584, %v3814
      %v4225 = vmul.f32 %v3585, %v3829
      %v4226 = vmul.f32 %v3586, %v3844
      %v4227 = vmul.f32 %v3587, %v3859
      %v4228 = vmul.f32 %v3588, %v3874
      %v4229 = vmul.f32 %v3589, %v3889
      %v4230 = vmul.f32 %v3590, %v3904
      %v4231 = vmul.f32 %v3591, %v3919
      %v4232 = vmul.f32 %v3592, %v3934
      %v4233 = vmul.f32 %v3593, %v3949
      %v4234 = vmul.f32 %v3594, %v3964
      %v4235 = vmul.f32 %v3595, %v3979
      %v4236 = vmul.f32 %v3596, %v3994
      %v4237 = vmul.f32 %v3597, %v4009
      %v4238 = vmul.f32 %v3598, %v4024
      %v4239 = vmul.f32 %v3599, %v4039
      %v4240 = vmul.f32 %v3600, %v4054
      %v4241 = vmul.f32 %v3601, %v4069
      %v4242 = vmul.f32 %v3602, %v4084
      %v4243 = vmul.f32 %v3603, %v4099
      %v4244 = vmul.f32 %v3604, %v4114
      %v4245 = vmul.f32 %v3605, %v4129
      %v4246 = vmul.f32 %v3606, %v4144
      %v4247 = vmul.f32 %v3607, %v4159
      %v4248 = vmul.f32 %v3608, %v4174
      %v4249 = vmul.f32 %v3609, %v4189
      %v4250 = vmul.f32 %v3610, %v4204
      %v4251 = vmul.f32 %v3611, %v4219
      %vm4252 = vcmask 64512
      %4253 = vst.msk [vmem:[%s407] sm:$0xff] %vm4252, %v4220
      %4254 = vst.msk [vmem:[%s407 + $0x8] sm:$0xff] %vm4252, %v4221
      %4255 = vst.msk [vmem:[%s407 + $0x10] sm:$0xff] %vm4252, %v4222
      %4256 = vst.msk [vmem:[%s407 + $0x18] sm:$0xff] %vm4252, %v4223
      %4257 = vst.msk [vmem:[%s407 + $0x20] sm:$0xff] %vm4252, %v4224
      %4258 = vst.msk [vmem:[%s407 + $0x28] sm:$0xff] %vm4252, %v4225
      %4259 = vst.msk [vmem:[%s407 + $0x30] sm:$0xff] %vm4252, %v4226
      %4260 = vst.msk [vmem:[%s407 + $0x38] sm:$0xff] %vm4252, %v4227
      %4261 = vst.msk [vmem:[%s407 + $0x40] sm:$0xff] %vm4252, %v4228
      %4262 = vst.msk [vmem:[%s407 + $0x48] sm:$0xff] %vm4252, %v4229
      %4263 = vst.msk [vmem:[%s407 + $0x50] sm:$0xff] %vm4252, %v4230
      %4264 = vst.msk [vmem:[%s407 + $0x58] sm:$0xff] %vm4252, %v4231
      %4265 = vst.msk [vmem:[%s407 + $0x60] sm:$0xff] %vm4252, %v4232
      %4266 = vst.msk [vmem:[%s407 + $0x68] sm:$0xff] %vm4252, %v4233
      %4267 = vst.msk [vmem:[%s407 + $0x70] sm:$0xff] %vm4252, %v4234
      %4268 = vst.msk [vmem:[%s407 + $0x78] sm:$0xff] %vm4252, %v4235
      %4269 = vst.msk [vmem:[%s407 + $0x80] sm:$0xff] %vm4252, %v4236
      %4270 = vst.msk [vmem:[%s407 + $0x88] sm:$0xff] %vm4252, %v4237
      %4271 = vst.msk [vmem:[%s407 + $0x90] sm:$0xff] %vm4252, %v4238
      %4272 = vst.msk [vmem:[%s407 + $0x98] sm:$0xff] %vm4252, %v4239
      %4273 = vst.msk [vmem:[%s407 + $0xa0] sm:$0xff] %vm4252, %v4240
      %4274 = vst.msk [vmem:[%s407 + $0xa8] sm:$0xff] %vm4252, %v4241
      %4275 = vst.msk [vmem:[%s407 + $0xb0] sm:$0xff] %vm4252, %v4242
      %4276 = vst.msk [vmem:[%s407 + $0xb8] sm:$0xff] %vm4252, %v4243
      %4277 = vst.msk [vmem:[%s407 + $0xc0] sm:$0xff] %vm4252, %v4244
      %4278 = vst.msk [vmem:[%s407 + $0xc8] sm:$0xff] %vm4252, %v4245
      %4279 = vst.msk [vmem:[%s407 + $0xd0] sm:$0xff] %vm4252, %v4246
      %4280 = vst.msk [vmem:[%s407 + $0xd8] sm:$0xff] %vm4252, %v4247
      %4281 = vst.msk [vmem:[%s407 + $0xe0] sm:$0xff] %vm4252, %v4248
      %4282 = vst.msk [vmem:[%s407 + $0xe8] sm:$0xff] %vm4252, %v4249
      %4283 = vst.msk [vmem:[%s407 + $0xf0] sm:$0xff] %vm4252, %v4250
      %4284 = vst.msk [vmem:[%s407 + $0xf8] sm:$0xff] %vm4252, %v4251
      %s4285 = smul.u32 16, %s24
      %p4286 = scmp.lt.s32.totalorder %s23, 1
      %s4287 = scalar_select %p4286, %s23, 1
      %p4288 = scmp.lt.s32.totalorder %s4285, 15
      %s4289 = scalar_select %p4288, %s4285, 15
      %s4290 = smul.addr %s4289, 2
      %s4291 = smul.addr %s4287, 32
      %s4292 = sadd.s32 %s4290, %s4291
      %s4293 = smul.addr %s4292, 8
      %s4294 = scalar_lea.vmem %s8, %s4293
      // Predicated region
      $region53: #{c3_forward.3} parent=51 // pred_check
        %p4295 = pneg %p238
      $region54: #{c3_forward.3} parent=51 // pred_check_branch
        %4297 = sbr.rel (%p4295) target = $region56
      $region55: #{c3_forward.3} parent=51 // pred_region
        %s4298 = smul.u32 16, %s24
      $region56: #{c3_forward.3} parent=51 // pred_fallthru
        _
    $region52: #{c3_forward.3} parent=5 // pred_fallthru
      _
    %p4299 = scmp.le.s32.totalorder 2, %s14
    // Predicated region
    $region57: #{c3_forward.3} parent=5 // pred_check
      %p4300 = pneg %p4299
    $region58: #{c3_forward.3} parent=5 // pred_check_branch
      %4302 = sbr.rel (%p4300) target = $region60
    $region59: #{c3_forward.3} parent=5 // pred_region
      %s4303 = ssub.s32 %s14, 2
      // Predicated region
      $region61: #{c3_forward.3} parent=59 // pred_check
        %p4304 = pneg %p244
      $region62: #{c3_forward.3} parent=59 // pred_check_branch
        %4306 = sbr.rel (%p4304) target = $region64
      $region63: #{c3_forward.3} parent=59 // pred_region
        %s4307 = smul.u32 16, %s26
        %p4308 = scmp.lt.s32.totalorder %s25, 1
        %s4309 = scalar_select %p4308, %s25, 1
        %p4310 = scmp.lt.s32.totalorder %s4307, 15
        %s4311 = scalar_select %p4310, %s4307, 15
        %s4312 = smul.addr %s4311, 2
        %s4313 = smul.addr %s4309, 32
        %s4314 = sadd.s32 %s4312, %s4313
        %s4315 = smul.addr %s4314, 8
        %s4316 = scalar_lea.vmem %s8, %s4315
      $region64: #{c3_forward.3} parent=59 // pred_fallthru
        _
    $region60: #{c3_forward.3} parent=5 // pred_fallthru
      _
  $region6: #{c3_forward.3} parent=0 // loop_footer
    %s18 = sadd.s32 1, %s14
  $region7: #{c3_forward.3} parent=0 // loop_footer_branch
    %13 = sbr.rel target = $region3
  $region8: #{c3_forward.3} parent=0 // loop_exit
    _

</llo_original>
